<compile_context>
chip_gen: v6e
topology: v6e:2x2x1
jax: 0.10.0
libtpu: 0.0.40
codegen_flags: <defaults>
</compile_context>

<pallas_src>
import jax
import jax.numpy as jnp
from jax.experimental import pallas as pl
from jax.experimental.pallas import tpu as pltpu

D_IN = 512
D_HID = 2048
TK = 1024                     # hidden-dim streaming chunk (2 grid steps)
EPS = 1e-5
N_PAD = 256                   # token rows padded (196 -> 256)

_INV_SQRT2 = 0.7071067811865476


def ffn_kernel(x_ref, gamma_ref, beta_ref, w1_ref, b1_ref, w2_ref, b2_ref,
               o_ref, xn_ref, acc_ref):
    k = pl.program_id(0)

    # LayerNorm (f32) computed once; cached as bf16 matmul operand.
    @pl.when(k == 0)
    def _():
        x = x_ref[...]                                     # (N_PAD, 512) f32
        mean = jnp.mean(x, axis=-1, keepdims=True)
        var = jnp.mean((x - mean) ** 2, axis=-1, keepdims=True)
        xn = (x - mean) * jax.lax.rsqrt(var + EPS)
        xn = xn * gamma_ref[...] + beta_ref[...]
        xn_ref[...] = xn.astype(jnp.bfloat16)
        acc_ref[...] = jnp.zeros_like(acc_ref)

    # Linear 512 -> TK (bf16 MXU, f32 accumulate) + bias chunk.
    h = jnp.dot(xn_ref[...], w1_ref[...], preferred_element_type=jnp.float32)
    h = h + b1_ref[...]

    # GELU (exact, approximate='none'), f32 math.
    h = 0.5 * h * (1.0 + jax.lax.erf(h * jnp.float32(_INV_SQRT2)))

    # Dropout(p=0.0) is identity.

    # Linear TK -> 512, accumulate over hidden chunks.
    acc_ref[...] += jnp.dot(h.astype(jnp.bfloat16), w2_ref[...],
                            preferred_element_type=jnp.float32)

    @pl.when(k == pl.num_programs(0) - 1)
    def _():
        o_ref[...] = (acc_ref[...] + b2_ref[...]).astype(o_ref.dtype)
        # Dropout(p=0.0) is identity.


def mlp_block(x, gamma, beta, w1, b1, w2, b2):
    """x: (B, H, W, 512) float32. w1: (512, 2048), w2: (2048, 512). Returns x's shape."""
    orig_shape = x.shape
    n_tok = orig_shape[0] * orig_shape[1] * orig_shape[2]
    x2d = x.reshape(n_tok, D_IN)
    # Pad token rows to a sublane-aligned, MXU-friendly count.
    x2d = jnp.pad(x2d, ((0, N_PAD - n_tok), (0, 0)))

    # bf16 weights: halves HBM traffic, enables native bf16 MXU rate.
    w1_bf = w1.astype(jnp.bfloat16)
    w2_bf = w2.astype(jnp.bfloat16)

    n_k = D_HID // TK

    cost = pl.CostEstimate(
        flops=2 * 2 * N_PAD * D_IN * D_HID,
        transcendentals=N_PAD * D_HID,
        bytes_accessed=(2 * D_IN * D_HID * 2          # w1 + w2 (bf16)
                        + 2 * N_PAD * D_IN * 4        # x in + out
                        + (D_HID + 3 * D_IN) * 4),    # biases / affine params
    )

    grid_spec = pltpu.PrefetchScalarGridSpec(
        num_scalar_prefetch=0,
        grid=(n_k,),
        in_specs=[
            pl.BlockSpec((N_PAD, D_IN), lambda k: (0, 0)),   # x (resident, fetched once)
            pl.BlockSpec((1, D_IN), lambda k: (0, 0)),       # gamma
            pl.BlockSpec((1, D_IN), lambda k: (0, 0)),       # beta
            pl.BlockSpec((D_IN, TK), lambda k: (0, k)),      # w1 column chunk
            pl.BlockSpec((1, TK), lambda k: (0, k)),         # b1 chunk
            pl.BlockSpec((TK, D_IN), lambda k: (k, 0)),      # w2 row chunk
            pl.BlockSpec((1, D_IN), lambda k: (0, 0)),       # b2
        ],
        out_specs=pl.BlockSpec((N_PAD, D_IN), lambda k: (0, 0)),
        scratch_shapes=[
            pltpu.VMEM((N_PAD, D_IN), jnp.bfloat16),         # cached LayerNorm output
            pltpu.VMEM((N_PAD, D_IN), jnp.float32),          # output accumulator
        ],
    )

    out = pl.pallas_call(
        ffn_kernel,
        out_shape=jax.ShapeDtypeStruct((N_PAD, D_IN), jnp.float32),
        grid_spec=grid_spec,
        compiler_params=pltpu.CompilerParams(
            dimension_semantics=("arbitrary",),
            vmem_limit_bytes=32 << 20,
        ),
        cost_estimate=cost,
    )(
        x2d,
        gamma.reshape(1, D_IN).astype(jnp.float32),
        beta.reshape(1, D_IN).astype(jnp.float32),
        w1_bf,
        b1.reshape(1, D_HID).astype(jnp.float32),
        w2_bf,
        b2.reshape(1, D_IN).astype(jnp.float32),
    )
    return out[:n_tok].reshape(orig_shape)


if __name__ == "__main__":
    key = jax.random.PRNGKey(0)
    kx, kg, kb, kw1, kb1, kw2, kb2 = jax.random.split(key, 7)

    # Input consistent with the module: [1, 14, 14, 512]
    x = jax.random.normal(kx, (1, 14, 14, 512), dtype=jnp.float32)

    # Deterministic synthetic parameters (shapes match the PyTorch module).
    gamma = 1.0 + 0.01 * jax.random.normal(kg, (D_IN,), dtype=jnp.float32)
    beta = 0.01 * jax.random.normal(kb, (D_IN,), dtype=jnp.float32)
    # Linear weights stored as (in, out) so the kernel computes x @ W + b,
    # matching PyTorch's x @ W^T with W of shape (out, in).
    w1 = 0.02 * jax.random.normal(kw1, (D_IN, D_HID), dtype=jnp.float32)
    b1 = 0.01 * jax.random.normal(kb1, (D_HID,), dtype=jnp.float32)
    w2 = 0.02 * jax.random.normal(kw2, (D_HID, D_IN), dtype=jnp.float32)
    b2 = 0.01 * jax.random.normal(kb2, (D_IN,), dtype=jnp.float32)

    out = mlp_block(x, gamma, beta, w1, b1, w2, b2)
    jax.block_until_ready(out)

    # Pure-JAX reference (f32; kernel uses bf16 MXU operands -> looser tolerance).
    mean = jnp.mean(x, axis=-1, keepdims=True)
    var = jnp.mean((x - mean) ** 2, axis=-1, keepdims=True)
    xn = (x - mean) / jnp.sqrt(var + EPS) * gamma + beta
    h = xn @ w1 + b1
    h = 0.5 * h * (1.0 + jax.lax.erf(h / jnp.sqrt(2.0)))
    ref = h @ w2 + b2

    assert out.shape == (1, 14, 14, 512)
    max_err = float(jnp.max(jnp.abs(out - ref)))
    assert jnp.allclose(out, ref, atol=3e-2, rtol=3e-2), max_err

    print("KERNEL_OK")
</pallas_src>

<mosaic_0001>
module attributes {stable_mosaic.version = 11 : i64} {
  func.func @ffn_kernel(%arg0: i32, %arg1: memref<256x512xf32, #tpu.memory_space<vmem>>, %arg2: memref<1x512xf32, #tpu.memory_space<vmem>>, %arg3: memref<1x512xf32, #tpu.memory_space<vmem>>, %arg4: memref<512x1024xbf16, #tpu.memory_space<vmem>>, %arg5: memref<1x1024xf32, #tpu.memory_space<vmem>>, %arg6: memref<1024x512xbf16, #tpu.memory_space<vmem>>, %arg7: memref<1x512xf32, #tpu.memory_space<vmem>>, %arg8: memref<256x512xf32, #tpu.memory_space<vmem>>, %arg9: memref<256x512xbf16, #tpu.memory_space<vmem>>, %arg10: memref<256x512xf32, #tpu.memory_space<vmem>>) attributes {dimension_semantics = [#tpu.dimension_semantics<arbitrary>], iteration_bounds = array<i64: 2>, scalar_prefetch = 0 : i64, scratch_operands = 2 : i64, tpu.core_type = #tpu.core_type<tc>, window_params = [{pipeline_mode = #tpu.pipeline_mode<synchronous>, transform_indices = @transform_0, window_bounds = array<i64: 256, 512>}, {pipeline_mode = #tpu.pipeline_mode<synchronous>, transform_indices = @transform_1, window_bounds = array<i64: 1, 512>}, {pipeline_mode = #tpu.pipeline_mode<synchronous>, transform_indices = @transform_2, window_bounds = array<i64: 1, 512>}, {transform_indices = @transform_3, window_bounds = array<i64: 512, 1024>}, {transform_indices = @transform_4, window_bounds = array<i64: 1, 1024>}, {transform_indices = @transform_5, window_bounds = array<i64: 1024, 512>}, {pipeline_mode = #tpu.pipeline_mode<synchronous>, transform_indices = @transform_6, window_bounds = array<i64: 1, 512>}, {pipeline_mode = #tpu.pipeline_mode<synchronous>, transform_indices = @transform_7, window_bounds = array<i64: 256, 512>}]} {
    %c0_i32 = arith.constant 0 : i32
    %0 = arith.cmpi eq, %arg0, %c0_i32 : i32
    %1 = arith.extui %0 : i1 to i32
    %c0_i32_0 = arith.constant 0 : i32
    %2 = arith.cmpi ne, %1, %c0_i32_0 : i32
    scf.if %2 {
      %c0_17 = arith.constant 0 : index
      %c0_18 = arith.constant 0 : index
      %26 = vector.load %arg1[%c0_17, %c0_18] : memref<256x512xf32, #tpu.memory_space<vmem>>, vector<256x512xf32>
      %cst_19 = arith.constant dense<0.000000e+00> : vector<256xf32>
      %27 = vector.multi_reduction <add>, %26, %cst_19 [1] : vector<256x512xf32> to vector<256xf32>
      %28 = vector.shape_cast %27 : vector<256xf32> to vector<256x1xf32>
      %cst_20 = arith.constant 5.120000e+02 : f32
      %29 = vector.broadcast %cst_20 : f32 to vector<256x1xf32>
      %30 = arith.divf %28, %29 : vector<256x1xf32>
      %31 = vector.broadcast %30 : vector<256x1xf32> to vector<256x512xf32>
      %32 = arith.subf %26, %31 : vector<256x512xf32>
      %33 = arith.mulf %32, %32 : vector<256x512xf32>
      %cst_21 = arith.constant dense<0.000000e+00> : vector<256xf32>
      %34 = vector.multi_reduction <add>, %33, %cst_21 [1] : vector<256x512xf32> to vector<256xf32>
      %35 = vector.shape_cast %34 : vector<256xf32> to vector<256x1xf32>
      %cst_22 = arith.constant 5.120000e+02 : f32
      %36 = vector.broadcast %cst_22 : f32 to vector<256x1xf32>
      %37 = arith.divf %35, %36 : vector<256x1xf32>
      %38 = vector.broadcast %30 : vector<256x1xf32> to vector<256x512xf32>
      %39 = arith.subf %26, %38 : vector<256x512xf32>
      %cst_23 = arith.constant 9.99999974E-6 : f32
      %40 = vector.broadcast %cst_23 : f32 to vector<256x1xf32>
      %41 = arith.addf %37, %40 : vector<256x1xf32>
      %42 = math.rsqrt %41 : vector<256x1xf32>
      %43 = vector.broadcast %42 : vector<256x1xf32> to vector<256x512xf32>
      %44 = arith.mulf %39, %43 : vector<256x512xf32>
      %c0_24 = arith.constant 0 : index
      %c0_25 = arith.constant 0 : index
      %45 = vector.load %arg2[%c0_24, %c0_25] : memref<1x512xf32, #tpu.memory_space<vmem>>, vector<1x512xf32>
      %46 = vector.broadcast %45 : vector<1x512xf32> to vector<256x512xf32>
      %47 = arith.mulf %44, %46 : vector<256x512xf32>
      %c0_26 = arith.constant 0 : index
      %c0_27 = arith.constant 0 : index
      %48 = vector.load %arg3[%c0_26, %c0_27] : memref<1x512xf32, #tpu.memory_space<vmem>>, vector<1x512xf32>
      %49 = vector.broadcast %48 : vector<1x512xf32> to vector<256x512xf32>
      %50 = arith.addf %47, %49 : vector<256x512xf32>
      %51 = arith.truncf %50 : vector<256x512xf32> to vector<256x512xbf16>
      %c0_28 = arith.constant 0 : index
      %c0_29 = arith.constant 0 : index
      %52 = vector.load %arg9[%c0_28, %c0_29] : memref<256x512xbf16, #tpu.memory_space<vmem>>, vector<256x512xbf16>
      tpu.vector_store %arg9[%c0_28, %c0_29], %51 {strides = array<i32>} : memref<256x512xbf16, #tpu.memory_space<vmem>>, vector<256x512xbf16>,
      %cst_30 = arith.constant 0.000000e+00 : f32
      %53 = vector.broadcast %cst_30 : f32 to vector<256x512xf32>
      %c0_31 = arith.constant 0 : index
      %c0_32 = arith.constant 0 : index
      %54 = vector.load %arg10[%c0_31, %c0_32] : memref<256x512xf32, #tpu.memory_space<vmem>>, vector<256x512xf32>
      tpu.vector_store %arg10[%c0_31, %c0_32], %53 {strides = array<i32>} : memref<256x512xf32, #tpu.memory_space<vmem>>, vector<256x512xf32>,
    } else {
    }
    %c0 = arith.constant 0 : index
    %c0_1 = arith.constant 0 : index
    %3 = vector.load %arg9[%c0, %c0_1] : memref<256x512xbf16, #tpu.memory_space<vmem>>, vector<256x512xbf16>
    %c0_2 = arith.constant 0 : index
    %c0_3 = arith.constant 0 : index
    %4 = vector.load %arg4[%c0_2, %c0_3] : memref<512x1024xbf16, #tpu.memory_space<vmem>>, vector<512x1024xbf16>
    %cst = arith.constant dense<0.000000e+00> : vector<256x1024xf32>
    %5 = tpu.matmul %3, %4, %cst {dimension_numbers = #tpu.dot_dimension_numbers<[1], [0], [0], [1], [0, 0, 1, 1], [], []>} : vector<256x512xbf16>, vector<512x1024xbf16>, vector<256x1024xf32> -> vector<256x1024xf32>
    %c0_4 = arith.constant 0 : index
    %c0_5 = arith.constant 0 : index
    %6 = vector.load %arg5[%c0_4, %c0_5] : memref<1x1024xf32, #tpu.memory_space<vmem>>, vector<1x1024xf32>
    %7 = vector.broadcast %6 : vector<1x1024xf32> to vector<256x1024xf32>
    %8 = arith.addf %5, %7 : vector<256x1024xf32>
    %cst_6 = arith.constant 5.000000e-01 : f32
    %9 = vector.broadcast %cst_6 : f32 to vector<256x1024xf32>
    %10 = arith.mulf %9, %8 : vector<256x1024xf32>
    %cst_7 = arith.constant 0.707106769 : f32
    %11 = vector.broadcast %cst_7 : f32 to vector<256x1024xf32>
    %12 = arith.mulf %8, %11 : vector<256x1024xf32>
    %13 = math.erf %12 : vector<256x1024xf32>
    %cst_8 = arith.constant 1.000000e+00 : f32
    %14 = vector.broadcast %cst_8 : f32 to vector<256x1024xf32>
    %15 = arith.addf %14, %13 : vector<256x1024xf32>
    %16 = arith.mulf %10, %15 : vector<256x1024xf32>
    %c0_9 = arith.constant 0 : index
    %c0_10 = arith.constant 0 : index
    %17 = vector.load %arg10[%c0_9, %c0_10] : memref<256x512xf32, #tpu.memory_space<vmem>>, vector<256x512xf32>
    %18 = arith.truncf %16 : vector<256x1024xf32> to vector<256x1024xbf16>
    %c0_11 = arith.constant 0 : index
    %c0_12 = arith.constant 0 : index
    %19 = vector.load %arg6[%c0_11, %c0_12] : memref<1024x512xbf16, #tpu.memory_space<vmem>>, vector<1024x512xbf16>
    %cst_13 = arith.constant dense<0.000000e+00> : vector<256x512xf32>
    %20 = tpu.matmul %18, %19, %cst_13 {dimension_numbers = #tpu.dot_dimension_numbers<[1], [0], [0], [1], [0, 0, 1, 1], [], []>} : vector<256x1024xbf16>, vector<1024x512xbf16>, vector<256x512xf32> -> vector<256x512xf32>
    %21 = arith.addf %17, %20 : vector<256x512xf32>
    %c0_14 = arith.constant 0 : index
    %c0_15 = arith.constant 0 : index
    %22 = vector.load %arg10[%c0_14, %c0_15] : memref<256x512xf32, #tpu.memory_space<vmem>>, vector<256x512xf32>
    tpu.vector_store %arg10[%c0_14, %c0_15], %21 {strides = array<i32>} : memref<256x512xf32, #tpu.memory_space<vmem>>, vector<256x512xf32>,
    %c1_i32 = arith.constant 1 : i32
    %23 = arith.cmpi eq, %arg0, %c1_i32 : i32
    %24 = arith.extui %23 : i1 to i32
    %c0_i32_16 = arith.constant 0 : i32
    %25 = arith.cmpi ne, %24, %c0_i32_16 : i32
    scf.if %25 {
      %c0_17 = arith.constant 0 : index
      %c0_18 = arith.constant 0 : index
      %26 = vector.load %arg10[%c0_17, %c0_18] : memref<256x512xf32, #tpu.memory_space<vmem>>, vector<256x512xf32>
      %c0_19 = arith.constant 0 : index
      %c0_20 = arith.constant 0 : index
      %27 = vector.load %arg7[%c0_19, %c0_20] : memref<1x512xf32, #tpu.memory_space<vmem>>, vector<1x512xf32>
      %28 = vector.broadcast %27 : vector<1x512xf32> to vector<256x512xf32>
      %29 = arith.addf %26, %28 : vector<256x512xf32>
      %c0_21 = arith.constant 0 : index
      %c0_22 = arith.constant 0 : index
      %30 = vector.load %arg8[%c0_21, %c0_22] : memref<256x512xf32, #tpu.memory_space<vmem>>, vector<256x512xf32>
      tpu.vector_store %arg8[%c0_21, %c0_22], %29 {strides = array<i32>} : memref<256x512xf32, #tpu.memory_space<vmem>>, vector<256x512xf32>,
    } else {
    }
    return
  }
  func.func @transform_0(%arg0: i32) -> (i32, i32) {
    %c0_i32 = arith.constant 0 : i32
    %c0_i32_0 = arith.constant 0 : i32
    %c0_i32_1 = arith.constant 0 : i32
    return %c0_i32, %c0_i32_0 : i32, i32
  }
  func.func @transform_1(%arg0: i32) -> (i32, i32) {
    %c0_i32 = arith.constant 0 : i32
    %c0_i32_0 = arith.constant 0 : i32
    %c0_i32_1 = arith.constant 0 : i32
    return %c0_i32, %c0_i32_0 : i32, i32
  }
  func.func @transform_2(%arg0: i32) -> (i32, i32) {
    %c0_i32 = arith.constant 0 : i32
    %c0_i32_0 = arith.constant 0 : i32
    %c0_i32_1 = arith.constant 0 : i32
    return %c0_i32, %c0_i32_0 : i32, i32
  }
  func.func @transform_3(%arg0: i32) -> (i32, i32) {
    %c0_i32 = arith.constant 0 : i32
    %c0_i32_0 = arith.constant 0 : i32
    return %c0_i32, %arg0 : i32, i32
  }
  func.func @transform_4(%arg0: i32) -> (i32, i32) {
    %c0_i32 = arith.constant 0 : i32
    %c0_i32_0 = arith.constant 0 : i32
    return %c0_i32, %arg0 : i32, i32
  }
  func.func @transform_5(%arg0: i32) -> (i32, i32) {
    %c0_i32 = arith.constant 0 : i32
    %c0_i32_0 = arith.constant 0 : i32
    return %arg0, %c0_i32 : i32, i32
  }
  func.func @transform_6(%arg0: i32) -> (i32, i32) {
    %c0_i32 = arith.constant 0 : i32
    %c0_i32_0 = arith.constant 0 : i32
    %c0_i32_1 = arith.constant 0 : i32
    return %c0_i32, %c0_i32_0 : i32, i32
  }
  func.func @transform_7(%arg0: i32) -> (i32, i32) {
    %c0_i32 = arith.constant 0 : i32
    %c0_i32_0 = arith.constant 0 : i32
    %c0_i32_1 = arith.constant 0 : i32
    return %c0_i32, %c0_i32_0 : i32, i32
  }
}

</mosaic_0001>

<llo_original>
// kernel: tpu_custom_call.1
$region0: #{tpu_custom_call.1}
  #allocation0 [shape = 'u32[]', space=smem, size = 0x4, offset = 0x4, fixed_abs, tag = 'smem constant byte address 0x4 - core index']
  #allocation1 [shape = 'u32[144,128]{1,0:T(1,128)}', space=vmem, size = 0x12000, scoped, tag = 'internal scratch']
  #allocation2 [shape = 'bf16[256,512]{1,0:T(8,128)(2,1)}', space=vmem, size = 0x40000, scoped, tag = 'scratch operand']
  #allocation3 [shape = 'f32[256,512]{1,0:T(8,128)}', space=vmem, size = 0x80000, scoped, tag = 'scratch operand']
  %s0 = inlined_call_operand.hbm [shape: f32[256,512], index: 0, kind: input, shape index: {}]
  %s1 = inlined_call_operand.hbm [shape: f32[1,512], index: 1, kind: input, shape index: {}]
  %s2 = inlined_call_operand.hbm [shape: f32[1,512], index: 2, kind: input, shape index: {}]
  %s3 = inlined_call_operand.hbm [shape: bf16[512,2048], index: 3, kind: input, shape index: {}]
  %s4 = inlined_call_operand.hbm [shape: f32[1,2048], index: 4, kind: input, shape index: {}]
  %s5 = inlined_call_operand.hbm [shape: bf16[2048,512], index: 5, kind: input, shape index: {}]
  %s6 = inlined_call_operand.hbm [shape: f32[1,512], index: 6, kind: input, shape index: {}]
  %s7 = inlined_call_operand.hbm [shape: f32[256,512], index: 7, kind: output, shape index: {}]
  %s8 = sld [smem:[#allocation0]]
  $region97: #{tpu_custom_call.1} parent=0
    _
  %s10 = ssub.s32 1, %s8
  %s11 = scalar_select 0, %s10, %s8
  $region1: #{tpu_custom_call.1} parent=0
    #allocation4 [shape = 'u8[524288]{0}', space=vmem, size = 0x80000, scoped, tag = 'input window, operand 0, single buffered']
    #allocation5 [shape = 's32[2]{0}', space=sflag, size = 0x8, scoped, tag = 'scoped memory for tpu_custom_call.1']
    #allocation6 [shape = 's32[2]{0}', space=sflag, size = 0x8, scoped, tag = 'scoped memory for tpu_custom_call.1']
    #allocation7 [shape = 'u8[2048]{0}', space=vmem, size = 0x800, scoped, tag = 'input window, operand 1, single buffered']
    #allocation8 [shape = 's32[1]{0}', space=sflag, size = 0x4, scoped, tag = 'scoped memory for tpu_custom_call.1']
    #allocation9 [shape = 'u8[2048]{0}', space=vmem, size = 0x800, scoped, tag = 'input window, operand 2, single buffered']
    #allocation10 [shape = 'u8[2097152]{0}', space=vmem, size = 0x200000, scoped, tag = 'input window, operand 3']
    #allocation11 [shape = 's32[2]{0}', space=sflag, size = 0x8, scoped, tag = 'scoped memory for tpu_custom_call.1']
    #allocation12 [shape = 'u8[8192]{0}', space=vmem, size = 0x2000, scoped, tag = 'input window, operand 4']
    #allocation13 [shape = 'u8[2097152]{0}', space=vmem, size = 0x200000, scoped, tag = 'input window, operand 5']
    #allocation14 [shape = 's32[2]{0}', space=sflag, size = 0x8, scoped, tag = 'scoped memory for tpu_custom_call.1']
    #allocation15 [shape = 'u8[2048]{0}', space=vmem, size = 0x800, scoped, tag = 'input window, operand 6, single buffered']
    #allocation16 [shape = 'u8[524288]{0}', space=vmem, size = 0x80000, scoped, tag = 'output window, operand 0, single buffered']
    %12 = vsyncpa [#allocation5], 0
    %13 = vsyncpa [#allocation8], 0
    %14 = vsyncpa [#allocation11], 0
    %s15 = scalar_lea.sflag [#allocation11], 1
    %16 = vsyncpa %s15, 0
    %17 = vsyncpa [#allocation14], 0
    %s18 = scalar_lea.sflag [#allocation14], 1
    %19 = vsyncpa %s18, 0
    %20 = vsyncpa [#allocation6], 0
    loop: start=0, step=1, limit=4
    $region2: #{tpu_custom_call.1} parent=1 // loop_pre_header
      _
    $region3: #{tpu_custom_call.1} parent=1 // loop_header
      %s22 = sphi 0, %s26
      %p23 = scmp.ge.s32.totalorder %s22, 4
      %s30 = sphi 0, %s30
      %s32 = sphi 0, %s30
      %s33 = sphi 0, %s32
      %s47 = sphi 0, %s33
      %s51 = sphi 0, %s51
      %s53 = sphi 0, %s51
      %s54 = sphi 0, %s53
      %s68 = sphi 0, %s54
      %s72 = sphi 0, %s72
      %s74 = sphi 0, %s72
      %s75 = sphi 0, %s74
      %s89 = sphi 0, %s75
      %s95 = sphi 0, %s97
      %s98 = sphi 0, %s95
      %s99 = sphi 0, %s98
      %s115 = sphi 0, %s99
      %s121 = sphi 0, %s123
      %s124 = sphi 0, %s121
      %s125 = sphi 0, %s124
      %s141 = sphi 0, %s125
      %s147 = sphi 0, %s149
      %s150 = sphi 0, %s147
      %s151 = sphi 0, %s150
      %s167 = sphi 0, %s151
      %s171 = sphi 0, %s171
      %s173 = sphi 0, %s171
      %s174 = sphi 0, %s173
      %s188 = sphi 0, %s174
      %s192 = sphi 0, %s192
      %s194 = sphi 0, %s192
      %s195 = sphi 0, %s194
      %s209 = sphi 0, %s195
    $region4: #{tpu_custom_call.1} parent=1 // loop_header_branch
      %25 = sbr.rel (%p23) target = $region8
    $region5: #{tpu_custom_call.1} parent=1 // loop_body
      %s27 = ssub.s32 %s22, 1
      %s28 = ssub.s32 %s22, 2
      %s29 = sadd.s32 %s22, 1
      %s31 = sadd.s32 %s30, 1
      %p34 = scmp.eq.s32.totalorder %s22, 1
      %p35 = scmp.ne.s32.totalorder %s30, %s32
      %p36 = scmp.eq.s32.totalorder %s22, 0
      %p37 = por %p35, %p36
      %p38 = scmp.ne.s32.totalorder %s30, %s32
      %p39 = scmp.eq.s32.totalorder %s27, 1
      %p40 = por %p38, %p39
      %p41 = scmp.ne.s32.totalorder %s32, %s33
      %p42 = scmp.eq.s32.totalorder %s27, 0
      %p43 = por %p41, %p42
      %p44 = scmp.ne.s32.totalorder %s32, %s33
      %p45 = scmp.eq.s32.totalorder %s28, 1
      %p46 = por %p44, %p45
      %p48 = scmp.ne.s32.totalorder %s33, %s47
      %p49 = scmp.eq.s32.totalorder %s28, 0
      %p50 = por %p48, %p49
      %s52 = sadd.s32 %s51, 1
      %p55 = scmp.eq.s32.totalorder %s22, 1
      %p56 = scmp.ne.s32.totalorder %s51, %s53
      %p57 = scmp.eq.s32.totalorder %s22, 0
      %p58 = por %p56, %p57
      %p59 = scmp.ne.s32.totalorder %s51, %s53
      %p60 = scmp.eq.s32.totalorder %s27, 1
      %p61 = por %p59, %p60
      %p62 = scmp.ne.s32.totalorder %s53, %s54
      %p63 = scmp.eq.s32.totalorder %s27, 0
      %p64 = por %p62, %p63
      %p65 = scmp.ne.s32.totalorder %s53, %s54
      %p66 = scmp.eq.s32.totalorder %s28, 1
      %p67 = por %p65, %p66
      %p69 = scmp.ne.s32.totalorder %s54, %s68
      %p70 = scmp.eq.s32.totalorder %s28, 0
      %p71 = por %p69, %p70
      %s73 = sadd.s32 %s72, 1
      %p76 = scmp.eq.s32.totalorder %s22, 1
      %p77 = scmp.ne.s32.totalorder %s72, %s74
      %p78 = scmp.eq.s32.totalorder %s22, 0
      %p79 = por %p77, %p78
      %p80 = scmp.ne.s32.totalorder %s72, %s74
      %p81 = scmp.eq.s32.totalorder %s27, 1
      %p82 = por %p80, %p81
      %p83 = scmp.ne.s32.totalorder %s74, %s75
      %p84 = scmp.eq.s32.totalorder %s27, 0
      %p85 = por %p83, %p84
      %p86 = scmp.ne.s32.totalorder %s74, %s75
      %p87 = scmp.eq.s32.totalorder %s28, 1
      %p88 = por %p86, %p87
      %p90 = scmp.ne.s32.totalorder %s75, %s89
      %p91 = scmp.eq.s32.totalorder %s28, 0
      %p92 = por %p90, %p91
      %s93 = ssub.s32 %s22, %s29
      %p94 = scmp.eq.s32.totalorder %s93, 0
      %s96 = sadd.s32 %s95, 1
      %s97 = scalar_select %p94, %s95, %s96
      %p100 = pneg %p94
      %p101 = scmp.eq.s32.totalorder %s22, 1
      %p102 = por %p100, %p101
      %p103 = scmp.ne.s32.totalorder %s95, %s98
      %p104 = scmp.eq.s32.totalorder %s22, 0
      %p105 = por %p103, %p104
      %p106 = scmp.ne.s32.totalorder %s95, %s98
      %p107 = scmp.eq.s32.totalorder %s27, 1
      %p108 = por %p106, %p107
      %p109 = scmp.ne.s32.totalorder %s98, %s99
      %p110 = scmp.eq.s32.totalorder %s27, 0
      %p111 = por %p109, %p110
      %p112 = scmp.ne.s32.totalorder %s98, %s99
      %p113 = scmp.eq.s32.totalorder %s28, 1
      %p114 = por %p112, %p113
      %p116 = scmp.ne.s32.totalorder %s99, %s115
      %p117 = scmp.eq.s32.totalorder %s28, 0
      %p118 = por %p116, %p117
      %s119 = ssub.s32 %s22, %s29
      %p120 = scmp.eq.s32.totalorder %s119, 0
      %s122 = sadd.s32 %s121, 1
      %s123 = scalar_select %p120, %s121, %s122
      %p126 = pneg %p120
      %p127 = scmp.eq.s32.totalorder %s22, 1
      %p128 = por %p126, %p127
      %p129 = scmp.ne.s32.totalorder %s121, %s124
      %p130 = scmp.eq.s32.totalorder %s22, 0
      %p131 = por %p129, %p130
      %p132 = scmp.ne.s32.totalorder %s121, %s124
      %p133 = scmp.eq.s32.totalorder %s27, 1
      %p134 = por %p132, %p133
      %p135 = scmp.ne.s32.totalorder %s124, %s125
      %p136 = scmp.eq.s32.totalorder %s27, 0
      %p137 = por %p135, %p136
      %p138 = scmp.ne.s32.totalorder %s124, %s125
      %p139 = scmp.eq.s32.totalorder %s28, 1
      %p140 = por %p138, %p139
      %p142 = scmp.ne.s32.totalorder %s125, %s141
      %p143 = scmp.eq.s32.totalorder %s28, 0
      %p144 = por %p142, %p143
      %s145 = ssub.s32 %s22, %s29
      %p146 = scmp.eq.s32.totalorder %s145, 0
      %s148 = sadd.s32 %s147, 1
      %s149 = scalar_select %p146, %s147, %s148
      %p152 = pneg %p146
      %p153 = scmp.eq.s32.totalorder %s22, 1
      %p154 = por %p152, %p153
      %p155 = scmp.ne.s32.totalorder %s147, %s150
      %p156 = scmp.eq.s32.totalorder %s22, 0
      %p157 = por %p155, %p156
      %p158 = scmp.ne.s32.totalorder %s147, %s150
      %p159 = scmp.eq.s32.totalorder %s27, 1
      %p160 = por %p158, %p159
      %p161 = scmp.ne.s32.totalorder %s150, %s151
      %p162 = scmp.eq.s32.totalorder %s27, 0
      %p163 = por %p161, %p162
      %p164 = scmp.ne.s32.totalorder %s150, %s151
      %p165 = scmp.eq.s32.totalorder %s28, 1
      %p166 = por %p164, %p165
      %p168 = scmp.ne.s32.totalorder %s151, %s167
      %p169 = scmp.eq.s32.totalorder %s28, 0
      %p170 = por %p168, %p169
      %s172 = sadd.s32 %s171, 1
      %p175 = scmp.eq.s32.totalorder %s22, 1
      %p176 = scmp.ne.s32.totalorder %s171, %s173
      %p177 = scmp.eq.s32.totalorder %s22, 0
      %p178 = por %p176, %p177
      %p179 = scmp.ne.s32.totalorder %s171, %s173
      %p180 = scmp.eq.s32.totalorder %s27, 1
      %p181 = por %p179, %p180
      %p182 = scmp.ne.s32.totalorder %s173, %s174
      %p183 = scmp.eq.s32.totalorder %s27, 0
      %p184 = por %p182, %p183
      %p185 = scmp.ne.s32.totalorder %s173, %s174
      %p186 = scmp.eq.s32.totalorder %s28, 1
      %p187 = por %p185, %p186
      %p189 = scmp.ne.s32.totalorder %s174, %s188
      %p190 = scmp.eq.s32.totalorder %s28, 0
      %p191 = por %p189, %p190
      %s193 = sadd.s32 %s192, 1
      %p196 = scmp.eq.s32.totalorder %s22, 1
      %p197 = scmp.ne.s32.totalorder %s192, %s194
      %p198 = scmp.eq.s32.totalorder %s22, 0
      %p199 = por %p197, %p198
      %p200 = scmp.ne.s32.totalorder %s192, %s194
      %p201 = scmp.eq.s32.totalorder %s27, 1
      %p202 = por %p200, %p201
      %p203 = scmp.ne.s32.totalorder %s194, %s195
      %p204 = scmp.eq.s32.totalorder %s27, 0
      %p205 = por %p203, %p204
      %p206 = scmp.ne.s32.totalorder %s194, %s195
      %p207 = scmp.eq.s32.totalorder %s28, 1
      %p208 = por %p206, %p207
      %p210 = scmp.ne.s32.totalorder %s195, %s209
      %p211 = scmp.eq.s32.totalorder %s28, 0
      %p212 = por %p210, %p211
      %p213 = scmp.le.s32.totalorder 1, %s22
      %p214 = scmp.lt.s32.totalorder %s22, 3
      %p215 = pnand %p213, %p214
      %p216 = pneg %p215
      // Predicated region
      $region9: #{tpu_custom_call.1} parent=5 // pred_check
        _
      $region10: #{tpu_custom_call.1} parent=5 // pred_check_branch
        %218 = sbr.rel (%p215) target = $region12
      $region11: #{tpu_custom_call.1} parent=5 // pred_region
        %s219 = ssub.s32 %s22, 1
        // Predicated region
        $region13: #{tpu_custom_call.1} parent=11 // pred_check
          %p220 = pneg %p43
        $region14: #{tpu_custom_call.1} parent=11 // pred_check_branch
          %222 = sbr.rel (%p220) target = $region16
        $region15: #{tpu_custom_call.1} parent=11 // pred_region
          %s224 = ssub.s32 16384, 16384
          %225 = vsyncadd [#allocation5], %s224
          %s226 = sshll.u32 [#allocation4], 4
          %s227 = int_to_ptr.vmem [resolvable:$true] %s226
          %232 = dma.hbm_to_vmem [thread:$0]  %s0, 16384, %s227, [#allocation5], 512, 512, 32
        $region16: #{tpu_custom_call.1} parent=11 // pred_fallthru
          _
        // Predicated region
        $region17: #{tpu_custom_call.1} parent=11 // pred_check
          %p233 = pneg %p64
        $region18: #{tpu_custom_call.1} parent=11 // pred_check_branch
          %235 = sbr.rel (%p233) target = $region20
        $region19: #{tpu_custom_call.1} parent=11 // pred_region
          %s237 = ssub.s32 64, 64
          %238 = vsyncadd [#allocation8], %s237
          %s240 = sshll.u32 [#allocation7], 4
          %s241 = int_to_ptr.vmem [resolvable:$true] %s240
          %243 = dma.hbm_to_vmem [thread:$0]  %s1, 64, %s241, [#allocation8]
        $region20: #{tpu_custom_call.1} parent=11 // pred_fallthru
          _
        // Predicated region
        $region21: #{tpu_custom_call.1} parent=11 // pred_check
          %p244 = pneg %p85
        $region22: #{tpu_custom_call.1} parent=11 // pred_check_branch
          %246 = sbr.rel (%p244) target = $region24
        $region23: #{tpu_custom_call.1} parent=11 // pred_region
          %s248 = ssub.s32 64, 64
          %249 = vsyncadd [#allocation8], %s248
          %s251 = sshll.u32 [#allocation9], 4
          %s252 = int_to_ptr.vmem [resolvable:$true] %s251
          %254 = dma.hbm_to_vmem [thread:$0]  %s2, 64, %s252, [#allocation8]
        $region24: #{tpu_custom_call.1} parent=11 // pred_fallthru
          _
        // Predicated region
        $region25: #{tpu_custom_call.1} parent=11 // pred_check
          %p255 = pneg %p184
        $region26: #{tpu_custom_call.1} parent=11 // pred_check_branch
          %257 = sbr.rel (%p255) target = $region28
        $region27: #{tpu_custom_call.1} parent=11 // pred_region
          %s259 = ssub.s32 64, 64
          %260 = vsyncadd [#allocation14], %s259
          %s262 = sshll.u32 [#allocation15], 4
          %s263 = int_to_ptr.vmem [resolvable:$true] %s262
          %265 = dma.hbm_to_vmem [thread:$0]  %s6, 64, %s263, [#allocation14]
        $region28: #{tpu_custom_call.1} parent=11 // pred_fallthru
          _
      $region12: #{tpu_custom_call.1} parent=5 // pred_fallthru
        _
      %p266 = scmp.lt.s32.totalorder %s22, 2
      // Predicated region
      $region29: #{tpu_custom_call.1} parent=5 // pred_check
        %p267 = pneg %p266
      $region30: #{tpu_custom_call.1} parent=5 // pred_check_branch
        %269 = sbr.rel (%p267) target = $region32
      $region31: #{tpu_custom_call.1} parent=5 // pred_region
        // Predicated region
        $region33: #{tpu_custom_call.1} parent=31 // pred_check
          %p270 = pneg %p105
        $region34: #{tpu_custom_call.1} parent=31 // pred_check_branch
          %272 = sbr.rel (%p270) target = $region36
        $region35: #{tpu_custom_call.1} parent=31 // pred_region
          %s273 = sand.u32 %s22, 1
          %s274 = scalar_lea.sflag [#allocation11], %s273
          %s275 = sand.u32 %s95, 1
          %s276 = smul.addr %s275, 2048
          %s277 = scalar_lea.vmem [#allocation10], %s276
          %s278 = smul.u32 8, %s22
          %s280 = ssub.s32 32768, 32768
          %281 = vsyncadd %s274, %s280
          %s282 = smul.addr %s278, 64
          %s283 = scalar_lea.hbm %s3, %s282
          %s284 = sshll.u32 %s277, 4
          %s285 = int_to_ptr.vmem [resolvable:$true] %s284
          %290 = dma.hbm_to_vmem [thread:$0]  %s283, 32768, %s285, %s274, 1024, 512, 32
        $region36: #{tpu_custom_call.1} parent=31 // pred_fallthru
          _
        // Predicated region
        $region37: #{tpu_custom_call.1} parent=31 // pred_check
          %p291 = pneg %p131
        $region38: #{tpu_custom_call.1} parent=31 // pred_check_branch
          %293 = sbr.rel (%p291) target = $region40
        $region39: #{tpu_custom_call.1} parent=31 // pred_region
          %s294 = sand.u32 %s22, 1
          %s295 = scalar_lea.sflag [#allocation11], %s294
          %s296 = sand.u32 %s121, 1
          %s297 = smul.addr %s296, 8
          %s298 = scalar_lea.vmem [#allocation12], %s297
          %s299 = smul.u32 8, %s22
          %s301 = ssub.s32 128, 128
          %302 = vsyncadd %s295, %s301
          %s303 = smul.addr %s299, 16
          %s304 = scalar_lea.hbm %s4, %s303
          %s306 = sshll.u32 %s298, 4
          %s307 = int_to_ptr.vmem [resolvable:$true] %s306
          %309 = dma.hbm_to_vmem [thread:$0]  %s304, 128, %s307, %s295
        $region40: #{tpu_custom_call.1} parent=31 // pred_fallthru
          _
        // Predicated region
        $region41: #{tpu_custom_call.1} parent=31 // pred_check
          %p310 = pneg %p157
        $region42: #{tpu_custom_call.1} parent=31 // pred_check_branch
          %312 = sbr.rel (%p310) target = $region44
        $region43: #{tpu_custom_call.1} parent=31 // pred_region
          %s313 = sand.u32 %s22, 1
          %s314 = scalar_lea.sflag [#allocation14], %s313
          %s315 = sand.u32 %s147, 1
          %s316 = smul.addr %s315, 2048
          %s317 = scalar_lea.vmem [#allocation13], %s316
          %s318 = smul.u32 128, %s22
          %s320 = ssub.s32 32768, 32768
          %321 = vsyncadd %s314, %s320
          %s322 = smul.addr %s318, 4
          %s323 = smul.addr %s322, 64
          %s324 = scalar_lea.hbm %s5, %s323
          %s325 = sshll.u32 %s317, 4
          %s326 = int_to_ptr.vmem [resolvable:$true] %s325
          %331 = dma.hbm_to_vmem [thread:$0]  %s324, 32768, %s326, %s314, 256, 256, 16
        $region44: #{tpu_custom_call.1} parent=31 // pred_fallthru
          _
      $region32: #{tpu_custom_call.1} parent=5 // pred_fallthru
        _
      %p332 = scmp.le.s32.totalorder 1, %s22
      %p333 = scmp.lt.s32.totalorder %s22, 3
      %p334 = pnand %p332, %p333
      %p335 = pneg %p334
      // Predicated region
      $region45: #{tpu_custom_call.1} parent=5 // pred_check
        _
      $region46: #{tpu_custom_call.1} parent=5 // pred_check_branch
        %337 = sbr.rel (%p334) target = $region48
      $region47: #{tpu_custom_call.1} parent=5 // pred_region
        %s338 = ssub.s32 %s22, 1
        // Predicated region
        $region49: #{tpu_custom_call.1} parent=47 // pred_check
          %p339 = pneg %p43
        $region50: #{tpu_custom_call.1} parent=47 // pred_check_branch
          %341 = sbr.rel (%p339) target = $region52
        $region51: #{tpu_custom_call.1} parent=47 // pred_region
          %342 = dma.done [#allocation5], 16384
        $region52: #{tpu_custom_call.1} parent=47 // pred_fallthru
          _
        // Predicated region
        $region53: #{tpu_custom_call.1} parent=47 // pred_check
          %p343 = pneg %p64
        $region54: #{tpu_custom_call.1} parent=47 // pred_check_branch
          %345 = sbr.rel (%p343) target = $region56
        $region55: #{tpu_custom_call.1} parent=47 // pred_region
          %346 = dma.done [#allocation8], 64
        $region56: #{tpu_custom_call.1} parent=47 // pred_fallthru
          _
        // Predicated region
        $region57: #{tpu_custom_call.1} parent=47 // pred_check
          %p347 = pneg %p85
        $region58: #{tpu_custom_call.1} parent=47 // pred_check_branch
          %349 = sbr.rel (%p347) target = $region60
        $region59: #{tpu_custom_call.1} parent=47 // pred_region
          %350 = dma.done [#allocation8], 64
        $region60: #{tpu_custom_call.1} parent=47 // pred_fallthru
          _
        %s351 = sand.u32 %s27, 1
        %s352 = scalar_lea.sflag [#allocation11], %s351
        %s353 = sand.u32 %s98, 1
        %s354 = smul.addr %s353, 2048
        %s355 = scalar_lea.vmem [#allocation10], %s354
        // Predicated region
        $region61: #{tpu_custom_call.1} parent=47 // pred_check
          %p356 = pneg %p111
        $region62: #{tpu_custom_call.1} parent=47 // pred_check_branch
          %358 = sbr.rel (%p356) target = $region64
        $region63: #{tpu_custom_call.1} parent=47 // pred_region
          %359 = dma.done %s352, 32768
        $region64: #{tpu_custom_call.1} parent=47 // pred_fallthru
          _
        %s360 = sand.u32 %s27, 1
        %s361 = scalar_lea.sflag [#allocation11], %s360
        %s362 = sand.u32 %s124, 1
        %s363 = smul.addr %s362, 8
        %s364 = scalar_lea.vmem [#allocation12], %s363
        // Predicated region
        $region65: #{tpu_custom_call.1} parent=47 // pred_check
          %p365 = pneg %p137
        $region66: #{tpu_custom_call.1} parent=47 // pred_check_branch
          %367 = sbr.rel (%p365) target = $region68
        $region67: #{tpu_custom_call.1} parent=47 // pred_region
          %368 = dma.done %s361, 128
        $region68: #{tpu_custom_call.1} parent=47 // pred_fallthru
          _
        %s369 = sand.u32 %s27, 1
        %s370 = scalar_lea.sflag [#allocation14], %s369
        %s371 = sand.u32 %s150, 1
        %s372 = smul.addr %s371, 2048
        %s373 = scalar_lea.vmem [#allocation13], %s372
        // Predicated region
        $region69: #{tpu_custom_call.1} parent=47 // pred_check
          %p374 = pneg %p163
        $region70: #{tpu_custom_call.1} parent=47 // pred_check_branch
          %376 = sbr.rel (%p374) target = $region72
        $region71: #{tpu_custom_call.1} parent=47 // pred_region
          %377 = dma.done %s370, 32768
        $region72: #{tpu_custom_call.1} parent=47 // pred_fallthru
          _
        // Predicated region
        $region73: #{tpu_custom_call.1} parent=47 // pred_check
          %p378 = pneg %p184
        $region74: #{tpu_custom_call.1} parent=47 // pred_check_branch
          %380 = sbr.rel (%p378) target = $region76
        $region75: #{tpu_custom_call.1} parent=47 // pred_region
          %381 = dma.done [#allocation14], 64
        $region76: #{tpu_custom_call.1} parent=47 // pred_fallthru
          _
        %p382 = pneg %p43
        %p383 = pneg %p40
        %p384 = pneg %p64
        %p385 = pneg %p61
        %p386 = pneg %p85
        %p387 = pneg %p82
        %s388 = sand.u32 %s27, 1
        %s389 = scalar_lea.sflag [#allocation11], %s388
        %s390 = sand.u32 %s98, 1
        %s391 = smul.addr %s390, 2048
        %s392 = scalar_lea.vmem [#allocation10], %s391
        %p393 = pneg %p111
        %p394 = pneg %p108
        %s395 = sand.u32 %s27, 1
        %s396 = scalar_lea.sflag [#allocation11], %s395
        %s397 = sand.u32 %s124, 1
        %s398 = smul.addr %s397, 8
        %s399 = scalar_lea.vmem [#allocation12], %s398
        %p400 = pneg %p137
        %p401 = pneg %p134
        %s402 = sand.u32 %s27, 1
        %s403 = scalar_lea.sflag [#allocation14], %s402
        %s404 = sand.u32 %s150, 1
        %s405 = smul.addr %s404, 2048
        %s406 = scalar_lea.vmem [#allocation13], %s405
        %p407 = pneg %p163
        %p408 = pneg %p160
        %p409 = pneg %p184
        %p410 = pneg %p181
        %p411 = pneg %p205
        %p412 = pneg %p202
        %s413 = smul.u32 8, %s27
        %s414 = smul.u32 8, %s27
        %s415 = smul.u32 128, %s27
        %p416 = scmp.eq.s32.totalorder %s27, 0
        // Predicated region
        $region77: #{tpu_custom_call.1} parent=47 // pred_check
          %p417 = pneg %p416
        $region78: #{tpu_custom_call.1} parent=47 // pred_check_branch
          %419 = sbr.rel (%p417) target = $region80
        $region79: #{tpu_custom_call.1} parent=47 // pred_region
          %v420 = vld [vmem:[#allocation4] sm:$0xff]
          %v421 = vld [vmem:[#allocation4 + $0x8] sm:$0xff]
          %v422 = vld [vmem:[#allocation4 + $0x10] sm:$0xff]
          %v423 = vld [vmem:[#allocation4 + $0x18] sm:$0xff]
          %v424 = vld [vmem:[#allocation4 + $0x20] sm:$0xff]
          %v425 = vld [vmem:[#allocation4 + $0x28] sm:$0xff]
          %v426 = vld [vmem:[#allocation4 + $0x30] sm:$0xff]
          %v427 = vld [vmem:[#allocation4 + $0x38] sm:$0xff]
          %v428 = vld [vmem:[#allocation4 + $0x40] sm:$0xff]
          %v429 = vld [vmem:[#allocation4 + $0x48] sm:$0xff]
          %v430 = vld [vmem:[#allocation4 + $0x50] sm:$0xff]
          %v431 = vld [vmem:[#allocation4 + $0x58] sm:$0xff]
          %v432 = vld [vmem:[#allocation4 + $0x60] sm:$0xff]
          %v433 = vld [vmem:[#allocation4 + $0x68] sm:$0xff]
          %v434 = vld [vmem:[#allocation4 + $0x70] sm:$0xff]
          %v435 = vld [vmem:[#allocation4 + $0x78] sm:$0xff]
          %v436 = vld [vmem:[#allocation4 + $0x80] sm:$0xff]
          %v437 = vld [vmem:[#allocation4 + $0x88] sm:$0xff]
          %v438 = vld [vmem:[#allocation4 + $0x90] sm:$0xff]
          %v439 = vld [vmem:[#allocation4 + $0x98] sm:$0xff]
          %v440 = vld [vmem:[#allocation4 + $0xa0] sm:$0xff]
          %v441 = vld [vmem:[#allocation4 + $0xa8] sm:$0xff]
          %v442 = vld [vmem:[#allocation4 + $0xb0] sm:$0xff]
          %v443 = vld [vmem:[#allocation4 + $0xb8] sm:$0xff]
          %v444 = vld [vmem:[#allocation4 + $0xc0] sm:$0xff]
          %v445 = vld [vmem:[#allocation4 + $0xc8] sm:$0xff]
          %v446 = vld [vmem:[#allocation4 + $0xd0] sm:$0xff]
          %v447 = vld [vmem:[#allocation4 + $0xd8] sm:$0xff]
          %v448 = vld [vmem:[#allocation4 + $0xe0] sm:$0xff]
          %v449 = vld [vmem:[#allocation4 + $0xe8] sm:$0xff]
          %v450 = vld [vmem:[#allocation4 + $0xf0] sm:$0xff]
          %v451 = vld [vmem:[#allocation4 + $0xf8] sm:$0xff]
          %v452 = vld [vmem:[#allocation4 + $0x100] sm:$0xff]
          %v453 = vld [vmem:[#allocation4 + $0x108] sm:$0xff]
          %v454 = vld [vmem:[#allocation4 + $0x110] sm:$0xff]
          %v455 = vld [vmem:[#allocation4 + $0x118] sm:$0xff]
          %v456 = vld [vmem:[#allocation4 + $0x120] sm:$0xff]
          %v457 = vld [vmem:[#allocation4 + $0x128] sm:$0xff]
          %v458 = vld [vmem:[#allocation4 + $0x130] sm:$0xff]
          %v459 = vld [vmem:[#allocation4 + $0x138] sm:$0xff]
          %v460 = vld [vmem:[#allocation4 + $0x140] sm:$0xff]
          %v461 = vld [vmem:[#allocation4 + $0x148] sm:$0xff]
          %v462 = vld [vmem:[#allocation4 + $0x150] sm:$0xff]
          %v463 = vld [vmem:[#allocation4 + $0x158] sm:$0xff]
          %v464 = vld [vmem:[#allocation4 + $0x160] sm:$0xff]
          %v465 = vld [vmem:[#allocation4 + $0x168] sm:$0xff]
          %v466 = vld [vmem:[#allocation4 + $0x170] sm:$0xff]
          %v467 = vld [vmem:[#allocation4 + $0x178] sm:$0xff]
          %v468 = vld [vmem:[#allocation4 + $0x180] sm:$0xff]
          %v469 = vld [vmem:[#allocation4 + $0x188] sm:$0xff]
          %v470 = vld [vmem:[#allocation4 + $0x190] sm:$0xff]
          %v471 = vld [vmem:[#allocation4 + $0x198] sm:$0xff]
          %v472 = vld [vmem:[#allocation4 + $0x1a0] sm:$0xff]
          %v473 = vld [vmem:[#allocation4 + $0x1a8] sm:$0xff]
          %v474 = vld [vmem:[#allocation4 + $0x1b0] sm:$0xff]
          %v475 = vld [vmem:[#allocation4 + $0x1b8] sm:$0xff]
          %v476 = vld [vmem:[#allocation4 + $0x1c0] sm:$0xff]
          %v477 = vld [vmem:[#allocation4 + $0x1c8] sm:$0xff]
          %v478 = vld [vmem:[#allocation4 + $0x1d0] sm:$0xff]
          %v479 = vld [vmem:[#allocation4 + $0x1d8] sm:$0xff]
          %v480 = vld [vmem:[#allocation4 + $0x1e0] sm:$0xff]
          %v481 = vld [vmem:[#allocation4 + $0x1e8] sm:$0xff]
          %v482 = vld [vmem:[#allocation4 + $0x1f0] sm:$0xff]
          %v483 = vld [vmem:[#allocation4 + $0x1f8] sm:$0xff]
          %v484 = vld [vmem:[#allocation4 + $0x200] sm:$0xff]
          %v485 = vld [vmem:[#allocation4 + $0x208] sm:$0xff]
          %v486 = vld [vmem:[#allocation4 + $0x210] sm:$0xff]
          %v487 = vld [vmem:[#allocation4 + $0x218] sm:$0xff]
          %v488 = vld [vmem:[#allocation4 + $0x220] sm:$0xff]
          %v489 = vld [vmem:[#allocation4 + $0x228] sm:$0xff]
          %v490 = vld [vmem:[#allocation4 + $0x230] sm:$0xff]
          %v491 = vld [vmem:[#allocation4 + $0x238] sm:$0xff]
          %v492 = vld [vmem:[#allocation4 + $0x240] sm:$0xff]
          %v493 = vld [vmem:[#allocation4 + $0x248] sm:$0xff]
          %v494 = vld [vmem:[#allocation4 + $0x250] sm:$0xff]
          %v495 = vld [vmem:[#allocation4 + $0x258] sm:$0xff]
          %v496 = vld [vmem:[#allocation4 + $0x260] sm:$0xff]
          %v497 = vld [vmem:[#allocation4 + $0x268] sm:$0xff]
          %v498 = vld [vmem:[#allocation4 + $0x270] sm:$0xff]
          %v499 = vld [vmem:[#allocation4 + $0x278] sm:$0xff]
          %v500 = vld [vmem:[#allocation4 + $0x280] sm:$0xff]
          %v501 = vld [vmem:[#allocation4 + $0x288] sm:$0xff]
          %v502 = vld [vmem:[#allocation4 + $0x290] sm:$0xff]
          %v503 = vld [vmem:[#allocation4 + $0x298] sm:$0xff]
          %v504 = vld [vmem:[#allocation4 + $0x2a0] sm:$0xff]
          %v505 = vld [vmem:[#allocation4 + $0x2a8] sm:$0xff]
          %v506 = vld [vmem:[#allocation4 + $0x2b0] sm:$0xff]
          %v507 = vld [vmem:[#allocation4 + $0x2b8] sm:$0xff]
          %v508 = vld [vmem:[#allocation4 + $0x2c0] sm:$0xff]
          %v509 = vld [vmem:[#allocation4 + $0x2c8] sm:$0xff]
          %v510 = vld [vmem:[#allocation4 + $0x2d0] sm:$0xff]
          %v511 = vld [vmem:[#allocation4 + $0x2d8] sm:$0xff]
          %v512 = vld [vmem:[#allocation4 + $0x2e0] sm:$0xff]
          %v513 = vld [vmem:[#allocation4 + $0x2e8] sm:$0xff]
          %v514 = vld [vmem:[#allocation4 + $0x2f0] sm:$0xff]
          %v515 = vld [vmem:[#allocation4 + $0x2f8] sm:$0xff]
          %v516 = vld [vmem:[#allocation4 + $0x300] sm:$0xff]
          %v517 = vld [vmem:[#allocation4 + $0x308] sm:$0xff]
          %v518 = vld [vmem:[#allocation4 + $0x310] sm:$0xff]
          %v519 = vld [vmem:[#allocation4 + $0x318] sm:$0xff]
          %v520 = vld [vmem:[#allocation4 + $0x320] sm:$0xff]
          %v521 = vld [vmem:[#allocation4 + $0x328] sm:$0xff]
          %v522 = vld [vmem:[#allocation4 + $0x330] sm:$0xff]
          %v523 = vld [vmem:[#allocation4 + $0x338] sm:$0xff]
          %v524 = vld [vmem:[#allocation4 + $0x340] sm:$0xff]
          %v525 = vld [vmem:[#allocation4 + $0x348] sm:$0xff]
          %v526 = vld [vmem:[#allocation4 + $0x350] sm:$0xff]
          %v527 = vld [vmem:[#allocation4 + $0x358] sm:$0xff]
          %v528 = vld [vmem:[#allocation4 + $0x360] sm:$0xff]
          %v529 = vld [vmem:[#allocation4 + $0x368] sm:$0xff]
          %v530 = vld [vmem:[#allocation4 + $0x370] sm:$0xff]
          %v531 = vld [vmem:[#allocation4 + $0x378] sm:$0xff]
          %v532 = vld [vmem:[#allocation4 + $0x380] sm:$0xff]
          %v533 = vld [vmem:[#allocation4 + $0x388] sm:$0xff]
          %v534 = vld [vmem:[#allocation4 + $0x390] sm:$0xff]
          %v535 = vld [vmem:[#allocation4 + $0x398] sm:$0xff]
          %v536 = vld [vmem:[#allocation4 + $0x3a0] sm:$0xff]
          %v537 = vld [vmem:[#allocation4 + $0x3a8] sm:$0xff]
          %v538 = vld [vmem:[#allocation4 + $0x3b0] sm:$0xff]
          %v539 = vld [vmem:[#allocation4 + $0x3b8] sm:$0xff]
          %v540 = vld [vmem:[#allocation4 + $0x3c0] sm:$0xff]
          %v541 = vld [vmem:[#allocation4 + $0x3c8] sm:$0xff]
          %v542 = vld [vmem:[#allocation4 + $0x3d0] sm:$0xff]
          %v543 = vld [vmem:[#allocation4 + $0x3d8] sm:$0xff]
          %v544 = vld [vmem:[#allocation4 + $0x3e0] sm:$0xff]
          %v545 = vld [vmem:[#allocation4 + $0x3e8] sm:$0xff]
          %v546 = vld [vmem:[#allocation4 + $0x3f0] sm:$0xff]
          %v547 = vld [vmem:[#allocation4 + $0x3f8] sm:$0xff]
          %v548 = vadd.f32 %v420, %v421
          %v549 = vadd.f32 %v548, %v422
          %v550 = vadd.f32 %v549, %v423
          %551 = vadd.xlane.f32.xlu0 %v550
          %v552 = vpop.xlane.xlu0 %551
          %v553 = vadd.f32 %v424, %v425
          %v554 = vadd.f32 %v553, %v426
          %v555 = vadd.f32 %v554, %v427
          %556 = vadd.xlane.f32.xlu0 %v555
          %v557 = vpop.xlane.xlu0 %556
          %v558 = vadd.f32 %v428, %v429
          %v559 = vadd.f32 %v558, %v430
          %v560 = vadd.f32 %v559, %v431
          %561 = vadd.xlane.f32.xlu0 %v560
          %v562 = vpop.xlane.xlu0 %561
          %v563 = vadd.f32 %v432, %v433
          %v564 = vadd.f32 %v563, %v434
          %v565 = vadd.f32 %v564, %v435
          %566 = vadd.xlane.f32.xlu0 %v565
          %v567 = vpop.xlane.xlu0 %566
          %v568 = vadd.f32 %v436, %v437
          %v569 = vadd.f32 %v568, %v438
          %v570 = vadd.f32 %v569, %v439
          %571 = vadd.xlane.f32.xlu0 %v570
          %v572 = vpop.xlane.xlu0 %571
          %v573 = vadd.f32 %v440, %v441
          %v574 = vadd.f32 %v573, %v442
          %v575 = vadd.f32 %v574, %v443
          %576 = vadd.xlane.f32.xlu0 %v575
          %v577 = vpop.xlane.xlu0 %576
          %v578 = vadd.f32 %v444, %v445
          %v579 = vadd.f32 %v578, %v446
          %v580 = vadd.f32 %v579, %v447
          %581 = vadd.xlane.f32.xlu0 %v580
          %v582 = vpop.xlane.xlu0 %581
          %v583 = vadd.f32 %v448, %v449
          %v584 = vadd.f32 %v583, %v450
          %v585 = vadd.f32 %v584, %v451
          %586 = vadd.xlane.f32.xlu0 %v585
          %v587 = vpop.xlane.xlu0 %586
          %v588 = vadd.f32 %v452, %v453
          %v589 = vadd.f32 %v588, %v454
          %v590 = vadd.f32 %v589, %v455
          %591 = vadd.xlane.f32.xlu0 %v590
          %v592 = vpop.xlane.xlu0 %591
          %v593 = vadd.f32 %v456, %v457
          %v594 = vadd.f32 %v593, %v458
          %v595 = vadd.f32 %v594, %v459
          %596 = vadd.xlane.f32.xlu0 %v595
          %v597 = vpop.xlane.xlu0 %596
          %v598 = vadd.f32 %v460, %v461
          %v599 = vadd.f32 %v598, %v462
          %v600 = vadd.f32 %v599, %v463
          %601 = vadd.xlane.f32.xlu0 %v600
          %v602 = vpop.xlane.xlu0 %601
          %v603 = vadd.f32 %v464, %v465
          %v604 = vadd.f32 %v603, %v466
          %v605 = vadd.f32 %v604, %v467
          %606 = vadd.xlane.f32.xlu0 %v605
          %v607 = vpop.xlane.xlu0 %606
          %v608 = vadd.f32 %v468, %v469
          %v609 = vadd.f32 %v608, %v470
          %v610 = vadd.f32 %v609, %v471
          %611 = vadd.xlane.f32.xlu0 %v610
          %v612 = vpop.xlane.xlu0 %611
          %v613 = vadd.f32 %v472, %v473
          %v614 = vadd.f32 %v613, %v474
          %v615 = vadd.f32 %v614, %v475
          %616 = vadd.xlane.f32.xlu0 %v615
          %v617 = vpop.xlane.xlu0 %616
          %v618 = vadd.f32 %v476, %v477
          %v619 = vadd.f32 %v618, %v478
          %v620 = vadd.f32 %v619, %v479
          %621 = vadd.xlane.f32.xlu0 %v620
          %v622 = vpop.xlane.xlu0 %621
          %v623 = vadd.f32 %v480, %v481
          %v624 = vadd.f32 %v623, %v482
          %v625 = vadd.f32 %v624, %v483
          %626 = vadd.xlane.f32.xlu0 %v625
          %v627 = vpop.xlane.xlu0 %626
          %v628 = vadd.f32 %v484, %v485
          %v629 = vadd.f32 %v628, %v486
          %v630 = vadd.f32 %v629, %v487
          %631 = vadd.xlane.f32.xlu0 %v630
          %v632 = vpop.xlane.xlu0 %631
          %v633 = vadd.f32 %v488, %v489
          %v634 = vadd.f32 %v633, %v490
          %v635 = vadd.f32 %v634, %v491
          %636 = vadd.xlane.f32.xlu0 %v635
          %v637 = vpop.xlane.xlu0 %636
          %v638 = vadd.f32 %v492, %v493
          %v639 = vadd.f32 %v638, %v494
          %v640 = vadd.f32 %v639, %v495
          %641 = vadd.xlane.f32.xlu0 %v640
          %v642 = vpop.xlane.xlu0 %641
          %v643 = vadd.f32 %v496, %v497
          %v644 = vadd.f32 %v643, %v498
          %v645 = vadd.f32 %v644, %v499
          %646 = vadd.xlane.f32.xlu0 %v645
          %v647 = vpop.xlane.xlu0 %646
          %v648 = vadd.f32 %v500, %v501
          %v649 = vadd.f32 %v648, %v502
          %v650 = vadd.f32 %v649, %v503
          %651 = vadd.xlane.f32.xlu0 %v650
          %v652 = vpop.xlane.xlu0 %651
          %v653 = vadd.f32 %v504, %v505
          %v654 = vadd.f32 %v653, %v506
          %v655 = vadd.f32 %v654, %v507
          %656 = vadd.xlane.f32.xlu0 %v655
          %v657 = vpop.xlane.xlu0 %656
          %v658 = vadd.f32 %v508, %v509
          %v659 = vadd.f32 %v658, %v510
          %v660 = vadd.f32 %v659, %v511
          %661 = vadd.xlane.f32.xlu0 %v660
          %v662 = vpop.xlane.xlu0 %661
          %v663 = vadd.f32 %v512, %v513
          %v664 = vadd.f32 %v663, %v514
          %v665 = vadd.f32 %v664, %v515
          %666 = vadd.xlane.f32.xlu0 %v665
          %v667 = vpop.xlane.xlu0 %666
          %v668 = vadd.f32 %v516, %v517
          %v669 = vadd.f32 %v668, %v518
          %v670 = vadd.f32 %v669, %v519
          %671 = vadd.xlane.f32.xlu0 %v670
          %v672 = vpop.xlane.xlu0 %671
          %v673 = vadd.f32 %v520, %v521
          %v674 = vadd.f32 %v673, %v522
          %v675 = vadd.f32 %v674, %v523
          %676 = vadd.xlane.f32.xlu0 %v675
          %v677 = vpop.xlane.xlu0 %676
          %v678 = vadd.f32 %v524, %v525
          %v679 = vadd.f32 %v678, %v526
          %v680 = vadd.f32 %v679, %v527
          %681 = vadd.xlane.f32.xlu0 %v680
          %v682 = vpop.xlane.xlu0 %681
          %v683 = vadd.f32 %v528, %v529
          %v684 = vadd.f32 %v683, %v530
          %v685 = vadd.f32 %v684, %v531
          %686 = vadd.xlane.f32.xlu0 %v685
          %v687 = vpop.xlane.xlu0 %686
          %v688 = vadd.f32 %v532, %v533
          %v689 = vadd.f32 %v688, %v534
          %v690 = vadd.f32 %v689, %v535
          %691 = vadd.xlane.f32.xlu0 %v690
          %v692 = vpop.xlane.xlu0 %691
          %v693 = vadd.f32 %v536, %v537
          %v694 = vadd.f32 %v693, %v538
          %v695 = vadd.f32 %v694, %v539
          %696 = vadd.xlane.f32.xlu0 %v695
          %v697 = vpop.xlane.xlu0 %696
          %v698 = vadd.f32 %v540, %v541
          %v699 = vadd.f32 %v698, %v542
          %v700 = vadd.f32 %v699, %v543
          %701 = vadd.xlane.f32.xlu0 %v700
          %v702 = vpop.xlane.xlu0 %701
          %v703 = vadd.f32 %v544, %v545
          %v704 = vadd.f32 %v703, %v546
          %v705 = vadd.f32 %v704, %v547
          %706 = vadd.xlane.f32.xlu0 %v705
          %v707 = vpop.xlane.xlu0 %706
          %v708 = vrcp.pop 512.0
          %v709 = vmul.f32 %v552, %v708
          %v710 = vmul.f32 %v557, %v708
          %v711 = vmul.f32 %v562, %v708
          %v712 = vmul.f32 %v567, %v708
          %v713 = vmul.f32 %v572, %v708
          %v714 = vmul.f32 %v577, %v708
          %v715 = vmul.f32 %v582, %v708
          %v716 = vmul.f32 %v587, %v708
          %v717 = vmul.f32 %v592, %v708
          %v718 = vmul.f32 %v597, %v708
          %v719 = vmul.f32 %v602, %v708
          %v720 = vmul.f32 %v607, %v708
          %v721 = vmul.f32 %v612, %v708
          %v722 = vmul.f32 %v617, %v708
          %v723 = vmul.f32 %v622, %v708
          %v724 = vmul.f32 %v627, %v708
          %v725 = vmul.f32 %v632, %v708
          %v726 = vmul.f32 %v637, %v708
          %v727 = vmul.f32 %v642, %v708
          %v728 = vmul.f32 %v647, %v708
          %v729 = vmul.f32 %v652, %v708
          %v730 = vmul.f32 %v657, %v708
          %v731 = vmul.f32 %v662, %v708
          %v732 = vmul.f32 %v667, %v708
          %v733 = vmul.f32 %v672, %v708
          %v734 = vmul.f32 %v677, %v708
          %v735 = vmul.f32 %v682, %v708
          %v736 = vmul.f32 %v687, %v708
          %v737 = vmul.f32 %v692, %v708
          %v738 = vmul.f32 %v697, %v708
          %v739 = vmul.f32 %v702, %v708
          %v740 = vmul.f32 %v707, %v708
          %v741 = vsub.f32 %v420, %v709
          %v742 = vsub.f32 %v421, %v709
          %v743 = vsub.f32 %v422, %v709
          %v744 = vsub.f32 %v423, %v709
          %v745 = vsub.f32 %v424, %v710
          %v746 = vsub.f32 %v425, %v710
          %v747 = vsub.f32 %v426, %v710
          %v748 = vsub.f32 %v427, %v710
          %v749 = vsub.f32 %v428, %v711
          %v750 = vsub.f32 %v429, %v711
          %v751 = vsub.f32 %v430, %v711
          %v752 = vsub.f32 %v431, %v711
          %v753 = vsub.f32 %v432, %v712
          %v754 = vsub.f32 %v433, %v712
          %v755 = vsub.f32 %v434, %v712
          %v756 = vsub.f32 %v435, %v712
          %v757 = vsub.f32 %v436, %v713
          %v758 = vsub.f32 %v437, %v713
          %v759 = vsub.f32 %v438, %v713
          %v760 = vsub.f32 %v439, %v713
          %v761 = vsub.f32 %v440, %v714
          %v762 = vsub.f32 %v441, %v714
          %v763 = vsub.f32 %v442, %v714
          %v764 = vsub.f32 %v443, %v714
          %v765 = vsub.f32 %v444, %v715
          %v766 = vsub.f32 %v445, %v715
          %v767 = vsub.f32 %v446, %v715
          %v768 = vsub.f32 %v447, %v715
          %v769 = vsub.f32 %v448, %v716
          %v770 = vsub.f32 %v449, %v716
          %v771 = vsub.f32 %v450, %v716
          %v772 = vsub.f32 %v451, %v716
          %v773 = vsub.f32 %v452, %v717
          %v774 = vsub.f32 %v453, %v717
          %v775 = vsub.f32 %v454, %v717
          %v776 = vsub.f32 %v455, %v717
          %v777 = vsub.f32 %v456, %v718
          %v778 = vsub.f32 %v457, %v718
          %v779 = vsub.f32 %v458, %v718
          %v780 = vsub.f32 %v459, %v718
          %v781 = vsub.f32 %v460, %v719
          %v782 = vsub.f32 %v461, %v719
          %v783 = vsub.f32 %v462, %v719
          %v784 = vsub.f32 %v463, %v719
          %v785 = vsub.f32 %v464, %v720
          %v786 = vsub.f32 %v465, %v720
          %v787 = vsub.f32 %v466, %v720
          %v788 = vsub.f32 %v467, %v720
          %v789 = vsub.f32 %v468, %v721
          %v790 = vsub.f32 %v469, %v721
          %v791 = vsub.f32 %v470, %v721
          %v792 = vsub.f32 %v471, %v721
          %v793 = vsub.f32 %v472, %v722
          %v794 = vsub.f32 %v473, %v722
          %v795 = vsub.f32 %v474, %v722
          %v796 = vsub.f32 %v475, %v722
          %v797 = vsub.f32 %v476, %v723
          %v798 = vsub.f32 %v477, %v723
          %v799 = vsub.f32 %v478, %v723
          %v800 = vsub.f32 %v479, %v723
          %v801 = vsub.f32 %v480, %v724
          %v802 = vsub.f32 %v481, %v724
          %v803 = vsub.f32 %v482, %v724
          %v804 = vsub.f32 %v483, %v724
          %v805 = vsub.f32 %v484, %v725
          %v806 = vsub.f32 %v485, %v725
          %v807 = vsub.f32 %v486, %v725
          %v808 = vsub.f32 %v487, %v725
          %v809 = vsub.f32 %v488, %v726
          %v810 = vsub.f32 %v489, %v726
          %v811 = vsub.f32 %v490, %v726
          %v812 = vsub.f32 %v491, %v726
          %v813 = vsub.f32 %v492, %v727
          %v814 = vsub.f32 %v493, %v727
          %v815 = vsub.f32 %v494, %v727
          %v816 = vsub.f32 %v495, %v727
          %v817 = vsub.f32 %v496, %v728
          %v818 = vsub.f32 %v497, %v728
          %v819 = vsub.f32 %v498, %v728
          %v820 = vsub.f32 %v499, %v728
          %v821 = vsub.f32 %v500, %v729
          %v822 = vsub.f32 %v501, %v729
          %v823 = vsub.f32 %v502, %v729
          %v824 = vsub.f32 %v503, %v729
          %v825 = vsub.f32 %v504, %v730
          %v826 = vsub.f32 %v505, %v730
          %v827 = vsub.f32 %v506, %v730
          %v828 = vsub.f32 %v507, %v730
          %v829 = vsub.f32 %v508, %v731
          %v830 = vsub.f32 %v509, %v731
          %v831 = vsub.f32 %v510, %v731
          %v832 = vsub.f32 %v511, %v731
          %v833 = vsub.f32 %v512, %v732
          %v834 = vsub.f32 %v513, %v732
          %v835 = vsub.f32 %v514, %v732
          %v836 = vsub.f32 %v515, %v732
          %v837 = vsub.f32 %v516, %v733
          %v838 = vsub.f32 %v517, %v733
          %v839 = vsub.f32 %v518, %v733
          %v840 = vsub.f32 %v519, %v733
          %v841 = vsub.f32 %v520, %v734
          %v842 = vsub.f32 %v521, %v734
          %v843 = vsub.f32 %v522, %v734
          %v844 = vsub.f32 %v523, %v734
          %v845 = vsub.f32 %v524, %v735
          %v846 = vsub.f32 %v525, %v735
          %v847 = vsub.f32 %v526, %v735
          %v848 = vsub.f32 %v527, %v735
          %v849 = vsub.f32 %v528, %v736
          %v850 = vsub.f32 %v529, %v736
          %v851 = vsub.f32 %v530, %v736
          %v852 = vsub.f32 %v531, %v736
          %v853 = vsub.f32 %v532, %v737
          %v854 = vsub.f32 %v533, %v737
          %v855 = vsub.f32 %v534, %v737
          %v856 = vsub.f32 %v535, %v737
          %v857 = vsub.f32 %v536, %v738
          %v858 = vsub.f32 %v537, %v738
          %v859 = vsub.f32 %v538, %v738
          %v860 = vsub.f32 %v539, %v738
          %v861 = vsub.f32 %v540, %v739
          %v862 = vsub.f32 %v541, %v739
          %v863 = vsub.f32 %v542, %v739
          %v864 = vsub.f32 %v543, %v739
          %v865 = vsub.f32 %v544, %v740
          %v866 = vsub.f32 %v545, %v740
          %v867 = vsub.f32 %v546, %v740
          %v868 = vsub.f32 %v547, %v740
          %v869 = vmul.f32 %v741, %v741
          %v870 = vmul.f32 %v742, %v742
          %v871 = vmul.f32 %v743, %v743
          %v872 = vmul.f32 %v744, %v744
          %v873 = vmul.f32 %v745, %v745
          %v874 = vmul.f32 %v746, %v746
          %v875 = vmul.f32 %v747, %v747
          %v876 = vmul.f32 %v748, %v748
          %v877 = vmul.f32 %v749, %v749
          %v878 = vmul.f32 %v750, %v750
          %v879 = vmul.f32 %v751, %v751
          %v880 = vmul.f32 %v752, %v752
          %v881 = vmul.f32 %v753, %v753
          %v882 = vmul.f32 %v754, %v754
          %v883 = vmul.f32 %v755, %v755
          %v884 = vmul.f32 %v756, %v756
          %v885 = vmul.f32 %v757, %v757
          %v886 = vmul.f32 %v758, %v758
          %v887 = vmul.f32 %v759, %v759
          %v888 = vmul.f32 %v760, %v760
          %v889 = vmul.f32 %v761, %v761
          %v890 = vmul.f32 %v762, %v762
          %v891 = vmul.f32 %v763, %v763
          %v892 = vmul.f32 %v764, %v764
          %v893 = vmul.f32 %v765, %v765
          %v894 = vmul.f32 %v766, %v766
          %v895 = vmul.f32 %v767, %v767
          %v896 = vmul.f32 %v768, %v768
          %v897 = vmul.f32 %v769, %v769
          %v898 = vmul.f32 %v770, %v770
          %v899 = vmul.f32 %v771, %v771
          %v900 = vmul.f32 %v772, %v772
          %v901 = vmul.f32 %v773, %v773
          %v902 = vmul.f32 %v774, %v774
          %v903 = vmul.f32 %v775, %v775
          %v904 = vmul.f32 %v776, %v776
          %v905 = vmul.f32 %v777, %v777
          %v906 = vmul.f32 %v778, %v778
          %v907 = vmul.f32 %v779, %v779
          %v908 = vmul.f32 %v780, %v780
          %v909 = vmul.f32 %v781, %v781
          %v910 = vmul.f32 %v782, %v782
          %v911 = vmul.f32 %v783, %v783
          %v912 = vmul.f32 %v784, %v784
          %v913 = vmul.f32 %v785, %v785
          %v914 = vmul.f32 %v786, %v786
          %v915 = vmul.f32 %v787, %v787
          %v916 = vmul.f32 %v788, %v788
          %v917 = vmul.f32 %v789, %v789
          %v918 = vmul.f32 %v790, %v790
          %v919 = vmul.f32 %v791, %v791
          %v920 = vmul.f32 %v792, %v792
          %v921 = vmul.f32 %v793, %v793
          %v922 = vmul.f32 %v794, %v794
          %v923 = vmul.f32 %v795, %v795
          %v924 = vmul.f32 %v796, %v796
          %v925 = vmul.f32 %v797, %v797
          %v926 = vmul.f32 %v798, %v798
          %v927 = vmul.f32 %v799, %v799
          %v928 = vmul.f32 %v800, %v800
          %v929 = vmul.f32 %v801, %v801
          %v930 = vmul.f32 %v802, %v802
          %v931 = vmul.f32 %v803, %v803
          %v932 = vmul.f32 %v804, %v804
          %v933 = vmul.f32 %v805, %v805
          %v934 = vmul.f32 %v806, %v806
          %v935 = vmul.f32 %v807, %v807
          %v936 = vmul.f32 %v808, %v808
          %v937 = vmul.f32 %v809, %v809
          %v938 = vmul.f32 %v810, %v810
          %v939 = vmul.f32 %v811, %v811
          %v940 = vmul.f32 %v812, %v812
          %v941 = vmul.f32 %v813, %v813
          %v942 = vmul.f32 %v814, %v814
          %v943 = vmul.f32 %v815, %v815
          %v944 = vmul.f32 %v816, %v816
          %v945 = vmul.f32 %v817, %v817
          %v946 = vmul.f32 %v818, %v818
          %v947 = vmul.f32 %v819, %v819
          %v948 = vmul.f32 %v820, %v820
          %v949 = vmul.f32 %v821, %v821
          %v950 = vmul.f32 %v822, %v822
          %v951 = vmul.f32 %v823, %v823
          %v952 = vmul.f32 %v824, %v824
          %v953 = vmul.f32 %v825, %v825
          %v954 = vmul.f32 %v826, %v826
          %v955 = vmul.f32 %v827, %v827
          %v956 = vmul.f32 %v828, %v828
          %v957 = vmul.f32 %v829, %v829
          %v958 = vmul.f32 %v830, %v830
          %v959 = vmul.f32 %v831, %v831
          %v960 = vmul.f32 %v832, %v832
          %v961 = vmul.f32 %v833, %v833
          %v962 = vmul.f32 %v834, %v834
          %v963 = vmul.f32 %v835, %v835
          %v964 = vmul.f32 %v836, %v836
          %v965 = vmul.f32 %v837, %v837
          %v966 = vmul.f32 %v838, %v838
          %v967 = vmul.f32 %v839, %v839
          %v968 = vmul.f32 %v840, %v840
          %v969 = vmul.f32 %v841, %v841
          %v970 = vmul.f32 %v842, %v842
          %v971 = vmul.f32 %v843, %v843
          %v972 = vmul.f32 %v844, %v844
          %v973 = vmul.f32 %v845, %v845
          %v974 = vmul.f32 %v846, %v846
          %v975 = vmul.f32 %v847, %v847
          %v976 = vmul.f32 %v848, %v848
          %v977 = vmul.f32 %v849, %v849
          %v978 = vmul.f32 %v850, %v850
          %v979 = vmul.f32 %v851, %v851
          %v980 = vmul.f32 %v852, %v852
          %v981 = vmul.f32 %v853, %v853
          %v982 = vmul.f32 %v854, %v854
          %v983 = vmul.f32 %v855, %v855
          %v984 = vmul.f32 %v856, %v856
          %v985 = vmul.f32 %v857, %v857
          %v986 = vmul.f32 %v858, %v858
          %v987 = vmul.f32 %v859, %v859
          %v988 = vmul.f32 %v860, %v860
          %v989 = vmul.f32 %v861, %v861
          %v990 = vmul.f32 %v862, %v862
          %v991 = vmul.f32 %v863, %v863
          %v992 = vmul.f32 %v864, %v864
          %v993 = vmul.f32 %v865, %v865
          %v994 = vmul.f32 %v866, %v866
          %v995 = vmul.f32 %v867, %v867
          %v996 = vmul.f32 %v868, %v868
          %v997 = vadd.f32 %v869, %v870
          %v998 = vadd.f32 %v997, %v871
          %v999 = vadd.f32 %v998, %v872
          %1000 = vadd.xlane.f32.xlu0 %v999
          %v1001 = vpop.xlane.xlu0 %1000
          %v1002 = vadd.f32 %v873, %v874
          %v1003 = vadd.f32 %v1002, %v875
          %v1004 = vadd.f32 %v1003, %v876
          %1005 = vadd.xlane.f32.xlu0 %v1004
          %v1006 = vpop.xlane.xlu0 %1005
          %v1007 = vadd.f32 %v877, %v878
          %v1008 = vadd.f32 %v1007, %v879
          %v1009 = vadd.f32 %v1008, %v880
          %1010 = vadd.xlane.f32.xlu0 %v1009
          %v1011 = vpop.xlane.xlu0 %1010
          %v1012 = vadd.f32 %v881, %v882
          %v1013 = vadd.f32 %v1012, %v883
          %v1014 = vadd.f32 %v1013, %v884
          %1015 = vadd.xlane.f32.xlu0 %v1014
          %v1016 = vpop.xlane.xlu0 %1015
          %v1017 = vadd.f32 %v885, %v886
          %v1018 = vadd.f32 %v1017, %v887
          %v1019 = vadd.f32 %v1018, %v888
          %1020 = vadd.xlane.f32.xlu0 %v1019
          %v1021 = vpop.xlane.xlu0 %1020
          %v1022 = vadd.f32 %v889, %v890
          %v1023 = vadd.f32 %v1022, %v891
          %v1024 = vadd.f32 %v1023, %v892
          %1025 = vadd.xlane.f32.xlu0 %v1024
          %v1026 = vpop.xlane.xlu0 %1025
          %v1027 = vadd.f32 %v893, %v894
          %v1028 = vadd.f32 %v1027, %v895
          %v1029 = vadd.f32 %v1028, %v896
          %1030 = vadd.xlane.f32.xlu0 %v1029
          %v1031 = vpop.xlane.xlu0 %1030
          %v1032 = vadd.f32 %v897, %v898
          %v1033 = vadd.f32 %v1032, %v899
          %v1034 = vadd.f32 %v1033, %v900
          %1035 = vadd.xlane.f32.xlu0 %v1034
          %v1036 = vpop.xlane.xlu0 %1035
          %v1037 = vadd.f32 %v901, %v902
          %v1038 = vadd.f32 %v1037, %v903
          %v1039 = vadd.f32 %v1038, %v904
          %1040 = vadd.xlane.f32.xlu0 %v1039
          %v1041 = vpop.xlane.xlu0 %1040
          %v1042 = vadd.f32 %v905, %v906
          %v1043 = vadd.f32 %v1042, %v907
          %v1044 = vadd.f32 %v1043, %v908
          %1045 = vadd.xlane.f32.xlu0 %v1044
          %v1046 = vpop.xlane.xlu0 %1045
          %v1047 = vadd.f32 %v909, %v910
          %v1048 = vadd.f32 %v1047, %v911
          %v1049 = vadd.f32 %v1048, %v912
          %1050 = vadd.xlane.f32.xlu0 %v1049
          %v1051 = vpop.xlane.xlu0 %1050
          %v1052 = vadd.f32 %v913, %v914
          %v1053 = vadd.f32 %v1052, %v915
          %v1054 = vadd.f32 %v1053, %v916
          %1055 = vadd.xlane.f32.xlu0 %v1054
          %v1056 = vpop.xlane.xlu0 %1055
          %v1057 = vadd.f32 %v917, %v918
          %v1058 = vadd.f32 %v1057, %v919
          %v1059 = vadd.f32 %v1058, %v920
          %1060 = vadd.xlane.f32.xlu0 %v1059
          %v1061 = vpop.xlane.xlu0 %1060
          %v1062 = vadd.f32 %v921, %v922
          %v1063 = vadd.f32 %v1062, %v923
          %v1064 = vadd.f32 %v1063, %v924
          %1065 = vadd.xlane.f32.xlu0 %v1064
          %v1066 = vpop.xlane.xlu0 %1065
          %v1067 = vadd.f32 %v925, %v926
          %v1068 = vadd.f32 %v1067, %v927
          %v1069 = vadd.f32 %v1068, %v928
          %1070 = vadd.xlane.f32.xlu0 %v1069
          %v1071 = vpop.xlane.xlu0 %1070
          %v1072 = vadd.f32 %v929, %v930
          %v1073 = vadd.f32 %v1072, %v931
          %v1074 = vadd.f32 %v1073, %v932
          %1075 = vadd.xlane.f32.xlu0 %v1074
          %v1076 = vpop.xlane.xlu0 %1075
          %v1077 = vadd.f32 %v933, %v934
          %v1078 = vadd.f32 %v1077, %v935
          %v1079 = vadd.f32 %v1078, %v936
          %1080 = vadd.xlane.f32.xlu0 %v1079
          %v1081 = vpop.xlane.xlu0 %1080
          %v1082 = vadd.f32 %v937, %v938
          %v1083 = vadd.f32 %v1082, %v939
          %v1084 = vadd.f32 %v1083, %v940
          %1085 = vadd.xlane.f32.xlu0 %v1084
          %v1086 = vpop.xlane.xlu0 %1085
          %v1087 = vadd.f32 %v941, %v942
          %v1088 = vadd.f32 %v1087, %v943
          %v1089 = vadd.f32 %v1088, %v944
          %1090 = vadd.xlane.f32.xlu0 %v1089
          %v1091 = vpop.xlane.xlu0 %1090
          %v1092 = vadd.f32 %v945, %v946
          %v1093 = vadd.f32 %v1092, %v947
          %v1094 = vadd.f32 %v1093, %v948
          %1095 = vadd.xlane.f32.xlu0 %v1094
          %v1096 = vpop.xlane.xlu0 %1095
          %v1097 = vadd.f32 %v949, %v950
          %v1098 = vadd.f32 %v1097, %v951
          %v1099 = vadd.f32 %v1098, %v952
          %1100 = vadd.xlane.f32.xlu0 %v1099
          %v1101 = vpop.xlane.xlu0 %1100
          %v1102 = vadd.f32 %v953, %v954
          %v1103 = vadd.f32 %v1102, %v955
          %v1104 = vadd.f32 %v1103, %v956
          %1105 = vadd.xlane.f32.xlu0 %v1104
          %v1106 = vpop.xlane.xlu0 %1105
          %v1107 = vadd.f32 %v957, %v958
          %v1108 = vadd.f32 %v1107, %v959
          %v1109 = vadd.f32 %v1108, %v960
          %1110 = vadd.xlane.f32.xlu0 %v1109
          %v1111 = vpop.xlane.xlu0 %1110
          %v1112 = vadd.f32 %v961, %v962
          %v1113 = vadd.f32 %v1112, %v963
          %v1114 = vadd.f32 %v1113, %v964
          %1115 = vadd.xlane.f32.xlu0 %v1114
          %v1116 = vpop.xlane.xlu0 %1115
          %v1117 = vadd.f32 %v965, %v966
          %v1118 = vadd.f32 %v1117, %v967
          %v1119 = vadd.f32 %v1118, %v968
          %1120 = vadd.xlane.f32.xlu0 %v1119
          %v1121 = vpop.xlane.xlu0 %1120
          %v1122 = vadd.f32 %v969, %v970
          %v1123 = vadd.f32 %v1122, %v971
          %v1124 = vadd.f32 %v1123, %v972
          %1125 = vadd.xlane.f32.xlu0 %v1124
          %v1126 = vpop.xlane.xlu0 %1125
          %v1127 = vadd.f32 %v973, %v974
          %v1128 = vadd.f32 %v1127, %v975
          %v1129 = vadd.f32 %v1128, %v976
          %1130 = vadd.xlane.f32.xlu0 %v1129
          %v1131 = vpop.xlane.xlu0 %1130
          %v1132 = vadd.f32 %v977, %v978
          %v1133 = vadd.f32 %v1132, %v979
          %v1134 = vadd.f32 %v1133, %v980
          %1135 = vadd.xlane.f32.xlu0 %v1134
          %v1136 = vpop.xlane.xlu0 %1135
          %v1137 = vadd.f32 %v981, %v982
          %v1138 = vadd.f32 %v1137, %v983
          %v1139 = vadd.f32 %v1138, %v984
          %1140 = vadd.xlane.f32.xlu0 %v1139
          %v1141 = vpop.xlane.xlu0 %1140
          %v1142 = vadd.f32 %v985, %v986
          %v1143 = vadd.f32 %v1142, %v987
          %v1144 = vadd.f32 %v1143, %v988
          %1145 = vadd.xlane.f32.xlu0 %v1144
          %v1146 = vpop.xlane.xlu0 %1145
          %v1147 = vadd.f32 %v989, %v990
          %v1148 = vadd.f32 %v1147, %v991
          %v1149 = vadd.f32 %v1148, %v992
          %1150 = vadd.xlane.f32.xlu0 %v1149
          %v1151 = vpop.xlane.xlu0 %1150
          %v1152 = vadd.f32 %v993, %v994
          %v1153 = vadd.f32 %v1152, %v995
          %v1154 = vadd.f32 %v1153, %v996
          %1155 = vadd.xlane.f32.xlu0 %v1154
          %v1156 = vpop.xlane.xlu0 %1155
          %v1157 = vmul.f32 %v1001, %v708
          %v1158 = vmul.f32 %v1006, %v708
          %v1159 = vmul.f32 %v1011, %v708
          %v1160 = vmul.f32 %v1016, %v708
          %v1161 = vmul.f32 %v1021, %v708
          %v1162 = vmul.f32 %v1026, %v708
          %v1163 = vmul.f32 %v1031, %v708
          %v1164 = vmul.f32 %v1036, %v708
          %v1165 = vmul.f32 %v1041, %v708
          %v1166 = vmul.f32 %v1046, %v708
          %v1167 = vmul.f32 %v1051, %v708
          %v1168 = vmul.f32 %v1056, %v708
          %v1169 = vmul.f32 %v1061, %v708
          %v1170 = vmul.f32 %v1066, %v708
          %v1171 = vmul.f32 %v1071, %v708
          %v1172 = vmul.f32 %v1076, %v708
          %v1173 = vmul.f32 %v1081, %v708
          %v1174 = vmul.f32 %v1086, %v708
          %v1175 = vmul.f32 %v1091, %v708
          %v1176 = vmul.f32 %v1096, %v708
          %v1177 = vmul.f32 %v1101, %v708
          %v1178 = vmul.f32 %v1106, %v708
          %v1179 = vmul.f32 %v1111, %v708
          %v1180 = vmul.f32 %v1116, %v708
          %v1181 = vmul.f32 %v1121, %v708
          %v1182 = vmul.f32 %v1126, %v708
          %v1183 = vmul.f32 %v1131, %v708
          %v1184 = vmul.f32 %v1136, %v708
          %v1185 = vmul.f32 %v1141, %v708
          %v1186 = vmul.f32 %v1146, %v708
          %v1187 = vmul.f32 %v1151, %v708
          %v1188 = vmul.f32 %v1156, %v708
          %v1189 = vadd.f32 %v1157, 1e-05
          %v1190 = vadd.f32 %v1158, 1e-05
          %v1191 = vadd.f32 %v1159, 1e-05
          %v1192 = vadd.f32 %v1160, 1e-05
          %v1193 = vadd.f32 %v1161, 1e-05
          %v1194 = vadd.f32 %v1162, 1e-05
          %v1195 = vadd.f32 %v1163, 1e-05
          %v1196 = vadd.f32 %v1164, 1e-05
          %v1197 = vadd.f32 %v1165, 1e-05
          %v1198 = vadd.f32 %v1166, 1e-05
          %v1199 = vadd.f32 %v1167, 1e-05
          %v1200 = vadd.f32 %v1168, 1e-05
          %v1201 = vadd.f32 %v1169, 1e-05
          %v1202 = vadd.f32 %v1170, 1e-05
          %v1203 = vadd.f32 %v1171, 1e-05
          %v1204 = vadd.f32 %v1172, 1e-05
          %v1205 = vadd.f32 %v1173, 1e-05
          %v1206 = vadd.f32 %v1174, 1e-05
          %v1207 = vadd.f32 %v1175, 1e-05
          %v1208 = vadd.f32 %v1176, 1e-05
          %v1209 = vadd.f32 %v1177, 1e-05
          %v1210 = vadd.f32 %v1178, 1e-05
          %v1211 = vadd.f32 %v1179, 1e-05
          %v1212 = vadd.f32 %v1180, 1e-05
          %v1213 = vadd.f32 %v1181, 1e-05
          %v1214 = vadd.f32 %v1182, 1e-05
          %v1215 = vadd.f32 %v1183, 1e-05
          %v1216 = vadd.f32 %v1184, 1e-05
          %v1217 = vadd.f32 %v1185, 1e-05
          %v1218 = vadd.f32 %v1186, 1e-05
          %v1219 = vadd.f32 %v1187, 1e-05
          %v1220 = vadd.f32 %v1188, 1e-05
          %v1221 = vrsqrt.pop %v1189
          %v1222 = vrsqrt.pop %v1190
          %v1223 = vrsqrt.pop %v1191
          %v1224 = vrsqrt.pop %v1192
          %v1225 = vrsqrt.pop %v1193
          %v1226 = vrsqrt.pop %v1194
          %v1227 = vrsqrt.pop %v1195
          %v1228 = vrsqrt.pop %v1196
          %v1229 = vrsqrt.pop %v1197
          %v1230 = vrsqrt.pop %v1198
          %v1231 = vrsqrt.pop %v1199
          %v1232 = vrsqrt.pop %v1200
          %v1233 = vrsqrt.pop %v1201
          %v1234 = vrsqrt.pop %v1202
          %v1235 = vrsqrt.pop %v1203
          %v1236 = vrsqrt.pop %v1204
          %v1237 = vrsqrt.pop %v1205
          %v1238 = vrsqrt.pop %v1206
          %v1239 = vrsqrt.pop %v1207
          %v1240 = vrsqrt.pop %v1208
          %v1241 = vrsqrt.pop %v1209
          %v1242 = vrsqrt.pop %v1210
          %v1243 = vrsqrt.pop %v1211
          %v1244 = vrsqrt.pop %v1212
          %v1245 = vrsqrt.pop %v1213
          %v1246 = vrsqrt.pop %v1214
          %v1247 = vrsqrt.pop %v1215
          %v1248 = vrsqrt.pop %v1216
          %v1249 = vrsqrt.pop %v1217
          %v1250 = vrsqrt.pop %v1218
          %v1251 = vrsqrt.pop %v1219
          %v1252 = vrsqrt.pop %v1220
          %v1253 = vmul.f32 %v741, %v1221
          %v1254 = vmul.f32 %v742, %v1221
          %v1255 = vmul.f32 %v743, %v1221
          %v1256 = vmul.f32 %v744, %v1221
          %v1257 = vmul.f32 %v745, %v1222
          %v1258 = vmul.f32 %v746, %v1222
          %v1259 = vmul.f32 %v747, %v1222
          %v1260 = vmul.f32 %v748, %v1222
          %v1261 = vmul.f32 %v749, %v1223
          %v1262 = vmul.f32 %v750, %v1223
          %v1263 = vmul.f32 %v751, %v1223
          %v1264 = vmul.f32 %v752, %v1223
          %v1265 = vmul.f32 %v753, %v1224
          %v1266 = vmul.f32 %v754, %v1224
          %v1267 = vmul.f32 %v755, %v1224
          %v1268 = vmul.f32 %v756, %v1224
          %v1269 = vmul.f32 %v757, %v1225
          %v1270 = vmul.f32 %v758, %v1225
          %v1271 = vmul.f32 %v759, %v1225
          %v1272 = vmul.f32 %v760, %v1225
          %v1273 = vmul.f32 %v761, %v1226
          %v1274 = vmul.f32 %v762, %v1226
          %v1275 = vmul.f32 %v763, %v1226
          %v1276 = vmul.f32 %v764, %v1226
          %v1277 = vmul.f32 %v765, %v1227
          %v1278 = vmul.f32 %v766, %v1227
          %v1279 = vmul.f32 %v767, %v1227
          %v1280 = vmul.f32 %v768, %v1227
          %v1281 = vmul.f32 %v769, %v1228
          %v1282 = vmul.f32 %v770, %v1228
          %v1283 = vmul.f32 %v771, %v1228
          %v1284 = vmul.f32 %v772, %v1228
          %v1285 = vmul.f32 %v773, %v1229
          %v1286 = vmul.f32 %v774, %v1229
          %v1287 = vmul.f32 %v775, %v1229
          %v1288 = vmul.f32 %v776, %v1229
          %v1289 = vmul.f32 %v777, %v1230
          %v1290 = vmul.f32 %v778, %v1230
          %v1291 = vmul.f32 %v779, %v1230
          %v1292 = vmul.f32 %v780, %v1230
          %v1293 = vmul.f32 %v781, %v1231
          %v1294 = vmul.f32 %v782, %v1231
          %v1295 = vmul.f32 %v783, %v1231
          %v1296 = vmul.f32 %v784, %v1231
          %v1297 = vmul.f32 %v785, %v1232
          %v1298 = vmul.f32 %v786, %v1232
          %v1299 = vmul.f32 %v787, %v1232
          %v1300 = vmul.f32 %v788, %v1232
          %v1301 = vmul.f32 %v789, %v1233
          %v1302 = vmul.f32 %v790, %v1233
          %v1303 = vmul.f32 %v791, %v1233
          %v1304 = vmul.f32 %v792, %v1233
          %v1305 = vmul.f32 %v793, %v1234
          %v1306 = vmul.f32 %v794, %v1234
          %v1307 = vmul.f32 %v795, %v1234
          %v1308 = vmul.f32 %v796, %v1234
          %v1309 = vmul.f32 %v797, %v1235
          %v1310 = vmul.f32 %v798, %v1235
          %v1311 = vmul.f32 %v799, %v1235
          %v1312 = vmul.f32 %v800, %v1235
          %v1313 = vmul.f32 %v801, %v1236
          %v1314 = vmul.f32 %v802, %v1236
          %v1315 = vmul.f32 %v803, %v1236
          %v1316 = vmul.f32 %v804, %v1236
          %v1317 = vmul.f32 %v805, %v1237
          %v1318 = vmul.f32 %v806, %v1237
          %v1319 = vmul.f32 %v807, %v1237
          %v1320 = vmul.f32 %v808, %v1237
          %v1321 = vmul.f32 %v809, %v1238
          %v1322 = vmul.f32 %v810, %v1238
          %v1323 = vmul.f32 %v811, %v1238
          %v1324 = vmul.f32 %v812, %v1238
          %v1325 = vmul.f32 %v813, %v1239
          %v1326 = vmul.f32 %v814, %v1239
          %v1327 = vmul.f32 %v815, %v1239
          %v1328 = vmul.f32 %v816, %v1239
          %v1329 = vmul.f32 %v817, %v1240
          %v1330 = vmul.f32 %v818, %v1240
          %v1331 = vmul.f32 %v819, %v1240
          %v1332 = vmul.f32 %v820, %v1240
          %v1333 = vmul.f32 %v821, %v1241
          %v1334 = vmul.f32 %v822, %v1241
          %v1335 = vmul.f32 %v823, %v1241
          %v1336 = vmul.f32 %v824, %v1241
          %v1337 = vmul.f32 %v825, %v1242
          %v1338 = vmul.f32 %v826, %v1242
          %v1339 = vmul.f32 %v827, %v1242
          %v1340 = vmul.f32 %v828, %v1242
          %v1341 = vmul.f32 %v829, %v1243
          %v1342 = vmul.f32 %v830, %v1243
          %v1343 = vmul.f32 %v831, %v1243
          %v1344 = vmul.f32 %v832, %v1243
          %v1345 = vmul.f32 %v833, %v1244
          %v1346 = vmul.f32 %v834, %v1244
          %v1347 = vmul.f32 %v835, %v1244
          %v1348 = vmul.f32 %v836, %v1244
          %v1349 = vmul.f32 %v837, %v1245
          %v1350 = vmul.f32 %v838, %v1245
          %v1351 = vmul.f32 %v839, %v1245
          %v1352 = vmul.f32 %v840, %v1245
          %v1353 = vmul.f32 %v841, %v1246
          %v1354 = vmul.f32 %v842, %v1246
          %v1355 = vmul.f32 %v843, %v1246
          %v1356 = vmul.f32 %v844, %v1246
          %v1357 = vmul.f32 %v845, %v1247
          %v1358 = vmul.f32 %v846, %v1247
          %v1359 = vmul.f32 %v847, %v1247
          %v1360 = vmul.f32 %v848, %v1247
          %v1361 = vmul.f32 %v849, %v1248
          %v1362 = vmul.f32 %v850, %v1248
          %v1363 = vmul.f32 %v851, %v1248
          %v1364 = vmul.f32 %v852, %v1248
          %v1365 = vmul.f32 %v853, %v1249
          %v1366 = vmul.f32 %v854, %v1249
          %v1367 = vmul.f32 %v855, %v1249
          %v1368 = vmul.f32 %v856, %v1249
          %v1369 = vmul.f32 %v857, %v1250
          %v1370 = vmul.f32 %v858, %v1250
          %v1371 = vmul.f32 %v859, %v1250
          %v1372 = vmul.f32 %v860, %v1250
          %v1373 = vmul.f32 %v861, %v1251
          %v1374 = vmul.f32 %v862, %v1251
          %v1375 = vmul.f32 %v863, %v1251
          %v1376 = vmul.f32 %v864, %v1251
          %v1377 = vmul.f32 %v865, %v1252
          %v1378 = vmul.f32 %v866, %v1252
          %v1379 = vmul.f32 %v867, %v1252
          %v1380 = vmul.f32 %v868, %v1252
          %v1381 = vld [vmem:[#allocation7] sm:$0xf]
          %v1383 = vlaneseq
          %v1384 = vshrl.u32 %v1383, 7
          %v1385 = vsub.s32 0, %v1384
          %v1386 = vrot.slane %v1381, %v1385
          %v1387 = vlaneseq
          %v1388 = vshrl.u32 %v1387, 7
          %v1389 = vsub.s32 1, %v1388
          %v1390 = vrot.slane %v1381, %v1389
          %v1391 = vlaneseq
          %v1392 = vshrl.u32 %v1391, 7
          %v1393 = vsub.s32 2, %v1392
          %v1394 = vrot.slane %v1381, %v1393
          %v1395 = vlaneseq
          %v1396 = vshrl.u32 %v1395, 7
          %v1397 = vsub.s32 3, %v1396
          %v1398 = vrot.slane %v1381, %v1397
          %v1403 = vmul.f32 %v1253, %v1386
          %v1404 = vmul.f32 %v1254, %v1390
          %v1405 = vmul.f32 %v1255, %v1394
          %v1406 = vmul.f32 %v1256, %v1398
          %v1407 = vmul.f32 %v1257, %v1386
          %v1408 = vmul.f32 %v1258, %v1390
          %v1409 = vmul.f32 %v1259, %v1394
          %v1410 = vmul.f32 %v1260, %v1398
          %v1411 = vmul.f32 %v1261, %v1386
          %v1412 = vmul.f32 %v1262, %v1390
          %v1413 = vmul.f32 %v1263, %v1394
          %v1414 = vmul.f32 %v1264, %v1398
          %v1415 = vmul.f32 %v1265, %v1386
          %v1416 = vmul.f32 %v1266, %v1390
          %v1417 = vmul.f32 %v1267, %v1394
          %v1418 = vmul.f32 %v1268, %v1398
          %v1419 = vmul.f32 %v1269, %v1386
          %v1420 = vmul.f32 %v1270, %v1390
          %v1421 = vmul.f32 %v1271, %v1394
          %v1422 = vmul.f32 %v1272, %v1398
          %v1423 = vmul.f32 %v1273, %v1386
          %v1424 = vmul.f32 %v1274, %v1390
          %v1425 = vmul.f32 %v1275, %v1394
          %v1426 = vmul.f32 %v1276, %v1398
          %v1427 = vmul.f32 %v1277, %v1386
          %v1428 = vmul.f32 %v1278, %v1390
          %v1429 = vmul.f32 %v1279, %v1394
          %v1430 = vmul.f32 %v1280, %v1398
          %v1431 = vmul.f32 %v1281, %v1386
          %v1432 = vmul.f32 %v1282, %v1390
          %v1433 = vmul.f32 %v1283, %v1394
          %v1434 = vmul.f32 %v1284, %v1398
          %v1435 = vmul.f32 %v1285, %v1386
          %v1436 = vmul.f32 %v1286, %v1390
          %v1437 = vmul.f32 %v1287, %v1394
          %v1438 = vmul.f32 %v1288, %v1398
          %v1439 = vmul.f32 %v1289, %v1386
          %v1440 = vmul.f32 %v1290, %v1390
          %v1441 = vmul.f32 %v1291, %v1394
          %v1442 = vmul.f32 %v1292, %v1398
          %v1443 = vmul.f32 %v1293, %v1386
          %v1444 = vmul.f32 %v1294, %v1390
          %v1445 = vmul.f32 %v1295, %v1394
          %v1446 = vmul.f32 %v1296, %v1398
          %v1447 = vmul.f32 %v1297, %v1386
          %v1448 = vmul.f32 %v1298, %v1390
          %v1449 = vmul.f32 %v1299, %v1394
          %v1450 = vmul.f32 %v1300, %v1398
          %v1451 = vmul.f32 %v1301, %v1386
          %v1452 = vmul.f32 %v1302, %v1390
          %v1453 = vmul.f32 %v1303, %v1394
          %v1454 = vmul.f32 %v1304, %v1398
          %v1455 = vmul.f32 %v1305, %v1386
          %v1456 = vmul.f32 %v1306, %v1390
          %v1457 = vmul.f32 %v1307, %v1394
          %v1458 = vmul.f32 %v1308, %v1398
          %v1459 = vmul.f32 %v1309, %v1386
          %v1460 = vmul.f32 %v1310, %v1390
          %v1461 = vmul.f32 %v1311, %v1394
          %v1462 = vmul.f32 %v1312, %v1398
          %v1463 = vmul.f32 %v1313, %v1386
          %v1464 = vmul.f32 %v1314, %v1390
          %v1465 = vmul.f32 %v1315, %v1394
          %v1466 = vmul.f32 %v1316, %v1398
          %v1467 = vmul.f32 %v1317, %v1386
          %v1468 = vmul.f32 %v1318, %v1390
          %v1469 = vmul.f32 %v1319, %v1394
          %v1470 = vmul.f32 %v1320, %v1398
          %v1471 = vmul.f32 %v1321, %v1386
          %v1472 = vmul.f32 %v1322, %v1390
          %v1473 = vmul.f32 %v1323, %v1394
          %v1474 = vmul.f32 %v1324, %v1398
          %v1475 = vmul.f32 %v1325, %v1386
          %v1476 = vmul.f32 %v1326, %v1390
          %v1477 = vmul.f32 %v1327, %v1394
          %v1478 = vmul.f32 %v1328, %v1398
          %v1479 = vmul.f32 %v1329, %v1386
          %v1480 = vmul.f32 %v1330, %v1390
          %v1481 = vmul.f32 %v1331, %v1394
          %v1482 = vmul.f32 %v1332, %v1398
          %v1483 = vmul.f32 %v1333, %v1386
          %v1484 = vmul.f32 %v1334, %v1390
          %v1485 = vmul.f32 %v1335, %v1394
          %v1486 = vmul.f32 %v1336, %v1398
          %v1487 = vmul.f32 %v1337, %v1386
          %v1488 = vmul.f32 %v1338, %v1390
          %v1489 = vmul.f32 %v1339, %v1394
          %v1490 = vmul.f32 %v1340, %v1398
          %v1491 = vmul.f32 %v1341, %v1386
          %v1492 = vmul.f32 %v1342, %v1390
          %v1493 = vmul.f32 %v1343, %v1394
          %v1494 = vmul.f32 %v1344, %v1398
          %v1495 = vmul.f32 %v1345, %v1386
          %v1496 = vmul.f32 %v1346, %v1390
          %v1497 = vmul.f32 %v1347, %v1394
          %v1498 = vmul.f32 %v1348, %v1398
          %v1499 = vmul.f32 %v1349, %v1386
          %v1500 = vmul.f32 %v1350, %v1390
          %v1501 = vmul.f32 %v1351, %v1394
          %v1502 = vmul.f32 %v1352, %v1398
          %v1503 = vmul.f32 %v1353, %v1386
          %v1504 = vmul.f32 %v1354, %v1390
          %v1505 = vmul.f32 %v1355, %v1394
          %v1506 = vmul.f32 %v1356, %v1398
          %v1507 = vmul.f32 %v1357, %v1386
          %v1508 = vmul.f32 %v1358, %v1390
          %v1509 = vmul.f32 %v1359, %v1394
          %v1510 = vmul.f32 %v1360, %v1398
          %v1511 = vmul.f32 %v1361, %v1386
          %v1512 = vmul.f32 %v1362, %v1390
          %v1513 = vmul.f32 %v1363, %v1394
          %v1514 = vmul.f32 %v1364, %v1398
          %v1515 = vmul.f32 %v1365, %v1386
          %v1516 = vmul.f32 %v1366, %v1390
          %v1517 = vmul.f32 %v1367, %v1394
          %v1518 = vmul.f32 %v1368, %v1398
          %v1519 = vmul.f32 %v1369, %v1386
          %v1520 = vmul.f32 %v1370, %v1390
          %v1521 = vmul.f32 %v1371, %v1394
          %v1522 = vmul.f32 %v1372, %v1398
          %v1523 = vmul.f32 %v1373, %v1386
          %v1524 = vmul.f32 %v1374, %v1390
          %v1525 = vmul.f32 %v1375, %v1394
          %v1526 = vmul.f32 %v1376, %v1398
          %v1527 = vmul.f32 %v1377, %v1386
          %v1528 = vmul.f32 %v1378, %v1390
          %v1529 = vmul.f32 %v1379, %v1394
          %v1530 = vmul.f32 %v1380, %v1398
          %v1531 = vld [vmem:[#allocation9] sm:$0xf]
          %v1533 = vlaneseq
          %v1534 = vshrl.u32 %v1533, 7
          %v1535 = vsub.s32 0, %v1534
          %v1536 = vrot.slane %v1531, %v1535
          %v1537 = vlaneseq
          %v1538 = vshrl.u32 %v1537, 7
          %v1539 = vsub.s32 1, %v1538
          %v1540 = vrot.slane %v1531, %v1539
          %v1541 = vlaneseq
          %v1542 = vshrl.u32 %v1541, 7
          %v1543 = vsub.s32 2, %v1542
          %v1544 = vrot.slane %v1531, %v1543
          %v1545 = vlaneseq
          %v1546 = vshrl.u32 %v1545, 7
          %v1547 = vsub.s32 3, %v1546
          %v1548 = vrot.slane %v1531, %v1547
          %v1553 = vadd.f32 %v1403, %v1536
          %v1554 = vadd.f32 %v1404, %v1540
          %v1555 = vadd.f32 %v1405, %v1544
          %v1556 = vadd.f32 %v1406, %v1548
          %v1557 = vadd.f32 %v1407, %v1536
          %v1558 = vadd.f32 %v1408, %v1540
          %v1559 = vadd.f32 %v1409, %v1544
          %v1560 = vadd.f32 %v1410, %v1548
          %v1561 = vadd.f32 %v1411, %v1536
          %v1562 = vadd.f32 %v1412, %v1540
          %v1563 = vadd.f32 %v1413, %v1544
          %v1564 = vadd.f32 %v1414, %v1548
          %v1565 = vadd.f32 %v1415, %v1536
          %v1566 = vadd.f32 %v1416, %v1540
          %v1567 = vadd.f32 %v1417, %v1544
          %v1568 = vadd.f32 %v1418, %v1548
          %v1569 = vadd.f32 %v1419, %v1536
          %v1570 = vadd.f32 %v1420, %v1540
          %v1571 = vadd.f32 %v1421, %v1544
          %v1572 = vadd.f32 %v1422, %v1548
          %v1573 = vadd.f32 %v1423, %v1536
          %v1574 = vadd.f32 %v1424, %v1540
          %v1575 = vadd.f32 %v1425, %v1544
          %v1576 = vadd.f32 %v1426, %v1548
          %v1577 = vadd.f32 %v1427, %v1536
          %v1578 = vadd.f32 %v1428, %v1540
          %v1579 = vadd.f32 %v1429, %v1544
          %v1580 = vadd.f32 %v1430, %v1548
          %v1581 = vadd.f32 %v1431, %v1536
          %v1582 = vadd.f32 %v1432, %v1540
          %v1583 = vadd.f32 %v1433, %v1544
          %v1584 = vadd.f32 %v1434, %v1548
          %v1585 = vadd.f32 %v1435, %v1536
          %v1586 = vadd.f32 %v1436, %v1540
          %v1587 = vadd.f32 %v1437, %v1544
          %v1588 = vadd.f32 %v1438, %v1548
          %v1589 = vadd.f32 %v1439, %v1536
          %v1590 = vadd.f32 %v1440, %v1540
          %v1591 = vadd.f32 %v1441, %v1544
          %v1592 = vadd.f32 %v1442, %v1548
          %v1593 = vadd.f32 %v1443, %v1536
          %v1594 = vadd.f32 %v1444, %v1540
          %v1595 = vadd.f32 %v1445, %v1544
          %v1596 = vadd.f32 %v1446, %v1548
          %v1597 = vadd.f32 %v1447, %v1536
          %v1598 = vadd.f32 %v1448, %v1540
          %v1599 = vadd.f32 %v1449, %v1544
          %v1600 = vadd.f32 %v1450, %v1548
          %v1601 = vadd.f32 %v1451, %v1536
          %v1602 = vadd.f32 %v1452, %v1540
          %v1603 = vadd.f32 %v1453, %v1544
          %v1604 = vadd.f32 %v1454, %v1548
          %v1605 = vadd.f32 %v1455, %v1536
          %v1606 = vadd.f32 %v1456, %v1540
          %v1607 = vadd.f32 %v1457, %v1544
          %v1608 = vadd.f32 %v1458, %v1548
          %v1609 = vadd.f32 %v1459, %v1536
          %v1610 = vadd.f32 %v1460, %v1540
          %v1611 = vadd.f32 %v1461, %v1544
          %v1612 = vadd.f32 %v1462, %v1548
          %v1613 = vadd.f32 %v1463, %v1536
          %v1614 = vadd.f32 %v1464, %v1540
          %v1615 = vadd.f32 %v1465, %v1544
          %v1616 = vadd.f32 %v1466, %v1548
          %v1617 = vadd.f32 %v1467, %v1536
          %v1618 = vadd.f32 %v1468, %v1540
          %v1619 = vadd.f32 %v1469, %v1544
          %v1620 = vadd.f32 %v1470, %v1548
          %v1621 = vadd.f32 %v1471, %v1536
          %v1622 = vadd.f32 %v1472, %v1540
          %v1623 = vadd.f32 %v1473, %v1544
          %v1624 = vadd.f32 %v1474, %v1548
          %v1625 = vadd.f32 %v1475, %v1536
          %v1626 = vadd.f32 %v1476, %v1540
          %v1627 = vadd.f32 %v1477, %v1544
          %v1628 = vadd.f32 %v1478, %v1548
          %v1629 = vadd.f32 %v1479, %v1536
          %v1630 = vadd.f32 %v1480, %v1540
          %v1631 = vadd.f32 %v1481, %v1544
          %v1632 = vadd.f32 %v1482, %v1548
          %v1633 = vadd.f32 %v1483, %v1536
          %v1634 = vadd.f32 %v1484, %v1540
          %v1635 = vadd.f32 %v1485, %v1544
          %v1636 = vadd.f32 %v1486, %v1548
          %v1637 = vadd.f32 %v1487, %v1536
          %v1638 = vadd.f32 %v1488, %v1540
          %v1639 = vadd.f32 %v1489, %v1544
          %v1640 = vadd.f32 %v1490, %v1548
          %v1641 = vadd.f32 %v1491, %v1536
          %v1642 = vadd.f32 %v1492, %v1540
          %v1643 = vadd.f32 %v1493, %v1544
          %v1644 = vadd.f32 %v1494, %v1548
          %v1645 = vadd.f32 %v1495, %v1536
          %v1646 = vadd.f32 %v1496, %v1540
          %v1647 = vadd.f32 %v1497, %v1544
          %v1648 = vadd.f32 %v1498, %v1548
          %v1649 = vadd.f32 %v1499, %v1536
          %v1650 = vadd.f32 %v1500, %v1540
          %v1651 = vadd.f32 %v1501, %v1544
          %v1652 = vadd.f32 %v1502, %v1548
          %v1653 = vadd.f32 %v1503, %v1536
          %v1654 = vadd.f32 %v1504, %v1540
          %v1655 = vadd.f32 %v1505, %v1544
          %v1656 = vadd.f32 %v1506, %v1548
          %v1657 = vadd.f32 %v1507, %v1536
          %v1658 = vadd.f32 %v1508, %v1540
          %v1659 = vadd.f32 %v1509, %v1544
          %v1660 = vadd.f32 %v1510, %v1548
          %v1661 = vadd.f32 %v1511, %v1536
          %v1662 = vadd.f32 %v1512, %v1540
          %v1663 = vadd.f32 %v1513, %v1544
          %v1664 = vadd.f32 %v1514, %v1548
          %v1665 = vadd.f32 %v1515, %v1536
          %v1666 = vadd.f32 %v1516, %v1540
          %v1667 = vadd.f32 %v1517, %v1544
          %v1668 = vadd.f32 %v1518, %v1548
          %v1669 = vadd.f32 %v1519, %v1536
          %v1670 = vadd.f32 %v1520, %v1540
          %v1671 = vadd.f32 %v1521, %v1544
          %v1672 = vadd.f32 %v1522, %v1548
          %v1673 = vadd.f32 %v1523, %v1536
          %v1674 = vadd.f32 %v1524, %v1540
          %v1675 = vadd.f32 %v1525, %v1544
          %v1676 = vadd.f32 %v1526, %v1548
          %v1677 = vadd.f32 %v1527, %v1536
          %v1678 = vadd.f32 %v1528, %v1540
          %v1679 = vadd.f32 %v1529, %v1544
          %v1680 = vadd.f32 %v1530, %v1548
          %v1681 = vpack.c.bf16 %v1557, %v1553
          %v1682 = vpack.c.bf16 %v1558, %v1554
          %v1683 = vpack.c.bf16 %v1559, %v1555
          %v1684 = vpack.c.bf16 %v1560, %v1556
          %v1685 = vpack.c.bf16 %v1565, %v1561
          %v1686 = vpack.c.bf16 %v1566, %v1562
          %v1687 = vpack.c.bf16 %v1567, %v1563
          %v1688 = vpack.c.bf16 %v1568, %v1564
          %v1689 = vpack.c.bf16 %v1573, %v1569
          %v1690 = vpack.c.bf16 %v1574, %v1570
          %v1691 = vpack.c.bf16 %v1575, %v1571
          %v1692 = vpack.c.bf16 %v1576, %v1572
          %v1693 = vpack.c.bf16 %v1581, %v1577
          %v1694 = vpack.c.bf16 %v1582, %v1578
          %v1695 = vpack.c.bf16 %v1583, %v1579
          %v1696 = vpack.c.bf16 %v1584, %v1580
          %v1697 = vpack.c.bf16 %v1589, %v1585
          %v1698 = vpack.c.bf16 %v1590, %v1586
          %v1699 = vpack.c.bf16 %v1591, %v1587
          %v1700 = vpack.c.bf16 %v1592, %v1588
          %v1701 = vpack.c.bf16 %v1597, %v1593
          %v1702 = vpack.c.bf16 %v1598, %v1594
          %v1703 = vpack.c.bf16 %v1599, %v1595
          %v1704 = vpack.c.bf16 %v1600, %v1596
          %v1705 = vpack.c.bf16 %v1605, %v1601
          %v1706 = vpack.c.bf16 %v1606, %v1602
          %v1707 = vpack.c.bf16 %v1607, %v1603
          %v1708 = vpack.c.bf16 %v1608, %v1604
          %v1709 = vpack.c.bf16 %v1613, %v1609
          %v1710 = vpack.c.bf16 %v1614, %v1610
          %v1711 = vpack.c.bf16 %v1615, %v1611
          %v1712 = vpack.c.bf16 %v1616, %v1612
          %v1713 = vpack.c.bf16 %v1621, %v1617
          %v1714 = vpack.c.bf16 %v1622, %v1618
          %v1715 = vpack.c.bf16 %v1623, %v1619
          %v1716 = vpack.c.bf16 %v1624, %v1620
          %v1717 = vpack.c.bf16 %v1629, %v1625
          %v1718 = vpack.c.bf16 %v1630, %v1626
          %v1719 = vpack.c.bf16 %v1631, %v1627
          %v1720 = vpack.c.bf16 %v1632, %v1628
          %v1721 = vpack.c.bf16 %v1637, %v1633
          %v1722 = vpack.c.bf16 %v1638, %v1634
          %v1723 = vpack.c.bf16 %v1639, %v1635
          %v1724 = vpack.c.bf16 %v1640, %v1636
          %v1725 = vpack.c.bf16 %v1645, %v1641
          %v1726 = vpack.c.bf16 %v1646, %v1642
          %v1727 = vpack.c.bf16 %v1647, %v1643
          %v1728 = vpack.c.bf16 %v1648, %v1644
          %v1729 = vpack.c.bf16 %v1653, %v1649
          %v1730 = vpack.c.bf16 %v1654, %v1650
          %v1731 = vpack.c.bf16 %v1655, %v1651
          %v1732 = vpack.c.bf16 %v1656, %v1652
          %v1733 = vpack.c.bf16 %v1661, %v1657
          %v1734 = vpack.c.bf16 %v1662, %v1658
          %v1735 = vpack.c.bf16 %v1663, %v1659
          %v1736 = vpack.c.bf16 %v1664, %v1660
          %v1737 = vpack.c.bf16 %v1669, %v1665
          %v1738 = vpack.c.bf16 %v1670, %v1666
          %v1739 = vpack.c.bf16 %v1671, %v1667
          %v1740 = vpack.c.bf16 %v1672, %v1668
          %v1741 = vpack.c.bf16 %v1677, %v1673
          %v1742 = vpack.c.bf16 %v1678, %v1674
          %v1743 = vpack.c.bf16 %v1679, %v1675
          %v1744 = vpack.c.bf16 %v1680, %v1676
          %v1809 = vunpack.c.l.b16 %v1681
          %v1810 = vunpack.c.l.b16 %v1682
          %v1811 = vunpack.c.l.b16 %v1683
          %v1812 = vunpack.c.l.b16 %v1684
          %v1813 = vunpack.c.h.b16 %v1681
          %v1814 = vunpack.c.h.b16 %v1682
          %v1815 = vunpack.c.h.b16 %v1683
          %v1816 = vunpack.c.h.b16 %v1684
          %v1817 = vunpack.c.l.b16 %v1685
          %v1818 = vunpack.c.l.b16 %v1686
          %v1819 = vunpack.c.l.b16 %v1687
          %v1820 = vunpack.c.l.b16 %v1688
          %v1821 = vunpack.c.h.b16 %v1685
          %v1822 = vunpack.c.h.b16 %v1686
          %v1823 = vunpack.c.h.b16 %v1687
          %v1824 = vunpack.c.h.b16 %v1688
          %v1825 = vunpack.c.l.b16 %v1689
          %v1826 = vunpack.c.l.b16 %v1690
          %v1827 = vunpack.c.l.b16 %v1691
          %v1828 = vunpack.c.l.b16 %v1692
          %v1829 = vunpack.c.h.b16 %v1689
          %v1830 = vunpack.c.h.b16 %v1690
          %v1831 = vunpack.c.h.b16 %v1691
          %v1832 = vunpack.c.h.b16 %v1692
          %v1833 = vunpack.c.l.b16 %v1693
          %v1834 = vunpack.c.l.b16 %v1694
          %v1835 = vunpack.c.l.b16 %v1695
          %v1836 = vunpack.c.l.b16 %v1696
          %v1837 = vunpack.c.h.b16 %v1693
          %v1838 = vunpack.c.h.b16 %v1694
          %v1839 = vunpack.c.h.b16 %v1695
          %v1840 = vunpack.c.h.b16 %v1696
          %v1841 = vunpack.c.l.b16 %v1697
          %v1842 = vunpack.c.l.b16 %v1698
          %v1843 = vunpack.c.l.b16 %v1699
          %v1844 = vunpack.c.l.b16 %v1700
          %v1845 = vunpack.c.h.b16 %v1697
          %v1846 = vunpack.c.h.b16 %v1698
          %v1847 = vunpack.c.h.b16 %v1699
          %v1848 = vunpack.c.h.b16 %v1700
          %v1849 = vunpack.c.l.b16 %v1701
          %v1850 = vunpack.c.l.b16 %v1702
          %v1851 = vunpack.c.l.b16 %v1703
          %v1852 = vunpack.c.l.b16 %v1704
          %v1853 = vunpack.c.h.b16 %v1701
          %v1854 = vunpack.c.h.b16 %v1702
          %v1855 = vunpack.c.h.b16 %v1703
          %v1856 = vunpack.c.h.b16 %v1704
          %v1857 = vunpack.c.l.b16 %v1705
          %v1858 = vunpack.c.l.b16 %v1706
          %v1859 = vunpack.c.l.b16 %v1707
          %v1860 = vunpack.c.l.b16 %v1708
          %v1861 = vunpack.c.h.b16 %v1705
          %v1862 = vunpack.c.h.b16 %v1706
          %v1863 = vunpack.c.h.b16 %v1707
          %v1864 = vunpack.c.h.b16 %v1708
          %v1865 = vunpack.c.l.b16 %v1709
          %v1866 = vunpack.c.l.b16 %v1710
          %v1867 = vunpack.c.l.b16 %v1711
          %v1868 = vunpack.c.l.b16 %v1712
          %v1869 = vunpack.c.h.b16 %v1709
          %v1870 = vunpack.c.h.b16 %v1710
          %v1871 = vunpack.c.h.b16 %v1711
          %v1872 = vunpack.c.h.b16 %v1712
          %v1873 = vunpack.c.l.b16 %v1713
          %v1874 = vunpack.c.l.b16 %v1714
          %v1875 = vunpack.c.l.b16 %v1715
          %v1876 = vunpack.c.l.b16 %v1716
          %v1877 = vunpack.c.h.b16 %v1713
          %v1878 = vunpack.c.h.b16 %v1714
          %v1879 = vunpack.c.h.b16 %v1715
          %v1880 = vunpack.c.h.b16 %v1716
          %v1881 = vunpack.c.l.b16 %v1717
          %v1882 = vunpack.c.l.b16 %v1718
          %v1883 = vunpack.c.l.b16 %v1719
          %v1884 = vunpack.c.l.b16 %v1720
          %v1885 = vunpack.c.h.b16 %v1717
          %v1886 = vunpack.c.h.b16 %v1718
          %v1887 = vunpack.c.h.b16 %v1719
          %v1888 = vunpack.c.h.b16 %v1720
          %v1889 = vunpack.c.l.b16 %v1721
          %v1890 = vunpack.c.l.b16 %v1722
          %v1891 = vunpack.c.l.b16 %v1723
          %v1892 = vunpack.c.l.b16 %v1724
          %v1893 = vunpack.c.h.b16 %v1721
          %v1894 = vunpack.c.h.b16 %v1722
          %v1895 = vunpack.c.h.b16 %v1723
          %v1896 = vunpack.c.h.b16 %v1724
          %v1897 = vunpack.c.l.b16 %v1725
          %v1898 = vunpack.c.l.b16 %v1726
          %v1899 = vunpack.c.l.b16 %v1727
          %v1900 = vunpack.c.l.b16 %v1728
          %v1901 = vunpack.c.h.b16 %v1725
          %v1902 = vunpack.c.h.b16 %v1726
          %v1903 = vunpack.c.h.b16 %v1727
          %v1904 = vunpack.c.h.b16 %v1728
          %v1905 = vunpack.c.l.b16 %v1729
          %v1906 = vunpack.c.l.b16 %v1730
          %v1907 = vunpack.c.l.b16 %v1731
          %v1908 = vunpack.c.l.b16 %v1732
          %v1909 = vunpack.c.h.b16 %v1729
          %v1910 = vunpack.c.h.b16 %v1730
          %v1911 = vunpack.c.h.b16 %v1731
          %v1912 = vunpack.c.h.b16 %v1732
          %v1913 = vunpack.c.l.b16 %v1733
          %v1914 = vunpack.c.l.b16 %v1734
          %v1915 = vunpack.c.l.b16 %v1735
          %v1916 = vunpack.c.l.b16 %v1736
          %v1917 = vunpack.c.h.b16 %v1733
          %v1918 = vunpack.c.h.b16 %v1734
          %v1919 = vunpack.c.h.b16 %v1735
          %v1920 = vunpack.c.h.b16 %v1736
          %v1921 = vunpack.c.l.b16 %v1737
          %v1922 = vunpack.c.l.b16 %v1738
          %v1923 = vunpack.c.l.b16 %v1739
          %v1924 = vunpack.c.l.b16 %v1740
          %v1925 = vunpack.c.h.b16 %v1737
          %v1926 = vunpack.c.h.b16 %v1738
          %v1927 = vunpack.c.h.b16 %v1739
          %v1928 = vunpack.c.h.b16 %v1740
          %v1929 = vunpack.c.l.b16 %v1741
          %v1930 = vunpack.c.l.b16 %v1742
          %v1931 = vunpack.c.l.b16 %v1743
          %v1932 = vunpack.c.l.b16 %v1744
          %v1933 = vunpack.c.h.b16 %v1741
          %v1934 = vunpack.c.h.b16 %v1742
          %v1935 = vunpack.c.h.b16 %v1743
          %v1936 = vunpack.c.h.b16 %v1744
          %v1937 = vpack.c.b16 %v1810, %v1809
          %v1938 = vpack.c.b16 %v1812, %v1811
          %v1939 = vpack.c.b16 %v1814, %v1813
          %v1940 = vpack.c.b16 %v1816, %v1815
          %v1941 = vpack.c.b16 %v1818, %v1817
          %v1942 = vpack.c.b16 %v1820, %v1819
          %v1943 = vpack.c.b16 %v1822, %v1821
          %v1944 = vpack.c.b16 %v1824, %v1823
          %v1945 = vpack.c.b16 %v1826, %v1825
          %v1946 = vpack.c.b16 %v1828, %v1827
          %v1947 = vpack.c.b16 %v1830, %v1829
          %v1948 = vpack.c.b16 %v1832, %v1831
          %v1949 = vpack.c.b16 %v1834, %v1833
          %v1950 = vpack.c.b16 %v1836, %v1835
          %v1951 = vpack.c.b16 %v1838, %v1837
          %v1952 = vpack.c.b16 %v1840, %v1839
          %v1953 = vpack.c.b16 %v1842, %v1841
          %v1954 = vpack.c.b16 %v1844, %v1843
          %v1955 = vpack.c.b16 %v1846, %v1845
          %v1956 = vpack.c.b16 %v1848, %v1847
          %v1957 = vpack.c.b16 %v1850, %v1849
          %v1958 = vpack.c.b16 %v1852, %v1851
          %v1959 = vpack.c.b16 %v1854, %v1853
          %v1960 = vpack.c.b16 %v1856, %v1855
          %v1961 = vpack.c.b16 %v1858, %v1857
          %v1962 = vpack.c.b16 %v1860, %v1859
          %v1963 = vpack.c.b16 %v1862, %v1861
          %v1964 = vpack.c.b16 %v1864, %v1863
          %v1965 = vpack.c.b16 %v1866, %v1865
          %v1966 = vpack.c.b16 %v1868, %v1867
          %v1967 = vpack.c.b16 %v1870, %v1869
          %v1968 = vpack.c.b16 %v1872, %v1871
          %v1969 = vpack.c.b16 %v1874, %v1873
          %v1970 = vpack.c.b16 %v1876, %v1875
          %v1971 = vpack.c.b16 %v1878, %v1877
          %v1972 = vpack.c.b16 %v1880, %v1879
          %v1973 = vpack.c.b16 %v1882, %v1881
          %v1974 = vpack.c.b16 %v1884, %v1883
          %v1975 = vpack.c.b16 %v1886, %v1885
          %v1976 = vpack.c.b16 %v1888, %v1887
          %v1977 = vpack.c.b16 %v1890, %v1889
          %v1978 = vpack.c.b16 %v1892, %v1891
          %v1979 = vpack.c.b16 %v1894, %v1893
          %v1980 = vpack.c.b16 %v1896, %v1895
          %v1981 = vpack.c.b16 %v1898, %v1897
          %v1982 = vpack.c.b16 %v1900, %v1899
          %v1983 = vpack.c.b16 %v1902, %v1901
          %v1984 = vpack.c.b16 %v1904, %v1903
          %v1985 = vpack.c.b16 %v1906, %v1905
          %v1986 = vpack.c.b16 %v1908, %v1907
          %v1987 = vpack.c.b16 %v1910, %v1909
          %v1988 = vpack.c.b16 %v1912, %v1911
          %v1989 = vpack.c.b16 %v1914, %v1913
          %v1990 = vpack.c.b16 %v1916, %v1915
          %v1991 = vpack.c.b16 %v1918, %v1917
          %v1992 = vpack.c.b16 %v1920, %v1919
          %v1993 = vpack.c.b16 %v1922, %v1921
          %v1994 = vpack.c.b16 %v1924, %v1923
          %v1995 = vpack.c.b16 %v1926, %v1925
          %v1996 = vpack.c.b16 %v1928, %v1927
          %v1997 = vpack.c.b16 %v1930, %v1929
          %v1998 = vpack.c.b16 %v1932, %v1931
          %v1999 = vpack.c.b16 %v1934, %v1933
          %v2000 = vpack.c.b16 %v1936, %v1935
          %2065 = vst [vmem:[#allocation2] sm:$0xff] %v1937
          %2066 = vst [vmem:[#allocation2 + $0x8] sm:$0xff] %v1938
          %2067 = vst [vmem:[#allocation2 + $0x10] sm:$0xff] %v1939
          %2068 = vst [vmem:[#allocation2 + $0x18] sm:$0xff] %v1940
          %2069 = vst [vmem:[#allocation2 + $0x20] sm:$0xff] %v1941
          %2070 = vst [vmem:[#allocation2 + $0x28] sm:$0xff] %v1942
          %2071 = vst [vmem:[#allocation2 + $0x30] sm:$0xff] %v1943
          %2072 = vst [vmem:[#allocation2 + $0x38] sm:$0xff] %v1944
          %2073 = vst [vmem:[#allocation2 + $0x40] sm:$0xff] %v1945
          %2074 = vst [vmem:[#allocation2 + $0x48] sm:$0xff] %v1946
          %2075 = vst [vmem:[#allocation2 + $0x50] sm:$0xff] %v1947
          %2076 = vst [vmem:[#allocation2 + $0x58] sm:$0xff] %v1948
          %2077 = vst [vmem:[#allocation2 + $0x60] sm:$0xff] %v1949
          %2078 = vst [vmem:[#allocation2 + $0x68] sm:$0xff] %v1950
          %2079 = vst [vmem:[#allocation2 + $0x70] sm:$0xff] %v1951
          %2080 = vst [vmem:[#allocation2 + $0x78] sm:$0xff] %v1952
          %2081 = vst [vmem:[#allocation2 + $0x80] sm:$0xff] %v1953
          %2082 = vst [vmem:[#allocation2 + $0x88] sm:$0xff] %v1954
          %2083 = vst [vmem:[#allocation2 + $0x90] sm:$0xff] %v1955
          %2084 = vst [vmem:[#allocation2 + $0x98] sm:$0xff] %v1956
          %2085 = vst [vmem:[#allocation2 + $0xa0] sm:$0xff] %v1957
          %2086 = vst [vmem:[#allocation2 + $0xa8] sm:$0xff] %v1958
          %2087 = vst [vmem:[#allocation2 + $0xb0] sm:$0xff] %v1959
          %2088 = vst [vmem:[#allocation2 + $0xb8] sm:$0xff] %v1960
          %2089 = vst [vmem:[#allocation2 + $0xc0] sm:$0xff] %v1961
          %2090 = vst [vmem:[#allocation2 + $0xc8] sm:$0xff] %v1962
          %2091 = vst [vmem:[#allocation2 + $0xd0] sm:$0xff] %v1963
          %2092 = vst [vmem:[#allocation2 + $0xd8] sm:$0xff] %v1964
          %2093 = vst [vmem:[#allocation2 + $0xe0] sm:$0xff] %v1965
          %2094 = vst [vmem:[#allocation2 + $0xe8] sm:$0xff] %v1966
          %2095 = vst [vmem:[#allocation2 + $0xf0] sm:$0xff] %v1967
          %2096 = vst [vmem:[#allocation2 + $0xf8] sm:$0xff] %v1968
          %2097 = vst [vmem:[#allocation2 + $0x100] sm:$0xff] %v1969
          %2098 = vst [vmem:[#allocation2 + $0x108] sm:$0xff] %v1970
          %2099 = vst [vmem:[#allocation2 + $0x110] sm:$0xff] %v1971
          %2100 = vst [vmem:[#allocation2 + $0x118] sm:$0xff] %v1972
          %2101 = vst [vmem:[#allocation2 + $0x120] sm:$0xff] %v1973
          %2102 = vst [vmem:[#allocation2 + $0x128] sm:$0xff] %v1974
          %2103 = vst [vmem:[#allocation2 + $0x130] sm:$0xff] %v1975
          %2104 = vst [vmem:[#allocation2 + $0x138] sm:$0xff] %v1976
          %2105 = vst [vmem:[#allocation2 + $0x140] sm:$0xff] %v1977
          %2106 = vst [vmem:[#allocation2 + $0x148] sm:$0xff] %v1978
          %2107 = vst [vmem:[#allocation2 + $0x150] sm:$0xff] %v1979
          %2108 = vst [vmem:[#allocation2 + $0x158] sm:$0xff] %v1980
          %2109 = vst [vmem:[#allocation2 + $0x160] sm:$0xff] %v1981
          %2110 = vst [vmem:[#allocation2 + $0x168] sm:$0xff] %v1982
          %2111 = vst [vmem:[#allocation2 + $0x170] sm:$0xff] %v1983
          %2112 = vst [vmem:[#allocation2 + $0x178] sm:$0xff] %v1984
          %2113 = vst [vmem:[#allocation2 + $0x180] sm:$0xff] %v1985
          %2114 = vst [vmem:[#allocation2 + $0x188] sm:$0xff] %v1986
          %2115 = vst [vmem:[#allocation2 + $0x190] sm:$0xff] %v1987
          %2116 = vst [vmem:[#allocation2 + $0x198] sm:$0xff] %v1988
          %2117 = vst [vmem:[#allocation2 + $0x1a0] sm:$0xff] %v1989
          %2118 = vst [vmem:[#allocation2 + $0x1a8] sm:$0xff] %v1990
          %2119 = vst [vmem:[#allocation2 + $0x1b0] sm:$0xff] %v1991
          %2120 = vst [vmem:[#allocation2 + $0x1b8] sm:$0xff] %v1992
          %2121 = vst [vmem:[#allocation2 + $0x1c0] sm:$0xff] %v1993
          %2122 = vst [vmem:[#allocation2 + $0x1c8] sm:$0xff] %v1994
          %2123 = vst [vmem:[#allocation2 + $0x1d0] sm:$0xff] %v1995
          %2124 = vst [vmem:[#allocation2 + $0x1d8] sm:$0xff] %v1996
          %2125 = vst [vmem:[#allocation2 + $0x1e0] sm:$0xff] %v1997
          %2126 = vst [vmem:[#allocation2 + $0x1e8] sm:$0xff] %v1998
          %2127 = vst [vmem:[#allocation2 + $0x1f0] sm:$0xff] %v1999
          %2128 = vst [vmem:[#allocation2 + $0x1f8] sm:$0xff] %v2000
          %2129 = vst [vmem:[#allocation3] sm:$0xff] 0.0
          %2130 = vst [vmem:[#allocation3 + $0x8] sm:$0xff] 0.0
          %2131 = vst [vmem:[#allocation3 + $0x10] sm:$0xff] 0.0
          %2132 = vst [vmem:[#allocation3 + $0x18] sm:$0xff] 0.0
          %2133 = vst [vmem:[#allocation3 + $0x20] sm:$0xff] 0.0
          %2134 = vst [vmem:[#allocation3 + $0x28] sm:$0xff] 0.0
          %2135 = vst [vmem:[#allocation3 + $0x30] sm:$0xff] 0.0
          %2136 = vst [vmem:[#allocation3 + $0x38] sm:$0xff] 0.0
          %2137 = vst [vmem:[#allocation3 + $0x40] sm:$0xff] 0.0
          %2138 = vst [vmem:[#allocation3 + $0x48] sm:$0xff] 0.0
          %2139 = vst [vmem:[#allocation3 + $0x50] sm:$0xff] 0.0
          %2140 = vst [vmem:[#allocation3 + $0x58] sm:$0xff] 0.0
          %2141 = vst [vmem:[#allocation3 + $0x60] sm:$0xff] 0.0
          %2142 = vst [vmem:[#allocation3 + $0x68] sm:$0xff] 0.0
          %2143 = vst [vmem:[#allocation3 + $0x70] sm:$0xff] 0.0
          %2144 = vst [vmem:[#allocation3 + $0x78] sm:$0xff] 0.0
          %2145 = vst [vmem:[#allocation3 + $0x80] sm:$0xff] 0.0
          %2146 = vst [vmem:[#allocation3 + $0x88] sm:$0xff] 0.0
          %2147 = vst [vmem:[#allocation3 + $0x90] sm:$0xff] 0.0
          %2148 = vst [vmem:[#allocation3 + $0x98] sm:$0xff] 0.0
          %2149 = vst [vmem:[#allocation3 + $0xa0] sm:$0xff] 0.0
          %2150 = vst [vmem:[#allocation3 + $0xa8] sm:$0xff] 0.0
          %2151 = vst [vmem:[#allocation3 + $0xb0] sm:$0xff] 0.0
          %2152 = vst [vmem:[#allocation3 + $0xb8] sm:$0xff] 0.0
          %2153 = vst [vmem:[#allocation3 + $0xc0] sm:$0xff] 0.0
          %2154 = vst [vmem:[#allocation3 + $0xc8] sm:$0xff] 0.0
          %2155 = vst [vmem:[#allocation3 + $0xd0] sm:$0xff] 0.0
          %2156 = vst [vmem:[#allocation3 + $0xd8] sm:$0xff] 0.0
          %2157 = vst [vmem:[#allocation3 + $0xe0] sm:$0xff] 0.0
          %2158 = vst [vmem:[#allocation3 + $0xe8] sm:$0xff] 0.0
          %2159 = vst [vmem:[#allocation3 + $0xf0] sm:$0xff] 0.0
          %2160 = vst [vmem:[#allocation3 + $0xf8] sm:$0xff] 0.0
          %2161 = vst [vmem:[#allocation3 + $0x100] sm:$0xff] 0.0
          %2162 = vst [vmem:[#allocation3 + $0x108] sm:$0xff] 0.0
          %2163 = vst [vmem:[#allocation3 + $0x110] sm:$0xff] 0.0
          %2164 = vst [vmem:[#allocation3 + $0x118] sm:$0xff] 0.0
          %2165 = vst [vmem:[#allocation3 + $0x120] sm:$0xff] 0.0
          %2166 = vst [vmem:[#allocation3 + $0x128] sm:$0xff] 0.0
          %2167 = vst [vmem:[#allocation3 + $0x130] sm:$0xff] 0.0
          %2168 = vst [vmem:[#allocation3 + $0x138] sm:$0xff] 0.0
          %2169 = vst [vmem:[#allocation3 + $0x140] sm:$0xff] 0.0
          %2170 = vst [vmem:[#allocation3 + $0x148] sm:$0xff] 0.0
          %2171 = vst [vmem:[#allocation3 + $0x150] sm:$0xff] 0.0
          %2172 = vst [vmem:[#allocation3 + $0x158] sm:$0xff] 0.0
          %2173 = vst [vmem:[#allocation3 + $0x160] sm:$0xff] 0.0
          %2174 = vst [vmem:[#allocation3 + $0x168] sm:$0xff] 0.0
          %2175 = vst [vmem:[#allocation3 + $0x170] sm:$0xff] 0.0
          %2176 = vst [vmem:[#allocation3 + $0x178] sm:$0xff] 0.0
          %2177 = vst [vmem:[#allocation3 + $0x180] sm:$0xff] 0.0
          %2178 = vst [vmem:[#allocation3 + $0x188] sm:$0xff] 0.0
          %2179 = vst [vmem:[#allocation3 + $0x190] sm:$0xff] 0.0
          %2180 = vst [vmem:[#allocation3 + $0x198] sm:$0xff] 0.0
          %2181 = vst [vmem:[#allocation3 + $0x1a0] sm:$0xff] 0.0
          %2182 = vst [vmem:[#allocation3 + $0x1a8] sm:$0xff] 0.0
          %2183 = vst [vmem:[#allocation3 + $0x1b0] sm:$0xff] 0.0
          %2184 = vst [vmem:[#allocation3 + $0x1b8] sm:$0xff] 0.0
          %2185 = vst [vmem:[#allocation3 + $0x1c0] sm:$0xff] 0.0
          %2186 = vst [vmem:[#allocation3 + $0x1c8] sm:$0xff] 0.0
          %2187 = vst [vmem:[#allocation3 + $0x1d0] sm:$0xff] 0.0
          %2188 = vst [vmem:[#allocation3 + $0x1d8] sm:$0xff] 0.0
          %2189 = vst [vmem:[#allocation3 + $0x1e0] sm:$0xff] 0.0
          %2190 = vst [vmem:[#allocation3 + $0x1e8] sm:$0xff] 0.0
          %2191 = vst [vmem:[#allocation3 + $0x1f0] sm:$0xff] 0.0
          %2192 = vst [vmem:[#allocation3 + $0x1f8] sm:$0xff] 0.0
          %2193 = vst [vmem:[#allocation3 + $0x200] sm:$0xff] 0.0
          %2194 = vst [vmem:[#allocation3 + $0x208] sm:$0xff] 0.0
          %2195 = vst [vmem:[#allocation3 + $0x210] sm:$0xff] 0.0
          %2196 = vst [vmem:[#allocation3 + $0x218] sm:$0xff] 0.0
          %2197 = vst [vmem:[#allocation3 + $0x220] sm:$0xff] 0.0
          %2198 = vst [vmem:[#allocation3 + $0x228] sm:$0xff] 0.0
          %2199 = vst [vmem:[#allocation3 + $0x230] sm:$0xff] 0.0
          %2200 = vst [vmem:[#allocation3 + $0x238] sm:$0xff] 0.0
          %2201 = vst [vmem:[#allocation3 + $0x240] sm:$0xff] 0.0
          %2202 = vst [vmem:[#allocation3 + $0x248] sm:$0xff] 0.0
          %2203 = vst [vmem:[#allocation3 + $0x250] sm:$0xff] 0.0
          %2204 = vst [vmem:[#allocation3 + $0x258] sm:$0xff] 0.0
          %2205 = vst [vmem:[#allocation3 + $0x260] sm:$0xff] 0.0
          %2206 = vst [vmem:[#allocation3 + $0x268] sm:$0xff] 0.0
          %2207 = vst [vmem:[#allocation3 + $0x270] sm:$0xff] 0.0
          %2208 = vst [vmem:[#allocation3 + $0x278] sm:$0xff] 0.0
          %2209 = vst [vmem:[#allocation3 + $0x280] sm:$0xff] 0.0
          %2210 = vst [vmem:[#allocation3 + $0x288] sm:$0xff] 0.0
          %2211 = vst [vmem:[#allocation3 + $0x290] sm:$0xff] 0.0
          %2212 = vst [vmem:[#allocation3 + $0x298] sm:$0xff] 0.0
          %2213 = vst [vmem:[#allocation3 + $0x2a0] sm:$0xff] 0.0
          %2214 = vst [vmem:[#allocation3 + $0x2a8] sm:$0xff] 0.0
          %2215 = vst [vmem:[#allocation3 + $0x2b0] sm:$0xff] 0.0
          %2216 = vst [vmem:[#allocation3 + $0x2b8] sm:$0xff] 0.0
          %2217 = vst [vmem:[#allocation3 + $0x2c0] sm:$0xff] 0.0
          %2218 = vst [vmem:[#allocation3 + $0x2c8] sm:$0xff] 0.0
          %2219 = vst [vmem:[#allocation3 + $0x2d0] sm:$0xff] 0.0
          %2220 = vst [vmem:[#allocation3 + $0x2d8] sm:$0xff] 0.0
          %2221 = vst [vmem:[#allocation3 + $0x2e0] sm:$0xff] 0.0
          %2222 = vst [vmem:[#allocation3 + $0x2e8] sm:$0xff] 0.0
          %2223 = vst [vmem:[#allocation3 + $0x2f0] sm:$0xff] 0.0
          %2224 = vst [vmem:[#allocation3 + $0x2f8] sm:$0xff] 0.0
          %2225 = vst [vmem:[#allocation3 + $0x300] sm:$0xff] 0.0
          %2226 = vst [vmem:[#allocation3 + $0x308] sm:$0xff] 0.0
          %2227 = vst [vmem:[#allocation3 + $0x310] sm:$0xff] 0.0
          %2228 = vst [vmem:[#allocation3 + $0x318] sm:$0xff] 0.0
          %2229 = vst [vmem:[#allocation3 + $0x320] sm:$0xff] 0.0
          %2230 = vst [vmem:[#allocation3 + $0x328] sm:$0xff] 0.0
          %2231 = vst [vmem:[#allocation3 + $0x330] sm:$0xff] 0.0
          %2232 = vst [vmem:[#allocation3 + $0x338] sm:$0xff] 0.0
          %2233 = vst [vmem:[#allocation3 + $0x340] sm:$0xff] 0.0
          %2234 = vst [vmem:[#allocation3 + $0x348] sm:$0xff] 0.0
          %2235 = vst [vmem:[#allocation3 + $0x350] sm:$0xff] 0.0
          %2236 = vst [vmem:[#allocation3 + $0x358] sm:$0xff] 0.0
          %2237 = vst [vmem:[#allocation3 + $0x360] sm:$0xff] 0.0
          %2238 = vst [vmem:[#allocation3 + $0x368] sm:$0xff] 0.0
          %2239 = vst [vmem:[#allocation3 + $0x370] sm:$0xff] 0.0
          %2240 = vst [vmem:[#allocation3 + $0x378] sm:$0xff] 0.0
          %2241 = vst [vmem:[#allocation3 + $0x380] sm:$0xff] 0.0
          %2242 = vst [vmem:[#allocation3 + $0x388] sm:$0xff] 0.0
          %2243 = vst [vmem:[#allocation3 + $0x390] sm:$0xff] 0.0
          %2244 = vst [vmem:[#allocation3 + $0x398] sm:$0xff] 0.0
          %2245 = vst [vmem:[#allocation3 + $0x3a0] sm:$0xff] 0.0
          %2246 = vst [vmem:[#allocation3 + $0x3a8] sm:$0xff] 0.0
          %2247 = vst [vmem:[#allocation3 + $0x3b0] sm:$0xff] 0.0
          %2248 = vst [vmem:[#allocation3 + $0x3b8] sm:$0xff] 0.0
          %2249 = vst [vmem:[#allocation3 + $0x3c0] sm:$0xff] 0.0
          %2250 = vst [vmem:[#allocation3 + $0x3c8] sm:$0xff] 0.0
          %2251 = vst [vmem:[#allocation3 + $0x3d0] sm:$0xff] 0.0
          %2252 = vst [vmem:[#allocation3 + $0x3d8] sm:$0xff] 0.0
          %2253 = vst [vmem:[#allocation3 + $0x3e0] sm:$0xff] 0.0
          %2254 = vst [vmem:[#allocation3 + $0x3e8] sm:$0xff] 0.0
          %2255 = vst [vmem:[#allocation3 + $0x3f0] sm:$0xff] 0.0
          %2256 = vst [vmem:[#allocation3 + $0x3f8] sm:$0xff] 0.0
        $region80: #{tpu_custom_call.1} parent=47 // pred_fallthru
          _
        %v2257 = vld [vmem:[#allocation2] sm:$0xff]
        %v2258 = vld [vmem:[#allocation2 + $0x8] sm:$0xff]
        %v2259 = vld [vmem:[#allocation2 + $0x10] sm:$0xff]
        %v2260 = vld [vmem:[#allocation2 + $0x18] sm:$0xff]
        %v2261 = vld [vmem:[#allocation2 + $0x20] sm:$0xff]
        %v2262 = vld [vmem:[#allocation2 + $0x28] sm:$0xff]
        %v2263 = vld [vmem:[#allocation2 + $0x30] sm:$0xff]
        %v2264 = vld [vmem:[#allocation2 + $0x38] sm:$0xff]
        %v2265 = vld [vmem:[#allocation2 + $0x40] sm:$0xff]
        %v2266 = vld [vmem:[#allocation2 + $0x48] sm:$0xff]
        %v2267 = vld [vmem:[#allocation2 + $0x50] sm:$0xff]
        %v2268 = vld [vmem:[#allocation2 + $0x58] sm:$0xff]
        %v2269 = vld [vmem:[#allocation2 + $0x60] sm:$0xff]
        %v2270 = vld [vmem:[#allocation2 + $0x68] sm:$0xff]
        %v2271 = vld [vmem:[#allocation2 + $0x70] sm:$0xff]
        %v2272 = vld [vmem:[#allocation2 + $0x78] sm:$0xff]
        %v2273 = vld [vmem:[#allocation2 + $0x80] sm:$0xff]
        %v2274 = vld [vmem:[#allocation2 + $0x88] sm:$0xff]
        %v2275 = vld [vmem:[#allocation2 + $0x90] sm:$0xff]
        %v2276 = vld [vmem:[#allocation2 + $0x98] sm:$0xff]
        %v2277 = vld [vmem:[#allocation2 + $0xa0] sm:$0xff]
        %v2278 = vld [vmem:[#allocation2 + $0xa8] sm:$0xff]
        %v2279 = vld [vmem:[#allocation2 + $0xb0] sm:$0xff]
        %v2280 = vld [vmem:[#allocation2 + $0xb8] sm:$0xff]
        %v2281 = vld [vmem:[#allocation2 + $0xc0] sm:$0xff]
        %v2282 = vld [vmem:[#allocation2 + $0xc8] sm:$0xff]
        %v2283 = vld [vmem:[#allocation2 + $0xd0] sm:$0xff]
        %v2284 = vld [vmem:[#allocation2 + $0xd8] sm:$0xff]
        %v2285 = vld [vmem:[#allocation2 + $0xe0] sm:$0xff]
        %v2286 = vld [vmem:[#allocation2 + $0xe8] sm:$0xff]
        %v2287 = vld [vmem:[#allocation2 + $0xf0] sm:$0xff]
        %v2288 = vld [vmem:[#allocation2 + $0xf8] sm:$0xff]
        %v2289 = vld [vmem:[#allocation2 + $0x100] sm:$0xff]
        %v2290 = vld [vmem:[#allocation2 + $0x108] sm:$0xff]
        %v2291 = vld [vmem:[#allocation2 + $0x110] sm:$0xff]
        %v2292 = vld [vmem:[#allocation2 + $0x118] sm:$0xff]
        %v2293 = vld [vmem:[#allocation2 + $0x120] sm:$0xff]
        %v2294 = vld [vmem:[#allocation2 + $0x128] sm:$0xff]
        %v2295 = vld [vmem:[#allocation2 + $0x130] sm:$0xff]
        %v2296 = vld [vmem:[#allocation2 + $0x138] sm:$0xff]
        %v2297 = vld [vmem:[#allocation2 + $0x140] sm:$0xff]
        %v2298 = vld [vmem:[#allocation2 + $0x148] sm:$0xff]
        %v2299 = vld [vmem:[#allocation2 + $0x150] sm:$0xff]
        %v2300 = vld [vmem:[#allocation2 + $0x158] sm:$0xff]
        %v2301 = vld [vmem:[#allocation2 + $0x160] sm:$0xff]
        %v2302 = vld [vmem:[#allocation2 + $0x168] sm:$0xff]
        %v2303 = vld [vmem:[#allocation2 + $0x170] sm:$0xff]
        %v2304 = vld [vmem:[#allocation2 + $0x178] sm:$0xff]
        %v2305 = vld [vmem:[#allocation2 + $0x180] sm:$0xff]
        %v2306 = vld [vmem:[#allocation2 + $0x188] sm:$0xff]
        %v2307 = vld [vmem:[#allocation2 + $0x190] sm:$0xff]
        %v2308 = vld [vmem:[#allocation2 + $0x198] sm:$0xff]
        %v2309 = vld [vmem:[#allocation2 + $0x1a0] sm:$0xff]
        %v2310 = vld [vmem:[#allocation2 + $0x1a8] sm:$0xff]
        %v2311 = vld [vmem:[#allocation2 + $0x1b0] sm:$0xff]
        %v2312 = vld [vmem:[#allocation2 + $0x1b8] sm:$0xff]
        %v2313 = vld [vmem:[#allocation2 + $0x1c0] sm:$0xff]
        %v2314 = vld [vmem:[#allocation2 + $0x1c8] sm:$0xff]
        %v2315 = vld [vmem:[#allocation2 + $0x1d0] sm:$0xff]
        %v2316 = vld [vmem:[#allocation2 + $0x1d8] sm:$0xff]
        %v2317 = vld [vmem:[#allocation2 + $0x1e0] sm:$0xff]
        %v2318 = vld [vmem:[#allocation2 + $0x1e8] sm:$0xff]
        %v2319 = vld [vmem:[#allocation2 + $0x1f0] sm:$0xff]
        %v2320 = vld [vmem:[#allocation2 + $0x1f8] sm:$0xff]
        %v2321 = vld [vmem:[%s355] sm:$0xff]
        %v2322 = vld [vmem:[%s355 + $0x8] sm:$0xff]
        %v2323 = vld [vmem:[%s355 + $0x10] sm:$0xff]
        %v2324 = vld [vmem:[%s355 + $0x18] sm:$0xff]
        %v2325 = vld [vmem:[%s355 + $0x20] sm:$0xff]
        %v2326 = vld [vmem:[%s355 + $0x28] sm:$0xff]
        %v2327 = vld [vmem:[%s355 + $0x30] sm:$0xff]
        %v2328 = vld [vmem:[%s355 + $0x38] sm:$0xff]
        %v2329 = vld [vmem:[%s355 + $0x40] sm:$0xff]
        %v2330 = vld [vmem:[%s355 + $0x48] sm:$0xff]
        %v2331 = vld [vmem:[%s355 + $0x50] sm:$0xff]
        %v2332 = vld [vmem:[%s355 + $0x58] sm:$0xff]
        %v2333 = vld [vmem:[%s355 + $0x60] sm:$0xff]
        %v2334 = vld [vmem:[%s355 + $0x68] sm:$0xff]
        %v2335 = vld [vmem:[%s355 + $0x70] sm:$0xff]
        %v2336 = vld [vmem:[%s355 + $0x78] sm:$0xff]
        %v2337 = vld [vmem:[%s355 + $0x80] sm:$0xff]
        %v2338 = vld [vmem:[%s355 + $0x88] sm:$0xff]
        %v2339 = vld [vmem:[%s355 + $0x90] sm:$0xff]
        %v2340 = vld [vmem:[%s355 + $0x98] sm:$0xff]
        %v2341 = vld [vmem:[%s355 + $0xa0] sm:$0xff]
        %v2342 = vld [vmem:[%s355 + $0xa8] sm:$0xff]
        %v2343 = vld [vmem:[%s355 + $0xb0] sm:$0xff]
        %v2344 = vld [vmem:[%s355 + $0xb8] sm:$0xff]
        %v2345 = vld [vmem:[%s355 + $0xc0] sm:$0xff]
        %v2346 = vld [vmem:[%s355 + $0xc8] sm:$0xff]
        %v2347 = vld [vmem:[%s355 + $0xd0] sm:$0xff]
        %v2348 = vld [vmem:[%s355 + $0xd8] sm:$0xff]
        %v2349 = vld [vmem:[%s355 + $0xe0] sm:$0xff]
        %v2350 = vld [vmem:[%s355 + $0xe8] sm:$0xff]
        %v2351 = vld [vmem:[%s355 + $0xf0] sm:$0xff]
        %v2352 = vld [vmem:[%s355 + $0xf8] sm:$0xff]
        %v2353 = vld [vmem:[%s355 + $0x100] sm:$0xff]
        %v2354 = vld [vmem:[%s355 + $0x108] sm:$0xff]
        %v2355 = vld [vmem:[%s355 + $0x110] sm:$0xff]
        %v2356 = vld [vmem:[%s355 + $0x118] sm:$0xff]
        %v2357 = vld [vmem:[%s355 + $0x120] sm:$0xff]
        %v2358 = vld [vmem:[%s355 + $0x128] sm:$0xff]
        %v2359 = vld [vmem:[%s355 + $0x130] sm:$0xff]
        %v2360 = vld [vmem:[%s355 + $0x138] sm:$0xff]
        %v2361 = vld [vmem:[%s355 + $0x140] sm:$0xff]
        %v2362 = vld [vmem:[%s355 + $0x148] sm:$0xff]
        %v2363 = vld [vmem:[%s355 + $0x150] sm:$0xff]
        %v2364 = vld [vmem:[%s355 + $0x158] sm:$0xff]
        %v2365 = vld [vmem:[%s355 + $0x160] sm:$0xff]
        %v2366 = vld [vmem:[%s355 + $0x168] sm:$0xff]
        %v2367 = vld [vmem:[%s355 + $0x170] sm:$0xff]
        %v2368 = vld [vmem:[%s355 + $0x178] sm:$0xff]
        %v2369 = vld [vmem:[%s355 + $0x180] sm:$0xff]
        %v2370 = vld [vmem:[%s355 + $0x188] sm:$0xff]
        %v2371 = vld [vmem:[%s355 + $0x190] sm:$0xff]
        %v2372 = vld [vmem:[%s355 + $0x198] sm:$0xff]
        %v2373 = vld [vmem:[%s355 + $0x1a0] sm:$0xff]
        %v2374 = vld [vmem:[%s355 + $0x1a8] sm:$0xff]
        %v2375 = vld [vmem:[%s355 + $0x1b0] sm:$0xff]
        %v2376 = vld [vmem:[%s355 + $0x1b8] sm:$0xff]
        %v2377 = vld [vmem:[%s355 + $0x1c0] sm:$0xff]
        %v2378 = vld [vmem:[%s355 + $0x1c8] sm:$0xff]
        %v2379 = vld [vmem:[%s355 + $0x1d0] sm:$0xff]
        %v2380 = vld [vmem:[%s355 + $0x1d8] sm:$0xff]
        %v2381 = vld [vmem:[%s355 + $0x1e0] sm:$0xff]
        %v2382 = vld [vmem:[%s355 + $0x1e8] sm:$0xff]
        %v2383 = vld [vmem:[%s355 + $0x1f0] sm:$0xff]
        %v2384 = vld [vmem:[%s355 + $0x1f8] sm:$0xff]
        %v2385 = vld [vmem:[%s355 + $0x200] sm:$0xff]
        %v2386 = vld [vmem:[%s355 + $0x208] sm:$0xff]
        %v2387 = vld [vmem:[%s355 + $0x210] sm:$0xff]
        %v2388 = vld [vmem:[%s355 + $0x218] sm:$0xff]
        %v2389 = vld [vmem:[%s355 + $0x220] sm:$0xff]
        %v2390 = vld [vmem:[%s355 + $0x228] sm:$0xff]
        %v2391 = vld [vmem:[%s355 + $0x230] sm:$0xff]
        %v2392 = vld [vmem:[%s355 + $0x238] sm:$0xff]
        %v2393 = vld [vmem:[%s355 + $0x240] sm:$0xff]
        %v2394 = vld [vmem:[%s355 + $0x248] sm:$0xff]
        %v2395 = vld [vmem:[%s355 + $0x250] sm:$0xff]
        %v2396 = vld [vmem:[%s355 + $0x258] sm:$0xff]
        %v2397 = vld [vmem:[%s355 + $0x260] sm:$0xff]
        %v2398 = vld [vmem:[%s355 + $0x268] sm:$0xff]
        %v2399 = vld [vmem:[%s355 + $0x270] sm:$0xff]
        %v2400 = vld [vmem:[%s355 + $0x278] sm:$0xff]
        %v2401 = vld [vmem:[%s355 + $0x280] sm:$0xff]
        %v2402 = vld [vmem:[%s355 + $0x288] sm:$0xff]
        %v2403 = vld [vmem:[%s355 + $0x290] sm:$0xff]
        %v2404 = vld [vmem:[%s355 + $0x298] sm:$0xff]
        %v2405 = vld [vmem:[%s355 + $0x2a0] sm:$0xff]
        %v2406 = vld [vmem:[%s355 + $0x2a8] sm:$0xff]
        %v2407 = vld [vmem:[%s355 + $0x2b0] sm:$0xff]
        %v2408 = vld [vmem:[%s355 + $0x2b8] sm:$0xff]
        %v2409 = vld [vmem:[%s355 + $0x2c0] sm:$0xff]
        %v2410 = vld [vmem:[%s355 + $0x2c8] sm:$0xff]
        %v2411 = vld [vmem:[%s355 + $0x2d0] sm:$0xff]
        %v2412 = vld [vmem:[%s355 + $0x2d8] sm:$0xff]
        %v2413 = vld [vmem:[%s355 + $0x2e0] sm:$0xff]
        %v2414 = vld [vmem:[%s355 + $0x2e8] sm:$0xff]
        %v2415 = vld [vmem:[%s355 + $0x2f0] sm:$0xff]
        %v2416 = vld [vmem:[%s355 + $0x2f8] sm:$0xff]
        %v2417 = vld [vmem:[%s355 + $0x300] sm:$0xff]
        %v2418 = vld [vmem:[%s355 + $0x308] sm:$0xff]
        %v2419 = vld [vmem:[%s355 + $0x310] sm:$0xff]
        %v2420 = vld [vmem:[%s355 + $0x318] sm:$0xff]
        %v2421 = vld [vmem:[%s355 + $0x320] sm:$0xff]
        %v2422 = vld [vmem:[%s355 + $0x328] sm:$0xff]
        %v2423 = vld [vmem:[%s355 + $0x330] sm:$0xff]
        %v2424 = vld [vmem:[%s355 + $0x338] sm:$0xff]
        %v2425 = vld [vmem:[%s355 + $0x340] sm:$0xff]
        %v2426 = vld [vmem:[%s355 + $0x348] sm:$0xff]
        %v2427 = vld [vmem:[%s355 + $0x350] sm:$0xff]
        %v2428 = vld [vmem:[%s355 + $0x358] sm:$0xff]
        %v2429 = vld [vmem:[%s355 + $0x360] sm:$0xff]
        %v2430 = vld [vmem:[%s355 + $0x368] sm:$0xff]
        %v2431 = vld [vmem:[%s355 + $0x370] sm:$0xff]
        %v2432 = vld [vmem:[%s355 + $0x378] sm:$0xff]
        %v2433 = vld [vmem:[%s355 + $0x380] sm:$0xff]
        %v2434 = vld [vmem:[%s355 + $0x388] sm:$0xff]
        %v2435 = vld [vmem:[%s355 + $0x390] sm:$0xff]
        %v2436 = vld [vmem:[%s355 + $0x398] sm:$0xff]
        %v2437 = vld [vmem:[%s355 + $0x3a0] sm:$0xff]
        %v2438 = vld [vmem:[%s355 + $0x3a8] sm:$0xff]
        %v2439 = vld [vmem:[%s355 + $0x3b0] sm:$0xff]
        %v2440 = vld [vmem:[%s355 + $0x3b8] sm:$0xff]
        %v2441 = vld [vmem:[%s355 + $0x3c0] sm:$0xff]
        %v2442 = vld [vmem:[%s355 + $0x3c8] sm:$0xff]
        %v2443 = vld [vmem:[%s355 + $0x3d0] sm:$0xff]
        %v2444 = vld [vmem:[%s355 + $0x3d8] sm:$0xff]
        %v2445 = vld [vmem:[%s355 + $0x3e0] sm:$0xff]
        %v2446 = vld [vmem:[%s355 + $0x3e8] sm:$0xff]
        %v2447 = vld [vmem:[%s355 + $0x3f0] sm:$0xff]
        %v2448 = vld [vmem:[%s355 + $0x3f8] sm:$0xff]
        %v2449 = vld [vmem:[%s355 + $0x400] sm:$0xff]
        %v2450 = vld [vmem:[%s355 + $0x408] sm:$0xff]
        %v2451 = vld [vmem:[%s355 + $0x410] sm:$0xff]
        %v2452 = vld [vmem:[%s355 + $0x418] sm:$0xff]
        %v2453 = vld [vmem:[%s355 + $0x420] sm:$0xff]
        %v2454 = vld [vmem:[%s355 + $0x428] sm:$0xff]
        %v2455 = vld [vmem:[%s355 + $0x430] sm:$0xff]
        %v2456 = vld [vmem:[%s355 + $0x438] sm:$0xff]
        %v2457 = vld [vmem:[%s355 + $0x440] sm:$0xff]
        %v2458 = vld [vmem:[%s355 + $0x448] sm:$0xff]
        %v2459 = vld [vmem:[%s355 + $0x450] sm:$0xff]
        %v2460 = vld [vmem:[%s355 + $0x458] sm:$0xff]
        %v2461 = vld [vmem:[%s355 + $0x460] sm:$0xff]
        %v2462 = vld [vmem:[%s355 + $0x468] sm:$0xff]
        %v2463 = vld [vmem:[%s355 + $0x470] sm:$0xff]
        %v2464 = vld [vmem:[%s355 + $0x478] sm:$0xff]
        %v2465 = vld [vmem:[%s355 + $0x480] sm:$0xff]
        %v2466 = vld [vmem:[%s355 + $0x488] sm:$0xff]
        %v2467 = vld [vmem:[%s355 + $0x490] sm:$0xff]
        %v2468 = vld [vmem:[%s355 + $0x498] sm:$0xff]
        %v2469 = vld [vmem:[%s355 + $0x4a0] sm:$0xff]
        %v2470 = vld [vmem:[%s355 + $0x4a8] sm:$0xff]
        %v2471 = vld [vmem:[%s355 + $0x4b0] sm:$0xff]
        %v2472 = vld [vmem:[%s355 + $0x4b8] sm:$0xff]
        %v2473 = vld [vmem:[%s355 + $0x4c0] sm:$0xff]
        %v2474 = vld [vmem:[%s355 + $0x4c8] sm:$0xff]
        %v2475 = vld [vmem:[%s355 + $0x4d0] sm:$0xff]
        %v2476 = vld [vmem:[%s355 + $0x4d8] sm:$0xff]
        %v2477 = vld [vmem:[%s355 + $0x4e0] sm:$0xff]
        %v2478 = vld [vmem:[%s355 + $0x4e8] sm:$0xff]
        %v2479 = vld [vmem:[%s355 + $0x4f0] sm:$0xff]
        %v2480 = vld [vmem:[%s355 + $0x4f8] sm:$0xff]
        %v2481 = vld [vmem:[%s355 + $0x500] sm:$0xff]
        %v2482 = vld [vmem:[%s355 + $0x508] sm:$0xff]
        %v2483 = vld [vmem:[%s355 + $0x510] sm:$0xff]
        %v2484 = vld [vmem:[%s355 + $0x518] sm:$0xff]
        %v2485 = vld [vmem:[%s355 + $0x520] sm:$0xff]
        %v2486 = vld [vmem:[%s355 + $0x528] sm:$0xff]
        %v2487 = vld [vmem:[%s355 + $0x530] sm:$0xff]
        %v2488 = vld [vmem:[%s355 + $0x538] sm:$0xff]
        %v2489 = vld [vmem:[%s355 + $0x540] sm:$0xff]
        %v2490 = vld [vmem:[%s355 + $0x548] sm:$0xff]
        %v2491 = vld [vmem:[%s355 + $0x550] sm:$0xff]
        %v2492 = vld [vmem:[%s355 + $0x558] sm:$0xff]
        %v2493 = vld [vmem:[%s355 + $0x560] sm:$0xff]
        %v2494 = vld [vmem:[%s355 + $0x568] sm:$0xff]
        %v2495 = vld [vmem:[%s355 + $0x570] sm:$0xff]
        %v2496 = vld [vmem:[%s355 + $0x578] sm:$0xff]
        %v2497 = vld [vmem:[%s355 + $0x580] sm:$0xff]
        %v2498 = vld [vmem:[%s355 + $0x588] sm:$0xff]
        %v2499 = vld [vmem:[%s355 + $0x590] sm:$0xff]
        %v2500 = vld [vmem:[%s355 + $0x598] sm:$0xff]
        %v2501 = vld [vmem:[%s355 + $0x5a0] sm:$0xff]
        %v2502 = vld [vmem:[%s355 + $0x5a8] sm:$0xff]
        %v2503 = vld [vmem:[%s355 + $0x5b0] sm:$0xff]
        %v2504 = vld [vmem:[%s355 + $0x5b8] sm:$0xff]
        %v2505 = vld [vmem:[%s355 + $0x5c0] sm:$0xff]
        %v2506 = vld [vmem:[%s355 + $0x5c8] sm:$0xff]
        %v2507 = vld [vmem:[%s355 + $0x5d0] sm:$0xff]
        %v2508 = vld [vmem:[%s355 + $0x5d8] sm:$0xff]
        %v2509 = vld [vmem:[%s355 + $0x5e0] sm:$0xff]
        %v2510 = vld [vmem:[%s355 + $0x5e8] sm:$0xff]
        %v2511 = vld [vmem:[%s355 + $0x5f0] sm:$0xff]
        %v2512 = vld [vmem:[%s355 + $0x5f8] sm:$0xff]
        %v2513 = vld [vmem:[%s355 + $0x600] sm:$0xff]
        %v2514 = vld [vmem:[%s355 + $0x608] sm:$0xff]
        %v2515 = vld [vmem:[%s355 + $0x610] sm:$0xff]
        %v2516 = vld [vmem:[%s355 + $0x618] sm:$0xff]
        %v2517 = vld [vmem:[%s355 + $0x620] sm:$0xff]
        %v2518 = vld [vmem:[%s355 + $0x628] sm:$0xff]
        %v2519 = vld [vmem:[%s355 + $0x630] sm:$0xff]
        %v2520 = vld [vmem:[%s355 + $0x638] sm:$0xff]
        %v2521 = vld [vmem:[%s355 + $0x640] sm:$0xff]
        %v2522 = vld [vmem:[%s355 + $0x648] sm:$0xff]
        %v2523 = vld [vmem:[%s355 + $0x650] sm:$0xff]
        %v2524 = vld [vmem:[%s355 + $0x658] sm:$0xff]
        %v2525 = vld [vmem:[%s355 + $0x660] sm:$0xff]
        %v2526 = vld [vmem:[%s355 + $0x668] sm:$0xff]
        %v2527 = vld [vmem:[%s355 + $0x670] sm:$0xff]
        %v2528 = vld [vmem:[%s355 + $0x678] sm:$0xff]
        %v2529 = vld [vmem:[%s355 + $0x680] sm:$0xff]
        %v2530 = vld [vmem:[%s355 + $0x688] sm:$0xff]
        %v2531 = vld [vmem:[%s355 + $0x690] sm:$0xff]
        %v2532 = vld [vmem:[%s355 + $0x698] sm:$0xff]
        %v2533 = vld [vmem:[%s355 + $0x6a0] sm:$0xff]
        %v2534 = vld [vmem:[%s355 + $0x6a8] sm:$0xff]
        %v2535 = vld [vmem:[%s355 + $0x6b0] sm:$0xff]
        %v2536 = vld [vmem:[%s355 + $0x6b8] sm:$0xff]
        %v2537 = vld [vmem:[%s355 + $0x6c0] sm:$0xff]
        %v2538 = vld [vmem:[%s355 + $0x6c8] sm:$0xff]
        %v2539 = vld [vmem:[%s355 + $0x6d0] sm:$0xff]
        %v2540 = vld [vmem:[%s355 + $0x6d8] sm:$0xff]
        %v2541 = vld [vmem:[%s355 + $0x6e0] sm:$0xff]
        %v2542 = vld [vmem:[%s355 + $0x6e8] sm:$0xff]
        %v2543 = vld [vmem:[%s355 + $0x6f0] sm:$0xff]
        %v2544 = vld [vmem:[%s355 + $0x6f8] sm:$0xff]
        %v2545 = vld [vmem:[%s355 + $0x700] sm:$0xff]
        %v2546 = vld [vmem:[%s355 + $0x708] sm:$0xff]
        %v2547 = vld [vmem:[%s355 + $0x710] sm:$0xff]
        %v2548 = vld [vmem:[%s355 + $0x718] sm:$0xff]
        %v2549 = vld [vmem:[%s355 + $0x720] sm:$0xff]
        %v2550 = vld [vmem:[%s355 + $0x728] sm:$0xff]
        %v2551 = vld [vmem:[%s355 + $0x730] sm:$0xff]
        %v2552 = vld [vmem:[%s355 + $0x738] sm:$0xff]
        %v2553 = vld [vmem:[%s355 + $0x740] sm:$0xff]
        %v2554 = vld [vmem:[%s355 + $0x748] sm:$0xff]
        %v2555 = vld [vmem:[%s355 + $0x750] sm:$0xff]
        %v2556 = vld [vmem:[%s355 + $0x758] sm:$0xff]
        %v2557 = vld [vmem:[%s355 + $0x760] sm:$0xff]
        %v2558 = vld [vmem:[%s355 + $0x768] sm:$0xff]
        %v2559 = vld [vmem:[%s355 + $0x770] sm:$0xff]
        %v2560 = vld [vmem:[%s355 + $0x778] sm:$0xff]
        %v2561 = vld [vmem:[%s355 + $0x780] sm:$0xff]
        %v2562 = vld [vmem:[%s355 + $0x788] sm:$0xff]
        %v2563 = vld [vmem:[%s355 + $0x790] sm:$0xff]
        %v2564 = vld [vmem:[%s355 + $0x798] sm:$0xff]
        %v2565 = vld [vmem:[%s355 + $0x7a0] sm:$0xff]
        %v2566 = vld [vmem:[%s355 + $0x7a8] sm:$0xff]
        %v2567 = vld [vmem:[%s355 + $0x7b0] sm:$0xff]
        %v2568 = vld [vmem:[%s355 + $0x7b8] sm:$0xff]
        %v2569 = vld [vmem:[%s355 + $0x7c0] sm:$0xff]
        %v2570 = vld [vmem:[%s355 + $0x7c8] sm:$0xff]
        %v2571 = vld [vmem:[%s355 + $0x7d0] sm:$0xff]
        %v2572 = vld [vmem:[%s355 + $0x7d8] sm:$0xff]
        %v2573 = vld [vmem:[%s355 + $0x7e0] sm:$0xff]
        %v2574 = vld [vmem:[%s355 + $0x7e8] sm:$0xff]
        %v2575 = vld [vmem:[%s355 + $0x7f0] sm:$0xff]
        %v2576 = vld [vmem:[%s355 + $0x7f8] sm:$0xff]
        %v2577 = vld [vmem:[%s364] sm:$0xff]
        %v2579 = vlaneseq
        %v2580 = vshrl.u32 %v2579, 7
        %v2581 = vsub.s32 0, %v2580
        %v2582 = vrot.slane %v2577, %v2581
        %v2583 = vlaneseq
        %v2584 = vshrl.u32 %v2583, 7
        %v2585 = vsub.s32 1, %v2584
        %v2586 = vrot.slane %v2577, %v2585
        %v2587 = vlaneseq
        %v2588 = vshrl.u32 %v2587, 7
        %v2589 = vsub.s32 2, %v2588
        %v2590 = vrot.slane %v2577, %v2589
        %v2591 = vlaneseq
        %v2592 = vshrl.u32 %v2591, 7
        %v2593 = vsub.s32 3, %v2592
        %v2594 = vrot.slane %v2577, %v2593
        %v2595 = vlaneseq
        %v2596 = vshrl.u32 %v2595, 7
        %v2597 = vsub.s32 4, %v2596
        %v2598 = vrot.slane %v2577, %v2597
        %v2599 = vlaneseq
        %v2600 = vshrl.u32 %v2599, 7
        %v2601 = vsub.s32 5, %v2600
        %v2602 = vrot.slane %v2577, %v2601
        %v2603 = vlaneseq
        %v2604 = vshrl.u32 %v2603, 7
        %v2605 = vsub.s32 6, %v2604
        %v2606 = vrot.slane %v2577, %v2605
        %v2607 = vlaneseq
        %v2608 = vshrl.u32 %v2607, 7
        %v2609 = vsub.s32 7, %v2608
        %v2610 = vrot.slane %v2577, %v2609
        %v2683 = vunpack.c.l.b16 %v2257
        %v2684 = vunpack.c.h.b16 %v2257
        %v2685 = vunpack.c.l.b16 %v2258
        %v2686 = vunpack.c.h.b16 %v2258
        %v2687 = vunpack.c.l.b16 %v2259
        %v2688 = vunpack.c.h.b16 %v2259
        %v2689 = vunpack.c.l.b16 %v2260
        %v2690 = vunpack.c.h.b16 %v2260
        %v2691 = vunpack.c.l.b16 %v2261
        %v2692 = vunpack.c.h.b16 %v2261
        %v2693 = vunpack.c.l.b16 %v2262
        %v2694 = vunpack.c.h.b16 %v2262
        %v2695 = vunpack.c.l.b16 %v2263
        %v2696 = vunpack.c.h.b16 %v2263
        %v2697 = vunpack.c.l.b16 %v2264
        %v2698 = vunpack.c.h.b16 %v2264
        %v2699 = vunpack.c.l.b16 %v2265
        %v2700 = vunpack.c.h.b16 %v2265
        %v2701 = vunpack.c.l.b16 %v2266
        %v2702 = vunpack.c.h.b16 %v2266
        %v2703 = vunpack.c.l.b16 %v2267
        %v2704 = vunpack.c.h.b16 %v2267
        %v2705 = vunpack.c.l.b16 %v2268
        %v2706 = vunpack.c.h.b16 %v2268
        %v2707 = vunpack.c.l.b16 %v2269
        %v2708 = vunpack.c.h.b16 %v2269
        %v2709 = vunpack.c.l.b16 %v2270
        %v2710 = vunpack.c.h.b16 %v2270
        %v2711 = vunpack.c.l.b16 %v2271
        %v2712 = vunpack.c.h.b16 %v2271
        %v2713 = vunpack.c.l.b16 %v2272
        %v2714 = vunpack.c.h.b16 %v2272
        %v2715 = vunpack.c.l.b16 %v2273
        %v2716 = vunpack.c.h.b16 %v2273
        %v2717 = vunpack.c.l.b16 %v2274
        %v2718 = vunpack.c.h.b16 %v2274
        %v2719 = vunpack.c.l.b16 %v2275
        %v2720 = vunpack.c.h.b16 %v2275
        %v2721 = vunpack.c.l.b16 %v2276
        %v2722 = vunpack.c.h.b16 %v2276
        %v2723 = vunpack.c.l.b16 %v2277
        %v2724 = vunpack.c.h.b16 %v2277
        %v2725 = vunpack.c.l.b16 %v2278
        %v2726 = vunpack.c.h.b16 %v2278
        %v2727 = vunpack.c.l.b16 %v2279
        %v2728 = vunpack.c.h.b16 %v2279
        %v2729 = vunpack.c.l.b16 %v2280
        %v2730 = vunpack.c.h.b16 %v2280
        %v2731 = vunpack.c.l.b16 %v2281
        %v2732 = vunpack.c.h.b16 %v2281
        %v2733 = vunpack.c.l.b16 %v2282
        %v2734 = vunpack.c.h.b16 %v2282
        %v2735 = vunpack.c.l.b16 %v2283
        %v2736 = vunpack.c.h.b16 %v2283
        %v2737 = vunpack.c.l.b16 %v2284
        %v2738 = vunpack.c.h.b16 %v2284
        %v2739 = vunpack.c.l.b16 %v2285
        %v2740 = vunpack.c.h.b16 %v2285
        %v2741 = vunpack.c.l.b16 %v2286
        %v2742 = vunpack.c.h.b16 %v2286
        %v2743 = vunpack.c.l.b16 %v2287
        %v2744 = vunpack.c.h.b16 %v2287
        %v2745 = vunpack.c.l.b16 %v2288
        %v2746 = vunpack.c.h.b16 %v2288
        %v2747 = vunpack.c.l.b16 %v2289
        %v2748 = vunpack.c.h.b16 %v2289
        %v2749 = vunpack.c.l.b16 %v2290
        %v2750 = vunpack.c.h.b16 %v2290
        %v2751 = vunpack.c.l.b16 %v2291
        %v2752 = vunpack.c.h.b16 %v2291
        %v2753 = vunpack.c.l.b16 %v2292
        %v2754 = vunpack.c.h.b16 %v2292
        %v2755 = vunpack.c.l.b16 %v2293
        %v2756 = vunpack.c.h.b16 %v2293
        %v2757 = vunpack.c.l.b16 %v2294
        %v2758 = vunpack.c.h.b16 %v2294
        %v2759 = vunpack.c.l.b16 %v2295
        %v2760 = vunpack.c.h.b16 %v2295
        %v2761 = vunpack.c.l.b16 %v2296
        %v2762 = vunpack.c.h.b16 %v2296
        %v2763 = vunpack.c.l.b16 %v2297
        %v2764 = vunpack.c.h.b16 %v2297
        %v2765 = vunpack.c.l.b16 %v2298
        %v2766 = vunpack.c.h.b16 %v2298
        %v2767 = vunpack.c.l.b16 %v2299
        %v2768 = vunpack.c.h.b16 %v2299
        %v2769 = vunpack.c.l.b16 %v2300
        %v2770 = vunpack.c.h.b16 %v2300
        %v2771 = vunpack.c.l.b16 %v2301
        %v2772 = vunpack.c.h.b16 %v2301
        %v2773 = vunpack.c.l.b16 %v2302
        %v2774 = vunpack.c.h.b16 %v2302
        %v2775 = vunpack.c.l.b16 %v2303
        %v2776 = vunpack.c.h.b16 %v2303
        %v2777 = vunpack.c.l.b16 %v2304
        %v2778 = vunpack.c.h.b16 %v2304
        %v2779 = vunpack.c.l.b16 %v2305
        %v2780 = vunpack.c.h.b16 %v2305
        %v2781 = vunpack.c.l.b16 %v2306
        %v2782 = vunpack.c.h.b16 %v2306
        %v2783 = vunpack.c.l.b16 %v2307
        %v2784 = vunpack.c.h.b16 %v2307
        %v2785 = vunpack.c.l.b16 %v2308
        %v2786 = vunpack.c.h.b16 %v2308
        %v2787 = vunpack.c.l.b16 %v2309
        %v2788 = vunpack.c.h.b16 %v2309
        %v2789 = vunpack.c.l.b16 %v2310
        %v2790 = vunpack.c.h.b16 %v2310
        %v2791 = vunpack.c.l.b16 %v2311
        %v2792 = vunpack.c.h.b16 %v2311
        %v2793 = vunpack.c.l.b16 %v2312
        %v2794 = vunpack.c.h.b16 %v2312
        %v2795 = vunpack.c.l.b16 %v2313
        %v2796 = vunpack.c.h.b16 %v2313
        %v2797 = vunpack.c.l.b16 %v2314
        %v2798 = vunpack.c.h.b16 %v2314
        %v2799 = vunpack.c.l.b16 %v2315
        %v2800 = vunpack.c.h.b16 %v2315
        %v2801 = vunpack.c.l.b16 %v2316
        %v2802 = vunpack.c.h.b16 %v2316
        %v2803 = vunpack.c.l.b16 %v2317
        %v2804 = vunpack.c.h.b16 %v2317
        %v2805 = vunpack.c.l.b16 %v2318
        %v2806 = vunpack.c.h.b16 %v2318
        %v2807 = vunpack.c.l.b16 %v2319
        %v2808 = vunpack.c.h.b16 %v2319
        %v2809 = vunpack.c.l.b16 %v2320
        %v2810 = vunpack.c.h.b16 %v2320
        %v2811 = vpack.c.b16 %v2687, %v2683
        %v2812 = vpack.c.b16 %v2688, %v2684
        %v2813 = vpack.c.b16 %v2689, %v2685
        %v2814 = vpack.c.b16 %v2690, %v2686
        %v2815 = vpack.c.b16 %v2695, %v2691
        %v2816 = vpack.c.b16 %v2696, %v2692
        %v2817 = vpack.c.b16 %v2697, %v2693
        %v2818 = vpack.c.b16 %v2698, %v2694
        %v2819 = vpack.c.b16 %v2703, %v2699
        %v2820 = vpack.c.b16 %v2704, %v2700
        %v2821 = vpack.c.b16 %v2705, %v2701
        %v2822 = vpack.c.b16 %v2706, %v2702
        %v2823 = vpack.c.b16 %v2711, %v2707
        %v2824 = vpack.c.b16 %v2712, %v2708
        %v2825 = vpack.c.b16 %v2713, %v2709
        %v2826 = vpack.c.b16 %v2714, %v2710
        %v2827 = vpack.c.b16 %v2719, %v2715
        %v2828 = vpack.c.b16 %v2720, %v2716
        %v2829 = vpack.c.b16 %v2721, %v2717
        %v2830 = vpack.c.b16 %v2722, %v2718
        %v2831 = vpack.c.b16 %v2727, %v2723
        %v2832 = vpack.c.b16 %v2728, %v2724
        %v2833 = vpack.c.b16 %v2729, %v2725
        %v2834 = vpack.c.b16 %v2730, %v2726
        %v2835 = vpack.c.b16 %v2735, %v2731
        %v2836 = vpack.c.b16 %v2736, %v2732
        %v2837 = vpack.c.b16 %v2737, %v2733
        %v2838 = vpack.c.b16 %v2738, %v2734
        %v2839 = vpack.c.b16 %v2743, %v2739
        %v2840 = vpack.c.b16 %v2744, %v2740
        %v2841 = vpack.c.b16 %v2745, %v2741
        %v2842 = vpack.c.b16 %v2746, %v2742
        %v2843 = vpack.c.b16 %v2751, %v2747
        %v2844 = vpack.c.b16 %v2752, %v2748
        %v2845 = vpack.c.b16 %v2753, %v2749
        %v2846 = vpack.c.b16 %v2754, %v2750
        %v2847 = vpack.c.b16 %v2759, %v2755
        %v2848 = vpack.c.b16 %v2760, %v2756
        %v2849 = vpack.c.b16 %v2761, %v2757
        %v2850 = vpack.c.b16 %v2762, %v2758
        %v2851 = vpack.c.b16 %v2767, %v2763
        %v2852 = vpack.c.b16 %v2768, %v2764
        %v2853 = vpack.c.b16 %v2769, %v2765
        %v2854 = vpack.c.b16 %v2770, %v2766
        %v2855 = vpack.c.b16 %v2775, %v2771
        %v2856 = vpack.c.b16 %v2776, %v2772
        %v2857 = vpack.c.b16 %v2777, %v2773
        %v2858 = vpack.c.b16 %v2778, %v2774
        %v2859 = vpack.c.b16 %v2783, %v2779
        %v2860 = vpack.c.b16 %v2784, %v2780
        %v2861 = vpack.c.b16 %v2785, %v2781
        %v2862 = vpack.c.b16 %v2786, %v2782
        %v2863 = vpack.c.b16 %v2791, %v2787
        %v2864 = vpack.c.b16 %v2792, %v2788
        %v2865 = vpack.c.b16 %v2793, %v2789
        %v2866 = vpack.c.b16 %v2794, %v2790
        %v2867 = vpack.c.b16 %v2799, %v2795
        %v2868 = vpack.c.b16 %v2800, %v2796
        %v2869 = vpack.c.b16 %v2801, %v2797
        %v2870 = vpack.c.b16 %v2802, %v2798
        %v2871 = vpack.c.b16 %v2807, %v2803
        %v2872 = vpack.c.b16 %v2808, %v2804
        %v2873 = vpack.c.b16 %v2809, %v2805
        %v2874 = vpack.c.b16 %v2810, %v2806
        %v3195 = vunpack.c.l.b16 %v2321
        %v3196 = vunpack.c.h.b16 %v2321
        %v3197 = vunpack.c.l.b16 %v2322
        %v3198 = vunpack.c.h.b16 %v2322
        %v3199 = vunpack.c.l.b16 %v2323
        %v3200 = vunpack.c.h.b16 %v2323
        %v3201 = vunpack.c.l.b16 %v2324
        %v3202 = vunpack.c.h.b16 %v2324
        %v3203 = vunpack.c.l.b16 %v2325
        %v3204 = vunpack.c.h.b16 %v2325
        %v3205 = vunpack.c.l.b16 %v2326
        %v3206 = vunpack.c.h.b16 %v2326
        %v3207 = vunpack.c.l.b16 %v2327
        %v3208 = vunpack.c.h.b16 %v2327
        %v3209 = vunpack.c.l.b16 %v2328
        %v3210 = vunpack.c.h.b16 %v2328
        %v3211 = vunpack.c.l.b16 %v2329
        %v3212 = vunpack.c.h.b16 %v2329
        %v3213 = vunpack.c.l.b16 %v2330
        %v3214 = vunpack.c.h.b16 %v2330
        %v3215 = vunpack.c.l.b16 %v2331
        %v3216 = vunpack.c.h.b16 %v2331
        %v3217 = vunpack.c.l.b16 %v2332
        %v3218 = vunpack.c.h.b16 %v2332
        %v3219 = vunpack.c.l.b16 %v2333
        %v3220 = vunpack.c.h.b16 %v2333
        %v3221 = vunpack.c.l.b16 %v2334
        %v3222 = vunpack.c.h.b16 %v2334
        %v3223 = vunpack.c.l.b16 %v2335
        %v3224 = vunpack.c.h.b16 %v2335
        %v3225 = vunpack.c.l.b16 %v2336
        %v3226 = vunpack.c.h.b16 %v2336
        %v3227 = vunpack.c.l.b16 %v2337
        %v3228 = vunpack.c.h.b16 %v2337
        %v3229 = vunpack.c.l.b16 %v2338
        %v3230 = vunpack.c.h.b16 %v2338
        %v3231 = vunpack.c.l.b16 %v2339
        %v3232 = vunpack.c.h.b16 %v2339
        %v3233 = vunpack.c.l.b16 %v2340
        %v3234 = vunpack.c.h.b16 %v2340
        %v3235 = vunpack.c.l.b16 %v2341
        %v3236 = vunpack.c.h.b16 %v2341
        %v3237 = vunpack.c.l.b16 %v2342
        %v3238 = vunpack.c.h.b16 %v2342
        %v3239 = vunpack.c.l.b16 %v2343
        %v3240 = vunpack.c.h.b16 %v2343
        %v3241 = vunpack.c.l.b16 %v2344
        %v3242 = vunpack.c.h.b16 %v2344
        %v3243 = vunpack.c.l.b16 %v2345
        %v3244 = vunpack.c.h.b16 %v2345
        %v3245 = vunpack.c.l.b16 %v2346
        %v3246 = vunpack.c.h.b16 %v2346
        %v3247 = vunpack.c.l.b16 %v2347
        %v3248 = vunpack.c.h.b16 %v2347
        %v3249 = vunpack.c.l.b16 %v2348
        %v3250 = vunpack.c.h.b16 %v2348
        %v3251 = vunpack.c.l.b16 %v2349
        %v3252 = vunpack.c.h.b16 %v2349
        %v3253 = vunpack.c.l.b16 %v2350
        %v3254 = vunpack.c.h.b16 %v2350
        %v3255 = vunpack.c.l.b16 %v2351
        %v3256 = vunpack.c.h.b16 %v2351
        %v3257 = vunpack.c.l.b16 %v2352
        %v3258 = vunpack.c.h.b16 %v2352
        %v3259 = vunpack.c.l.b16 %v2353
        %v3260 = vunpack.c.h.b16 %v2353
        %v3261 = vunpack.c.l.b16 %v2354
        %v3262 = vunpack.c.h.b16 %v2354
        %v3263 = vunpack.c.l.b16 %v2355
        %v3264 = vunpack.c.h.b16 %v2355
        %v3265 = vunpack.c.l.b16 %v2356
        %v3266 = vunpack.c.h.b16 %v2356
        %v3267 = vunpack.c.l.b16 %v2357
        %v3268 = vunpack.c.h.b16 %v2357
        %v3269 = vunpack.c.l.b16 %v2358
        %v3270 = vunpack.c.h.b16 %v2358
        %v3271 = vunpack.c.l.b16 %v2359
        %v3272 = vunpack.c.h.b16 %v2359
        %v3273 = vunpack.c.l.b16 %v2360
        %v3274 = vunpack.c.h.b16 %v2360
        %v3275 = vunpack.c.l.b16 %v2361
        %v3276 = vunpack.c.h.b16 %v2361
        %v3277 = vunpack.c.l.b16 %v2362
        %v3278 = vunpack.c.h.b16 %v2362
        %v3279 = vunpack.c.l.b16 %v2363
        %v3280 = vunpack.c.h.b16 %v2363
        %v3281 = vunpack.c.l.b16 %v2364
        %v3282 = vunpack.c.h.b16 %v2364
        %v3283 = vunpack.c.l.b16 %v2365
        %v3284 = vunpack.c.h.b16 %v2365
        %v3285 = vunpack.c.l.b16 %v2366
        %v3286 = vunpack.c.h.b16 %v2366
        %v3287 = vunpack.c.l.b16 %v2367
        %v3288 = vunpack.c.h.b16 %v2367
        %v3289 = vunpack.c.l.b16 %v2368
        %v3290 = vunpack.c.h.b16 %v2368
        %v3291 = vunpack.c.l.b16 %v2369
        %v3292 = vunpack.c.h.b16 %v2369
        %v3293 = vunpack.c.l.b16 %v2370
        %v3294 = vunpack.c.h.b16 %v2370
        %v3295 = vunpack.c.l.b16 %v2371
        %v3296 = vunpack.c.h.b16 %v2371
        %v3297 = vunpack.c.l.b16 %v2372
        %v3298 = vunpack.c.h.b16 %v2372
        %v3299 = vunpack.c.l.b16 %v2373
        %v3300 = vunpack.c.h.b16 %v2373
        %v3301 = vunpack.c.l.b16 %v2374
        %v3302 = vunpack.c.h.b16 %v2374
        %v3303 = vunpack.c.l.b16 %v2375
        %v3304 = vunpack.c.h.b16 %v2375
        %v3305 = vunpack.c.l.b16 %v2376
        %v3306 = vunpack.c.h.b16 %v2376
        %v3307 = vunpack.c.l.b16 %v2377
        %v3308 = vunpack.c.h.b16 %v2377
        %v3309 = vunpack.c.l.b16 %v2378
        %v3310 = vunpack.c.h.b16 %v2378
        %v3311 = vunpack.c.l.b16 %v2379
        %v3312 = vunpack.c.h.b16 %v2379
        %v3313 = vunpack.c.l.b16 %v2380
        %v3314 = vunpack.c.h.b16 %v2380
        %v3315 = vunpack.c.l.b16 %v2381
        %v3316 = vunpack.c.h.b16 %v2381
        %v3317 = vunpack.c.l.b16 %v2382
        %v3318 = vunpack.c.h.b16 %v2382
        %v3319 = vunpack.c.l.b16 %v2383
        %v3320 = vunpack.c.h.b16 %v2383
        %v3321 = vunpack.c.l.b16 %v2384
        %v3322 = vunpack.c.h.b16 %v2384
        %v3323 = vunpack.c.l.b16 %v2385
        %v3324 = vunpack.c.h.b16 %v2385
        %v3325 = vunpack.c.l.b16 %v2386
        %v3326 = vunpack.c.h.b16 %v2386
        %v3327 = vunpack.c.l.b16 %v2387
        %v3328 = vunpack.c.h.b16 %v2387
        %v3329 = vunpack.c.l.b16 %v2388
        %v3330 = vunpack.c.h.b16 %v2388
        %v3331 = vunpack.c.l.b16 %v2389
        %v3332 = vunpack.c.h.b16 %v2389
        %v3333 = vunpack.c.l.b16 %v2390
        %v3334 = vunpack.c.h.b16 %v2390
        %v3335 = vunpack.c.l.b16 %v2391
        %v3336 = vunpack.c.h.b16 %v2391
        %v3337 = vunpack.c.l.b16 %v2392
        %v3338 = vunpack.c.h.b16 %v2392
        %v3339 = vunpack.c.l.b16 %v2393
        %v3340 = vunpack.c.h.b16 %v2393
        %v3341 = vunpack.c.l.b16 %v2394
        %v3342 = vunpack.c.h.b16 %v2394
        %v3343 = vunpack.c.l.b16 %v2395
        %v3344 = vunpack.c.h.b16 %v2395
        %v3345 = vunpack.c.l.b16 %v2396
        %v3346 = vunpack.c.h.b16 %v2396
        %v3347 = vunpack.c.l.b16 %v2397
        %v3348 = vunpack.c.h.b16 %v2397
        %v3349 = vunpack.c.l.b16 %v2398
        %v3350 = vunpack.c.h.b16 %v2398
        %v3351 = vunpack.c.l.b16 %v2399
        %v3352 = vunpack.c.h.b16 %v2399
        %v3353 = vunpack.c.l.b16 %v2400
        %v3354 = vunpack.c.h.b16 %v2400
        %v3355 = vunpack.c.l.b16 %v2401
        %v3356 = vunpack.c.h.b16 %v2401
        %v3357 = vunpack.c.l.b16 %v2402
        %v3358 = vunpack.c.h.b16 %v2402
        %v3359 = vunpack.c.l.b16 %v2403
        %v3360 = vunpack.c.h.b16 %v2403
        %v3361 = vunpack.c.l.b16 %v2404
        %v3362 = vunpack.c.h.b16 %v2404
        %v3363 = vunpack.c.l.b16 %v2405
        %v3364 = vunpack.c.h.b16 %v2405
        %v3365 = vunpack.c.l.b16 %v2406
        %v3366 = vunpack.c.h.b16 %v2406
        %v3367 = vunpack.c.l.b16 %v2407
        %v3368 = vunpack.c.h.b16 %v2407
        %v3369 = vunpack.c.l.b16 %v2408
        %v3370 = vunpack.c.h.b16 %v2408
        %v3371 = vunpack.c.l.b16 %v2409
        %v3372 = vunpack.c.h.b16 %v2409
        %v3373 = vunpack.c.l.b16 %v2410
        %v3374 = vunpack.c.h.b16 %v2410
        %v3375 = vunpack.c.l.b16 %v2411
        %v3376 = vunpack.c.h.b16 %v2411
        %v3377 = vunpack.c.l.b16 %v2412
        %v3378 = vunpack.c.h.b16 %v2412
        %v3379 = vunpack.c.l.b16 %v2413
        %v3380 = vunpack.c.h.b16 %v2413
        %v3381 = vunpack.c.l.b16 %v2414
        %v3382 = vunpack.c.h.b16 %v2414
        %v3383 = vunpack.c.l.b16 %v2415
        %v3384 = vunpack.c.h.b16 %v2415
        %v3385 = vunpack.c.l.b16 %v2416
        %v3386 = vunpack.c.h.b16 %v2416
        %v3387 = vunpack.c.l.b16 %v2417
        %v3388 = vunpack.c.h.b16 %v2417
        %v3389 = vunpack.c.l.b16 %v2418
        %v3390 = vunpack.c.h.b16 %v2418
        %v3391 = vunpack.c.l.b16 %v2419
        %v3392 = vunpack.c.h.b16 %v2419
        %v3393 = vunpack.c.l.b16 %v2420
        %v3394 = vunpack.c.h.b16 %v2420
        %v3395 = vunpack.c.l.b16 %v2421
        %v3396 = vunpack.c.h.b16 %v2421
        %v3397 = vunpack.c.l.b16 %v2422
        %v3398 = vunpack.c.h.b16 %v2422
        %v3399 = vunpack.c.l.b16 %v2423
        %v3400 = vunpack.c.h.b16 %v2423
        %v3401 = vunpack.c.l.b16 %v2424
        %v3402 = vunpack.c.h.b16 %v2424
        %v3403 = vunpack.c.l.b16 %v2425
        %v3404 = vunpack.c.h.b16 %v2425
        %v3405 = vunpack.c.l.b16 %v2426
        %v3406 = vunpack.c.h.b16 %v2426
        %v3407 = vunpack.c.l.b16 %v2427
        %v3408 = vunpack.c.h.b16 %v2427
        %v3409 = vunpack.c.l.b16 %v2428
        %v3410 = vunpack.c.h.b16 %v2428
        %v3411 = vunpack.c.l.b16 %v2429
        %v3412 = vunpack.c.h.b16 %v2429
        %v3413 = vunpack.c.l.b16 %v2430
        %v3414 = vunpack.c.h.b16 %v2430
        %v3415 = vunpack.c.l.b16 %v2431
        %v3416 = vunpack.c.h.b16 %v2431
        %v3417 = vunpack.c.l.b16 %v2432
        %v3418 = vunpack.c.h.b16 %v2432
        %v3419 = vunpack.c.l.b16 %v2433
        %v3420 = vunpack.c.h.b16 %v2433
        %v3421 = vunpack.c.l.b16 %v2434
        %v3422 = vunpack.c.h.b16 %v2434
        %v3423 = vunpack.c.l.b16 %v2435
        %v3424 = vunpack.c.h.b16 %v2435
        %v3425 = vunpack.c.l.b16 %v2436
        %v3426 = vunpack.c.h.b16 %v2436
        %v3427 = vunpack.c.l.b16 %v2437
        %v3428 = vunpack.c.h.b16 %v2437
        %v3429 = vunpack.c.l.b16 %v2438
        %v3430 = vunpack.c.h.b16 %v2438
        %v3431 = vunpack.c.l.b16 %v2439
        %v3432 = vunpack.c.h.b16 %v2439
        %v3433 = vunpack.c.l.b16 %v2440
        %v3434 = vunpack.c.h.b16 %v2440
        %v3435 = vunpack.c.l.b16 %v2441
        %v3436 = vunpack.c.h.b16 %v2441
        %v3437 = vunpack.c.l.b16 %v2442
        %v3438 = vunpack.c.h.b16 %v2442
        %v3439 = vunpack.c.l.b16 %v2443
        %v3440 = vunpack.c.h.b16 %v2443
        %v3441 = vunpack.c.l.b16 %v2444
        %v3442 = vunpack.c.h.b16 %v2444
        %v3443 = vunpack.c.l.b16 %v2445
        %v3444 = vunpack.c.h.b16 %v2445
        %v3445 = vunpack.c.l.b16 %v2446
        %v3446 = vunpack.c.h.b16 %v2446
        %v3447 = vunpack.c.l.b16 %v2447
        %v3448 = vunpack.c.h.b16 %v2447
        %v3449 = vunpack.c.l.b16 %v2448
        %v3450 = vunpack.c.h.b16 %v2448
        %v3451 = vunpack.c.l.b16 %v2449
        %v3452 = vunpack.c.h.b16 %v2449
        %v3453 = vunpack.c.l.b16 %v2450
        %v3454 = vunpack.c.h.b16 %v2450
        %v3455 = vunpack.c.l.b16 %v2451
        %v3456 = vunpack.c.h.b16 %v2451
        %v3457 = vunpack.c.l.b16 %v2452
        %v3458 = vunpack.c.h.b16 %v2452
        %v3459 = vunpack.c.l.b16 %v2453
        %v3460 = vunpack.c.h.b16 %v2453
        %v3461 = vunpack.c.l.b16 %v2454
        %v3462 = vunpack.c.h.b16 %v2454
        %v3463 = vunpack.c.l.b16 %v2455
        %v3464 = vunpack.c.h.b16 %v2455
        %v3465 = vunpack.c.l.b16 %v2456
        %v3466 = vunpack.c.h.b16 %v2456
        %v3467 = vunpack.c.l.b16 %v2457
        %v3468 = vunpack.c.h.b16 %v2457
        %v3469 = vunpack.c.l.b16 %v2458
        %v3470 = vunpack.c.h.b16 %v2458
        %v3471 = vunpack.c.l.b16 %v2459
        %v3472 = vunpack.c.h.b16 %v2459
        %v3473 = vunpack.c.l.b16 %v2460
        %v3474 = vunpack.c.h.b16 %v2460
        %v3475 = vunpack.c.l.b16 %v2461
        %v3476 = vunpack.c.h.b16 %v2461
        %v3477 = vunpack.c.l.b16 %v2462
        %v3478 = vunpack.c.h.b16 %v2462
        %v3479 = vunpack.c.l.b16 %v2463
        %v3480 = vunpack.c.h.b16 %v2463
        %v3481 = vunpack.c.l.b16 %v2464
        %v3482 = vunpack.c.h.b16 %v2464
        %v3483 = vunpack.c.l.b16 %v2465
        %v3484 = vunpack.c.h.b16 %v2465
        %v3485 = vunpack.c.l.b16 %v2466
        %v3486 = vunpack.c.h.b16 %v2466
        %v3487 = vunpack.c.l.b16 %v2467
        %v3488 = vunpack.c.h.b16 %v2467
        %v3489 = vunpack.c.l.b16 %v2468
        %v3490 = vunpack.c.h.b16 %v2468
        %v3491 = vunpack.c.l.b16 %v2469
        %v3492 = vunpack.c.h.b16 %v2469
        %v3493 = vunpack.c.l.b16 %v2470
        %v3494 = vunpack.c.h.b16 %v2470
        %v3495 = vunpack.c.l.b16 %v2471
        %v3496 = vunpack.c.h.b16 %v2471
        %v3497 = vunpack.c.l.b16 %v2472
        %v3498 = vunpack.c.h.b16 %v2472
        %v3499 = vunpack.c.l.b16 %v2473
        %v3500 = vunpack.c.h.b16 %v2473
        %v3501 = vunpack.c.l.b16 %v2474
        %v3502 = vunpack.c.h.b16 %v2474
        %v3503 = vunpack.c.l.b16 %v2475
        %v3504 = vunpack.c.h.b16 %v2475
        %v3505 = vunpack.c.l.b16 %v2476
        %v3506 = vunpack.c.h.b16 %v2476
        %v3507 = vunpack.c.l.b16 %v2477
        %v3508 = vunpack.c.h.b16 %v2477
        %v3509 = vunpack.c.l.b16 %v2478
        %v3510 = vunpack.c.h.b16 %v2478
        %v3511 = vunpack.c.l.b16 %v2479
        %v3512 = vunpack.c.h.b16 %v2479
        %v3513 = vunpack.c.l.b16 %v2480
        %v3514 = vunpack.c.h.b16 %v2480
        %v3515 = vunpack.c.l.b16 %v2481
        %v3516 = vunpack.c.h.b16 %v2481
        %v3517 = vunpack.c.l.b16 %v2482
        %v3518 = vunpack.c.h.b16 %v2482
        %v3519 = vunpack.c.l.b16 %v2483
        %v3520 = vunpack.c.h.b16 %v2483
        %v3521 = vunpack.c.l.b16 %v2484
        %v3522 = vunpack.c.h.b16 %v2484
        %v3523 = vunpack.c.l.b16 %v2485
        %v3524 = vunpack.c.h.b16 %v2485
        %v3525 = vunpack.c.l.b16 %v2486
        %v3526 = vunpack.c.h.b16 %v2486
        %v3527 = vunpack.c.l.b16 %v2487
        %v3528 = vunpack.c.h.b16 %v2487
        %v3529 = vunpack.c.l.b16 %v2488
        %v3530 = vunpack.c.h.b16 %v2488
        %v3531 = vunpack.c.l.b16 %v2489
        %v3532 = vunpack.c.h.b16 %v2489
        %v3533 = vunpack.c.l.b16 %v2490
        %v3534 = vunpack.c.h.b16 %v2490
        %v3535 = vunpack.c.l.b16 %v2491
        %v3536 = vunpack.c.h.b16 %v2491
        %v3537 = vunpack.c.l.b16 %v2492
        %v3538 = vunpack.c.h.b16 %v2492
        %v3539 = vunpack.c.l.b16 %v2493
        %v3540 = vunpack.c.h.b16 %v2493
        %v3541 = vunpack.c.l.b16 %v2494
        %v3542 = vunpack.c.h.b16 %v2494
        %v3543 = vunpack.c.l.b16 %v2495
        %v3544 = vunpack.c.h.b16 %v2495
        %v3545 = vunpack.c.l.b16 %v2496
        %v3546 = vunpack.c.h.b16 %v2496
        %v3547 = vunpack.c.l.b16 %v2497
        %v3548 = vunpack.c.h.b16 %v2497
        %v3549 = vunpack.c.l.b16 %v2498
        %v3550 = vunpack.c.h.b16 %v2498
        %v3551 = vunpack.c.l.b16 %v2499
        %v3552 = vunpack.c.h.b16 %v2499
        %v3553 = vunpack.c.l.b16 %v2500
        %v3554 = vunpack.c.h.b16 %v2500
        %v3555 = vunpack.c.l.b16 %v2501
        %v3556 = vunpack.c.h.b16 %v2501
        %v3557 = vunpack.c.l.b16 %v2502
        %v3558 = vunpack.c.h.b16 %v2502
        %v3559 = vunpack.c.l.b16 %v2503
        %v3560 = vunpack.c.h.b16 %v2503
        %v3561 = vunpack.c.l.b16 %v2504
        %v3562 = vunpack.c.h.b16 %v2504
        %v3563 = vunpack.c.l.b16 %v2505
        %v3564 = vunpack.c.h.b16 %v2505
        %v3565 = vunpack.c.l.b16 %v2506
        %v3566 = vunpack.c.h.b16 %v2506
        %v3567 = vunpack.c.l.b16 %v2507
        %v3568 = vunpack.c.h.b16 %v2507
        %v3569 = vunpack.c.l.b16 %v2508
        %v3570 = vunpack.c.h.b16 %v2508
        %v3571 = vunpack.c.l.b16 %v2509
        %v3572 = vunpack.c.h.b16 %v2509
        %v3573 = vunpack.c.l.b16 %v2510
        %v3574 = vunpack.c.h.b16 %v2510
        %v3575 = vunpack.c.l.b16 %v2511
        %v3576 = vunpack.c.h.b16 %v2511
        %v3577 = vunpack.c.l.b16 %v2512
        %v3578 = vunpack.c.h.b16 %v2512
        %v3579 = vunpack.c.l.b16 %v2513
        %v3580 = vunpack.c.h.b16 %v2513
        %v3581 = vunpack.c.l.b16 %v2514
        %v3582 = vunpack.c.h.b16 %v2514
        %v3583 = vunpack.c.l.b16 %v2515
        %v3584 = vunpack.c.h.b16 %v2515
        %v3585 = vunpack.c.l.b16 %v2516
        %v3586 = vunpack.c.h.b16 %v2516
        %v3587 = vunpack.c.l.b16 %v2517
        %v3588 = vunpack.c.h.b16 %v2517
        %v3589 = vunpack.c.l.b16 %v2518
        %v3590 = vunpack.c.h.b16 %v2518
        %v3591 = vunpack.c.l.b16 %v2519
        %v3592 = vunpack.c.h.b16 %v2519
        %v3593 = vunpack.c.l.b16 %v2520
        %v3594 = vunpack.c.h.b16 %v2520
        %v3595 = vunpack.c.l.b16 %v2521
        %v3596 = vunpack.c.h.b16 %v2521
        %v3597 = vunpack.c.l.b16 %v2522
        %v3598 = vunpack.c.h.b16 %v2522
        %v3599 = vunpack.c.l.b16 %v2523
        %v3600 = vunpack.c.h.b16 %v2523
        %v3601 = vunpack.c.l.b16 %v2524
        %v3602 = vunpack.c.h.b16 %v2524
        %v3603 = vunpack.c.l.b16 %v2525
        %v3604 = vunpack.c.h.b16 %v2525
        %v3605 = vunpack.c.l.b16 %v2526
        %v3606 = vunpack.c.h.b16 %v2526
        %v3607 = vunpack.c.l.b16 %v2527
        %v3608 = vunpack.c.h.b16 %v2527
        %v3609 = vunpack.c.l.b16 %v2528
        %v3610 = vunpack.c.h.b16 %v2528
        %v3611 = vunpack.c.l.b16 %v2529
        %v3612 = vunpack.c.h.b16 %v2529
        %v3613 = vunpack.c.l.b16 %v2530
        %v3614 = vunpack.c.h.b16 %v2530
        %v3615 = vunpack.c.l.b16 %v2531
        %v3616 = vunpack.c.h.b16 %v2531
        %v3617 = vunpack.c.l.b16 %v2532
        %v3618 = vunpack.c.h.b16 %v2532
        %v3619 = vunpack.c.l.b16 %v2533
        %v3620 = vunpack.c.h.b16 %v2533
        %v3621 = vunpack.c.l.b16 %v2534
        %v3622 = vunpack.c.h.b16 %v2534
        %v3623 = vunpack.c.l.b16 %v2535
        %v3624 = vunpack.c.h.b16 %v2535
        %v3625 = vunpack.c.l.b16 %v2536
        %v3626 = vunpack.c.h.b16 %v2536
        %v3627 = vunpack.c.l.b16 %v2537
        %v3628 = vunpack.c.h.b16 %v2537
        %v3629 = vunpack.c.l.b16 %v2538
        %v3630 = vunpack.c.h.b16 %v2538
        %v3631 = vunpack.c.l.b16 %v2539
        %v3632 = vunpack.c.h.b16 %v2539
        %v3633 = vunpack.c.l.b16 %v2540
        %v3634 = vunpack.c.h.b16 %v2540
        %v3635 = vunpack.c.l.b16 %v2541
        %v3636 = vunpack.c.h.b16 %v2541
        %v3637 = vunpack.c.l.b16 %v2542
        %v3638 = vunpack.c.h.b16 %v2542
        %v3639 = vunpack.c.l.b16 %v2543
        %v3640 = vunpack.c.h.b16 %v2543
        %v3641 = vunpack.c.l.b16 %v2544
        %v3642 = vunpack.c.h.b16 %v2544
        %v3643 = vunpack.c.l.b16 %v2545
        %v3644 = vunpack.c.h.b16 %v2545
        %v3645 = vunpack.c.l.b16 %v2546
        %v3646 = vunpack.c.h.b16 %v2546
        %v3647 = vunpack.c.l.b16 %v2547
        %v3648 = vunpack.c.h.b16 %v2547
        %v3649 = vunpack.c.l.b16 %v2548
        %v3650 = vunpack.c.h.b16 %v2548
        %v3651 = vunpack.c.l.b16 %v2549
        %v3652 = vunpack.c.h.b16 %v2549
        %v3653 = vunpack.c.l.b16 %v2550
        %v3654 = vunpack.c.h.b16 %v2550
        %v3655 = vunpack.c.l.b16 %v2551
        %v3656 = vunpack.c.h.b16 %v2551
        %v3657 = vunpack.c.l.b16 %v2552
        %v3658 = vunpack.c.h.b16 %v2552
        %v3659 = vunpack.c.l.b16 %v2553
        %v3660 = vunpack.c.h.b16 %v2553
        %v3661 = vunpack.c.l.b16 %v2554
        %v3662 = vunpack.c.h.b16 %v2554
        %v3663 = vunpack.c.l.b16 %v2555
        %v3664 = vunpack.c.h.b16 %v2555
        %v3665 = vunpack.c.l.b16 %v2556
        %v3666 = vunpack.c.h.b16 %v2556
        %v3667 = vunpack.c.l.b16 %v2557
        %v3668 = vunpack.c.h.b16 %v2557
        %v3669 = vunpack.c.l.b16 %v2558
        %v3670 = vunpack.c.h.b16 %v2558
        %v3671 = vunpack.c.l.b16 %v2559
        %v3672 = vunpack.c.h.b16 %v2559
        %v3673 = vunpack.c.l.b16 %v2560
        %v3674 = vunpack.c.h.b16 %v2560
        %v3675 = vunpack.c.l.b16 %v2561
        %v3676 = vunpack.c.h.b16 %v2561
        %v3677 = vunpack.c.l.b16 %v2562
        %v3678 = vunpack.c.h.b16 %v2562
        %v3679 = vunpack.c.l.b16 %v2563
        %v3680 = vunpack.c.h.b16 %v2563
        %v3681 = vunpack.c.l.b16 %v2564
        %v3682 = vunpack.c.h.b16 %v2564
        %v3683 = vunpack.c.l.b16 %v2565
        %v3684 = vunpack.c.h.b16 %v2565
        %v3685 = vunpack.c.l.b16 %v2566
        %v3686 = vunpack.c.h.b16 %v2566
        %v3687 = vunpack.c.l.b16 %v2567
        %v3688 = vunpack.c.h.b16 %v2567
        %v3689 = vunpack.c.l.b16 %v2568
        %v3690 = vunpack.c.h.b16 %v2568
        %v3691 = vunpack.c.l.b16 %v2569
        %v3692 = vunpack.c.h.b16 %v2569
        %v3693 = vunpack.c.l.b16 %v2570
        %v3694 = vunpack.c.h.b16 %v2570
        %v3695 = vunpack.c.l.b16 %v2571
        %v3696 = vunpack.c.h.b16 %v2571
        %v3697 = vunpack.c.l.b16 %v2572
        %v3698 = vunpack.c.h.b16 %v2572
        %v3699 = vunpack.c.l.b16 %v2573
        %v3700 = vunpack.c.h.b16 %v2573
        %v3701 = vunpack.c.l.b16 %v2574
        %v3702 = vunpack.c.h.b16 %v2574
        %v3703 = vunpack.c.l.b16 %v2575
        %v3704 = vunpack.c.h.b16 %v2575
        %v3705 = vunpack.c.l.b16 %v2576
        %v3706 = vunpack.c.h.b16 %v2576
        %v3707 = vpack.c.b16 %v3203, %v3195
        %v3708 = vpack.c.b16 %v3204, %v3196
        %v3709 = vpack.c.b16 %v3205, %v3197
        %v3710 = vpack.c.b16 %v3206, %v3198
        %v3711 = vpack.c.b16 %v3207, %v3199
        %v3712 = vpack.c.b16 %v3208, %v3200
        %v3713 = vpack.c.b16 %v3209, %v3201
        %v3714 = vpack.c.b16 %v3210, %v3202
        %v3715 = vpack.c.b16 %v3219, %v3211
        %v3716 = vpack.c.b16 %v3220, %v3212
        %v3717 = vpack.c.b16 %v3221, %v3213
        %v3718 = vpack.c.b16 %v3222, %v3214
        %v3719 = vpack.c.b16 %v3223, %v3215
        %v3720 = vpack.c.b16 %v3224, %v3216
        %v3721 = vpack.c.b16 %v3225, %v3217
        %v3722 = vpack.c.b16 %v3226, %v3218
        %v3723 = vpack.c.b16 %v3235, %v3227
        %v3724 = vpack.c.b16 %v3236, %v3228
        %v3725 = vpack.c.b16 %v3237, %v3229
        %v3726 = vpack.c.b16 %v3238, %v3230
        %v3727 = vpack.c.b16 %v3239, %v3231
        %v3728 = vpack.c.b16 %v3240, %v3232
        %v3729 = vpack.c.b16 %v3241, %v3233
        %v3730 = vpack.c.b16 %v3242, %v3234
        %v3731 = vpack.c.b16 %v3251, %v3243
        %v3732 = vpack.c.b16 %v3252, %v3244
        %v3733 = vpack.c.b16 %v3253, %v3245
        %v3734 = vpack.c.b16 %v3254, %v3246
        %v3735 = vpack.c.b16 %v3255, %v3247
        %v3736 = vpack.c.b16 %v3256, %v3248
        %v3737 = vpack.c.b16 %v3257, %v3249
        %v3738 = vpack.c.b16 %v3258, %v3250
        %v3739 = vpack.c.b16 %v3267, %v3259
        %v3740 = vpack.c.b16 %v3268, %v3260
        %v3741 = vpack.c.b16 %v3269, %v3261
        %v3742 = vpack.c.b16 %v3270, %v3262
        %v3743 = vpack.c.b16 %v3271, %v3263
        %v3744 = vpack.c.b16 %v3272, %v3264
        %v3745 = vpack.c.b16 %v3273, %v3265
        %v3746 = vpack.c.b16 %v3274, %v3266
        %v3747 = vpack.c.b16 %v3283, %v3275
        %v3748 = vpack.c.b16 %v3284, %v3276
        %v3749 = vpack.c.b16 %v3285, %v3277
        %v3750 = vpack.c.b16 %v3286, %v3278
        %v3751 = vpack.c.b16 %v3287, %v3279
        %v3752 = vpack.c.b16 %v3288, %v3280
        %v3753 = vpack.c.b16 %v3289, %v3281
        %v3754 = vpack.c.b16 %v3290, %v3282
        %v3755 = vpack.c.b16 %v3299, %v3291
        %v3756 = vpack.c.b16 %v3300, %v3292
        %v3757 = vpack.c.b16 %v3301, %v3293
        %v3758 = vpack.c.b16 %v3302, %v3294
        %v3759 = vpack.c.b16 %v3303, %v3295
        %v3760 = vpack.c.b16 %v3304, %v3296
        %v3761 = vpack.c.b16 %v3305, %v3297
        %v3762 = vpack.c.b16 %v3306, %v3298
        %v3763 = vpack.c.b16 %v3315, %v3307
        %v3764 = vpack.c.b16 %v3316, %v3308
        %v3765 = vpack.c.b16 %v3317, %v3309
        %v3766 = vpack.c.b16 %v3318, %v3310
        %v3767 = vpack.c.b16 %v3319, %v3311
        %v3768 = vpack.c.b16 %v3320, %v3312
        %v3769 = vpack.c.b16 %v3321, %v3313
        %v3770 = vpack.c.b16 %v3322, %v3314
        %v3771 = vpack.c.b16 %v3331, %v3323
        %v3772 = vpack.c.b16 %v3332, %v3324
        %v3773 = vpack.c.b16 %v3333, %v3325
        %v3774 = vpack.c.b16 %v3334, %v3326
        %v3775 = vpack.c.b16 %v3335, %v3327
        %v3776 = vpack.c.b16 %v3336, %v3328
        %v3777 = vpack.c.b16 %v3337, %v3329
        %v3778 = vpack.c.b16 %v3338, %v3330
        %v3779 = vpack.c.b16 %v3347, %v3339
        %v3780 = vpack.c.b16 %v3348, %v3340
        %v3781 = vpack.c.b16 %v3349, %v3341
        %v3782 = vpack.c.b16 %v3350, %v3342
        %v3783 = vpack.c.b16 %v3351, %v3343
        %v3784 = vpack.c.b16 %v3352, %v3344
        %v3785 = vpack.c.b16 %v3353, %v3345
        %v3786 = vpack.c.b16 %v3354, %v3346
        %v3787 = vpack.c.b16 %v3363, %v3355
        %v3788 = vpack.c.b16 %v3364, %v3356
        %v3789 = vpack.c.b16 %v3365, %v3357
        %v3790 = vpack.c.b16 %v3366, %v3358
        %v3791 = vpack.c.b16 %v3367, %v3359
        %v3792 = vpack.c.b16 %v3368, %v3360
        %v3793 = vpack.c.b16 %v3369, %v3361
        %v3794 = vpack.c.b16 %v3370, %v3362
        %v3795 = vpack.c.b16 %v3379, %v3371
        %v3796 = vpack.c.b16 %v3380, %v3372
        %v3797 = vpack.c.b16 %v3381, %v3373
        %v3798 = vpack.c.b16 %v3382, %v3374
        %v3799 = vpack.c.b16 %v3383, %v3375
        %v3800 = vpack.c.b16 %v3384, %v3376
        %v3801 = vpack.c.b16 %v3385, %v3377
        %v3802 = vpack.c.b16 %v3386, %v3378
        %v3803 = vpack.c.b16 %v3395, %v3387
        %v3804 = vpack.c.b16 %v3396, %v3388
        %v3805 = vpack.c.b16 %v3397, %v3389
        %v3806 = vpack.c.b16 %v3398, %v3390
        %v3807 = vpack.c.b16 %v3399, %v3391
        %v3808 = vpack.c.b16 %v3400, %v3392
        %v3809 = vpack.c.b16 %v3401, %v3393
        %v3810 = vpack.c.b16 %v3402, %v3394
        %v3811 = vpack.c.b16 %v3411, %v3403
        %v3812 = vpack.c.b16 %v3412, %v3404
        %v3813 = vpack.c.b16 %v3413, %v3405
        %v3814 = vpack.c.b16 %v3414, %v3406
        %v3815 = vpack.c.b16 %v3415, %v3407
        %v3816 = vpack.c.b16 %v3416, %v3408
        %v3817 = vpack.c.b16 %v3417, %v3409
        %v3818 = vpack.c.b16 %v3418, %v3410
        %v3819 = vpack.c.b16 %v3427, %v3419
        %v3820 = vpack.c.b16 %v3428, %v3420
        %v3821 = vpack.c.b16 %v3429, %v3421
        %v3822 = vpack.c.b16 %v3430, %v3422
        %v3823 = vpack.c.b16 %v3431, %v3423
        %v3824 = vpack.c.b16 %v3432, %v3424
        %v3825 = vpack.c.b16 %v3433, %v3425
        %v3826 = vpack.c.b16 %v3434, %v3426
        %v3827 = vpack.c.b16 %v3443, %v3435
        %v3828 = vpack.c.b16 %v3444, %v3436
        %v3829 = vpack.c.b16 %v3445, %v3437
        %v3830 = vpack.c.b16 %v3446, %v3438
        %v3831 = vpack.c.b16 %v3447, %v3439
        %v3832 = vpack.c.b16 %v3448, %v3440
        %v3833 = vpack.c.b16 %v3449, %v3441
        %v3834 = vpack.c.b16 %v3450, %v3442
        %v3835 = vpack.c.b16 %v3459, %v3451
        %v3836 = vpack.c.b16 %v3460, %v3452
        %v3837 = vpack.c.b16 %v3461, %v3453
        %v3838 = vpack.c.b16 %v3462, %v3454
        %v3839 = vpack.c.b16 %v3463, %v3455
        %v3840 = vpack.c.b16 %v3464, %v3456
        %v3841 = vpack.c.b16 %v3465, %v3457
        %v3842 = vpack.c.b16 %v3466, %v3458
        %v3843 = vpack.c.b16 %v3475, %v3467
        %v3844 = vpack.c.b16 %v3476, %v3468
        %v3845 = vpack.c.b16 %v3477, %v3469
        %v3846 = vpack.c.b16 %v3478, %v3470
        %v3847 = vpack.c.b16 %v3479, %v3471
        %v3848 = vpack.c.b16 %v3480, %v3472
        %v3849 = vpack.c.b16 %v3481, %v3473
        %v3850 = vpack.c.b16 %v3482, %v3474
        %v3851 = vpack.c.b16 %v3491, %v3483
        %v3852 = vpack.c.b16 %v3492, %v3484
        %v3853 = vpack.c.b16 %v3493, %v3485
        %v3854 = vpack.c.b16 %v3494, %v3486
        %v3855 = vpack.c.b16 %v3495, %v3487
        %v3856 = vpack.c.b16 %v3496, %v3488
        %v3857 = vpack.c.b16 %v3497, %v3489
        %v3858 = vpack.c.b16 %v3498, %v3490
        %v3859 = vpack.c.b16 %v3507, %v3499
        %v3860 = vpack.c.b16 %v3508, %v3500
        %v3861 = vpack.c.b16 %v3509, %v3501
        %v3862 = vpack.c.b16 %v3510, %v3502
        %v3863 = vpack.c.b16 %v3511, %v3503
        %v3864 = vpack.c.b16 %v3512, %v3504
        %v3865 = vpack.c.b16 %v3513, %v3505
        %v3866 = vpack.c.b16 %v3514, %v3506
        %v3867 = vpack.c.b16 %v3523, %v3515
        %v3868 = vpack.c.b16 %v3524, %v3516
        %v3869 = vpack.c.b16 %v3525, %v3517
        %v3870 = vpack.c.b16 %v3526, %v3518
        %v3871 = vpack.c.b16 %v3527, %v3519
        %v3872 = vpack.c.b16 %v3528, %v3520
        %v3873 = vpack.c.b16 %v3529, %v3521
        %v3874 = vpack.c.b16 %v3530, %v3522
        %v3875 = vpack.c.b16 %v3539, %v3531
        %v3876 = vpack.c.b16 %v3540, %v3532
        %v3877 = vpack.c.b16 %v3541, %v3533
        %v3878 = vpack.c.b16 %v3542, %v3534
        %v3879 = vpack.c.b16 %v3543, %v3535
        %v3880 = vpack.c.b16 %v3544, %v3536
        %v3881 = vpack.c.b16 %v3545, %v3537
        %v3882 = vpack.c.b16 %v3546, %v3538
        %v3883 = vpack.c.b16 %v3555, %v3547
        %v3884 = vpack.c.b16 %v3556, %v3548
        %v3885 = vpack.c.b16 %v3557, %v3549
        %v3886 = vpack.c.b16 %v3558, %v3550
        %v3887 = vpack.c.b16 %v3559, %v3551
        %v3888 = vpack.c.b16 %v3560, %v3552
        %v3889 = vpack.c.b16 %v3561, %v3553
        %v3890 = vpack.c.b16 %v3562, %v3554
        %v3891 = vpack.c.b16 %v3571, %v3563
        %v3892 = vpack.c.b16 %v3572, %v3564
        %v3893 = vpack.c.b16 %v3573, %v3565
        %v3894 = vpack.c.b16 %v3574, %v3566
        %v3895 = vpack.c.b16 %v3575, %v3567
        %v3896 = vpack.c.b16 %v3576, %v3568
        %v3897 = vpack.c.b16 %v3577, %v3569
        %v3898 = vpack.c.b16 %v3578, %v3570
        %v3899 = vpack.c.b16 %v3587, %v3579
        %v3900 = vpack.c.b16 %v3588, %v3580
        %v3901 = vpack.c.b16 %v3589, %v3581
        %v3902 = vpack.c.b16 %v3590, %v3582
        %v3903 = vpack.c.b16 %v3591, %v3583
        %v3904 = vpack.c.b16 %v3592, %v3584
        %v3905 = vpack.c.b16 %v3593, %v3585
        %v3906 = vpack.c.b16 %v3594, %v3586
        %v3907 = vpack.c.b16 %v3603, %v3595
        %v3908 = vpack.c.b16 %v3604, %v3596
        %v3909 = vpack.c.b16 %v3605, %v3597
        %v3910 = vpack.c.b16 %v3606, %v3598
        %v3911 = vpack.c.b16 %v3607, %v3599
        %v3912 = vpack.c.b16 %v3608, %v3600
        %v3913 = vpack.c.b16 %v3609, %v3601
        %v3914 = vpack.c.b16 %v3610, %v3602
        %v3915 = vpack.c.b16 %v3619, %v3611
        %v3916 = vpack.c.b16 %v3620, %v3612
        %v3917 = vpack.c.b16 %v3621, %v3613
        %v3918 = vpack.c.b16 %v3622, %v3614
        %v3919 = vpack.c.b16 %v3623, %v3615
        %v3920 = vpack.c.b16 %v3624, %v3616
        %v3921 = vpack.c.b16 %v3625, %v3617
        %v3922 = vpack.c.b16 %v3626, %v3618
        %v3923 = vpack.c.b16 %v3635, %v3627
        %v3924 = vpack.c.b16 %v3636, %v3628
        %v3925 = vpack.c.b16 %v3637, %v3629
        %v3926 = vpack.c.b16 %v3638, %v3630
        %v3927 = vpack.c.b16 %v3639, %v3631
        %v3928 = vpack.c.b16 %v3640, %v3632
        %v3929 = vpack.c.b16 %v3641, %v3633
        %v3930 = vpack.c.b16 %v3642, %v3634
        %v3931 = vpack.c.b16 %v3651, %v3643
        %v3932 = vpack.c.b16 %v3652, %v3644
        %v3933 = vpack.c.b16 %v3653, %v3645
        %v3934 = vpack.c.b16 %v3654, %v3646
        %v3935 = vpack.c.b16 %v3655, %v3647
        %v3936 = vpack.c.b16 %v3656, %v3648
        %v3937 = vpack.c.b16 %v3657, %v3649
        %v3938 = vpack.c.b16 %v3658, %v3650
        %v3939 = vpack.c.b16 %v3667, %v3659
        %v3940 = vpack.c.b16 %v3668, %v3660
        %v3941 = vpack.c.b16 %v3669, %v3661
        %v3942 = vpack.c.b16 %v3670, %v3662
        %v3943 = vpack.c.b16 %v3671, %v3663
        %v3944 = vpack.c.b16 %v3672, %v3664
        %v3945 = vpack.c.b16 %v3673, %v3665
        %v3946 = vpack.c.b16 %v3674, %v3666
        %v3947 = vpack.c.b16 %v3683, %v3675
        %v3948 = vpack.c.b16 %v3684, %v3676
        %v3949 = vpack.c.b16 %v3685, %v3677
        %v3950 = vpack.c.b16 %v3686, %v3678
        %v3951 = vpack.c.b16 %v3687, %v3679
        %v3952 = vpack.c.b16 %v3688, %v3680
        %v3953 = vpack.c.b16 %v3689, %v3681
        %v3954 = vpack.c.b16 %v3690, %v3682
        %v3955 = vpack.c.b16 %v3699, %v3691
        %v3956 = vpack.c.b16 %v3700, %v3692
        %v3957 = vpack.c.b16 %v3701, %v3693
        %v3958 = vpack.c.b16 %v3702, %v3694
        %v3959 = vpack.c.b16 %v3703, %v3695
        %v3960 = vpack.c.b16 %v3704, %v3696
        %v3961 = vpack.c.b16 %v3705, %v3697
        %v3962 = vpack.c.b16 %v3706, %v3698
        %4219 = vmatprep.subr.bf16.mxu0 %v3764
        %4220 = vmatpush1.bf16.msra.mxu0 %v3763
        %4221 = vmatprep.subr.bf16.mxu0 %v3756
        %4222 = vmatpush1.bf16.msra.mxu0 %v3755
        %4223 = vmatprep.subr.bf16.mxu0 %v3748
        %4224 = vmatpush1.bf16.msra.mxu0 %v3747
        %4225 = vmatprep.subr.bf16.mxu0 %v3740
        %4226 = vmatpush1.bf16.msra.mxu0 %v3739
        %4227 = vmatprep.subr.bf16.mxu0 %v3732
        %4228 = vmatpush1.bf16.msra.mxu0 %v3731
        %4229 = vmatprep.subr.bf16.mxu0 %v3724
        %4230 = vmatpush1.bf16.msra.mxu0 %v3723
        %4231 = vmatprep.subr.bf16.mxu0 %v3716
        %4232 = vmatpush1.bf16.msra.mxu0 %v3715
        %4233 = vmatprep.subr.bf16.mxu0 %v3708
        %4234 = vmatpush1.bf16.msra.mxu0 %v3707
        %4235 = vmatprep.subr.bf16.mxu0 %v3828
        %4236 = vmatpush2.bf16.msra.mxu0 %v3827
        %4237 = vmatprep.subr.bf16.mxu0 %v3820
        %4238 = vmatpush2.bf16.msra.mxu0 %v3819
        %4239 = vmatprep.subr.bf16.mxu0 %v3812
        %4240 = vmatpush2.bf16.msra.mxu0 %v3811
        %4241 = vmatprep.subr.bf16.mxu0 %v3804
        %4242 = vmatpush2.bf16.msra.mxu0 %v3803
        %4243 = vmatprep.subr.bf16.mxu0 %v3796
        %4244 = vmatpush2.bf16.msra.mxu0 %v3795
        %4245 = vmatprep.subr.bf16.mxu0 %v3788
        %4246 = vmatpush2.bf16.msra.mxu0 %v3787
        %4247 = vmatprep.subr.bf16.mxu0 %v3780
        %4248 = vmatpush2.bf16.msra.mxu0 %v3779
        %4249 = vmatprep.subr.bf16.mxu0 %v3772
        %4250 = vmatpush2.bf16.msra.mxu0 %v3771
        %4251 = vmatprep.mubr.bf16.mxu0 %v2812
        %4252 = vmatmul.mubr.bf16.gmra.mxu0 %v2811
        %v4253 = vpop.f32.mrf.mxu0
        %v4254 = vadd.f32 %v2582, %v4253
        %v4255 = vpop.f32.mrf.mxu0
        %v4256 = vadd.f32 %v2586, %v4255
        %v4257 = vpop.f32.mrf.mxu0
        %v4258 = vadd.f32 %v2582, %v4257
        %v4259 = vpop.f32.mrf.mxu0
        %v4260 = vadd.f32 %v2586, %v4259
        %4261 = vmatprep.mubr.bf16.mxu0 %v2816
        %4262 = vmatmul.mubr.bf16.gmra.mxu0 %v2815
        %v4263 = vpop.f32.mrf.mxu0
        %v4264 = vadd.f32 %v2582, %v4263
        %v4265 = vpop.f32.mrf.mxu0
        %v4266 = vadd.f32 %v2586, %v4265
        %v4267 = vpop.f32.mrf.mxu0
        %v4268 = vadd.f32 %v2582, %v4267
        %v4269 = vpop.f32.mrf.mxu0
        %v4270 = vadd.f32 %v2586, %v4269
        %4271 = vmatprep.mubr.bf16.mxu0 %v2820
        %4272 = vmatmul.mubr.bf16.gmra.mxu0 %v2819
        %v4273 = vpop.f32.mrf.mxu0
        %v4274 = vadd.f32 %v2582, %v4273
        %v4275 = vpop.f32.mrf.mxu0
        %v4276 = vadd.f32 %v2586, %v4275
        %v4277 = vpop.f32.mrf.mxu0
        %v4278 = vadd.f32 %v2582, %v4277
        %v4279 = vpop.f32.mrf.mxu0
        %v4280 = vadd.f32 %v2586, %v4279
        %4281 = vmatprep.mubr.bf16.mxu0 %v2824
        %4282 = vmatmul.mubr.bf16.gmra.mxu0 %v2823
        %v4283 = vpop.f32.mrf.mxu0
        %v4284 = vadd.f32 %v2582, %v4283
        %v4285 = vpop.f32.mrf.mxu0
        %v4286 = vadd.f32 %v2586, %v4285
        %v4287 = vpop.f32.mrf.mxu0
        %v4288 = vadd.f32 %v2582, %v4287
        %v4289 = vpop.f32.mrf.mxu0
        %v4290 = vadd.f32 %v2586, %v4289
        %4291 = vmatprep.mubr.bf16.mxu0 %v2828
        %4292 = vmatmul.mubr.bf16.gmra.mxu0 %v2827
        %v4293 = vpop.f32.mrf.mxu0
        %v4294 = vadd.f32 %v2582, %v4293
        %v4295 = vpop.f32.mrf.mxu0
        %v4296 = vadd.f32 %v2586, %v4295
        %v4297 = vpop.f32.mrf.mxu0
        %v4298 = vadd.f32 %v2582, %v4297
        %v4299 = vpop.f32.mrf.mxu0
        %v4300 = vadd.f32 %v2586, %v4299
        %4301 = vmatprep.mubr.bf16.mxu0 %v2832
        %4302 = vmatmul.mubr.bf16.gmra.mxu0 %v2831
        %v4303 = vpop.f32.mrf.mxu0
        %v4304 = vadd.f32 %v2582, %v4303
        %v4305 = vpop.f32.mrf.mxu0
        %v4306 = vadd.f32 %v2586, %v4305
        %v4307 = vpop.f32.mrf.mxu0
        %v4308 = vadd.f32 %v2582, %v4307
        %v4309 = vpop.f32.mrf.mxu0
        %v4310 = vadd.f32 %v2586, %v4309
        %4311 = vmatprep.mubr.bf16.mxu0 %v2836
        %4312 = vmatmul.mubr.bf16.gmra.mxu0 %v2835
        %v4313 = vpop.f32.mrf.mxu0
        %v4314 = vadd.f32 %v2582, %v4313
        %v4315 = vpop.f32.mrf.mxu0
        %v4316 = vadd.f32 %v2586, %v4315
        %v4317 = vpop.f32.mrf.mxu0
        %v4318 = vadd.f32 %v2582, %v4317
        %v4319 = vpop.f32.mrf.mxu0
        %v4320 = vadd.f32 %v2586, %v4319
        %4321 = vmatprep.mubr.bf16.mxu0 %v2840
        %4322 = vmatmul.mubr.bf16.gmra.mxu0 %v2839
        %v4323 = vpop.f32.mrf.mxu0
        %v4324 = vadd.f32 %v2582, %v4323
        %v4325 = vpop.f32.mrf.mxu0
        %v4326 = vadd.f32 %v2586, %v4325
        %v4327 = vpop.f32.mrf.mxu0
        %v4328 = vadd.f32 %v2582, %v4327
        %v4329 = vpop.f32.mrf.mxu0
        %v4330 = vadd.f32 %v2586, %v4329
        %4331 = vmatprep.mubr.bf16.mxu0 %v2844
        %4332 = vmatmul.mubr.bf16.gmra.mxu0 %v2843
        %v4333 = vpop.f32.mrf.mxu0
        %v4334 = vadd.f32 %v2582, %v4333
        %v4335 = vpop.f32.mrf.mxu0
        %v4336 = vadd.f32 %v2586, %v4335
        %v4337 = vpop.f32.mrf.mxu0
        %v4338 = vadd.f32 %v2582, %v4337
        %v4339 = vpop.f32.mrf.mxu0
        %v4340 = vadd.f32 %v2586, %v4339
        %4341 = vmatprep.mubr.bf16.mxu0 %v2848
        %4342 = vmatmul.mubr.bf16.gmra.mxu0 %v2847
        %v4343 = vpop.f32.mrf.mxu0
        %v4344 = vadd.f32 %v2582, %v4343
        %v4345 = vpop.f32.mrf.mxu0
        %v4346 = vadd.f32 %v2586, %v4345
        %v4347 = vpop.f32.mrf.mxu0
        %v4348 = vadd.f32 %v2582, %v4347
        %v4349 = vpop.f32.mrf.mxu0
        %v4350 = vadd.f32 %v2586, %v4349
        %4351 = vmatprep.mubr.bf16.mxu0 %v2852
        %4352 = vmatmul.mubr.bf16.gmra.mxu0 %v2851
        %v4353 = vpop.f32.mrf.mxu0
        %v4354 = vadd.f32 %v2582, %v4353
        %v4355 = vpop.f32.mrf.mxu0
        %v4356 = vadd.f32 %v2586, %v4355
        %v4357 = vpop.f32.mrf.mxu0
        %v4358 = vadd.f32 %v2582, %v4357
        %v4359 = vpop.f32.mrf.mxu0
        %v4360 = vadd.f32 %v2586, %v4359
        %4361 = vmatprep.mubr.bf16.mxu0 %v2856
        %4362 = vmatmul.mubr.bf16.gmra.mxu0 %v2855
        %v4363 = vpop.f32.mrf.mxu0
        %v4364 = vadd.f32 %v2582, %v4363
        %v4365 = vpop.f32.mrf.mxu0
        %v4366 = vadd.f32 %v2586, %v4365
        %v4367 = vpop.f32.mrf.mxu0
        %v4368 = vadd.f32 %v2582, %v4367
        %v4369 = vpop.f32.mrf.mxu0
        %v4370 = vadd.f32 %v2586, %v4369
        %4371 = vmatprep.mubr.bf16.mxu0 %v2860
        %4372 = vmatmul.mubr.bf16.gmra.mxu0 %v2859
        %v4373 = vpop.f32.mrf.mxu0
        %v4374 = vadd.f32 %v2582, %v4373
        %v4375 = vpop.f32.mrf.mxu0
        %v4376 = vadd.f32 %v2586, %v4375
        %v4377 = vpop.f32.mrf.mxu0
        %v4378 = vadd.f32 %v2582, %v4377
        %v4379 = vpop.f32.mrf.mxu0
        %v4380 = vadd.f32 %v2586, %v4379
        %4381 = vmatprep.mubr.bf16.mxu0 %v2864
        %4382 = vmatmul.mubr.bf16.gmra.mxu0 %v2863
        %v4383 = vpop.f32.mrf.mxu0
        %v4384 = vadd.f32 %v2582, %v4383
        %v4385 = vpop.f32.mrf.mxu0
        %v4386 = vadd.f32 %v2586, %v4385
        %v4387 = vpop.f32.mrf.mxu0
        %v4388 = vadd.f32 %v2582, %v4387
        %v4389 = vpop.f32.mrf.mxu0
        %v4390 = vadd.f32 %v2586, %v4389
        %4391 = vmatprep.mubr.bf16.mxu0 %v2868
        %4392 = vmatmul.mubr.bf16.gmra.mxu0 %v2867
        %v4393 = vpop.f32.mrf.mxu0
        %v4394 = vadd.f32 %v2582, %v4393
        %v4395 = vpop.f32.mrf.mxu0
        %v4396 = vadd.f32 %v2586, %v4395
        %v4397 = vpop.f32.mrf.mxu0
        %v4398 = vadd.f32 %v2582, %v4397
        %v4399 = vpop.f32.mrf.mxu0
        %v4400 = vadd.f32 %v2586, %v4399
        %4401 = vmatprep.mubr.bf16.mxu0 %v2872
        %4402 = vmatmul.mubr.bf16.gmra.mxu0 %v2871
        %v4403 = vpop.f32.mrf.mxu0
        %v4404 = vadd.f32 %v2582, %v4403
        %v4405 = vpop.f32.mrf.mxu0
        %v4406 = vadd.f32 %v2586, %v4405
        %v4407 = vpop.f32.mrf.mxu0
        %v4408 = vadd.f32 %v2582, %v4407
        %v4409 = vpop.f32.mrf.mxu0
        %v4410 = vadd.f32 %v2586, %v4409
        %4411 = vdwg.mxu0
        %4412 = vmatprep.subr.bf16.mxu0 %v3892
        %4413 = vmatpush1.bf16.msra.mxu0 %v3891
        %4414 = vmatprep.subr.bf16.mxu0 %v3884
        %4415 = vmatpush1.bf16.msra.mxu0 %v3883
        %4416 = vmatprep.subr.bf16.mxu0 %v3876
        %4417 = vmatpush1.bf16.msra.mxu0 %v3875
        %4418 = vmatprep.subr.bf16.mxu0 %v3868
        %4419 = vmatpush1.bf16.msra.mxu0 %v3867
        %4420 = vmatprep.subr.bf16.mxu0 %v3860
        %4421 = vmatpush1.bf16.msra.mxu0 %v3859
        %4422 = vmatprep.subr.bf16.mxu0 %v3852
        %4423 = vmatpush1.bf16.msra.mxu0 %v3851
        %4424 = vmatprep.subr.bf16.mxu0 %v3844
        %4425 = vmatpush1.bf16.msra.mxu0 %v3843
        %4426 = vmatprep.subr.bf16.mxu0 %v3836
        %4427 = vmatpush1.bf16.msra.mxu0 %v3835
        %4428 = vmatprep.subr.bf16.mxu0 %v3956
        %4429 = vmatpush2.bf16.msra.mxu0 %v3955
        %4430 = vmatprep.subr.bf16.mxu0 %v3948
        %4431 = vmatpush2.bf16.msra.mxu0 %v3947
        %4432 = vmatprep.subr.bf16.mxu0 %v3940
        %4433 = vmatpush2.bf16.msra.mxu0 %v3939
        %4434 = vmatprep.subr.bf16.mxu0 %v3932
        %4435 = vmatpush2.bf16.msra.mxu0 %v3931
        %4436 = vmatprep.subr.bf16.mxu0 %v3924
        %4437 = vmatpush2.bf16.msra.mxu0 %v3923
        %4438 = vmatprep.subr.bf16.mxu0 %v3916
        %4439 = vmatpush2.bf16.msra.mxu0 %v3915
        %4440 = vmatprep.subr.bf16.mxu0 %v3908
        %4441 = vmatpush2.bf16.msra.mxu0 %v3907
        %4442 = vmatprep.subr.bf16.mxu0 %v3900
        %4443 = vmatpush2.bf16.msra.mxu0 %v3899
        %4444 = vmatprep.mubr.bf16.mxu0 %v2814
        %4445 = vmatmul.mubr.bf16.gmra.mxu0 %v2813
        %v4446 = vpop.f32.mrf.mxu0
        %v4447 = vadd.f32 %v4254, %v4446
        %v4448 = vpop.f32.mrf.mxu0
        %v4449 = vadd.f32 %v4256, %v4448
        %v4450 = vpop.f32.mrf.mxu0
        %v4451 = vadd.f32 %v4258, %v4450
        %v4452 = vpop.f32.mrf.mxu0
        %v4453 = vadd.f32 %v4260, %v4452
        %4454 = vmatprep.mubr.bf16.mxu0 %v2818
        %4455 = vmatmul.mubr.bf16.gmra.mxu0 %v2817
        %v4456 = vpop.f32.mrf.mxu0
        %v4457 = vadd.f32 %v4264, %v4456
        %v4458 = vpop.f32.mrf.mxu0
        %v4459 = vadd.f32 %v4266, %v4458
        %v4460 = vpop.f32.mrf.mxu0
        %v4461 = vadd.f32 %v4268, %v4460
        %v4462 = vpop.f32.mrf.mxu0
        %v4463 = vadd.f32 %v4270, %v4462
        %4464 = vmatprep.mubr.bf16.mxu0 %v2822
        %4465 = vmatmul.mubr.bf16.gmra.mxu0 %v2821
        %v4466 = vpop.f32.mrf.mxu0
        %v4467 = vadd.f32 %v4274, %v4466
        %v4468 = vpop.f32.mrf.mxu0
        %v4469 = vadd.f32 %v4276, %v4468
        %v4470 = vpop.f32.mrf.mxu0
        %v4471 = vadd.f32 %v4278, %v4470
        %v4472 = vpop.f32.mrf.mxu0
        %v4473 = vadd.f32 %v4280, %v4472
        %4474 = vmatprep.mubr.bf16.mxu0 %v2826
        %4475 = vmatmul.mubr.bf16.gmra.mxu0 %v2825
        %v4476 = vpop.f32.mrf.mxu0
        %v4477 = vadd.f32 %v4284, %v4476
        %v4478 = vpop.f32.mrf.mxu0
        %v4479 = vadd.f32 %v4286, %v4478
        %v4480 = vpop.f32.mrf.mxu0
        %v4481 = vadd.f32 %v4288, %v4480
        %v4482 = vpop.f32.mrf.mxu0
        %v4483 = vadd.f32 %v4290, %v4482
        %4484 = vmatprep.mubr.bf16.mxu0 %v2830
        %4485 = vmatmul.mubr.bf16.gmra.mxu0 %v2829
        %v4486 = vpop.f32.mrf.mxu0
        %v4487 = vadd.f32 %v4294, %v4486
        %v4488 = vpop.f32.mrf.mxu0
        %v4489 = vadd.f32 %v4296, %v4488
        %v4490 = vpop.f32.mrf.mxu0
        %v4491 = vadd.f32 %v4298, %v4490
        %v4492 = vpop.f32.mrf.mxu0
        %v4493 = vadd.f32 %v4300, %v4492
        %4494 = vmatprep.mubr.bf16.mxu0 %v2834
        %4495 = vmatmul.mubr.bf16.gmra.mxu0 %v2833
        %v4496 = vpop.f32.mrf.mxu0
        %v4497 = vadd.f32 %v4304, %v4496
        %v4498 = vpop.f32.mrf.mxu0
        %v4499 = vadd.f32 %v4306, %v4498
        %v4500 = vpop.f32.mrf.mxu0
        %v4501 = vadd.f32 %v4308, %v4500
        %v4502 = vpop.f32.mrf.mxu0
        %v4503 = vadd.f32 %v4310, %v4502
        %4504 = vmatprep.mubr.bf16.mxu0 %v2838
        %4505 = vmatmul.mubr.bf16.gmra.mxu0 %v2837
        %v4506 = vpop.f32.mrf.mxu0
        %v4507 = vadd.f32 %v4314, %v4506
        %v4508 = vpop.f32.mrf.mxu0
        %v4509 = vadd.f32 %v4316, %v4508
        %v4510 = vpop.f32.mrf.mxu0
        %v4511 = vadd.f32 %v4318, %v4510
        %v4512 = vpop.f32.mrf.mxu0
        %v4513 = vadd.f32 %v4320, %v4512
        %4514 = vmatprep.mubr.bf16.mxu0 %v2842
        %4515 = vmatmul.mubr.bf16.gmra.mxu0 %v2841
        %v4516 = vpop.f32.mrf.mxu0
        %v4517 = vadd.f32 %v4324, %v4516
        %v4518 = vpop.f32.mrf.mxu0
        %v4519 = vadd.f32 %v4326, %v4518
        %v4520 = vpop.f32.mrf.mxu0
        %v4521 = vadd.f32 %v4328, %v4520
        %v4522 = vpop.f32.mrf.mxu0
        %v4523 = vadd.f32 %v4330, %v4522
        %4524 = vmatprep.mubr.bf16.mxu0 %v2846
        %4525 = vmatmul.mubr.bf16.gmra.mxu0 %v2845
        %v4526 = vpop.f32.mrf.mxu0
        %v4527 = vadd.f32 %v4334, %v4526
        %v4528 = vpop.f32.mrf.mxu0
        %v4529 = vadd.f32 %v4336, %v4528
        %v4530 = vpop.f32.mrf.mxu0
        %v4531 = vadd.f32 %v4338, %v4530
        %v4532 = vpop.f32.mrf.mxu0
        %v4533 = vadd.f32 %v4340, %v4532
        %4534 = vmatprep.mubr.bf16.mxu0 %v2850
        %4535 = vmatmul.mubr.bf16.gmra.mxu0 %v2849
        %v4536 = vpop.f32.mrf.mxu0
        %v4537 = vadd.f32 %v4344, %v4536
        %v4538 = vpop.f32.mrf.mxu0
        %v4539 = vadd.f32 %v4346, %v4538
        %v4540 = vpop.f32.mrf.mxu0
        %v4541 = vadd.f32 %v4348, %v4540
        %v4542 = vpop.f32.mrf.mxu0
        %v4543 = vadd.f32 %v4350, %v4542
        %4544 = vmatprep.mubr.bf16.mxu0 %v2854
        %4545 = vmatmul.mubr.bf16.gmra.mxu0 %v2853
        %v4546 = vpop.f32.mrf.mxu0
        %v4547 = vadd.f32 %v4354, %v4546
        %v4548 = vpop.f32.mrf.mxu0
        %v4549 = vadd.f32 %v4356, %v4548
        %v4550 = vpop.f32.mrf.mxu0
        %v4551 = vadd.f32 %v4358, %v4550
        %v4552 = vpop.f32.mrf.mxu0
        %v4553 = vadd.f32 %v4360, %v4552
        %4554 = vmatprep.mubr.bf16.mxu0 %v2858
        %4555 = vmatmul.mubr.bf16.gmra.mxu0 %v2857
        %v4556 = vpop.f32.mrf.mxu0
        %v4557 = vadd.f32 %v4364, %v4556
        %v4558 = vpop.f32.mrf.mxu0
        %v4559 = vadd.f32 %v4366, %v4558
        %v4560 = vpop.f32.mrf.mxu0
        %v4561 = vadd.f32 %v4368, %v4560
        %v4562 = vpop.f32.mrf.mxu0
        %v4563 = vadd.f32 %v4370, %v4562
        %4564 = vmatprep.mubr.bf16.mxu0 %v2862
        %4565 = vmatmul.mubr.bf16.gmra.mxu0 %v2861
        %v4566 = vpop.f32.mrf.mxu0
        %v4567 = vadd.f32 %v4374, %v4566
        %v4568 = vpop.f32.mrf.mxu0
        %v4569 = vadd.f32 %v4376, %v4568
        %v4570 = vpop.f32.mrf.mxu0
        %v4571 = vadd.f32 %v4378, %v4570
        %v4572 = vpop.f32.mrf.mxu0
        %v4573 = vadd.f32 %v4380, %v4572
        %4574 = vmatprep.mubr.bf16.mxu0 %v2866
        %4575 = vmatmul.mubr.bf16.gmra.mxu0 %v2865
        %v4576 = vpop.f32.mrf.mxu0
        %v4577 = vadd.f32 %v4384, %v4576
        %v4578 = vpop.f32.mrf.mxu0
        %v4579 = vadd.f32 %v4386, %v4578
        %v4580 = vpop.f32.mrf.mxu0
        %v4581 = vadd.f32 %v4388, %v4580
        %v4582 = vpop.f32.mrf.mxu0
        %v4583 = vadd.f32 %v4390, %v4582
        %4584 = vmatprep.mubr.bf16.mxu0 %v2870
        %4585 = vmatmul.mubr.bf16.gmra.mxu0 %v2869
        %v4586 = vpop.f32.mrf.mxu0
        %v4587 = vadd.f32 %v4394, %v4586
        %v4588 = vpop.f32.mrf.mxu0
        %v4589 = vadd.f32 %v4396, %v4588
        %v4590 = vpop.f32.mrf.mxu0
        %v4591 = vadd.f32 %v4398, %v4590
        %v4592 = vpop.f32.mrf.mxu0
        %v4593 = vadd.f32 %v4400, %v4592
        %4594 = vmatprep.mubr.bf16.mxu0 %v2874
        %4595 = vmatmul.mubr.bf16.gmra.mxu0 %v2873
        %v4596 = vpop.f32.mrf.mxu0
        %v4597 = vadd.f32 %v4404, %v4596
        %v4598 = vpop.f32.mrf.mxu0
        %v4599 = vadd.f32 %v4406, %v4598
        %v4600 = vpop.f32.mrf.mxu0
        %v4601 = vadd.f32 %v4408, %v4600
        %v4602 = vpop.f32.mrf.mxu0
        %v4603 = vadd.f32 %v4410, %v4602
        %4604 = vdwg.mxu0
        %4605 = vmatprep.subr.bf16.mxu0 %v3766
        %4606 = vmatpush1.bf16.msra.mxu0 %v3765
        %4607 = vmatprep.subr.bf16.mxu0 %v3758
        %4608 = vmatpush1.bf16.msra.mxu0 %v3757
        %4609 = vmatprep.subr.bf16.mxu0 %v3750
        %4610 = vmatpush1.bf16.msra.mxu0 %v3749
        %4611 = vmatprep.subr.bf16.mxu0 %v3742
        %4612 = vmatpush1.bf16.msra.mxu0 %v3741
        %4613 = vmatprep.subr.bf16.mxu0 %v3734
        %4614 = vmatpush1.bf16.msra.mxu0 %v3733
        %4615 = vmatprep.subr.bf16.mxu0 %v3726
        %4616 = vmatpush1.bf16.msra.mxu0 %v3725
        %4617 = vmatprep.subr.bf16.mxu0 %v3718
        %4618 = vmatpush1.bf16.msra.mxu0 %v3717
        %4619 = vmatprep.subr.bf16.mxu0 %v3710
        %4620 = vmatpush1.bf16.msra.mxu0 %v3709
        %4621 = vmatprep.subr.bf16.mxu0 %v3830
        %4622 = vmatpush2.bf16.msra.mxu0 %v3829
        %4623 = vmatprep.subr.bf16.mxu0 %v3822
        %4624 = vmatpush2.bf16.msra.mxu0 %v3821
        %4625 = vmatprep.subr.bf16.mxu0 %v3814
        %4626 = vmatpush2.bf16.msra.mxu0 %v3813
        %4627 = vmatprep.subr.bf16.mxu0 %v3806
        %4628 = vmatpush2.bf16.msra.mxu0 %v3805
        %4629 = vmatprep.subr.bf16.mxu0 %v3798
        %4630 = vmatpush2.bf16.msra.mxu0 %v3797
        %4631 = vmatprep.subr.bf16.mxu0 %v3790
        %4632 = vmatpush2.bf16.msra.mxu0 %v3789
        %4633 = vmatprep.subr.bf16.mxu0 %v3782
        %4634 = vmatpush2.bf16.msra.mxu0 %v3781
        %4635 = vmatprep.subr.bf16.mxu0 %v3774
        %4636 = vmatpush2.bf16.msra.mxu0 %v3773
        %4637 = vmatprep.mubr.bf16.mxu0 %v2812
        %4638 = vmatmul.mubr.bf16.gmra.mxu0 %v2811
        %v4639 = vpop.f32.mrf.mxu0
        %v4640 = vadd.f32 %v2590, %v4639
        %v4641 = vpop.f32.mrf.mxu0
        %v4642 = vadd.f32 %v2594, %v4641
        %v4643 = vpop.f32.mrf.mxu0
        %v4644 = vadd.f32 %v2590, %v4643
        %v4645 = vpop.f32.mrf.mxu0
        %v4646 = vadd.f32 %v2594, %v4645
        %4647 = vmatprep.mubr.bf16.mxu0 %v2816
        %4648 = vmatmul.mubr.bf16.gmra.mxu0 %v2815
        %v4649 = vpop.f32.mrf.mxu0
        %v4650 = vadd.f32 %v2590, %v4649
        %v4651 = vpop.f32.mrf.mxu0
        %v4652 = vadd.f32 %v2594, %v4651
        %v4653 = vpop.f32.mrf.mxu0
        %v4654 = vadd.f32 %v2590, %v4653
        %v4655 = vpop.f32.mrf.mxu0
        %v4656 = vadd.f32 %v2594, %v4655
        %4657 = vmatprep.mubr.bf16.mxu0 %v2820
        %4658 = vmatmul.mubr.bf16.gmra.mxu0 %v2819
        %v4659 = vpop.f32.mrf.mxu0
        %v4660 = vadd.f32 %v2590, %v4659
        %v4661 = vpop.f32.mrf.mxu0
        %v4662 = vadd.f32 %v2594, %v4661
        %v4663 = vpop.f32.mrf.mxu0
        %v4664 = vadd.f32 %v2590, %v4663
        %v4665 = vpop.f32.mrf.mxu0
        %v4666 = vadd.f32 %v2594, %v4665
        %4667 = vmatprep.mubr.bf16.mxu0 %v2824
        %4668 = vmatmul.mubr.bf16.gmra.mxu0 %v2823
        %v4669 = vpop.f32.mrf.mxu0
        %v4670 = vadd.f32 %v2590, %v4669
        %v4671 = vpop.f32.mrf.mxu0
        %v4672 = vadd.f32 %v2594, %v4671
        %v4673 = vpop.f32.mrf.mxu0
        %v4674 = vadd.f32 %v2590, %v4673
        %v4675 = vpop.f32.mrf.mxu0
        %v4676 = vadd.f32 %v2594, %v4675
        %4677 = vmatprep.mubr.bf16.mxu0 %v2828
        %4678 = vmatmul.mubr.bf16.gmra.mxu0 %v2827
        %v4679 = vpop.f32.mrf.mxu0
        %v4680 = vadd.f32 %v2590, %v4679
        %v4681 = vpop.f32.mrf.mxu0
        %v4682 = vadd.f32 %v2594, %v4681
        %v4683 = vpop.f32.mrf.mxu0
        %v4684 = vadd.f32 %v2590, %v4683
        %v4685 = vpop.f32.mrf.mxu0
        %v4686 = vadd.f32 %v2594, %v4685
        %4687 = vmatprep.mubr.bf16.mxu0 %v2832
        %4688 = vmatmul.mubr.bf16.gmra.mxu0 %v2831
        %v4689 = vpop.f32.mrf.mxu0
        %v4690 = vadd.f32 %v2590, %v4689
        %v4691 = vpop.f32.mrf.mxu0
        %v4692 = vadd.f32 %v2594, %v4691
        %v4693 = vpop.f32.mrf.mxu0
        %v4694 = vadd.f32 %v2590, %v4693
        %v4695 = vpop.f32.mrf.mxu0
        %v4696 = vadd.f32 %v2594, %v4695
        %4697 = vmatprep.mubr.bf16.mxu0 %v2836
        %4698 = vmatmul.mubr.bf16.gmra.mxu0 %v2835
        %v4699 = vpop.f32.mrf.mxu0
        %v4700 = vadd.f32 %v2590, %v4699
        %v4701 = vpop.f32.mrf.mxu0
        %v4702 = vadd.f32 %v2594, %v4701
        %v4703 = vpop.f32.mrf.mxu0
        %v4704 = vadd.f32 %v2590, %v4703
        %v4705 = vpop.f32.mrf.mxu0
        %v4706 = vadd.f32 %v2594, %v4705
        %4707 = vmatprep.mubr.bf16.mxu0 %v2840
        %4708 = vmatmul.mubr.bf16.gmra.mxu0 %v2839
        %v4709 = vpop.f32.mrf.mxu0
        %v4710 = vadd.f32 %v2590, %v4709
        %v4711 = vpop.f32.mrf.mxu0
        %v4712 = vadd.f32 %v2594, %v4711
        %v4713 = vpop.f32.mrf.mxu0
        %v4714 = vadd.f32 %v2590, %v4713
        %v4715 = vpop.f32.mrf.mxu0
        %v4716 = vadd.f32 %v2594, %v4715
        %4717 = vmatprep.mubr.bf16.mxu0 %v2844
        %4718 = vmatmul.mubr.bf16.gmra.mxu0 %v2843
        %v4719 = vpop.f32.mrf.mxu0
        %v4720 = vadd.f32 %v2590, %v4719
        %v4721 = vpop.f32.mrf.mxu0
        %v4722 = vadd.f32 %v2594, %v4721
        %v4723 = vpop.f32.mrf.mxu0
        %v4724 = vadd.f32 %v2590, %v4723
        %v4725 = vpop.f32.mrf.mxu0
        %v4726 = vadd.f32 %v2594, %v4725
        %4727 = vmatprep.mubr.bf16.mxu0 %v2848
        %4728 = vmatmul.mubr.bf16.gmra.mxu0 %v2847
        %v4729 = vpop.f32.mrf.mxu0
        %v4730 = vadd.f32 %v2590, %v4729
        %v4731 = vpop.f32.mrf.mxu0
        %v4732 = vadd.f32 %v2594, %v4731
        %v4733 = vpop.f32.mrf.mxu0
        %v4734 = vadd.f32 %v2590, %v4733
        %v4735 = vpop.f32.mrf.mxu0
        %v4736 = vadd.f32 %v2594, %v4735
        %4737 = vmatprep.mubr.bf16.mxu0 %v2852
        %4738 = vmatmul.mubr.bf16.gmra.mxu0 %v2851
        %v4739 = vpop.f32.mrf.mxu0
        %v4740 = vadd.f32 %v2590, %v4739
        %v4741 = vpop.f32.mrf.mxu0
        %v4742 = vadd.f32 %v2594, %v4741
        %v4743 = vpop.f32.mrf.mxu0
        %v4744 = vadd.f32 %v2590, %v4743
        %v4745 = vpop.f32.mrf.mxu0
        %v4746 = vadd.f32 %v2594, %v4745
        %4747 = vmatprep.mubr.bf16.mxu0 %v2856
        %4748 = vmatmul.mubr.bf16.gmra.mxu0 %v2855
        %v4749 = vpop.f32.mrf.mxu0
        %v4750 = vadd.f32 %v2590, %v4749
        %v4751 = vpop.f32.mrf.mxu0
        %v4752 = vadd.f32 %v2594, %v4751
        %v4753 = vpop.f32.mrf.mxu0
        %v4754 = vadd.f32 %v2590, %v4753
        %v4755 = vpop.f32.mrf.mxu0
        %v4756 = vadd.f32 %v2594, %v4755
        %4757 = vmatprep.mubr.bf16.mxu0 %v2860
        %4758 = vmatmul.mubr.bf16.gmra.mxu0 %v2859
        %v4759 = vpop.f32.mrf.mxu0
        %v4760 = vadd.f32 %v2590, %v4759
        %v4761 = vpop.f32.mrf.mxu0
        %v4762 = vadd.f32 %v2594, %v4761
        %v4763 = vpop.f32.mrf.mxu0
        %v4764 = vadd.f32 %v2590, %v4763
        %v4765 = vpop.f32.mrf.mxu0
        %v4766 = vadd.f32 %v2594, %v4765
        %4767 = vmatprep.mubr.bf16.mxu0 %v2864
        %4768 = vmatmul.mubr.bf16.gmra.mxu0 %v2863
        %v4769 = vpop.f32.mrf.mxu0
        %v4770 = vadd.f32 %v2590, %v4769
        %v4771 = vpop.f32.mrf.mxu0
        %v4772 = vadd.f32 %v2594, %v4771
        %v4773 = vpop.f32.mrf.mxu0
        %v4774 = vadd.f32 %v2590, %v4773
        %v4775 = vpop.f32.mrf.mxu0
        %v4776 = vadd.f32 %v2594, %v4775
        %4777 = vmatprep.mubr.bf16.mxu0 %v2868
        %4778 = vmatmul.mubr.bf16.gmra.mxu0 %v2867
        %v4779 = vpop.f32.mrf.mxu0
        %v4780 = vadd.f32 %v2590, %v4779
        %v4781 = vpop.f32.mrf.mxu0
        %v4782 = vadd.f32 %v2594, %v4781
        %v4783 = vpop.f32.mrf.mxu0
        %v4784 = vadd.f32 %v2590, %v4783
        %v4785 = vpop.f32.mrf.mxu0
        %v4786 = vadd.f32 %v2594, %v4785
        %4787 = vmatprep.mubr.bf16.mxu0 %v2872
        %4788 = vmatmul.mubr.bf16.gmra.mxu0 %v2871
        %v4789 = vpop.f32.mrf.mxu0
        %v4790 = vadd.f32 %v2590, %v4789
        %v4791 = vpop.f32.mrf.mxu0
        %v4792 = vadd.f32 %v2594, %v4791
        %v4793 = vpop.f32.mrf.mxu0
        %v4794 = vadd.f32 %v2590, %v4793
        %v4795 = vpop.f32.mrf.mxu0
        %v4796 = vadd.f32 %v2594, %v4795
        %4797 = vdwg.mxu0
        %4798 = vmatprep.subr.bf16.mxu0 %v3894
        %4799 = vmatpush1.bf16.msra.mxu0 %v3893
        %4800 = vmatprep.subr.bf16.mxu0 %v3886
        %4801 = vmatpush1.bf16.msra.mxu0 %v3885
        %4802 = vmatprep.subr.bf16.mxu0 %v3878
        %4803 = vmatpush1.bf16.msra.mxu0 %v3877
        %4804 = vmatprep.subr.bf16.mxu0 %v3870
        %4805 = vmatpush1.bf16.msra.mxu0 %v3869
        %4806 = vmatprep.subr.bf16.mxu0 %v3862
        %4807 = vmatpush1.bf16.msra.mxu0 %v3861
        %4808 = vmatprep.subr.bf16.mxu0 %v3854
        %4809 = vmatpush1.bf16.msra.mxu0 %v3853
        %4810 = vmatprep.subr.bf16.mxu0 %v3846
        %4811 = vmatpush1.bf16.msra.mxu0 %v3845
        %4812 = vmatprep.subr.bf16.mxu0 %v3838
        %4813 = vmatpush1.bf16.msra.mxu0 %v3837
        %4814 = vmatprep.subr.bf16.mxu0 %v3958
        %4815 = vmatpush2.bf16.msra.mxu0 %v3957
        %4816 = vmatprep.subr.bf16.mxu0 %v3950
        %4817 = vmatpush2.bf16.msra.mxu0 %v3949
        %4818 = vmatprep.subr.bf16.mxu0 %v3942
        %4819 = vmatpush2.bf16.msra.mxu0 %v3941
        %4820 = vmatprep.subr.bf16.mxu0 %v3934
        %4821 = vmatpush2.bf16.msra.mxu0 %v3933
        %4822 = vmatprep.subr.bf16.mxu0 %v3926
        %4823 = vmatpush2.bf16.msra.mxu0 %v3925
        %4824 = vmatprep.subr.bf16.mxu0 %v3918
        %4825 = vmatpush2.bf16.msra.mxu0 %v3917
        %4826 = vmatprep.subr.bf16.mxu0 %v3910
        %4827 = vmatpush2.bf16.msra.mxu0 %v3909
        %4828 = vmatprep.subr.bf16.mxu0 %v3902
        %4829 = vmatpush2.bf16.msra.mxu0 %v3901
        %4830 = vmatprep.mubr.bf16.mxu0 %v2814
        %4831 = vmatmul.mubr.bf16.gmra.mxu0 %v2813
        %v4832 = vpop.f32.mrf.mxu0
        %v4833 = vadd.f32 %v4640, %v4832
        %v4834 = vpop.f32.mrf.mxu0
        %v4835 = vadd.f32 %v4642, %v4834
        %v4836 = vpop.f32.mrf.mxu0
        %v4837 = vadd.f32 %v4644, %v4836
        %v4838 = vpop.f32.mrf.mxu0
        %v4839 = vadd.f32 %v4646, %v4838
        %4840 = vmatprep.mubr.bf16.mxu0 %v2818
        %4841 = vmatmul.mubr.bf16.gmra.mxu0 %v2817
        %v4842 = vpop.f32.mrf.mxu0
        %v4843 = vadd.f32 %v4650, %v4842
        %v4844 = vpop.f32.mrf.mxu0
        %v4845 = vadd.f32 %v4652, %v4844
        %v4846 = vpop.f32.mrf.mxu0
        %v4847 = vadd.f32 %v4654, %v4846
        %v4848 = vpop.f32.mrf.mxu0
        %v4849 = vadd.f32 %v4656, %v4848
        %4850 = vmatprep.mubr.bf16.mxu0 %v2822
        %4851 = vmatmul.mubr.bf16.gmra.mxu0 %v2821
        %v4852 = vpop.f32.mrf.mxu0
        %v4853 = vadd.f32 %v4660, %v4852
        %v4854 = vpop.f32.mrf.mxu0
        %v4855 = vadd.f32 %v4662, %v4854
        %v4856 = vpop.f32.mrf.mxu0
        %v4857 = vadd.f32 %v4664, %v4856
        %v4858 = vpop.f32.mrf.mxu0
        %v4859 = vadd.f32 %v4666, %v4858
        %4860 = vmatprep.mubr.bf16.mxu0 %v2826
        %4861 = vmatmul.mubr.bf16.gmra.mxu0 %v2825
        %v4862 = vpop.f32.mrf.mxu0
        %v4863 = vadd.f32 %v4670, %v4862
        %v4864 = vpop.f32.mrf.mxu0
        %v4865 = vadd.f32 %v4672, %v4864
        %v4866 = vpop.f32.mrf.mxu0
        %v4867 = vadd.f32 %v4674, %v4866
        %v4868 = vpop.f32.mrf.mxu0
        %v4869 = vadd.f32 %v4676, %v4868
        %4870 = vmatprep.mubr.bf16.mxu0 %v2830
        %4871 = vmatmul.mubr.bf16.gmra.mxu0 %v2829
        %v4872 = vpop.f32.mrf.mxu0
        %v4873 = vadd.f32 %v4680, %v4872
        %v4874 = vpop.f32.mrf.mxu0
        %v4875 = vadd.f32 %v4682, %v4874
        %v4876 = vpop.f32.mrf.mxu0
        %v4877 = vadd.f32 %v4684, %v4876
        %v4878 = vpop.f32.mrf.mxu0
        %v4879 = vadd.f32 %v4686, %v4878
        %4880 = vmatprep.mubr.bf16.mxu0 %v2834
        %4881 = vmatmul.mubr.bf16.gmra.mxu0 %v2833
        %v4882 = vpop.f32.mrf.mxu0
        %v4883 = vadd.f32 %v4690, %v4882
        %v4884 = vpop.f32.mrf.mxu0
        %v4885 = vadd.f32 %v4692, %v4884
        %v4886 = vpop.f32.mrf.mxu0
        %v4887 = vadd.f32 %v4694, %v4886
        %v4888 = vpop.f32.mrf.mxu0
        %v4889 = vadd.f32 %v4696, %v4888
        %4890 = vmatprep.mubr.bf16.mxu0 %v2838
        %4891 = vmatmul.mubr.bf16.gmra.mxu0 %v2837
        %v4892 = vpop.f32.mrf.mxu0
        %v4893 = vadd.f32 %v4700, %v4892
        %v4894 = vpop.f32.mrf.mxu0
        %v4895 = vadd.f32 %v4702, %v4894
        %v4896 = vpop.f32.mrf.mxu0
        %v4897 = vadd.f32 %v4704, %v4896
        %v4898 = vpop.f32.mrf.mxu0
        %v4899 = vadd.f32 %v4706, %v4898
        %4900 = vmatprep.mubr.bf16.mxu0 %v2842
        %4901 = vmatmul.mubr.bf16.gmra.mxu0 %v2841
        %v4902 = vpop.f32.mrf.mxu0
        %v4903 = vadd.f32 %v4710, %v4902
        %v4904 = vpop.f32.mrf.mxu0
        %v4905 = vadd.f32 %v4712, %v4904
        %v4906 = vpop.f32.mrf.mxu0
        %v4907 = vadd.f32 %v4714, %v4906
        %v4908 = vpop.f32.mrf.mxu0
        %v4909 = vadd.f32 %v4716, %v4908
        %4910 = vmatprep.mubr.bf16.mxu0 %v2846
        %4911 = vmatmul.mubr.bf16.gmra.mxu0 %v2845
        %v4912 = vpop.f32.mrf.mxu0
        %v4913 = vadd.f32 %v4720, %v4912
        %v4914 = vpop.f32.mrf.mxu0
        %v4915 = vadd.f32 %v4722, %v4914
        %v4916 = vpop.f32.mrf.mxu0
        %v4917 = vadd.f32 %v4724, %v4916
        %v4918 = vpop.f32.mrf.mxu0
        %v4919 = vadd.f32 %v4726, %v4918
        %4920 = vmatprep.mubr.bf16.mxu0 %v2850
        %4921 = vmatmul.mubr.bf16.gmra.mxu0 %v2849
        %v4922 = vpop.f32.mrf.mxu0
        %v4923 = vadd.f32 %v4730, %v4922
        %v4924 = vpop.f32.mrf.mxu0
        %v4925 = vadd.f32 %v4732, %v4924
        %v4926 = vpop.f32.mrf.mxu0
        %v4927 = vadd.f32 %v4734, %v4926
        %v4928 = vpop.f32.mrf.mxu0
        %v4929 = vadd.f32 %v4736, %v4928
        %4930 = vmatprep.mubr.bf16.mxu0 %v2854
        %4931 = vmatmul.mubr.bf16.gmra.mxu0 %v2853
        %v4932 = vpop.f32.mrf.mxu0
        %v4933 = vadd.f32 %v4740, %v4932
        %v4934 = vpop.f32.mrf.mxu0
        %v4935 = vadd.f32 %v4742, %v4934
        %v4936 = vpop.f32.mrf.mxu0
        %v4937 = vadd.f32 %v4744, %v4936
        %v4938 = vpop.f32.mrf.mxu0
        %v4939 = vadd.f32 %v4746, %v4938
        %4940 = vmatprep.mubr.bf16.mxu0 %v2858
        %4941 = vmatmul.mubr.bf16.gmra.mxu0 %v2857
        %v4942 = vpop.f32.mrf.mxu0
        %v4943 = vadd.f32 %v4750, %v4942
        %v4944 = vpop.f32.mrf.mxu0
        %v4945 = vadd.f32 %v4752, %v4944
        %v4946 = vpop.f32.mrf.mxu0
        %v4947 = vadd.f32 %v4754, %v4946
        %v4948 = vpop.f32.mrf.mxu0
        %v4949 = vadd.f32 %v4756, %v4948
        %4950 = vmatprep.mubr.bf16.mxu0 %v2862
        %4951 = vmatmul.mubr.bf16.gmra.mxu0 %v2861
        %v4952 = vpop.f32.mrf.mxu0
        %v4953 = vadd.f32 %v4760, %v4952
        %v4954 = vpop.f32.mrf.mxu0
        %v4955 = vadd.f32 %v4762, %v4954
        %v4956 = vpop.f32.mrf.mxu0
        %v4957 = vadd.f32 %v4764, %v4956
        %v4958 = vpop.f32.mrf.mxu0
        %v4959 = vadd.f32 %v4766, %v4958
        %4960 = vmatprep.mubr.bf16.mxu0 %v2866
        %4961 = vmatmul.mubr.bf16.gmra.mxu0 %v2865
        %v4962 = vpop.f32.mrf.mxu0
        %v4963 = vadd.f32 %v4770, %v4962
        %v4964 = vpop.f32.mrf.mxu0
        %v4965 = vadd.f32 %v4772, %v4964
        %v4966 = vpop.f32.mrf.mxu0
        %v4967 = vadd.f32 %v4774, %v4966
        %v4968 = vpop.f32.mrf.mxu0
        %v4969 = vadd.f32 %v4776, %v4968
        %4970 = vmatprep.mubr.bf16.mxu0 %v2870
        %4971 = vmatmul.mubr.bf16.gmra.mxu0 %v2869
        %v4972 = vpop.f32.mrf.mxu0
        %v4973 = vadd.f32 %v4780, %v4972
        %v4974 = vpop.f32.mrf.mxu0
        %v4975 = vadd.f32 %v4782, %v4974
        %v4976 = vpop.f32.mrf.mxu0
        %v4977 = vadd.f32 %v4784, %v4976
        %v4978 = vpop.f32.mrf.mxu0
        %v4979 = vadd.f32 %v4786, %v4978
        %4980 = vmatprep.mubr.bf16.mxu0 %v2874
        %4981 = vmatmul.mubr.bf16.gmra.mxu0 %v2873
        %v4982 = vpop.f32.mrf.mxu0
        %v4983 = vadd.f32 %v4790, %v4982
        %v4984 = vpop.f32.mrf.mxu0
        %v4985 = vadd.f32 %v4792, %v4984
        %v4986 = vpop.f32.mrf.mxu0
        %v4987 = vadd.f32 %v4794, %v4986
        %v4988 = vpop.f32.mrf.mxu0
        %v4989 = vadd.f32 %v4796, %v4988
        %4990 = vdwg.mxu0
        %4991 = vmatprep.subr.bf16.mxu0 %v3768
        %4992 = vmatpush1.bf16.msra.mxu0 %v3767
        %4993 = vmatprep.subr.bf16.mxu0 %v3760
        %4994 = vmatpush1.bf16.msra.mxu0 %v3759
        %4995 = vmatprep.subr.bf16.mxu0 %v3752
        %4996 = vmatpush1.bf16.msra.mxu0 %v3751
        %4997 = vmatprep.subr.bf16.mxu0 %v3744
        %4998 = vmatpush1.bf16.msra.mxu0 %v3743
        %4999 = vmatprep.subr.bf16.mxu0 %v3736
        %5000 = vmatpush1.bf16.msra.mxu0 %v3735
        %5001 = vmatprep.subr.bf16.mxu0 %v3728
        %5002 = vmatpush1.bf16.msra.mxu0 %v3727
        %5003 = vmatprep.subr.bf16.mxu0 %v3720
        %5004 = vmatpush1.bf16.msra.mxu0 %v3719
        %5005 = vmatprep.subr.bf16.mxu0 %v3712
        %5006 = vmatpush1.bf16.msra.mxu0 %v3711
        %5007 = vmatprep.subr.bf16.mxu0 %v3832
        %5008 = vmatpush2.bf16.msra.mxu0 %v3831
        %5009 = vmatprep.subr.bf16.mxu0 %v3824
        %5010 = vmatpush2.bf16.msra.mxu0 %v3823
        %5011 = vmatprep.subr.bf16.mxu0 %v3816
        %5012 = vmatpush2.bf16.msra.mxu0 %v3815
        %5013 = vmatprep.subr.bf16.mxu0 %v3808
        %5014 = vmatpush2.bf16.msra.mxu0 %v3807
        %5015 = vmatprep.subr.bf16.mxu0 %v3800
        %5016 = vmatpush2.bf16.msra.mxu0 %v3799
        %5017 = vmatprep.subr.bf16.mxu0 %v3792
        %5018 = vmatpush2.bf16.msra.mxu0 %v3791
        %5019 = vmatprep.subr.bf16.mxu0 %v3784
        %5020 = vmatpush2.bf16.msra.mxu0 %v3783
        %5021 = vmatprep.subr.bf16.mxu0 %v3776
        %5022 = vmatpush2.bf16.msra.mxu0 %v3775
        %5023 = vmatprep.mubr.bf16.mxu0 %v2812
        %5024 = vmatmul.mubr.bf16.gmra.mxu0 %v2811
        %v5025 = vpop.f32.mrf.mxu0
        %v5026 = vadd.f32 %v2598, %v5025
        %v5027 = vpop.f32.mrf.mxu0
        %v5028 = vadd.f32 %v2602, %v5027
        %v5029 = vpop.f32.mrf.mxu0
        %v5030 = vadd.f32 %v2598, %v5029
        %v5031 = vpop.f32.mrf.mxu0
        %v5032 = vadd.f32 %v2602, %v5031
        %5033 = vmatprep.mubr.bf16.mxu0 %v2816
        %5034 = vmatmul.mubr.bf16.gmra.mxu0 %v2815
        %v5035 = vpop.f32.mrf.mxu0
        %v5036 = vadd.f32 %v2598, %v5035
        %v5037 = vpop.f32.mrf.mxu0
        %v5038 = vadd.f32 %v2602, %v5037
        %v5039 = vpop.f32.mrf.mxu0
        %v5040 = vadd.f32 %v2598, %v5039
        %v5041 = vpop.f32.mrf.mxu0
        %v5042 = vadd.f32 %v2602, %v5041
        %5043 = vmatprep.mubr.bf16.mxu0 %v2820
        %5044 = vmatmul.mubr.bf16.gmra.mxu0 %v2819
        %v5045 = vpop.f32.mrf.mxu0
        %v5046 = vadd.f32 %v2598, %v5045
        %v5047 = vpop.f32.mrf.mxu0
        %v5048 = vadd.f32 %v2602, %v5047
        %v5049 = vpop.f32.mrf.mxu0
        %v5050 = vadd.f32 %v2598, %v5049
        %v5051 = vpop.f32.mrf.mxu0
        %v5052 = vadd.f32 %v2602, %v5051
        %5053 = vmatprep.mubr.bf16.mxu0 %v2824
        %5054 = vmatmul.mubr.bf16.gmra.mxu0 %v2823
        %v5055 = vpop.f32.mrf.mxu0
        %v5056 = vadd.f32 %v2598, %v5055
        %v5057 = vpop.f32.mrf.mxu0
        %v5058 = vadd.f32 %v2602, %v5057
        %v5059 = vpop.f32.mrf.mxu0
        %v5060 = vadd.f32 %v2598, %v5059
        %v5061 = vpop.f32.mrf.mxu0
        %v5062 = vadd.f32 %v2602, %v5061
        %5063 = vmatprep.mubr.bf16.mxu0 %v2828
        %5064 = vmatmul.mubr.bf16.gmra.mxu0 %v2827
        %v5065 = vpop.f32.mrf.mxu0
        %v5066 = vadd.f32 %v2598, %v5065
        %v5067 = vpop.f32.mrf.mxu0
        %v5068 = vadd.f32 %v2602, %v5067
        %v5069 = vpop.f32.mrf.mxu0
        %v5070 = vadd.f32 %v2598, %v5069
        %v5071 = vpop.f32.mrf.mxu0
        %v5072 = vadd.f32 %v2602, %v5071
        %5073 = vmatprep.mubr.bf16.mxu0 %v2832
        %5074 = vmatmul.mubr.bf16.gmra.mxu0 %v2831
        %v5075 = vpop.f32.mrf.mxu0
        %v5076 = vadd.f32 %v2598, %v5075
        %v5077 = vpop.f32.mrf.mxu0
        %v5078 = vadd.f32 %v2602, %v5077
        %v5079 = vpop.f32.mrf.mxu0
        %v5080 = vadd.f32 %v2598, %v5079
        %v5081 = vpop.f32.mrf.mxu0
        %v5082 = vadd.f32 %v2602, %v5081
        %5083 = vmatprep.mubr.bf16.mxu0 %v2836
        %5084 = vmatmul.mubr.bf16.gmra.mxu0 %v2835
        %v5085 = vpop.f32.mrf.mxu0
        %v5086 = vadd.f32 %v2598, %v5085
        %v5087 = vpop.f32.mrf.mxu0
        %v5088 = vadd.f32 %v2602, %v5087
        %v5089 = vpop.f32.mrf.mxu0
        %v5090 = vadd.f32 %v2598, %v5089
        %v5091 = vpop.f32.mrf.mxu0
        %v5092 = vadd.f32 %v2602, %v5091
        %5093 = vmatprep.mubr.bf16.mxu0 %v2840
        %5094 = vmatmul.mubr.bf16.gmra.mxu0 %v2839
        %v5095 = vpop.f32.mrf.mxu0
        %v5096 = vadd.f32 %v2598, %v5095
        %v5097 = vpop.f32.mrf.mxu0
        %v5098 = vadd.f32 %v2602, %v5097
        %v5099 = vpop.f32.mrf.mxu0
        %v5100 = vadd.f32 %v2598, %v5099
        %v5101 = vpop.f32.mrf.mxu0
        %v5102 = vadd.f32 %v2602, %v5101
        %5103 = vmatprep.mubr.bf16.mxu0 %v2844
        %5104 = vmatmul.mubr.bf16.gmra.mxu0 %v2843
        %v5105 = vpop.f32.mrf.mxu0
        %v5106 = vadd.f32 %v2598, %v5105
        %v5107 = vpop.f32.mrf.mxu0
        %v5108 = vadd.f32 %v2602, %v5107
        %v5109 = vpop.f32.mrf.mxu0
        %v5110 = vadd.f32 %v2598, %v5109
        %v5111 = vpop.f32.mrf.mxu0
        %v5112 = vadd.f32 %v2602, %v5111
        %5113 = vmatprep.mubr.bf16.mxu0 %v2848
        %5114 = vmatmul.mubr.bf16.gmra.mxu0 %v2847
        %v5115 = vpop.f32.mrf.mxu0
        %v5116 = vadd.f32 %v2598, %v5115
        %v5117 = vpop.f32.mrf.mxu0
        %v5118 = vadd.f32 %v2602, %v5117
        %v5119 = vpop.f32.mrf.mxu0
        %v5120 = vadd.f32 %v2598, %v5119
        %v5121 = vpop.f32.mrf.mxu0
        %v5122 = vadd.f32 %v2602, %v5121
        %5123 = vmatprep.mubr.bf16.mxu0 %v2852
        %5124 = vmatmul.mubr.bf16.gmra.mxu0 %v2851
        %v5125 = vpop.f32.mrf.mxu0
        %v5126 = vadd.f32 %v2598, %v5125
        %v5127 = vpop.f32.mrf.mxu0
        %v5128 = vadd.f32 %v2602, %v5127
        %v5129 = vpop.f32.mrf.mxu0
        %v5130 = vadd.f32 %v2598, %v5129
        %v5131 = vpop.f32.mrf.mxu0
        %v5132 = vadd.f32 %v2602, %v5131
        %5133 = vmatprep.mubr.bf16.mxu0 %v2856
        %5134 = vmatmul.mubr.bf16.gmra.mxu0 %v2855
        %v5135 = vpop.f32.mrf.mxu0
        %v5136 = vadd.f32 %v2598, %v5135
        %v5137 = vpop.f32.mrf.mxu0
        %v5138 = vadd.f32 %v2602, %v5137
        %v5139 = vpop.f32.mrf.mxu0
        %v5140 = vadd.f32 %v2598, %v5139
        %v5141 = vpop.f32.mrf.mxu0
        %v5142 = vadd.f32 %v2602, %v5141
        %5143 = vmatprep.mubr.bf16.mxu0 %v2860
        %5144 = vmatmul.mubr.bf16.gmra.mxu0 %v2859
        %v5145 = vpop.f32.mrf.mxu0
        %v5146 = vadd.f32 %v2598, %v5145
        %v5147 = vpop.f32.mrf.mxu0
        %v5148 = vadd.f32 %v2602, %v5147
        %v5149 = vpop.f32.mrf.mxu0
        %v5150 = vadd.f32 %v2598, %v5149
        %v5151 = vpop.f32.mrf.mxu0
        %v5152 = vadd.f32 %v2602, %v5151
        %5153 = vmatprep.mubr.bf16.mxu0 %v2864
        %5154 = vmatmul.mubr.bf16.gmra.mxu0 %v2863
        %v5155 = vpop.f32.mrf.mxu0
        %v5156 = vadd.f32 %v2598, %v5155
        %v5157 = vpop.f32.mrf.mxu0
        %v5158 = vadd.f32 %v2602, %v5157
        %v5159 = vpop.f32.mrf.mxu0
        %v5160 = vadd.f32 %v2598, %v5159
        %v5161 = vpop.f32.mrf.mxu0
        %v5162 = vadd.f32 %v2602, %v5161
        %5163 = vmatprep.mubr.bf16.mxu0 %v2868
        %5164 = vmatmul.mubr.bf16.gmra.mxu0 %v2867
        %v5165 = vpop.f32.mrf.mxu0
        %v5166 = vadd.f32 %v2598, %v5165
        %v5167 = vpop.f32.mrf.mxu0
        %v5168 = vadd.f32 %v2602, %v5167
        %v5169 = vpop.f32.mrf.mxu0
        %v5170 = vadd.f32 %v2598, %v5169
        %v5171 = vpop.f32.mrf.mxu0
        %v5172 = vadd.f32 %v2602, %v5171
        %5173 = vmatprep.mubr.bf16.mxu0 %v2872
        %5174 = vmatmul.mubr.bf16.gmra.mxu0 %v2871
        %v5175 = vpop.f32.mrf.mxu0
        %v5176 = vadd.f32 %v2598, %v5175
        %v5177 = vpop.f32.mrf.mxu0
        %v5178 = vadd.f32 %v2602, %v5177
        %v5179 = vpop.f32.mrf.mxu0
        %v5180 = vadd.f32 %v2598, %v5179
        %v5181 = vpop.f32.mrf.mxu0
        %v5182 = vadd.f32 %v2602, %v5181
        %5183 = vdwg.mxu0
        %5184 = vmatprep.subr.bf16.mxu0 %v3896
        %5185 = vmatpush1.bf16.msra.mxu0 %v3895
        %5186 = vmatprep.subr.bf16.mxu0 %v3888
        %5187 = vmatpush1.bf16.msra.mxu0 %v3887
        %5188 = vmatprep.subr.bf16.mxu0 %v3880
        %5189 = vmatpush1.bf16.msra.mxu0 %v3879
        %5190 = vmatprep.subr.bf16.mxu0 %v3872
        %5191 = vmatpush1.bf16.msra.mxu0 %v3871
        %5192 = vmatprep.subr.bf16.mxu0 %v3864
        %5193 = vmatpush1.bf16.msra.mxu0 %v3863
        %5194 = vmatprep.subr.bf16.mxu0 %v3856
        %5195 = vmatpush1.bf16.msra.mxu0 %v3855
        %5196 = vmatprep.subr.bf16.mxu0 %v3848
        %5197 = vmatpush1.bf16.msra.mxu0 %v3847
        %5198 = vmatprep.subr.bf16.mxu0 %v3840
        %5199 = vmatpush1.bf16.msra.mxu0 %v3839
        %5200 = vmatprep.subr.bf16.mxu0 %v3960
        %5201 = vmatpush2.bf16.msra.mxu0 %v3959
        %5202 = vmatprep.subr.bf16.mxu0 %v3952
        %5203 = vmatpush2.bf16.msra.mxu0 %v3951
        %5204 = vmatprep.subr.bf16.mxu0 %v3944
        %5205 = vmatpush2.bf16.msra.mxu0 %v3943
        %5206 = vmatprep.subr.bf16.mxu0 %v3936
        %5207 = vmatpush2.bf16.msra.mxu0 %v3935
        %5208 = vmatprep.subr.bf16.mxu0 %v3928
        %5209 = vmatpush2.bf16.msra.mxu0 %v3927
        %5210 = vmatprep.subr.bf16.mxu0 %v3920
        %5211 = vmatpush2.bf16.msra.mxu0 %v3919
        %5212 = vmatprep.subr.bf16.mxu0 %v3912
        %5213 = vmatpush2.bf16.msra.mxu0 %v3911
        %5214 = vmatprep.subr.bf16.mxu0 %v3904
        %5215 = vmatpush2.bf16.msra.mxu0 %v3903
        %5216 = vmatprep.mubr.bf16.mxu0 %v2814
        %5217 = vmatmul.mubr.bf16.gmra.mxu0 %v2813
        %v5218 = vpop.f32.mrf.mxu0
        %v5219 = vadd.f32 %v5026, %v5218
        %v5220 = vpop.f32.mrf.mxu0
        %v5221 = vadd.f32 %v5028, %v5220
        %v5222 = vpop.f32.mrf.mxu0
        %v5223 = vadd.f32 %v5030, %v5222
        %v5224 = vpop.f32.mrf.mxu0
        %v5225 = vadd.f32 %v5032, %v5224
        %5226 = vmatprep.mubr.bf16.mxu0 %v2818
        %5227 = vmatmul.mubr.bf16.gmra.mxu0 %v2817
        %v5228 = vpop.f32.mrf.mxu0
        %v5229 = vadd.f32 %v5036, %v5228
        %v5230 = vpop.f32.mrf.mxu0
        %v5231 = vadd.f32 %v5038, %v5230
        %v5232 = vpop.f32.mrf.mxu0
        %v5233 = vadd.f32 %v5040, %v5232
        %v5234 = vpop.f32.mrf.mxu0
        %v5235 = vadd.f32 %v5042, %v5234
        %5236 = vmatprep.mubr.bf16.mxu0 %v2822
        %5237 = vmatmul.mubr.bf16.gmra.mxu0 %v2821
        %v5238 = vpop.f32.mrf.mxu0
        %v5239 = vadd.f32 %v5046, %v5238
        %v5240 = vpop.f32.mrf.mxu0
        %v5241 = vadd.f32 %v5048, %v5240
        %v5242 = vpop.f32.mrf.mxu0
        %v5243 = vadd.f32 %v5050, %v5242
        %v5244 = vpop.f32.mrf.mxu0
        %v5245 = vadd.f32 %v5052, %v5244
        %5246 = vmatprep.mubr.bf16.mxu0 %v2826
        %5247 = vmatmul.mubr.bf16.gmra.mxu0 %v2825
        %v5248 = vpop.f32.mrf.mxu0
        %v5249 = vadd.f32 %v5056, %v5248
        %v5250 = vpop.f32.mrf.mxu0
        %v5251 = vadd.f32 %v5058, %v5250
        %v5252 = vpop.f32.mrf.mxu0
        %v5253 = vadd.f32 %v5060, %v5252
        %v5254 = vpop.f32.mrf.mxu0
        %v5255 = vadd.f32 %v5062, %v5254
        %5256 = vmatprep.mubr.bf16.mxu0 %v2830
        %5257 = vmatmul.mubr.bf16.gmra.mxu0 %v2829
        %v5258 = vpop.f32.mrf.mxu0
        %v5259 = vadd.f32 %v5066, %v5258
        %v5260 = vpop.f32.mrf.mxu0
        %v5261 = vadd.f32 %v5068, %v5260
        %v5262 = vpop.f32.mrf.mxu0
        %v5263 = vadd.f32 %v5070, %v5262
        %v5264 = vpop.f32.mrf.mxu0
        %v5265 = vadd.f32 %v5072, %v5264
        %5266 = vmatprep.mubr.bf16.mxu0 %v2834
        %5267 = vmatmul.mubr.bf16.gmra.mxu0 %v2833
        %v5268 = vpop.f32.mrf.mxu0
        %v5269 = vadd.f32 %v5076, %v5268
        %v5270 = vpop.f32.mrf.mxu0
        %v5271 = vadd.f32 %v5078, %v5270
        %v5272 = vpop.f32.mrf.mxu0
        %v5273 = vadd.f32 %v5080, %v5272
        %v5274 = vpop.f32.mrf.mxu0
        %v5275 = vadd.f32 %v5082, %v5274
        %5276 = vmatprep.mubr.bf16.mxu0 %v2838
        %5277 = vmatmul.mubr.bf16.gmra.mxu0 %v2837
        %v5278 = vpop.f32.mrf.mxu0
        %v5279 = vadd.f32 %v5086, %v5278
        %v5280 = vpop.f32.mrf.mxu0
        %v5281 = vadd.f32 %v5088, %v5280
        %v5282 = vpop.f32.mrf.mxu0
        %v5283 = vadd.f32 %v5090, %v5282
        %v5284 = vpop.f32.mrf.mxu0
        %v5285 = vadd.f32 %v5092, %v5284
        %5286 = vmatprep.mubr.bf16.mxu0 %v2842
        %5287 = vmatmul.mubr.bf16.gmra.mxu0 %v2841
        %v5288 = vpop.f32.mrf.mxu0
        %v5289 = vadd.f32 %v5096, %v5288
        %v5290 = vpop.f32.mrf.mxu0
        %v5291 = vadd.f32 %v5098, %v5290
        %v5292 = vpop.f32.mrf.mxu0
        %v5293 = vadd.f32 %v5100, %v5292
        %v5294 = vpop.f32.mrf.mxu0
        %v5295 = vadd.f32 %v5102, %v5294
        %5296 = vmatprep.mubr.bf16.mxu0 %v2846
        %5297 = vmatmul.mubr.bf16.gmra.mxu0 %v2845
        %v5298 = vpop.f32.mrf.mxu0
        %v5299 = vadd.f32 %v5106, %v5298
        %v5300 = vpop.f32.mrf.mxu0
        %v5301 = vadd.f32 %v5108, %v5300
        %v5302 = vpop.f32.mrf.mxu0
        %v5303 = vadd.f32 %v5110, %v5302
        %v5304 = vpop.f32.mrf.mxu0
        %v5305 = vadd.f32 %v5112, %v5304
        %5306 = vmatprep.mubr.bf16.mxu0 %v2850
        %5307 = vmatmul.mubr.bf16.gmra.mxu0 %v2849
        %v5308 = vpop.f32.mrf.mxu0
        %v5309 = vadd.f32 %v5116, %v5308
        %v5310 = vpop.f32.mrf.mxu0
        %v5311 = vadd.f32 %v5118, %v5310
        %v5312 = vpop.f32.mrf.mxu0
        %v5313 = vadd.f32 %v5120, %v5312
        %v5314 = vpop.f32.mrf.mxu0
        %v5315 = vadd.f32 %v5122, %v5314
        %5316 = vmatprep.mubr.bf16.mxu0 %v2854
        %5317 = vmatmul.mubr.bf16.gmra.mxu0 %v2853
        %v5318 = vpop.f32.mrf.mxu0
        %v5319 = vadd.f32 %v5126, %v5318
        %v5320 = vpop.f32.mrf.mxu0
        %v5321 = vadd.f32 %v5128, %v5320
        %v5322 = vpop.f32.mrf.mxu0
        %v5323 = vadd.f32 %v5130, %v5322
        %v5324 = vpop.f32.mrf.mxu0
        %v5325 = vadd.f32 %v5132, %v5324
        %5326 = vmatprep.mubr.bf16.mxu0 %v2858
        %5327 = vmatmul.mubr.bf16.gmra.mxu0 %v2857
        %v5328 = vpop.f32.mrf.mxu0
        %v5329 = vadd.f32 %v5136, %v5328
        %v5330 = vpop.f32.mrf.mxu0
        %v5331 = vadd.f32 %v5138, %v5330
        %v5332 = vpop.f32.mrf.mxu0
        %v5333 = vadd.f32 %v5140, %v5332
        %v5334 = vpop.f32.mrf.mxu0
        %v5335 = vadd.f32 %v5142, %v5334
        %5336 = vmatprep.mubr.bf16.mxu0 %v2862
        %5337 = vmatmul.mubr.bf16.gmra.mxu0 %v2861
        %v5338 = vpop.f32.mrf.mxu0
        %v5339 = vadd.f32 %v5146, %v5338
        %v5340 = vpop.f32.mrf.mxu0
        %v5341 = vadd.f32 %v5148, %v5340
        %v5342 = vpop.f32.mrf.mxu0
        %v5343 = vadd.f32 %v5150, %v5342
        %v5344 = vpop.f32.mrf.mxu0
        %v5345 = vadd.f32 %v5152, %v5344
        %5346 = vmatprep.mubr.bf16.mxu0 %v2866
        %5347 = vmatmul.mubr.bf16.gmra.mxu0 %v2865
        %v5348 = vpop.f32.mrf.mxu0
        %v5349 = vadd.f32 %v5156, %v5348
        %v5350 = vpop.f32.mrf.mxu0
        %v5351 = vadd.f32 %v5158, %v5350
        %v5352 = vpop.f32.mrf.mxu0
        %v5353 = vadd.f32 %v5160, %v5352
        %v5354 = vpop.f32.mrf.mxu0
        %v5355 = vadd.f32 %v5162, %v5354
        %5356 = vmatprep.mubr.bf16.mxu0 %v2870
        %5357 = vmatmul.mubr.bf16.gmra.mxu0 %v2869
        %v5358 = vpop.f32.mrf.mxu0
        %v5359 = vadd.f32 %v5166, %v5358
        %v5360 = vpop.f32.mrf.mxu0
        %v5361 = vadd.f32 %v5168, %v5360
        %v5362 = vpop.f32.mrf.mxu0
        %v5363 = vadd.f32 %v5170, %v5362
        %v5364 = vpop.f32.mrf.mxu0
        %v5365 = vadd.f32 %v5172, %v5364
        %5366 = vmatprep.mubr.bf16.mxu0 %v2874
        %5367 = vmatmul.mubr.bf16.gmra.mxu0 %v2873
        %v5368 = vpop.f32.mrf.mxu0
        %v5369 = vadd.f32 %v5176, %v5368
        %v5370 = vpop.f32.mrf.mxu0
        %v5371 = vadd.f32 %v5178, %v5370
        %v5372 = vpop.f32.mrf.mxu0
        %v5373 = vadd.f32 %v5180, %v5372
        %v5374 = vpop.f32.mrf.mxu0
        %v5375 = vadd.f32 %v5182, %v5374
        %5376 = vdwg.mxu0
        %5377 = vmatprep.subr.bf16.mxu0 %v3770
        %5378 = vmatpush1.bf16.msra.mxu0 %v3769
        %5379 = vmatprep.subr.bf16.mxu0 %v3762
        %5380 = vmatpush1.bf16.msra.mxu0 %v3761
        %5381 = vmatprep.subr.bf16.mxu0 %v3754
        %5382 = vmatpush1.bf16.msra.mxu0 %v3753
        %5383 = vmatprep.subr.bf16.mxu0 %v3746
        %5384 = vmatpush1.bf16.msra.mxu0 %v3745
        %5385 = vmatprep.subr.bf16.mxu0 %v3738
        %5386 = vmatpush1.bf16.msra.mxu0 %v3737
        %5387 = vmatprep.subr.bf16.mxu0 %v3730
        %5388 = vmatpush1.bf16.msra.mxu0 %v3729
        %5389 = vmatprep.subr.bf16.mxu0 %v3722
        %5390 = vmatpush1.bf16.msra.mxu0 %v3721
        %5391 = vmatprep.subr.bf16.mxu0 %v3714
        %5392 = vmatpush1.bf16.msra.mxu0 %v3713
        %5393 = vmatprep.subr.bf16.mxu0 %v3834
        %5394 = vmatpush2.bf16.msra.mxu0 %v3833
        %5395 = vmatprep.subr.bf16.mxu0 %v3826
        %5396 = vmatpush2.bf16.msra.mxu0 %v3825
        %5397 = vmatprep.subr.bf16.mxu0 %v3818
        %5398 = vmatpush2.bf16.msra.mxu0 %v3817
        %5399 = vmatprep.subr.bf16.mxu0 %v3810
        %5400 = vmatpush2.bf16.msra.mxu0 %v3809
        %5401 = vmatprep.subr.bf16.mxu0 %v3802
        %5402 = vmatpush2.bf16.msra.mxu0 %v3801
        %5403 = vmatprep.subr.bf16.mxu0 %v3794
        %5404 = vmatpush2.bf16.msra.mxu0 %v3793
        %5405 = vmatprep.subr.bf16.mxu0 %v3786
        %5406 = vmatpush2.bf16.msra.mxu0 %v3785
        %5407 = vmatprep.subr.bf16.mxu0 %v3778
        %5408 = vmatpush2.bf16.msra.mxu0 %v3777
        %5409 = vmatprep.mubr.bf16.mxu0 %v2812
        %5410 = vmatmul.mubr.bf16.gmra.mxu0 %v2811
        %v5411 = vpop.f32.mrf.mxu0
        %v5412 = vadd.f32 %v2606, %v5411
        %v5413 = vpop.f32.mrf.mxu0
        %v5414 = vadd.f32 %v2610, %v5413
        %v5415 = vpop.f32.mrf.mxu0
        %v5416 = vadd.f32 %v2606, %v5415
        %v5417 = vpop.f32.mrf.mxu0
        %v5418 = vadd.f32 %v2610, %v5417
        %5419 = vmatprep.mubr.bf16.mxu0 %v2816
        %5420 = vmatmul.mubr.bf16.gmra.mxu0 %v2815
        %v5421 = vpop.f32.mrf.mxu0
        %v5422 = vadd.f32 %v2606, %v5421
        %v5423 = vpop.f32.mrf.mxu0
        %v5424 = vadd.f32 %v2610, %v5423
        %v5425 = vpop.f32.mrf.mxu0
        %v5426 = vadd.f32 %v2606, %v5425
        %v5427 = vpop.f32.mrf.mxu0
        %v5428 = vadd.f32 %v2610, %v5427
        %5429 = vmatprep.mubr.bf16.mxu0 %v2820
        %5430 = vmatmul.mubr.bf16.gmra.mxu0 %v2819
        %v5431 = vpop.f32.mrf.mxu0
        %v5432 = vadd.f32 %v2606, %v5431
        %v5433 = vpop.f32.mrf.mxu0
        %v5434 = vadd.f32 %v2610, %v5433
        %v5435 = vpop.f32.mrf.mxu0
        %v5436 = vadd.f32 %v2606, %v5435
        %v5437 = vpop.f32.mrf.mxu0
        %v5438 = vadd.f32 %v2610, %v5437
        %5439 = vmatprep.mubr.bf16.mxu0 %v2824
        %5440 = vmatmul.mubr.bf16.gmra.mxu0 %v2823
        %v5441 = vpop.f32.mrf.mxu0
        %v5442 = vadd.f32 %v2606, %v5441
        %v5443 = vpop.f32.mrf.mxu0
        %v5444 = vadd.f32 %v2610, %v5443
        %v5445 = vpop.f32.mrf.mxu0
        %v5446 = vadd.f32 %v2606, %v5445
        %v5447 = vpop.f32.mrf.mxu0
        %v5448 = vadd.f32 %v2610, %v5447
        %5449 = vmatprep.mubr.bf16.mxu0 %v2828
        %5450 = vmatmul.mubr.bf16.gmra.mxu0 %v2827
        %v5451 = vpop.f32.mrf.mxu0
        %v5452 = vadd.f32 %v2606, %v5451
        %v5453 = vpop.f32.mrf.mxu0
        %v5454 = vadd.f32 %v2610, %v5453
        %v5455 = vpop.f32.mrf.mxu0
        %v5456 = vadd.f32 %v2606, %v5455
        %v5457 = vpop.f32.mrf.mxu0
        %v5458 = vadd.f32 %v2610, %v5457
        %5459 = vmatprep.mubr.bf16.mxu0 %v2832
        %5460 = vmatmul.mubr.bf16.gmra.mxu0 %v2831
        %v5461 = vpop.f32.mrf.mxu0
        %v5462 = vadd.f32 %v2606, %v5461
        %v5463 = vpop.f32.mrf.mxu0
        %v5464 = vadd.f32 %v2610, %v5463
        %v5465 = vpop.f32.mrf.mxu0
        %v5466 = vadd.f32 %v2606, %v5465
        %v5467 = vpop.f32.mrf.mxu0
        %v5468 = vadd.f32 %v2610, %v5467
        %5469 = vmatprep.mubr.bf16.mxu0 %v2836
        %5470 = vmatmul.mubr.bf16.gmra.mxu0 %v2835
        %v5471 = vpop.f32.mrf.mxu0
        %v5472 = vadd.f32 %v2606, %v5471
        %v5473 = vpop.f32.mrf.mxu0
        %v5474 = vadd.f32 %v2610, %v5473
        %v5475 = vpop.f32.mrf.mxu0
        %v5476 = vadd.f32 %v2606, %v5475
        %v5477 = vpop.f32.mrf.mxu0
        %v5478 = vadd.f32 %v2610, %v5477
        %5479 = vmatprep.mubr.bf16.mxu0 %v2840
        %5480 = vmatmul.mubr.bf16.gmra.mxu0 %v2839
        %v5481 = vpop.f32.mrf.mxu0
        %v5482 = vadd.f32 %v2606, %v5481
        %v5483 = vpop.f32.mrf.mxu0
        %v5484 = vadd.f32 %v2610, %v5483
        %v5485 = vpop.f32.mrf.mxu0
        %v5486 = vadd.f32 %v2606, %v5485
        %v5487 = vpop.f32.mrf.mxu0
        %v5488 = vadd.f32 %v2610, %v5487
        %5489 = vmatprep.mubr.bf16.mxu0 %v2844
        %5490 = vmatmul.mubr.bf16.gmra.mxu0 %v2843
        %v5491 = vpop.f32.mrf.mxu0
        %v5492 = vadd.f32 %v2606, %v5491
        %v5493 = vpop.f32.mrf.mxu0
        %v5494 = vadd.f32 %v2610, %v5493
        %v5495 = vpop.f32.mrf.mxu0
        %v5496 = vadd.f32 %v2606, %v5495
        %v5497 = vpop.f32.mrf.mxu0
        %v5498 = vadd.f32 %v2610, %v5497
        %5499 = vmatprep.mubr.bf16.mxu0 %v2848
        %5500 = vmatmul.mubr.bf16.gmra.mxu0 %v2847
        %v5501 = vpop.f32.mrf.mxu0
        %v5502 = vadd.f32 %v2606, %v5501
        %v5503 = vpop.f32.mrf.mxu0
        %v5504 = vadd.f32 %v2610, %v5503
        %v5505 = vpop.f32.mrf.mxu0
        %v5506 = vadd.f32 %v2606, %v5505
        %v5507 = vpop.f32.mrf.mxu0
        %v5508 = vadd.f32 %v2610, %v5507
        %5509 = vmatprep.mubr.bf16.mxu0 %v2852
        %5510 = vmatmul.mubr.bf16.gmra.mxu0 %v2851
        %v5511 = vpop.f32.mrf.mxu0
        %v5512 = vadd.f32 %v2606, %v5511
        %v5513 = vpop.f32.mrf.mxu0
        %v5514 = vadd.f32 %v2610, %v5513
        %v5515 = vpop.f32.mrf.mxu0
        %v5516 = vadd.f32 %v2606, %v5515
        %v5517 = vpop.f32.mrf.mxu0
        %v5518 = vadd.f32 %v2610, %v5517
        %5519 = vmatprep.mubr.bf16.mxu0 %v2856
        %5520 = vmatmul.mubr.bf16.gmra.mxu0 %v2855
        %v5521 = vpop.f32.mrf.mxu0
        %v5522 = vadd.f32 %v2606, %v5521
        %v5523 = vpop.f32.mrf.mxu0
        %v5524 = vadd.f32 %v2610, %v5523
        %v5525 = vpop.f32.mrf.mxu0
        %v5526 = vadd.f32 %v2606, %v5525
        %v5527 = vpop.f32.mrf.mxu0
        %v5528 = vadd.f32 %v2610, %v5527
        %5529 = vmatprep.mubr.bf16.mxu0 %v2860
        %5530 = vmatmul.mubr.bf16.gmra.mxu0 %v2859
        %v5531 = vpop.f32.mrf.mxu0
        %v5532 = vadd.f32 %v2606, %v5531
        %v5533 = vpop.f32.mrf.mxu0
        %v5534 = vadd.f32 %v2610, %v5533
        %v5535 = vpop.f32.mrf.mxu0
        %v5536 = vadd.f32 %v2606, %v5535
        %v5537 = vpop.f32.mrf.mxu0
        %v5538 = vadd.f32 %v2610, %v5537
        %5539 = vmatprep.mubr.bf16.mxu0 %v2864
        %5540 = vmatmul.mubr.bf16.gmra.mxu0 %v2863
        %v5541 = vpop.f32.mrf.mxu0
        %v5542 = vadd.f32 %v2606, %v5541
        %v5543 = vpop.f32.mrf.mxu0
        %v5544 = vadd.f32 %v2610, %v5543
        %v5545 = vpop.f32.mrf.mxu0
        %v5546 = vadd.f32 %v2606, %v5545
        %v5547 = vpop.f32.mrf.mxu0
        %v5548 = vadd.f32 %v2610, %v5547
        %5549 = vmatprep.mubr.bf16.mxu0 %v2868
        %5550 = vmatmul.mubr.bf16.gmra.mxu0 %v2867
        %v5551 = vpop.f32.mrf.mxu0
        %v5552 = vadd.f32 %v2606, %v5551
        %v5553 = vpop.f32.mrf.mxu0
        %v5554 = vadd.f32 %v2610, %v5553
        %v5555 = vpop.f32.mrf.mxu0
        %v5556 = vadd.f32 %v2606, %v5555
        %v5557 = vpop.f32.mrf.mxu0
        %v5558 = vadd.f32 %v2610, %v5557
        %5559 = vmatprep.mubr.bf16.mxu0 %v2872
        %5560 = vmatmul.mubr.bf16.gmra.mxu0 %v2871
        %v5561 = vpop.f32.mrf.mxu0
        %v5562 = vadd.f32 %v2606, %v5561
        %v5563 = vpop.f32.mrf.mxu0
        %v5564 = vadd.f32 %v2610, %v5563
        %v5565 = vpop.f32.mrf.mxu0
        %v5566 = vadd.f32 %v2606, %v5565
        %v5567 = vpop.f32.mrf.mxu0
        %v5568 = vadd.f32 %v2610, %v5567
        %5569 = vdwg.mxu0
        %5570 = vmatprep.subr.bf16.mxu0 %v3898
        %5571 = vmatpush1.bf16.msra.mxu0 %v3897
        %5572 = vmatprep.subr.bf16.mxu0 %v3890
        %5573 = vmatpush1.bf16.msra.mxu0 %v3889
        %5574 = vmatprep.subr.bf16.mxu0 %v3882
        %5575 = vmatpush1.bf16.msra.mxu0 %v3881
        %5576 = vmatprep.subr.bf16.mxu0 %v3874
        %5577 = vmatpush1.bf16.msra.mxu0 %v3873
        %5578 = vmatprep.subr.bf16.mxu0 %v3866
        %5579 = vmatpush1.bf16.msra.mxu0 %v3865
        %5580 = vmatprep.subr.bf16.mxu0 %v3858
        %5581 = vmatpush1.bf16.msra.mxu0 %v3857
        %5582 = vmatprep.subr.bf16.mxu0 %v3850
        %5583 = vmatpush1.bf16.msra.mxu0 %v3849
        %5584 = vmatprep.subr.bf16.mxu0 %v3842
        %5585 = vmatpush1.bf16.msra.mxu0 %v3841
        %5586 = vmatprep.subr.bf16.mxu0 %v3962
        %5587 = vmatpush2.bf16.msra.mxu0 %v3961
        %5588 = vmatprep.subr.bf16.mxu0 %v3954
        %5589 = vmatpush2.bf16.msra.mxu0 %v3953
        %5590 = vmatprep.subr.bf16.mxu0 %v3946
        %5591 = vmatpush2.bf16.msra.mxu0 %v3945
        %5592 = vmatprep.subr.bf16.mxu0 %v3938
        %5593 = vmatpush2.bf16.msra.mxu0 %v3937
        %5594 = vmatprep.subr.bf16.mxu0 %v3930
        %5595 = vmatpush2.bf16.msra.mxu0 %v3929
        %5596 = vmatprep.subr.bf16.mxu0 %v3922
        %5597 = vmatpush2.bf16.msra.mxu0 %v3921
        %5598 = vmatprep.subr.bf16.mxu0 %v3914
        %5599 = vmatpush2.bf16.msra.mxu0 %v3913
        %5600 = vmatprep.subr.bf16.mxu0 %v3906
        %5601 = vmatpush2.bf16.msra.mxu0 %v3905
        %5602 = vmatprep.mubr.bf16.mxu0 %v2814
        %5603 = vmatmul.mubr.bf16.gmra.mxu0 %v2813
        %v5604 = vpop.f32.mrf.mxu0
        %v5605 = vadd.f32 %v5412, %v5604
        %v5606 = vpop.f32.mrf.mxu0
        %v5607 = vadd.f32 %v5414, %v5606
        %v5608 = vpop.f32.mrf.mxu0
        %v5609 = vadd.f32 %v5416, %v5608
        %v5610 = vpop.f32.mrf.mxu0
        %v5611 = vadd.f32 %v5418, %v5610
        %5612 = vmatprep.mubr.bf16.mxu0 %v2818
        %5613 = vmatmul.mubr.bf16.gmra.mxu0 %v2817
        %v5614 = vpop.f32.mrf.mxu0
        %v5615 = vadd.f32 %v5422, %v5614
        %v5616 = vpop.f32.mrf.mxu0
        %v5617 = vadd.f32 %v5424, %v5616
        %v5618 = vpop.f32.mrf.mxu0
        %v5619 = vadd.f32 %v5426, %v5618
        %v5620 = vpop.f32.mrf.mxu0
        %v5621 = vadd.f32 %v5428, %v5620
        %5622 = vmatprep.mubr.bf16.mxu0 %v2822
        %5623 = vmatmul.mubr.bf16.gmra.mxu0 %v2821
        %v5624 = vpop.f32.mrf.mxu0
        %v5625 = vadd.f32 %v5432, %v5624
        %v5626 = vpop.f32.mrf.mxu0
        %v5627 = vadd.f32 %v5434, %v5626
        %v5628 = vpop.f32.mrf.mxu0
        %v5629 = vadd.f32 %v5436, %v5628
        %v5630 = vpop.f32.mrf.mxu0
        %v5631 = vadd.f32 %v5438, %v5630
        %5632 = vmatprep.mubr.bf16.mxu0 %v2826
        %5633 = vmatmul.mubr.bf16.gmra.mxu0 %v2825
        %v5634 = vpop.f32.mrf.mxu0
        %v5635 = vadd.f32 %v5442, %v5634
        %v5636 = vpop.f32.mrf.mxu0
        %v5637 = vadd.f32 %v5444, %v5636
        %v5638 = vpop.f32.mrf.mxu0
        %v5639 = vadd.f32 %v5446, %v5638
        %v5640 = vpop.f32.mrf.mxu0
        %v5641 = vadd.f32 %v5448, %v5640
        %5642 = vmatprep.mubr.bf16.mxu0 %v2830
        %5643 = vmatmul.mubr.bf16.gmra.mxu0 %v2829
        %v5644 = vpop.f32.mrf.mxu0
        %v5645 = vadd.f32 %v5452, %v5644
        %v5646 = vpop.f32.mrf.mxu0
        %v5647 = vadd.f32 %v5454, %v5646
        %v5648 = vpop.f32.mrf.mxu0
        %v5649 = vadd.f32 %v5456, %v5648
        %v5650 = vpop.f32.mrf.mxu0
        %v5651 = vadd.f32 %v5458, %v5650
        %5652 = vmatprep.mubr.bf16.mxu0 %v2834
        %5653 = vmatmul.mubr.bf16.gmra.mxu0 %v2833
        %v5654 = vpop.f32.mrf.mxu0
        %v5655 = vadd.f32 %v5462, %v5654
        %v5656 = vpop.f32.mrf.mxu0
        %v5657 = vadd.f32 %v5464, %v5656
        %v5658 = vpop.f32.mrf.mxu0
        %v5659 = vadd.f32 %v5466, %v5658
        %v5660 = vpop.f32.mrf.mxu0
        %v5661 = vadd.f32 %v5468, %v5660
        %5662 = vmatprep.mubr.bf16.mxu0 %v2838
        %5663 = vmatmul.mubr.bf16.gmra.mxu0 %v2837
        %v5664 = vpop.f32.mrf.mxu0
        %v5665 = vadd.f32 %v5472, %v5664
        %v5666 = vpop.f32.mrf.mxu0
        %v5667 = vadd.f32 %v5474, %v5666
        %v5668 = vpop.f32.mrf.mxu0
        %v5669 = vadd.f32 %v5476, %v5668
        %v5670 = vpop.f32.mrf.mxu0
        %v5671 = vadd.f32 %v5478, %v5670
        %5672 = vmatprep.mubr.bf16.mxu0 %v2842
        %5673 = vmatmul.mubr.bf16.gmra.mxu0 %v2841
        %v5674 = vpop.f32.mrf.mxu0
        %v5675 = vadd.f32 %v5482, %v5674
        %v5676 = vpop.f32.mrf.mxu0
        %v5677 = vadd.f32 %v5484, %v5676
        %v5678 = vpop.f32.mrf.mxu0
        %v5679 = vadd.f32 %v5486, %v5678
        %v5680 = vpop.f32.mrf.mxu0
        %v5681 = vadd.f32 %v5488, %v5680
        %5682 = vmatprep.mubr.bf16.mxu0 %v2846
        %5683 = vmatmul.mubr.bf16.gmra.mxu0 %v2845
        %v5684 = vpop.f32.mrf.mxu0
        %v5685 = vadd.f32 %v5492, %v5684
        %v5686 = vpop.f32.mrf.mxu0
        %v5687 = vadd.f32 %v5494, %v5686
        %v5688 = vpop.f32.mrf.mxu0
        %v5689 = vadd.f32 %v5496, %v5688
        %v5690 = vpop.f32.mrf.mxu0
        %v5691 = vadd.f32 %v5498, %v5690
        %5692 = vmatprep.mubr.bf16.mxu0 %v2850
        %5693 = vmatmul.mubr.bf16.gmra.mxu0 %v2849
        %v5694 = vpop.f32.mrf.mxu0
        %v5695 = vadd.f32 %v5502, %v5694
        %v5696 = vpop.f32.mrf.mxu0
        %v5697 = vadd.f32 %v5504, %v5696
        %v5698 = vpop.f32.mrf.mxu0
        %v5699 = vadd.f32 %v5506, %v5698
        %v5700 = vpop.f32.mrf.mxu0
        %v5701 = vadd.f32 %v5508, %v5700
        %5702 = vmatprep.mubr.bf16.mxu0 %v2854
        %5703 = vmatmul.mubr.bf16.gmra.mxu0 %v2853
        %v5704 = vpop.f32.mrf.mxu0
        %v5705 = vadd.f32 %v5512, %v5704
        %v5706 = vpop.f32.mrf.mxu0
        %v5707 = vadd.f32 %v5514, %v5706
        %v5708 = vpop.f32.mrf.mxu0
        %v5709 = vadd.f32 %v5516, %v5708
        %v5710 = vpop.f32.mrf.mxu0
        %v5711 = vadd.f32 %v5518, %v5710
        %5712 = vmatprep.mubr.bf16.mxu0 %v2858
        %5713 = vmatmul.mubr.bf16.gmra.mxu0 %v2857
        %v5714 = vpop.f32.mrf.mxu0
        %v5715 = vadd.f32 %v5522, %v5714
        %v5716 = vpop.f32.mrf.mxu0
        %v5717 = vadd.f32 %v5524, %v5716
        %v5718 = vpop.f32.mrf.mxu0
        %v5719 = vadd.f32 %v5526, %v5718
        %v5720 = vpop.f32.mrf.mxu0
        %v5721 = vadd.f32 %v5528, %v5720
        %5722 = vmatprep.mubr.bf16.mxu0 %v2862
        %5723 = vmatmul.mubr.bf16.gmra.mxu0 %v2861
        %v5724 = vpop.f32.mrf.mxu0
        %v5725 = vadd.f32 %v5532, %v5724
        %v5726 = vpop.f32.mrf.mxu0
        %v5727 = vadd.f32 %v5534, %v5726
        %v5728 = vpop.f32.mrf.mxu0
        %v5729 = vadd.f32 %v5536, %v5728
        %v5730 = vpop.f32.mrf.mxu0
        %v5731 = vadd.f32 %v5538, %v5730
        %5732 = vmatprep.mubr.bf16.mxu0 %v2866
        %5733 = vmatmul.mubr.bf16.gmra.mxu0 %v2865
        %v5734 = vpop.f32.mrf.mxu0
        %v5735 = vadd.f32 %v5542, %v5734
        %v5736 = vpop.f32.mrf.mxu0
        %v5737 = vadd.f32 %v5544, %v5736
        %v5738 = vpop.f32.mrf.mxu0
        %v5739 = vadd.f32 %v5546, %v5738
        %v5740 = vpop.f32.mrf.mxu0
        %v5741 = vadd.f32 %v5548, %v5740
        %5742 = vmatprep.mubr.bf16.mxu0 %v2870
        %5743 = vmatmul.mubr.bf16.gmra.mxu0 %v2869
        %v5744 = vpop.f32.mrf.mxu0
        %v5745 = vadd.f32 %v5552, %v5744
        %v5746 = vpop.f32.mrf.mxu0
        %v5747 = vadd.f32 %v5554, %v5746
        %v5748 = vpop.f32.mrf.mxu0
        %v5749 = vadd.f32 %v5556, %v5748
        %v5750 = vpop.f32.mrf.mxu0
        %v5751 = vadd.f32 %v5558, %v5750
        %5752 = vmatprep.mubr.bf16.mxu0 %v2874
        %5753 = vmatmul.mubr.bf16.gmra.mxu0 %v2873
        %v5754 = vpop.f32.mrf.mxu0
        %v5755 = vadd.f32 %v5562, %v5754
        %v5756 = vpop.f32.mrf.mxu0
        %v5757 = vadd.f32 %v5564, %v5756
        %v5758 = vpop.f32.mrf.mxu0
        %v5759 = vadd.f32 %v5566, %v5758
        %v5760 = vpop.f32.mrf.mxu0
        %v5761 = vadd.f32 %v5568, %v5760
        %5762 = vdwg.mxu0
        %v5763 = vmul.f32 %v4447, 0.5
        %v5764 = vmul.f32 %v4449, 0.5
        %v5765 = vmul.f32 %v4833, 0.5
        %v5766 = vmul.f32 %v4835, 0.5
        %v5767 = vmul.f32 %v5219, 0.5
        %v5768 = vmul.f32 %v5221, 0.5
        %v5769 = vmul.f32 %v5605, 0.5
        %v5770 = vmul.f32 %v5607, 0.5
        %v5771 = vmul.f32 %v4451, 0.5
        %v5772 = vmul.f32 %v4453, 0.5
        %v5773 = vmul.f32 %v4837, 0.5
        %v5774 = vmul.f32 %v4839, 0.5
        %v5775 = vmul.f32 %v5223, 0.5
        %v5776 = vmul.f32 %v5225, 0.5
        %v5777 = vmul.f32 %v5609, 0.5
        %v5778 = vmul.f32 %v5611, 0.5
        %v5779 = vmul.f32 %v4457, 0.5
        %v5780 = vmul.f32 %v4459, 0.5
        %v5781 = vmul.f32 %v4843, 0.5
        %v5782 = vmul.f32 %v4845, 0.5
        %v5783 = vmul.f32 %v5229, 0.5
        %v5784 = vmul.f32 %v5231, 0.5
        %v5785 = vmul.f32 %v5615, 0.5
        %v5786 = vmul.f32 %v5617, 0.5
        %v5787 = vmul.f32 %v4461, 0.5
        %v5788 = vmul.f32 %v4463, 0.5
        %v5789 = vmul.f32 %v4847, 0.5
        %v5790 = vmul.f32 %v4849, 0.5
        %v5791 = vmul.f32 %v5233, 0.5
        %v5792 = vmul.f32 %v5235, 0.5
        %v5793 = vmul.f32 %v5619, 0.5
        %v5794 = vmul.f32 %v5621, 0.5
        %v5795 = vmul.f32 %v4467, 0.5
        %v5796 = vmul.f32 %v4469, 0.5
        %v5797 = vmul.f32 %v4853, 0.5
        %v5798 = vmul.f32 %v4855, 0.5
        %v5799 = vmul.f32 %v5239, 0.5
        %v5800 = vmul.f32 %v5241, 0.5
        %v5801 = vmul.f32 %v5625, 0.5
        %v5802 = vmul.f32 %v5627, 0.5
        %v5803 = vmul.f32 %v4471, 0.5
        %v5804 = vmul.f32 %v4473, 0.5
        %v5805 = vmul.f32 %v4857, 0.5
        %v5806 = vmul.f32 %v4859, 0.5
        %v5807 = vmul.f32 %v5243, 0.5
        %v5808 = vmul.f32 %v5245, 0.5
        %v5809 = vmul.f32 %v5629, 0.5
        %v5810 = vmul.f32 %v5631, 0.5
        %v5811 = vmul.f32 %v4477, 0.5
        %v5812 = vmul.f32 %v4479, 0.5
        %v5813 = vmul.f32 %v4863, 0.5
        %v5814 = vmul.f32 %v4865, 0.5
        %v5815 = vmul.f32 %v5249, 0.5
        %v5816 = vmul.f32 %v5251, 0.5
        %v5817 = vmul.f32 %v5635, 0.5
        %v5818 = vmul.f32 %v5637, 0.5
        %v5819 = vmul.f32 %v4481, 0.5
        %v5820 = vmul.f32 %v4483, 0.5
        %v5821 = vmul.f32 %v4867, 0.5
        %v5822 = vmul.f32 %v4869, 0.5
        %v5823 = vmul.f32 %v5253, 0.5
        %v5824 = vmul.f32 %v5255, 0.5
        %v5825 = vmul.f32 %v5639, 0.5
        %v5826 = vmul.f32 %v5641, 0.5
        %v5827 = vmul.f32 %v4487, 0.5
        %v5828 = vmul.f32 %v4489, 0.5
        %v5829 = vmul.f32 %v4873, 0.5
        %v5830 = vmul.f32 %v4875, 0.5
        %v5831 = vmul.f32 %v5259, 0.5
        %v5832 = vmul.f32 %v5261, 0.5
        %v5833 = vmul.f32 %v5645, 0.5
        %v5834 = vmul.f32 %v5647, 0.5
        %v5835 = vmul.f32 %v4491, 0.5
        %v5836 = vmul.f32 %v4493, 0.5
        %v5837 = vmul.f32 %v4877, 0.5
        %v5838 = vmul.f32 %v4879, 0.5
        %v5839 = vmul.f32 %v5263, 0.5
        %v5840 = vmul.f32 %v5265, 0.5
        %v5841 = vmul.f32 %v5649, 0.5
        %v5842 = vmul.f32 %v5651, 0.5
        %v5843 = vmul.f32 %v4497, 0.5
        %v5844 = vmul.f32 %v4499, 0.5
        %v5845 = vmul.f32 %v4883, 0.5
        %v5846 = vmul.f32 %v4885, 0.5
        %v5847 = vmul.f32 %v5269, 0.5
        %v5848 = vmul.f32 %v5271, 0.5
        %v5849 = vmul.f32 %v5655, 0.5
        %v5850 = vmul.f32 %v5657, 0.5
        %v5851 = vmul.f32 %v4501, 0.5
        %v5852 = vmul.f32 %v4503, 0.5
        %v5853 = vmul.f32 %v4887, 0.5
        %v5854 = vmul.f32 %v4889, 0.5
        %v5855 = vmul.f32 %v5273, 0.5
        %v5856 = vmul.f32 %v5275, 0.5
        %v5857 = vmul.f32 %v5659, 0.5
        %v5858 = vmul.f32 %v5661, 0.5
        %v5859 = vmul.f32 %v4507, 0.5
        %v5860 = vmul.f32 %v4509, 0.5
        %v5861 = vmul.f32 %v4893, 0.5
        %v5862 = vmul.f32 %v4895, 0.5
        %v5863 = vmul.f32 %v5279, 0.5
        %v5864 = vmul.f32 %v5281, 0.5
        %v5865 = vmul.f32 %v5665, 0.5
        %v5866 = vmul.f32 %v5667, 0.5
        %v5867 = vmul.f32 %v4511, 0.5
        %v5868 = vmul.f32 %v4513, 0.5
        %v5869 = vmul.f32 %v4897, 0.5
        %v5870 = vmul.f32 %v4899, 0.5
        %v5871 = vmul.f32 %v5283, 0.5
        %v5872 = vmul.f32 %v5285, 0.5
        %v5873 = vmul.f32 %v5669, 0.5
        %v5874 = vmul.f32 %v5671, 0.5
        %v5875 = vmul.f32 %v4517, 0.5
        %v5876 = vmul.f32 %v4519, 0.5
        %v5877 = vmul.f32 %v4903, 0.5
        %v5878 = vmul.f32 %v4905, 0.5
        %v5879 = vmul.f32 %v5289, 0.5
        %v5880 = vmul.f32 %v5291, 0.5
        %v5881 = vmul.f32 %v5675, 0.5
        %v5882 = vmul.f32 %v5677, 0.5
        %v5883 = vmul.f32 %v4521, 0.5
        %v5884 = vmul.f32 %v4523, 0.5
        %v5885 = vmul.f32 %v4907, 0.5
        %v5886 = vmul.f32 %v4909, 0.5
        %v5887 = vmul.f32 %v5293, 0.5
        %v5888 = vmul.f32 %v5295, 0.5
        %v5889 = vmul.f32 %v5679, 0.5
        %v5890 = vmul.f32 %v5681, 0.5
        %v5891 = vmul.f32 %v4527, 0.5
        %v5892 = vmul.f32 %v4529, 0.5
        %v5893 = vmul.f32 %v4913, 0.5
        %v5894 = vmul.f32 %v4915, 0.5
        %v5895 = vmul.f32 %v5299, 0.5
        %v5896 = vmul.f32 %v5301, 0.5
        %v5897 = vmul.f32 %v5685, 0.5
        %v5898 = vmul.f32 %v5687, 0.5
        %v5899 = vmul.f32 %v4531, 0.5
        %v5900 = vmul.f32 %v4533, 0.5
        %v5901 = vmul.f32 %v4917, 0.5
        %v5902 = vmul.f32 %v4919, 0.5
        %v5903 = vmul.f32 %v5303, 0.5
        %v5904 = vmul.f32 %v5305, 0.5
        %v5905 = vmul.f32 %v5689, 0.5
        %v5906 = vmul.f32 %v5691, 0.5
        %v5907 = vmul.f32 %v4537, 0.5
        %v5908 = vmul.f32 %v4539, 0.5
        %v5909 = vmul.f32 %v4923, 0.5
        %v5910 = vmul.f32 %v4925, 0.5
        %v5911 = vmul.f32 %v5309, 0.5
        %v5912 = vmul.f32 %v5311, 0.5
        %v5913 = vmul.f32 %v5695, 0.5
        %v5914 = vmul.f32 %v5697, 0.5
        %v5915 = vmul.f32 %v4541, 0.5
        %v5916 = vmul.f32 %v4543, 0.5
        %v5917 = vmul.f32 %v4927, 0.5
        %v5918 = vmul.f32 %v4929, 0.5
        %v5919 = vmul.f32 %v5313, 0.5
        %v5920 = vmul.f32 %v5315, 0.5
        %v5921 = vmul.f32 %v5699, 0.5
        %v5922 = vmul.f32 %v5701, 0.5
        %v5923 = vmul.f32 %v4547, 0.5
        %v5924 = vmul.f32 %v4549, 0.5
        %v5925 = vmul.f32 %v4933, 0.5
        %v5926 = vmul.f32 %v4935, 0.5
        %v5927 = vmul.f32 %v5319, 0.5
        %v5928 = vmul.f32 %v5321, 0.5
        %v5929 = vmul.f32 %v5705, 0.5
        %v5930 = vmul.f32 %v5707, 0.5
        %v5931 = vmul.f32 %v4551, 0.5
        %v5932 = vmul.f32 %v4553, 0.5
        %v5933 = vmul.f32 %v4937, 0.5
        %v5934 = vmul.f32 %v4939, 0.5
        %v5935 = vmul.f32 %v5323, 0.5
        %v5936 = vmul.f32 %v5325, 0.5
        %v5937 = vmul.f32 %v5709, 0.5
        %v5938 = vmul.f32 %v5711, 0.5
        %v5939 = vmul.f32 %v4557, 0.5
        %v5940 = vmul.f32 %v4559, 0.5
        %v5941 = vmul.f32 %v4943, 0.5
        %v5942 = vmul.f32 %v4945, 0.5
        %v5943 = vmul.f32 %v5329, 0.5
        %v5944 = vmul.f32 %v5331, 0.5
        %v5945 = vmul.f32 %v5715, 0.5
        %v5946 = vmul.f32 %v5717, 0.5
        %v5947 = vmul.f32 %v4561, 0.5
        %v5948 = vmul.f32 %v4563, 0.5
        %v5949 = vmul.f32 %v4947, 0.5
        %v5950 = vmul.f32 %v4949, 0.5
        %v5951 = vmul.f32 %v5333, 0.5
        %v5952 = vmul.f32 %v5335, 0.5
        %v5953 = vmul.f32 %v5719, 0.5
        %v5954 = vmul.f32 %v5721, 0.5
        %v5955 = vmul.f32 %v4567, 0.5
        %v5956 = vmul.f32 %v4569, 0.5
        %v5957 = vmul.f32 %v4953, 0.5
        %v5958 = vmul.f32 %v4955, 0.5
        %v5959 = vmul.f32 %v5339, 0.5
        %v5960 = vmul.f32 %v5341, 0.5
        %v5961 = vmul.f32 %v5725, 0.5
        %v5962 = vmul.f32 %v5727, 0.5
        %v5963 = vmul.f32 %v4571, 0.5
        %v5964 = vmul.f32 %v4573, 0.5
        %v5965 = vmul.f32 %v4957, 0.5
        %v5966 = vmul.f32 %v4959, 0.5
        %v5967 = vmul.f32 %v5343, 0.5
        %v5968 = vmul.f32 %v5345, 0.5
        %v5969 = vmul.f32 %v5729, 0.5
        %v5970 = vmul.f32 %v5731, 0.5
        %v5971 = vmul.f32 %v4577, 0.5
        %v5972 = vmul.f32 %v4579, 0.5
        %v5973 = vmul.f32 %v4963, 0.5
        %v5974 = vmul.f32 %v4965, 0.5
        %v5975 = vmul.f32 %v5349, 0.5
        %v5976 = vmul.f32 %v5351, 0.5
        %v5977 = vmul.f32 %v5735, 0.5
        %v5978 = vmul.f32 %v5737, 0.5
        %v5979 = vmul.f32 %v4581, 0.5
        %v5980 = vmul.f32 %v4583, 0.5
        %v5981 = vmul.f32 %v4967, 0.5
        %v5982 = vmul.f32 %v4969, 0.5
        %v5983 = vmul.f32 %v5353, 0.5
        %v5984 = vmul.f32 %v5355, 0.5
        %v5985 = vmul.f32 %v5739, 0.5
        %v5986 = vmul.f32 %v5741, 0.5
        %v5987 = vmul.f32 %v4587, 0.5
        %v5988 = vmul.f32 %v4589, 0.5
        %v5989 = vmul.f32 %v4973, 0.5
        %v5990 = vmul.f32 %v4975, 0.5
        %v5991 = vmul.f32 %v5359, 0.5
        %v5992 = vmul.f32 %v5361, 0.5
        %v5993 = vmul.f32 %v5745, 0.5
        %v5994 = vmul.f32 %v5747, 0.5
        %v5995 = vmul.f32 %v4591, 0.5
        %v5996 = vmul.f32 %v4593, 0.5
        %v5997 = vmul.f32 %v4977, 0.5
        %v5998 = vmul.f32 %v4979, 0.5
        %v5999 = vmul.f32 %v5363, 0.5
        %v6000 = vmul.f32 %v5365, 0.5
        %v6001 = vmul.f32 %v5749, 0.5
        %v6002 = vmul.f32 %v5751, 0.5
        %v6003 = vmul.f32 %v4597, 0.5
        %v6004 = vmul.f32 %v4599, 0.5
        %v6005 = vmul.f32 %v4983, 0.5
        %v6006 = vmul.f32 %v4985, 0.5
        %v6007 = vmul.f32 %v5369, 0.5
        %v6008 = vmul.f32 %v5371, 0.5
        %v6009 = vmul.f32 %v5755, 0.5
        %v6010 = vmul.f32 %v5757, 0.5
        %v6011 = vmul.f32 %v4601, 0.5
        %v6012 = vmul.f32 %v4603, 0.5
        %v6013 = vmul.f32 %v4987, 0.5
        %v6014 = vmul.f32 %v4989, 0.5
        %v6015 = vmul.f32 %v5373, 0.5
        %v6016 = vmul.f32 %v5375, 0.5
        %v6017 = vmul.f32 %v5759, 0.5
        %v6018 = vmul.f32 %v5761, 0.5
        %v6019 = vmul.f32 %v4447, 0.70710677
        %v6020 = vmul.f32 %v4449, 0.70710677
        %v6021 = vmul.f32 %v4833, 0.70710677
        %v6022 = vmul.f32 %v4835, 0.70710677
        %v6023 = vmul.f32 %v5219, 0.70710677
        %v6024 = vmul.f32 %v5221, 0.70710677
        %v6025 = vmul.f32 %v5605, 0.70710677
        %v6026 = vmul.f32 %v5607, 0.70710677
        %v6027 = vmul.f32 %v4451, 0.70710677
        %v6028 = vmul.f32 %v4453, 0.70710677
        %v6029 = vmul.f32 %v4837, 0.70710677
        %v6030 = vmul.f32 %v4839, 0.70710677
        %v6031 = vmul.f32 %v5223, 0.70710677
        %v6032 = vmul.f32 %v5225, 0.70710677
        %v6033 = vmul.f32 %v5609, 0.70710677
        %v6034 = vmul.f32 %v5611, 0.70710677
        %v6035 = vmul.f32 %v4457, 0.70710677
        %v6036 = vmul.f32 %v4459, 0.70710677
        %v6037 = vmul.f32 %v4843, 0.70710677
        %v6038 = vmul.f32 %v4845, 0.70710677
        %v6039 = vmul.f32 %v5229, 0.70710677
        %v6040 = vmul.f32 %v5231, 0.70710677
        %v6041 = vmul.f32 %v5615, 0.70710677
        %v6042 = vmul.f32 %v5617, 0.70710677
        %v6043 = vmul.f32 %v4461, 0.70710677
        %v6044 = vmul.f32 %v4463, 0.70710677
        %v6045 = vmul.f32 %v4847, 0.70710677
        %v6046 = vmul.f32 %v4849, 0.70710677
        %v6047 = vmul.f32 %v5233, 0.70710677
        %v6048 = vmul.f32 %v5235, 0.70710677
        %v6049 = vmul.f32 %v5619, 0.70710677
        %v6050 = vmul.f32 %v5621, 0.70710677
        %v6051 = vmul.f32 %v4467, 0.70710677
        %v6052 = vmul.f32 %v4469, 0.70710677
        %v6053 = vmul.f32 %v4853, 0.70710677
        %v6054 = vmul.f32 %v4855, 0.70710677
        %v6055 = vmul.f32 %v5239, 0.70710677
        %v6056 = vmul.f32 %v5241, 0.70710677
        %v6057 = vmul.f32 %v5625, 0.70710677
        %v6058 = vmul.f32 %v5627, 0.70710677
        %v6059 = vmul.f32 %v4471, 0.70710677
        %v6060 = vmul.f32 %v4473, 0.70710677
        %v6061 = vmul.f32 %v4857, 0.70710677
        %v6062 = vmul.f32 %v4859, 0.70710677
        %v6063 = vmul.f32 %v5243, 0.70710677
        %v6064 = vmul.f32 %v5245, 0.70710677
        %v6065 = vmul.f32 %v5629, 0.70710677
        %v6066 = vmul.f32 %v5631, 0.70710677
        %v6067 = vmul.f32 %v4477, 0.70710677
        %v6068 = vmul.f32 %v4479, 0.70710677
        %v6069 = vmul.f32 %v4863, 0.70710677
        %v6070 = vmul.f32 %v4865, 0.70710677
        %v6071 = vmul.f32 %v5249, 0.70710677
        %v6072 = vmul.f32 %v5251, 0.70710677
        %v6073 = vmul.f32 %v5635, 0.70710677
        %v6074 = vmul.f32 %v5637, 0.70710677
        %v6075 = vmul.f32 %v4481, 0.70710677
        %v6076 = vmul.f32 %v4483, 0.70710677
        %v6077 = vmul.f32 %v4867, 0.70710677
        %v6078 = vmul.f32 %v4869, 0.70710677
        %v6079 = vmul.f32 %v5253, 0.70710677
        %v6080 = vmul.f32 %v5255, 0.70710677
        %v6081 = vmul.f32 %v5639, 0.70710677
        %v6082 = vmul.f32 %v5641, 0.70710677
        %v6083 = vmul.f32 %v4487, 0.70710677
        %v6084 = vmul.f32 %v4489, 0.70710677
        %v6085 = vmul.f32 %v4873, 0.70710677
        %v6086 = vmul.f32 %v4875, 0.70710677
        %v6087 = vmul.f32 %v5259, 0.70710677
        %v6088 = vmul.f32 %v5261, 0.70710677
        %v6089 = vmul.f32 %v5645, 0.70710677
        %v6090 = vmul.f32 %v5647, 0.70710677
        %v6091 = vmul.f32 %v4491, 0.70710677
        %v6092 = vmul.f32 %v4493, 0.70710677
        %v6093 = vmul.f32 %v4877, 0.70710677
        %v6094 = vmul.f32 %v4879, 0.70710677
        %v6095 = vmul.f32 %v5263, 0.70710677
        %v6096 = vmul.f32 %v5265, 0.70710677
        %v6097 = vmul.f32 %v5649, 0.70710677
        %v6098 = vmul.f32 %v5651, 0.70710677
        %v6099 = vmul.f32 %v4497, 0.70710677
        %v6100 = vmul.f32 %v4499, 0.70710677
        %v6101 = vmul.f32 %v4883, 0.70710677
        %v6102 = vmul.f32 %v4885, 0.70710677
        %v6103 = vmul.f32 %v5269, 0.70710677
        %v6104 = vmul.f32 %v5271, 0.70710677
        %v6105 = vmul.f32 %v5655, 0.70710677
        %v6106 = vmul.f32 %v5657, 0.70710677
        %v6107 = vmul.f32 %v4501, 0.70710677
        %v6108 = vmul.f32 %v4503, 0.70710677
        %v6109 = vmul.f32 %v4887, 0.70710677
        %v6110 = vmul.f32 %v4889, 0.70710677
        %v6111 = vmul.f32 %v5273, 0.70710677
        %v6112 = vmul.f32 %v5275, 0.70710677
        %v6113 = vmul.f32 %v5659, 0.70710677
        %v6114 = vmul.f32 %v5661, 0.70710677
        %v6115 = vmul.f32 %v4507, 0.70710677
        %v6116 = vmul.f32 %v4509, 0.70710677
        %v6117 = vmul.f32 %v4893, 0.70710677
        %v6118 = vmul.f32 %v4895, 0.70710677
        %v6119 = vmul.f32 %v5279, 0.70710677
        %v6120 = vmul.f32 %v5281, 0.70710677
        %v6121 = vmul.f32 %v5665, 0.70710677
        %v6122 = vmul.f32 %v5667, 0.70710677
        %v6123 = vmul.f32 %v4511, 0.70710677
        %v6124 = vmul.f32 %v4513, 0.70710677
        %v6125 = vmul.f32 %v4897, 0.70710677
        %v6126 = vmul.f32 %v4899, 0.70710677
        %v6127 = vmul.f32 %v5283, 0.70710677
        %v6128 = vmul.f32 %v5285, 0.70710677
        %v6129 = vmul.f32 %v5669, 0.70710677
        %v6130 = vmul.f32 %v5671, 0.70710677
        %v6131 = vmul.f32 %v4517, 0.70710677
        %v6132 = vmul.f32 %v4519, 0.70710677
        %v6133 = vmul.f32 %v4903, 0.70710677
        %v6134 = vmul.f32 %v4905, 0.70710677
        %v6135 = vmul.f32 %v5289, 0.70710677
        %v6136 = vmul.f32 %v5291, 0.70710677
        %v6137 = vmul.f32 %v5675, 0.70710677
        %v6138 = vmul.f32 %v5677, 0.70710677
        %v6139 = vmul.f32 %v4521, 0.70710677
        %v6140 = vmul.f32 %v4523, 0.70710677
        %v6141 = vmul.f32 %v4907, 0.70710677
        %v6142 = vmul.f32 %v4909, 0.70710677
        %v6143 = vmul.f32 %v5293, 0.70710677
        %v6144 = vmul.f32 %v5295, 0.70710677
        %v6145 = vmul.f32 %v5679, 0.70710677
        %v6146 = vmul.f32 %v5681, 0.70710677
        %v6147 = vmul.f32 %v4527, 0.70710677
        %v6148 = vmul.f32 %v4529, 0.70710677
        %v6149 = vmul.f32 %v4913, 0.70710677
        %v6150 = vmul.f32 %v4915, 0.70710677
        %v6151 = vmul.f32 %v5299, 0.70710677
        %v6152 = vmul.f32 %v5301, 0.70710677
        %v6153 = vmul.f32 %v5685, 0.70710677
        %v6154 = vmul.f32 %v5687, 0.70710677
        %v6155 = vmul.f32 %v4531, 0.70710677
        %v6156 = vmul.f32 %v4533, 0.70710677
        %v6157 = vmul.f32 %v4917, 0.70710677
        %v6158 = vmul.f32 %v4919, 0.70710677
        %v6159 = vmul.f32 %v5303, 0.70710677
        %v6160 = vmul.f32 %v5305, 0.70710677
        %v6161 = vmul.f32 %v5689, 0.70710677
        %v6162 = vmul.f32 %v5691, 0.70710677
        %v6163 = vmul.f32 %v4537, 0.70710677
        %v6164 = vmul.f32 %v4539, 0.70710677
        %v6165 = vmul.f32 %v4923, 0.70710677
        %v6166 = vmul.f32 %v4925, 0.70710677
        %v6167 = vmul.f32 %v5309, 0.70710677
        %v6168 = vmul.f32 %v5311, 0.70710677
        %v6169 = vmul.f32 %v5695, 0.70710677
        %v6170 = vmul.f32 %v5697, 0.70710677
        %v6171 = vmul.f32 %v4541, 0.70710677
        %v6172 = vmul.f32 %v4543, 0.70710677
        %v6173 = vmul.f32 %v4927, 0.70710677
        %v6174 = vmul.f32 %v4929, 0.70710677
        %v6175 = vmul.f32 %v5313, 0.70710677
        %v6176 = vmul.f32 %v5315, 0.70710677
        %v6177 = vmul.f32 %v5699, 0.70710677
        %v6178 = vmul.f32 %v5701, 0.70710677
        %v6179 = vmul.f32 %v4547, 0.70710677
        %v6180 = vmul.f32 %v4549, 0.70710677
        %v6181 = vmul.f32 %v4933, 0.70710677
        %v6182 = vmul.f32 %v4935, 0.70710677
        %v6183 = vmul.f32 %v5319, 0.70710677
        %v6184 = vmul.f32 %v5321, 0.70710677
        %v6185 = vmul.f32 %v5705, 0.70710677
        %v6186 = vmul.f32 %v5707, 0.70710677
        %v6187 = vmul.f32 %v4551, 0.70710677
        %v6188 = vmul.f32 %v4553, 0.70710677
        %v6189 = vmul.f32 %v4937, 0.70710677
        %v6190 = vmul.f32 %v4939, 0.70710677
        %v6191 = vmul.f32 %v5323, 0.70710677
        %v6192 = vmul.f32 %v5325, 0.70710677
        %v6193 = vmul.f32 %v5709, 0.70710677
        %v6194 = vmul.f32 %v5711, 0.70710677
        %v6195 = vmul.f32 %v4557, 0.70710677
        %v6196 = vmul.f32 %v4559, 0.70710677
        %v6197 = vmul.f32 %v4943, 0.70710677
        %v6198 = vmul.f32 %v4945, 0.70710677
        %v6199 = vmul.f32 %v5329, 0.70710677
        %v6200 = vmul.f32 %v5331, 0.70710677
        %v6201 = vmul.f32 %v5715, 0.70710677
        %v6202 = vmul.f32 %v5717, 0.70710677
        %v6203 = vmul.f32 %v4561, 0.70710677
        %v6204 = vmul.f32 %v4563, 0.70710677
        %v6205 = vmul.f32 %v4947, 0.70710677
        %v6206 = vmul.f32 %v4949, 0.70710677
        %v6207 = vmul.f32 %v5333, 0.70710677
        %v6208 = vmul.f32 %v5335, 0.70710677
        %v6209 = vmul.f32 %v5719, 0.70710677
        %v6210 = vmul.f32 %v5721, 0.70710677
        %v6211 = vmul.f32 %v4567, 0.70710677
        %v6212 = vmul.f32 %v4569, 0.70710677
        %v6213 = vmul.f32 %v4953, 0.70710677
        %v6214 = vmul.f32 %v4955, 0.70710677
        %v6215 = vmul.f32 %v5339, 0.70710677
        %v6216 = vmul.f32 %v5341, 0.70710677
        %v6217 = vmul.f32 %v5725, 0.70710677
        %v6218 = vmul.f32 %v5727, 0.70710677
        %v6219 = vmul.f32 %v4571, 0.70710677
        %v6220 = vmul.f32 %v4573, 0.70710677
        %v6221 = vmul.f32 %v4957, 0.70710677
        %v6222 = vmul.f32 %v4959, 0.70710677
        %v6223 = vmul.f32 %v5343, 0.70710677
        %v6224 = vmul.f32 %v5345, 0.70710677
        %v6225 = vmul.f32 %v5729, 0.70710677
        %v6226 = vmul.f32 %v5731, 0.70710677
        %v6227 = vmul.f32 %v4577, 0.70710677
        %v6228 = vmul.f32 %v4579, 0.70710677
        %v6229 = vmul.f32 %v4963, 0.70710677
        %v6230 = vmul.f32 %v4965, 0.70710677
        %v6231 = vmul.f32 %v5349, 0.70710677
        %v6232 = vmul.f32 %v5351, 0.70710677
        %v6233 = vmul.f32 %v5735, 0.70710677
        %v6234 = vmul.f32 %v5737, 0.70710677
        %v6235 = vmul.f32 %v4581, 0.70710677
        %v6236 = vmul.f32 %v4583, 0.70710677
        %v6237 = vmul.f32 %v4967, 0.70710677
        %v6238 = vmul.f32 %v4969, 0.70710677
        %v6239 = vmul.f32 %v5353, 0.70710677
        %v6240 = vmul.f32 %v5355, 0.70710677
        %v6241 = vmul.f32 %v5739, 0.70710677
        %v6242 = vmul.f32 %v5741, 0.70710677
        %v6243 = vmul.f32 %v4587, 0.70710677
        %v6244 = vmul.f32 %v4589, 0.70710677
        %v6245 = vmul.f32 %v4973, 0.70710677
        %v6246 = vmul.f32 %v4975, 0.70710677
        %v6247 = vmul.f32 %v5359, 0.70710677
        %v6248 = vmul.f32 %v5361, 0.70710677
        %v6249 = vmul.f32 %v5745, 0.70710677
        %v6250 = vmul.f32 %v5747, 0.70710677
        %v6251 = vmul.f32 %v4591, 0.70710677
        %v6252 = vmul.f32 %v4593, 0.70710677
        %v6253 = vmul.f32 %v4977, 0.70710677
        %v6254 = vmul.f32 %v4979, 0.70710677
        %v6255 = vmul.f32 %v5363, 0.70710677
        %v6256 = vmul.f32 %v5365, 0.70710677
        %v6257 = vmul.f32 %v5749, 0.70710677
        %v6258 = vmul.f32 %v5751, 0.70710677
        %v6259 = vmul.f32 %v4597, 0.70710677
        %v6260 = vmul.f32 %v4599, 0.70710677
        %v6261 = vmul.f32 %v4983, 0.70710677
        %v6262 = vmul.f32 %v4985, 0.70710677
        %v6263 = vmul.f32 %v5369, 0.70710677
        %v6264 = vmul.f32 %v5371, 0.70710677
        %v6265 = vmul.f32 %v5755, 0.70710677
        %v6266 = vmul.f32 %v5757, 0.70710677
        %v6267 = vmul.f32 %v4601, 0.70710677
        %v6268 = vmul.f32 %v4603, 0.70710677
        %v6269 = vmul.f32 %v4987, 0.70710677
        %v6270 = vmul.f32 %v4989, 0.70710677
        %v6271 = vmul.f32 %v5373, 0.70710677
        %v6272 = vmul.f32 %v5375, 0.70710677
        %v6273 = vmul.f32 %v5759, 0.70710677
        %v6274 = vmul.f32 %v5761, 0.70710677
        %v6275 = verf.f32.pop %v6019
        %v6276 = verf.f32.pop %v6020
        %v6277 = verf.f32.pop %v6021
        %v6278 = verf.f32.pop %v6022
        %v6279 = verf.f32.pop %v6023
        %v6280 = verf.f32.pop %v6024
        %v6281 = verf.f32.pop %v6025
        %v6282 = verf.f32.pop %v6026
        %v6283 = verf.f32.pop %v6027
        %v6284 = verf.f32.pop %v6028
        %v6285 = verf.f32.pop %v6029
        %v6286 = verf.f32.pop %v6030
        %v6287 = verf.f32.pop %v6031
        %v6288 = verf.f32.pop %v6032
        %v6289 = verf.f32.pop %v6033
        %v6290 = verf.f32.pop %v6034
        %v6291 = verf.f32.pop %v6035
        %v6292 = verf.f32.pop %v6036
        %v6293 = verf.f32.pop %v6037
        %v6294 = verf.f32.pop %v6038
        %v6295 = verf.f32.pop %v6039
        %v6296 = verf.f32.pop %v6040
        %v6297 = verf.f32.pop %v6041
        %v6298 = verf.f32.pop %v6042
        %v6299 = verf.f32.pop %v6043
        %v6300 = verf.f32.pop %v6044
        %v6301 = verf.f32.pop %v6045
        %v6302 = verf.f32.pop %v6046
        %v6303 = verf.f32.pop %v6047
        %v6304 = verf.f32.pop %v6048
        %v6305 = verf.f32.pop %v6049
        %v6306 = verf.f32.pop %v6050
        %v6307 = verf.f32.pop %v6051
        %v6308 = verf.f32.pop %v6052
        %v6309 = verf.f32.pop %v6053
        %v6310 = verf.f32.pop %v6054
        %v6311 = verf.f32.pop %v6055
        %v6312 = verf.f32.pop %v6056
        %v6313 = verf.f32.pop %v6057
        %v6314 = verf.f32.pop %v6058
        %v6315 = verf.f32.pop %v6059
        %v6316 = verf.f32.pop %v6060
        %v6317 = verf.f32.pop %v6061
        %v6318 = verf.f32.pop %v6062
        %v6319 = verf.f32.pop %v6063
        %v6320 = verf.f32.pop %v6064
        %v6321 = verf.f32.pop %v6065
        %v6322 = verf.f32.pop %v6066
        %v6323 = verf.f32.pop %v6067
        %v6324 = verf.f32.pop %v6068
        %v6325 = verf.f32.pop %v6069
        %v6326 = verf.f32.pop %v6070
        %v6327 = verf.f32.pop %v6071
        %v6328 = verf.f32.pop %v6072
        %v6329 = verf.f32.pop %v6073
        %v6330 = verf.f32.pop %v6074
        %v6331 = verf.f32.pop %v6075
        %v6332 = verf.f32.pop %v6076
        %v6333 = verf.f32.pop %v6077
        %v6334 = verf.f32.pop %v6078
        %v6335 = verf.f32.pop %v6079
        %v6336 = verf.f32.pop %v6080
        %v6337 = verf.f32.pop %v6081
        %v6338 = verf.f32.pop %v6082
        %v6339 = verf.f32.pop %v6083
        %v6340 = verf.f32.pop %v6084
        %v6341 = verf.f32.pop %v6085
        %v6342 = verf.f32.pop %v6086
        %v6343 = verf.f32.pop %v6087
        %v6344 = verf.f32.pop %v6088
        %v6345 = verf.f32.pop %v6089
        %v6346 = verf.f32.pop %v6090
        %v6347 = verf.f32.pop %v6091
        %v6348 = verf.f32.pop %v6092
        %v6349 = verf.f32.pop %v6093
        %v6350 = verf.f32.pop %v6094
        %v6351 = verf.f32.pop %v6095
        %v6352 = verf.f32.pop %v6096
        %v6353 = verf.f32.pop %v6097
        %v6354 = verf.f32.pop %v6098
        %v6355 = verf.f32.pop %v6099
        %v6356 = verf.f32.pop %v6100
        %v6357 = verf.f32.pop %v6101
        %v6358 = verf.f32.pop %v6102
        %v6359 = verf.f32.pop %v6103
        %v6360 = verf.f32.pop %v6104
        %v6361 = verf.f32.pop %v6105
        %v6362 = verf.f32.pop %v6106
        %v6363 = verf.f32.pop %v6107
        %v6364 = verf.f32.pop %v6108
        %v6365 = verf.f32.pop %v6109
        %v6366 = verf.f32.pop %v6110
        %v6367 = verf.f32.pop %v6111
        %v6368 = verf.f32.pop %v6112
        %v6369 = verf.f32.pop %v6113
        %v6370 = verf.f32.pop %v6114
        %v6371 = verf.f32.pop %v6115
        %v6372 = verf.f32.pop %v6116
        %v6373 = verf.f32.pop %v6117
        %v6374 = verf.f32.pop %v6118
        %v6375 = verf.f32.pop %v6119
        %v6376 = verf.f32.pop %v6120
        %v6377 = verf.f32.pop %v6121
        %v6378 = verf.f32.pop %v6122
        %v6379 = verf.f32.pop %v6123
        %v6380 = verf.f32.pop %v6124
        %v6381 = verf.f32.pop %v6125
        %v6382 = verf.f32.pop %v6126
        %v6383 = verf.f32.pop %v6127
        %v6384 = verf.f32.pop %v6128
        %v6385 = verf.f32.pop %v6129
        %v6386 = verf.f32.pop %v6130
        %v6387 = verf.f32.pop %v6131
        %v6388 = verf.f32.pop %v6132
        %v6389 = verf.f32.pop %v6133
        %v6390 = verf.f32.pop %v6134
        %v6391 = verf.f32.pop %v6135
        %v6392 = verf.f32.pop %v6136
        %v6393 = verf.f32.pop %v6137
        %v6394 = verf.f32.pop %v6138
        %v6395 = verf.f32.pop %v6139
        %v6396 = verf.f32.pop %v6140
        %v6397 = verf.f32.pop %v6141
        %v6398 = verf.f32.pop %v6142
        %v6399 = verf.f32.pop %v6143
        %v6400 = verf.f32.pop %v6144
        %v6401 = verf.f32.pop %v6145
        %v6402 = verf.f32.pop %v6146
        %v6403 = verf.f32.pop %v6147
        %v6404 = verf.f32.pop %v6148
        %v6405 = verf.f32.pop %v6149
        %v6406 = verf.f32.pop %v6150
        %v6407 = verf.f32.pop %v6151
        %v6408 = verf.f32.pop %v6152
        %v6409 = verf.f32.pop %v6153
        %v6410 = verf.f32.pop %v6154
        %v6411 = verf.f32.pop %v6155
        %v6412 = verf.f32.pop %v6156
        %v6413 = verf.f32.pop %v6157
        %v6414 = verf.f32.pop %v6158
        %v6415 = verf.f32.pop %v6159
        %v6416 = verf.f32.pop %v6160
        %v6417 = verf.f32.pop %v6161
        %v6418 = verf.f32.pop %v6162
        %v6419 = verf.f32.pop %v6163
        %v6420 = verf.f32.pop %v6164
        %v6421 = verf.f32.pop %v6165
        %v6422 = verf.f32.pop %v6166
        %v6423 = verf.f32.pop %v6167
        %v6424 = verf.f32.pop %v6168
        %v6425 = verf.f32.pop %v6169
        %v6426 = verf.f32.pop %v6170
        %v6427 = verf.f32.pop %v6171
        %v6428 = verf.f32.pop %v6172
        %v6429 = verf.f32.pop %v6173
        %v6430 = verf.f32.pop %v6174
        %v6431 = verf.f32.pop %v6175
        %v6432 = verf.f32.pop %v6176
        %v6433 = verf.f32.pop %v6177
        %v6434 = verf.f32.pop %v6178
        %v6435 = verf.f32.pop %v6179
        %v6436 = verf.f32.pop %v6180
        %v6437 = verf.f32.pop %v6181
        %v6438 = verf.f32.pop %v6182
        %v6439 = verf.f32.pop %v6183
        %v6440 = verf.f32.pop %v6184
        %v6441 = verf.f32.pop %v6185
        %v6442 = verf.f32.pop %v6186
        %v6443 = verf.f32.pop %v6187
        %v6444 = verf.f32.pop %v6188
        %v6445 = verf.f32.pop %v6189
        %v6446 = verf.f32.pop %v6190
        %v6447 = verf.f32.pop %v6191
        %v6448 = verf.f32.pop %v6192
        %v6449 = verf.f32.pop %v6193
        %v6450 = verf.f32.pop %v6194
        %v6451 = verf.f32.pop %v6195
        %v6452 = verf.f32.pop %v6196
        %v6453 = verf.f32.pop %v6197
        %v6454 = verf.f32.pop %v6198
        %v6455 = verf.f32.pop %v6199
        %v6456 = verf.f32.pop %v6200
        %v6457 = verf.f32.pop %v6201
        %v6458 = verf.f32.pop %v6202
        %v6459 = verf.f32.pop %v6203
        %v6460 = verf.f32.pop %v6204
        %v6461 = verf.f32.pop %v6205
        %v6462 = verf.f32.pop %v6206
        %v6463 = verf.f32.pop %v6207
        %v6464 = verf.f32.pop %v6208
        %v6465 = verf.f32.pop %v6209
        %v6466 = verf.f32.pop %v6210
        %v6467 = verf.f32.pop %v6211
        %v6468 = verf.f32.pop %v6212
        %v6469 = verf.f32.pop %v6213
        %v6470 = verf.f32.pop %v6214
        %v6471 = verf.f32.pop %v6215
        %v6472 = verf.f32.pop %v6216
        %v6473 = verf.f32.pop %v6217
        %v6474 = verf.f32.pop %v6218
        %v6475 = verf.f32.pop %v6219
        %v6476 = verf.f32.pop %v6220
        %v6477 = verf.f32.pop %v6221
        %v6478 = verf.f32.pop %v6222
        %v6479 = verf.f32.pop %v6223
        %v6480 = verf.f32.pop %v6224
        %v6481 = verf.f32.pop %v6225
        %v6482 = verf.f32.pop %v6226
        %v6483 = verf.f32.pop %v6227
        %v6484 = verf.f32.pop %v6228
        %v6485 = verf.f32.pop %v6229
        %v6486 = verf.f32.pop %v6230
        %v6487 = verf.f32.pop %v6231
        %v6488 = verf.f32.pop %v6232
        %v6489 = verf.f32.pop %v6233
        %v6490 = verf.f32.pop %v6234
        %v6491 = verf.f32.pop %v6235
        %v6492 = verf.f32.pop %v6236
        %v6493 = verf.f32.pop %v6237
        %v6494 = verf.f32.pop %v6238
        %v6495 = verf.f32.pop %v6239
        %v6496 = verf.f32.pop %v6240
        %v6497 = verf.f32.pop %v6241
        %v6498 = verf.f32.pop %v6242
        %v6499 = verf.f32.pop %v6243
        %v6500 = verf.f32.pop %v6244
        %v6501 = verf.f32.pop %v6245
        %v6502 = verf.f32.pop %v6246
        %v6503 = verf.f32.pop %v6247
        %v6504 = verf.f32.pop %v6248
        %v6505 = verf.f32.pop %v6249
        %v6506 = verf.f32.pop %v6250
        %v6507 = verf.f32.pop %v6251
        %v6508 = verf.f32.pop %v6252
        %v6509 = verf.f32.pop %v6253
        %v6510 = verf.f32.pop %v6254
        %v6511 = verf.f32.pop %v6255
        %v6512 = verf.f32.pop %v6256
        %v6513 = verf.f32.pop %v6257
        %v6514 = verf.f32.pop %v6258
        %v6515 = verf.f32.pop %v6259
        %v6516 = verf.f32.pop %v6260
        %v6517 = verf.f32.pop %v6261
        %v6518 = verf.f32.pop %v6262
        %v6519 = verf.f32.pop %v6263
        %v6520 = verf.f32.pop %v6264
        %v6521 = verf.f32.pop %v6265
        %v6522 = verf.f32.pop %v6266
        %v6523 = verf.f32.pop %v6267
        %v6524 = verf.f32.pop %v6268
        %v6525 = verf.f32.pop %v6269
        %v6526 = verf.f32.pop %v6270
        %v6527 = verf.f32.pop %v6271
        %v6528 = verf.f32.pop %v6272
        %v6529 = verf.f32.pop %v6273
        %v6530 = verf.f32.pop %v6274
        %v6531 = vadd.f32 %v6275, 1.0
        %v6532 = vadd.f32 %v6276, 1.0
        %v6533 = vadd.f32 %v6277, 1.0
        %v6534 = vadd.f32 %v6278, 1.0
        %v6535 = vadd.f32 %v6279, 1.0
        %v6536 = vadd.f32 %v6280, 1.0
        %v6537 = vadd.f32 %v6281, 1.0
        %v6538 = vadd.f32 %v6282, 1.0
        %v6539 = vadd.f32 %v6283, 1.0
        %v6540 = vadd.f32 %v6284, 1.0
        %v6541 = vadd.f32 %v6285, 1.0
        %v6542 = vadd.f32 %v6286, 1.0
        %v6543 = vadd.f32 %v6287, 1.0
        %v6544 = vadd.f32 %v6288, 1.0
        %v6545 = vadd.f32 %v6289, 1.0
        %v6546 = vadd.f32 %v6290, 1.0
        %v6547 = vadd.f32 %v6291, 1.0
        %v6548 = vadd.f32 %v6292, 1.0
        %v6549 = vadd.f32 %v6293, 1.0
        %v6550 = vadd.f32 %v6294, 1.0
        %v6551 = vadd.f32 %v6295, 1.0
        %v6552 = vadd.f32 %v6296, 1.0
        %v6553 = vadd.f32 %v6297, 1.0
        %v6554 = vadd.f32 %v6298, 1.0
        %v6555 = vadd.f32 %v6299, 1.0
        %v6556 = vadd.f32 %v6300, 1.0
        %v6557 = vadd.f32 %v6301, 1.0
        %v6558 = vadd.f32 %v6302, 1.0
        %v6559 = vadd.f32 %v6303, 1.0
        %v6560 = vadd.f32 %v6304, 1.0
        %v6561 = vadd.f32 %v6305, 1.0
        %v6562 = vadd.f32 %v6306, 1.0
        %v6563 = vadd.f32 %v6307, 1.0
        %v6564 = vadd.f32 %v6308, 1.0
        %v6565 = vadd.f32 %v6309, 1.0
        %v6566 = vadd.f32 %v6310, 1.0
        %v6567 = vadd.f32 %v6311, 1.0
        %v6568 = vadd.f32 %v6312, 1.0
        %v6569 = vadd.f32 %v6313, 1.0
        %v6570 = vadd.f32 %v6314, 1.0
        %v6571 = vadd.f32 %v6315, 1.0
        %v6572 = vadd.f32 %v6316, 1.0
        %v6573 = vadd.f32 %v6317, 1.0
        %v6574 = vadd.f32 %v6318, 1.0
        %v6575 = vadd.f32 %v6319, 1.0
        %v6576 = vadd.f32 %v6320, 1.0
        %v6577 = vadd.f32 %v6321, 1.0
        %v6578 = vadd.f32 %v6322, 1.0
        %v6579 = vadd.f32 %v6323, 1.0
        %v6580 = vadd.f32 %v6324, 1.0
        %v6581 = vadd.f32 %v6325, 1.0
        %v6582 = vadd.f32 %v6326, 1.0
        %v6583 = vadd.f32 %v6327, 1.0
        %v6584 = vadd.f32 %v6328, 1.0
        %v6585 = vadd.f32 %v6329, 1.0
        %v6586 = vadd.f32 %v6330, 1.0
        %v6587 = vadd.f32 %v6331, 1.0
        %v6588 = vadd.f32 %v6332, 1.0
        %v6589 = vadd.f32 %v6333, 1.0
        %v6590 = vadd.f32 %v6334, 1.0
        %v6591 = vadd.f32 %v6335, 1.0
        %v6592 = vadd.f32 %v6336, 1.0
        %v6593 = vadd.f32 %v6337, 1.0
        %v6594 = vadd.f32 %v6338, 1.0
        %v6595 = vadd.f32 %v6339, 1.0
        %v6596 = vadd.f32 %v6340, 1.0
        %v6597 = vadd.f32 %v6341, 1.0
        %v6598 = vadd.f32 %v6342, 1.0
        %v6599 = vadd.f32 %v6343, 1.0
        %v6600 = vadd.f32 %v6344, 1.0
        %v6601 = vadd.f32 %v6345, 1.0
        %v6602 = vadd.f32 %v6346, 1.0
        %v6603 = vadd.f32 %v6347, 1.0
        %v6604 = vadd.f32 %v6348, 1.0
        %v6605 = vadd.f32 %v6349, 1.0
        %v6606 = vadd.f32 %v6350, 1.0
        %v6607 = vadd.f32 %v6351, 1.0
        %v6608 = vadd.f32 %v6352, 1.0
        %v6609 = vadd.f32 %v6353, 1.0
        %v6610 = vadd.f32 %v6354, 1.0
        %v6611 = vadd.f32 %v6355, 1.0
        %v6612 = vadd.f32 %v6356, 1.0
        %v6613 = vadd.f32 %v6357, 1.0
        %v6614 = vadd.f32 %v6358, 1.0
        %v6615 = vadd.f32 %v6359, 1.0
        %v6616 = vadd.f32 %v6360, 1.0
        %v6617 = vadd.f32 %v6361, 1.0
        %v6618 = vadd.f32 %v6362, 1.0
        %v6619 = vadd.f32 %v6363, 1.0
        %v6620 = vadd.f32 %v6364, 1.0
        %v6621 = vadd.f32 %v6365, 1.0
        %v6622 = vadd.f32 %v6366, 1.0
        %v6623 = vadd.f32 %v6367, 1.0
        %v6624 = vadd.f32 %v6368, 1.0
        %v6625 = vadd.f32 %v6369, 1.0
        %v6626 = vadd.f32 %v6370, 1.0
        %v6627 = vadd.f32 %v6371, 1.0
        %v6628 = vadd.f32 %v6372, 1.0
        %v6629 = vadd.f32 %v6373, 1.0
        %v6630 = vadd.f32 %v6374, 1.0
        %v6631 = vadd.f32 %v6375, 1.0
        %v6632 = vadd.f32 %v6376, 1.0
        %v6633 = vadd.f32 %v6377, 1.0
        %v6634 = vadd.f32 %v6378, 1.0
        %v6635 = vadd.f32 %v6379, 1.0
        %v6636 = vadd.f32 %v6380, 1.0
        %v6637 = vadd.f32 %v6381, 1.0
        %v6638 = vadd.f32 %v6382, 1.0
        %v6639 = vadd.f32 %v6383, 1.0
        %v6640 = vadd.f32 %v6384, 1.0
        %v6641 = vadd.f32 %v6385, 1.0
        %v6642 = vadd.f32 %v6386, 1.0
        %v6643 = vadd.f32 %v6387, 1.0
        %v6644 = vadd.f32 %v6388, 1.0
        %v6645 = vadd.f32 %v6389, 1.0
        %v6646 = vadd.f32 %v6390, 1.0
        %v6647 = vadd.f32 %v6391, 1.0
        %v6648 = vadd.f32 %v6392, 1.0
        %v6649 = vadd.f32 %v6393, 1.0
        %v6650 = vadd.f32 %v6394, 1.0
        %v6651 = vadd.f32 %v6395, 1.0
        %v6652 = vadd.f32 %v6396, 1.0
        %v6653 = vadd.f32 %v6397, 1.0
        %v6654 = vadd.f32 %v6398, 1.0
        %v6655 = vadd.f32 %v6399, 1.0
        %v6656 = vadd.f32 %v6400, 1.0
        %v6657 = vadd.f32 %v6401, 1.0
        %v6658 = vadd.f32 %v6402, 1.0
        %v6659 = vadd.f32 %v6403, 1.0
        %v6660 = vadd.f32 %v6404, 1.0
        %v6661 = vadd.f32 %v6405, 1.0
        %v6662 = vadd.f32 %v6406, 1.0
        %v6663 = vadd.f32 %v6407, 1.0
        %v6664 = vadd.f32 %v6408, 1.0
        %v6665 = vadd.f32 %v6409, 1.0
        %v6666 = vadd.f32 %v6410, 1.0
        %v6667 = vadd.f32 %v6411, 1.0
        %v6668 = vadd.f32 %v6412, 1.0
        %v6669 = vadd.f32 %v6413, 1.0
        %v6670 = vadd.f32 %v6414, 1.0
        %v6671 = vadd.f32 %v6415, 1.0
        %v6672 = vadd.f32 %v6416, 1.0
        %v6673 = vadd.f32 %v6417, 1.0
        %v6674 = vadd.f32 %v6418, 1.0
        %v6675 = vadd.f32 %v6419, 1.0
        %v6676 = vadd.f32 %v6420, 1.0
        %v6677 = vadd.f32 %v6421, 1.0
        %v6678 = vadd.f32 %v6422, 1.0
        %v6679 = vadd.f32 %v6423, 1.0
        %v6680 = vadd.f32 %v6424, 1.0
        %v6681 = vadd.f32 %v6425, 1.0
        %v6682 = vadd.f32 %v6426, 1.0
        %v6683 = vadd.f32 %v6427, 1.0
        %v6684 = vadd.f32 %v6428, 1.0
        %v6685 = vadd.f32 %v6429, 1.0
        %v6686 = vadd.f32 %v6430, 1.0
        %v6687 = vadd.f32 %v6431, 1.0
        %v6688 = vadd.f32 %v6432, 1.0
        %v6689 = vadd.f32 %v6433, 1.0
        %v6690 = vadd.f32 %v6434, 1.0
        %v6691 = vadd.f32 %v6435, 1.0
        %v6692 = vadd.f32 %v6436, 1.0
        %v6693 = vadd.f32 %v6437, 1.0
        %v6694 = vadd.f32 %v6438, 1.0
        %v6695 = vadd.f32 %v6439, 1.0
        %v6696 = vadd.f32 %v6440, 1.0
        %v6697 = vadd.f32 %v6441, 1.0
        %v6698 = vadd.f32 %v6442, 1.0
        %v6699 = vadd.f32 %v6443, 1.0
        %v6700 = vadd.f32 %v6444, 1.0
        %v6701 = vadd.f32 %v6445, 1.0
        %v6702 = vadd.f32 %v6446, 1.0
        %v6703 = vadd.f32 %v6447, 1.0
        %v6704 = vadd.f32 %v6448, 1.0
        %v6705 = vadd.f32 %v6449, 1.0
        %v6706 = vadd.f32 %v6450, 1.0
        %v6707 = vadd.f32 %v6451, 1.0
        %v6708 = vadd.f32 %v6452, 1.0
        %v6709 = vadd.f32 %v6453, 1.0
        %v6710 = vadd.f32 %v6454, 1.0
        %v6711 = vadd.f32 %v6455, 1.0
        %v6712 = vadd.f32 %v6456, 1.0
        %v6713 = vadd.f32 %v6457, 1.0
        %v6714 = vadd.f32 %v6458, 1.0
        %v6715 = vadd.f32 %v6459, 1.0
        %v6716 = vadd.f32 %v6460, 1.0
        %v6717 = vadd.f32 %v6461, 1.0
        %v6718 = vadd.f32 %v6462, 1.0
        %v6719 = vadd.f32 %v6463, 1.0
        %v6720 = vadd.f32 %v6464, 1.0
        %v6721 = vadd.f32 %v6465, 1.0
        %v6722 = vadd.f32 %v6466, 1.0
        %v6723 = vadd.f32 %v6467, 1.0
        %v6724 = vadd.f32 %v6468, 1.0
        %v6725 = vadd.f32 %v6469, 1.0
        %v6726 = vadd.f32 %v6470, 1.0
        %v6727 = vadd.f32 %v6471, 1.0
        %v6728 = vadd.f32 %v6472, 1.0
        %v6729 = vadd.f32 %v6473, 1.0
        %v6730 = vadd.f32 %v6474, 1.0
        %v6731 = vadd.f32 %v6475, 1.0
        %v6732 = vadd.f32 %v6476, 1.0
        %v6733 = vadd.f32 %v6477, 1.0
        %v6734 = vadd.f32 %v6478, 1.0
        %v6735 = vadd.f32 %v6479, 1.0
        %v6736 = vadd.f32 %v6480, 1.0
        %v6737 = vadd.f32 %v6481, 1.0
        %v6738 = vadd.f32 %v6482, 1.0
        %v6739 = vadd.f32 %v6483, 1.0
        %v6740 = vadd.f32 %v6484, 1.0
        %v6741 = vadd.f32 %v6485, 1.0
        %v6742 = vadd.f32 %v6486, 1.0
        %v6743 = vadd.f32 %v6487, 1.0
        %v6744 = vadd.f32 %v6488, 1.0
        %v6745 = vadd.f32 %v6489, 1.0
        %v6746 = vadd.f32 %v6490, 1.0
        %v6747 = vadd.f32 %v6491, 1.0
        %v6748 = vadd.f32 %v6492, 1.0
        %v6749 = vadd.f32 %v6493, 1.0
        %v6750 = vadd.f32 %v6494, 1.0
        %v6751 = vadd.f32 %v6495, 1.0
        %v6752 = vadd.f32 %v6496, 1.0
        %v6753 = vadd.f32 %v6497, 1.0
        %v6754 = vadd.f32 %v6498, 1.0
        %v6755 = vadd.f32 %v6499, 1.0
        %v6756 = vadd.f32 %v6500, 1.0
        %v6757 = vadd.f32 %v6501, 1.0
        %v6758 = vadd.f32 %v6502, 1.0
        %v6759 = vadd.f32 %v6503, 1.0
        %v6760 = vadd.f32 %v6504, 1.0
        %v6761 = vadd.f32 %v6505, 1.0
        %v6762 = vadd.f32 %v6506, 1.0
        %v6763 = vadd.f32 %v6507, 1.0
        %v6764 = vadd.f32 %v6508, 1.0
        %v6765 = vadd.f32 %v6509, 1.0
        %v6766 = vadd.f32 %v6510, 1.0
        %v6767 = vadd.f32 %v6511, 1.0
        %v6768 = vadd.f32 %v6512, 1.0
        %v6769 = vadd.f32 %v6513, 1.0
        %v6770 = vadd.f32 %v6514, 1.0
        %v6771 = vadd.f32 %v6515, 1.0
        %v6772 = vadd.f32 %v6516, 1.0
        %v6773 = vadd.f32 %v6517, 1.0
        %v6774 = vadd.f32 %v6518, 1.0
        %v6775 = vadd.f32 %v6519, 1.0
        %v6776 = vadd.f32 %v6520, 1.0
        %v6777 = vadd.f32 %v6521, 1.0
        %v6778 = vadd.f32 %v6522, 1.0
        %v6779 = vadd.f32 %v6523, 1.0
        %v6780 = vadd.f32 %v6524, 1.0
        %v6781 = vadd.f32 %v6525, 1.0
        %v6782 = vadd.f32 %v6526, 1.0
        %v6783 = vadd.f32 %v6527, 1.0
        %v6784 = vadd.f32 %v6528, 1.0
        %v6785 = vadd.f32 %v6529, 1.0
        %v6786 = vadd.f32 %v6530, 1.0
        %v6787 = vmul.f32 %v5763, %v6531
        %v6788 = vmul.f32 %v5764, %v6532
        %v6789 = vmul.f32 %v5765, %v6533
        %v6790 = vmul.f32 %v5766, %v6534
        %v6791 = vmul.f32 %v5767, %v6535
        %v6792 = vmul.f32 %v5768, %v6536
        %v6793 = vmul.f32 %v5769, %v6537
        %v6794 = vmul.f32 %v5770, %v6538
        %v6795 = vmul.f32 %v5771, %v6539
        %v6796 = vmul.f32 %v5772, %v6540
        %v6797 = vmul.f32 %v5773, %v6541
        %v6798 = vmul.f32 %v5774, %v6542
        %v6799 = vmul.f32 %v5775, %v6543
        %v6800 = vmul.f32 %v5776, %v6544
        %v6801 = vmul.f32 %v5777, %v6545
        %v6802 = vmul.f32 %v5778, %v6546
        %v6803 = vmul.f32 %v5779, %v6547
        %v6804 = vmul.f32 %v5780, %v6548
        %v6805 = vmul.f32 %v5781, %v6549
        %v6806 = vmul.f32 %v5782, %v6550
        %v6807 = vmul.f32 %v5783, %v6551
        %v6808 = vmul.f32 %v5784, %v6552
        %v6809 = vmul.f32 %v5785, %v6553
        %v6810 = vmul.f32 %v5786, %v6554
        %v6811 = vmul.f32 %v5787, %v6555
        %v6812 = vmul.f32 %v5788, %v6556
        %v6813 = vmul.f32 %v5789, %v6557
        %v6814 = vmul.f32 %v5790, %v6558
        %v6815 = vmul.f32 %v5791, %v6559
        %v6816 = vmul.f32 %v5792, %v6560
        %v6817 = vmul.f32 %v5793, %v6561
        %v6818 = vmul.f32 %v5794, %v6562
        %v6819 = vmul.f32 %v5795, %v6563
        %v6820 = vmul.f32 %v5796, %v6564
        %v6821 = vmul.f32 %v5797, %v6565
        %v6822 = vmul.f32 %v5798, %v6566
        %v6823 = vmul.f32 %v5799, %v6567
        %v6824 = vmul.f32 %v5800, %v6568
        %v6825 = vmul.f32 %v5801, %v6569
        %v6826 = vmul.f32 %v5802, %v6570
        %v6827 = vmul.f32 %v5803, %v6571
        %v6828 = vmul.f32 %v5804, %v6572
        %v6829 = vmul.f32 %v5805, %v6573
        %v6830 = vmul.f32 %v5806, %v6574
        %v6831 = vmul.f32 %v5807, %v6575
        %v6832 = vmul.f32 %v5808, %v6576
        %v6833 = vmul.f32 %v5809, %v6577
        %v6834 = vmul.f32 %v5810, %v6578
        %v6835 = vmul.f32 %v5811, %v6579
        %v6836 = vmul.f32 %v5812, %v6580
        %v6837 = vmul.f32 %v5813, %v6581
        %v6838 = vmul.f32 %v5814, %v6582
        %v6839 = vmul.f32 %v5815, %v6583
        %v6840 = vmul.f32 %v5816, %v6584
        %v6841 = vmul.f32 %v5817, %v6585
        %v6842 = vmul.f32 %v5818, %v6586
        %v6843 = vmul.f32 %v5819, %v6587
        %v6844 = vmul.f32 %v5820, %v6588
        %v6845 = vmul.f32 %v5821, %v6589
        %v6846 = vmul.f32 %v5822, %v6590
        %v6847 = vmul.f32 %v5823, %v6591
        %v6848 = vmul.f32 %v5824, %v6592
        %v6849 = vmul.f32 %v5825, %v6593
        %v6850 = vmul.f32 %v5826, %v6594
        %v6851 = vmul.f32 %v5827, %v6595
        %v6852 = vmul.f32 %v5828, %v6596
        %v6853 = vmul.f32 %v5829, %v6597
        %v6854 = vmul.f32 %v5830, %v6598
        %v6855 = vmul.f32 %v5831, %v6599
        %v6856 = vmul.f32 %v5832, %v6600
        %v6857 = vmul.f32 %v5833, %v6601
        %v6858 = vmul.f32 %v5834, %v6602
        %v6859 = vmul.f32 %v5835, %v6603
        %v6860 = vmul.f32 %v5836, %v6604
        %v6861 = vmul.f32 %v5837, %v6605
        %v6862 = vmul.f32 %v5838, %v6606
        %v6863 = vmul.f32 %v5839, %v6607
        %v6864 = vmul.f32 %v5840, %v6608
        %v6865 = vmul.f32 %v5841, %v6609
        %v6866 = vmul.f32 %v5842, %v6610
        %v6867 = vmul.f32 %v5843, %v6611
        %v6868 = vmul.f32 %v5844, %v6612
        %v6869 = vmul.f32 %v5845, %v6613
        %v6870 = vmul.f32 %v5846, %v6614
        %v6871 = vmul.f32 %v5847, %v6615
        %v6872 = vmul.f32 %v5848, %v6616
        %v6873 = vmul.f32 %v5849, %v6617
        %v6874 = vmul.f32 %v5850, %v6618
        %v6875 = vmul.f32 %v5851, %v6619
        %v6876 = vmul.f32 %v5852, %v6620
        %v6877 = vmul.f32 %v5853, %v6621
        %v6878 = vmul.f32 %v5854, %v6622
        %v6879 = vmul.f32 %v5855, %v6623
        %v6880 = vmul.f32 %v5856, %v6624
        %v6881 = vmul.f32 %v5857, %v6625
        %v6882 = vmul.f32 %v5858, %v6626
        %v6883 = vmul.f32 %v5859, %v6627
        %v6884 = vmul.f32 %v5860, %v6628
        %v6885 = vmul.f32 %v5861, %v6629
        %v6886 = vmul.f32 %v5862, %v6630
        %v6887 = vmul.f32 %v5863, %v6631
        %v6888 = vmul.f32 %v5864, %v6632
        %v6889 = vmul.f32 %v5865, %v6633
        %v6890 = vmul.f32 %v5866, %v6634
        %v6891 = vmul.f32 %v5867, %v6635
        %v6892 = vmul.f32 %v5868, %v6636
        %v6893 = vmul.f32 %v5869, %v6637
        %v6894 = vmul.f32 %v5870, %v6638
        %v6895 = vmul.f32 %v5871, %v6639
        %v6896 = vmul.f32 %v5872, %v6640
        %v6897 = vmul.f32 %v5873, %v6641
        %v6898 = vmul.f32 %v5874, %v6642
        %v6899 = vmul.f32 %v5875, %v6643
        %v6900 = vmul.f32 %v5876, %v6644
        %v6901 = vmul.f32 %v5877, %v6645
        %v6902 = vmul.f32 %v5878, %v6646
        %v6903 = vmul.f32 %v5879, %v6647
        %v6904 = vmul.f32 %v5880, %v6648
        %v6905 = vmul.f32 %v5881, %v6649
        %v6906 = vmul.f32 %v5882, %v6650
        %v6907 = vmul.f32 %v5883, %v6651
        %v6908 = vmul.f32 %v5884, %v6652
        %v6909 = vmul.f32 %v5885, %v6653
        %v6910 = vmul.f32 %v5886, %v6654
        %v6911 = vmul.f32 %v5887, %v6655
        %v6912 = vmul.f32 %v5888, %v6656
        %v6913 = vmul.f32 %v5889, %v6657
        %v6914 = vmul.f32 %v5890, %v6658
        %v6915 = vmul.f32 %v5891, %v6659
        %v6916 = vmul.f32 %v5892, %v6660
        %v6917 = vmul.f32 %v5893, %v6661
        %v6918 = vmul.f32 %v5894, %v6662
        %v6919 = vmul.f32 %v5895, %v6663
        %v6920 = vmul.f32 %v5896, %v6664
        %v6921 = vmul.f32 %v5897, %v6665
        %v6922 = vmul.f32 %v5898, %v6666
        %v6923 = vmul.f32 %v5899, %v6667
        %v6924 = vmul.f32 %v5900, %v6668
        %v6925 = vmul.f32 %v5901, %v6669
        %v6926 = vmul.f32 %v5902, %v6670
        %v6927 = vmul.f32 %v5903, %v6671
        %v6928 = vmul.f32 %v5904, %v6672
        %v6929 = vmul.f32 %v5905, %v6673
        %v6930 = vmul.f32 %v5906, %v6674
        %v6931 = vmul.f32 %v5907, %v6675
        %v6932 = vmul.f32 %v5908, %v6676
        %v6933 = vmul.f32 %v5909, %v6677
        %v6934 = vmul.f32 %v5910, %v6678
        %v6935 = vmul.f32 %v5911, %v6679
        %v6936 = vmul.f32 %v5912, %v6680
        %v6937 = vmul.f32 %v5913, %v6681
        %v6938 = vmul.f32 %v5914, %v6682
        %v6939 = vmul.f32 %v5915, %v6683
        %v6940 = vmul.f32 %v5916, %v6684
        %v6941 = vmul.f32 %v5917, %v6685
        %v6942 = vmul.f32 %v5918, %v6686
        %v6943 = vmul.f32 %v5919, %v6687
        %v6944 = vmul.f32 %v5920, %v6688
        %v6945 = vmul.f32 %v5921, %v6689
        %v6946 = vmul.f32 %v5922, %v6690
        %v6947 = vmul.f32 %v5923, %v6691
        %v6948 = vmul.f32 %v5924, %v6692
        %v6949 = vmul.f32 %v5925, %v6693
        %v6950 = vmul.f32 %v5926, %v6694
        %v6951 = vmul.f32 %v5927, %v6695
        %v6952 = vmul.f32 %v5928, %v6696
        %v6953 = vmul.f32 %v5929, %v6697
        %v6954 = vmul.f32 %v5930, %v6698
        %v6955 = vmul.f32 %v5931, %v6699
        %v6956 = vmul.f32 %v5932, %v6700
        %v6957 = vmul.f32 %v5933, %v6701
        %v6958 = vmul.f32 %v5934, %v6702
        %v6959 = vmul.f32 %v5935, %v6703
        %v6960 = vmul.f32 %v5936, %v6704
        %v6961 = vmul.f32 %v5937, %v6705
        %v6962 = vmul.f32 %v5938, %v6706
        %v6963 = vmul.f32 %v5939, %v6707
        %v6964 = vmul.f32 %v5940, %v6708
        %v6965 = vmul.f32 %v5941, %v6709
        %v6966 = vmul.f32 %v5942, %v6710
        %v6967 = vmul.f32 %v5943, %v6711
        %v6968 = vmul.f32 %v5944, %v6712
        %v6969 = vmul.f32 %v5945, %v6713
        %v6970 = vmul.f32 %v5946, %v6714
        %v6971 = vmul.f32 %v5947, %v6715
        %v6972 = vmul.f32 %v5948, %v6716
        %v6973 = vmul.f32 %v5949, %v6717
        %v6974 = vmul.f32 %v5950, %v6718
        %v6975 = vmul.f32 %v5951, %v6719
        %v6976 = vmul.f32 %v5952, %v6720
        %v6977 = vmul.f32 %v5953, %v6721
        %v6978 = vmul.f32 %v5954, %v6722
        %v6979 = vmul.f32 %v5955, %v6723
        %v6980 = vmul.f32 %v5956, %v6724
        %v6981 = vmul.f32 %v5957, %v6725
        %v6982 = vmul.f32 %v5958, %v6726
        %v6983 = vmul.f32 %v5959, %v6727
        %v6984 = vmul.f32 %v5960, %v6728
        %v6985 = vmul.f32 %v5961, %v6729
        %v6986 = vmul.f32 %v5962, %v6730
        %v6987 = vmul.f32 %v5963, %v6731
        %v6988 = vmul.f32 %v5964, %v6732
        %v6989 = vmul.f32 %v5965, %v6733
        %v6990 = vmul.f32 %v5966, %v6734
        %v6991 = vmul.f32 %v5967, %v6735
        %v6992 = vmul.f32 %v5968, %v6736
        %v6993 = vmul.f32 %v5969, %v6737
        %v6994 = vmul.f32 %v5970, %v6738
        %v6995 = vmul.f32 %v5971, %v6739
        %v6996 = vmul.f32 %v5972, %v6740
        %v6997 = vmul.f32 %v5973, %v6741
        %v6998 = vmul.f32 %v5974, %v6742
        %v6999 = vmul.f32 %v5975, %v6743
        %v7000 = vmul.f32 %v5976, %v6744
        %v7001 = vmul.f32 %v5977, %v6745
        %v7002 = vmul.f32 %v5978, %v6746
        %v7003 = vmul.f32 %v5979, %v6747
        %v7004 = vmul.f32 %v5980, %v6748
        %v7005 = vmul.f32 %v5981, %v6749
        %v7006 = vmul.f32 %v5982, %v6750
        %v7007 = vmul.f32 %v5983, %v6751
        %v7008 = vmul.f32 %v5984, %v6752
        %v7009 = vmul.f32 %v5985, %v6753
        %v7010 = vmul.f32 %v5986, %v6754
        %v7011 = vmul.f32 %v5987, %v6755
        %v7012 = vmul.f32 %v5988, %v6756
        %v7013 = vmul.f32 %v5989, %v6757
        %v7014 = vmul.f32 %v5990, %v6758
        %v7015 = vmul.f32 %v5991, %v6759
        %v7016 = vmul.f32 %v5992, %v6760
        %v7017 = vmul.f32 %v5993, %v6761
        %v7018 = vmul.f32 %v5994, %v6762
        %v7019 = vmul.f32 %v5995, %v6763
        %v7020 = vmul.f32 %v5996, %v6764
        %v7021 = vmul.f32 %v5997, %v6765
        %v7022 = vmul.f32 %v5998, %v6766
        %v7023 = vmul.f32 %v5999, %v6767
        %v7024 = vmul.f32 %v6000, %v6768
        %v7025 = vmul.f32 %v6001, %v6769
        %v7026 = vmul.f32 %v6002, %v6770
        %v7027 = vmul.f32 %v6003, %v6771
        %v7028 = vmul.f32 %v6004, %v6772
        %v7029 = vmul.f32 %v6005, %v6773
        %v7030 = vmul.f32 %v6006, %v6774
        %v7031 = vmul.f32 %v6007, %v6775
        %v7032 = vmul.f32 %v6008, %v6776
        %v7033 = vmul.f32 %v6009, %v6777
        %v7034 = vmul.f32 %v6010, %v6778
        %v7035 = vmul.f32 %v6011, %v6779
        %v7036 = vmul.f32 %v6012, %v6780
        %v7037 = vmul.f32 %v6013, %v6781
        %v7038 = vmul.f32 %v6014, %v6782
        %v7039 = vmul.f32 %v6015, %v6783
        %v7040 = vmul.f32 %v6016, %v6784
        %v7041 = vmul.f32 %v6017, %v6785
        %v7042 = vmul.f32 %v6018, %v6786
        %v7043 = vld [vmem:[#allocation3] sm:$0xff]
        %v7044 = vld [vmem:[#allocation3 + $0x8] sm:$0xff]
        %v7045 = vld [vmem:[#allocation3 + $0x10] sm:$0xff]
        %v7046 = vld [vmem:[#allocation3 + $0x18] sm:$0xff]
        %v7047 = vld [vmem:[#allocation3 + $0x20] sm:$0xff]
        %v7048 = vld [vmem:[#allocation3 + $0x28] sm:$0xff]
        %v7049 = vld [vmem:[#allocation3 + $0x30] sm:$0xff]
        %v7050 = vld [vmem:[#allocation3 + $0x38] sm:$0xff]
        %v7051 = vld [vmem:[#allocation3 + $0x40] sm:$0xff]
        %v7052 = vld [vmem:[#allocation3 + $0x48] sm:$0xff]
        %v7053 = vld [vmem:[#allocation3 + $0x50] sm:$0xff]
        %v7054 = vld [vmem:[#allocation3 + $0x58] sm:$0xff]
        %v7055 = vld [vmem:[#allocation3 + $0x60] sm:$0xff]
        %v7056 = vld [vmem:[#allocation3 + $0x68] sm:$0xff]
        %v7057 = vld [vmem:[#allocation3 + $0x70] sm:$0xff]
        %v7058 = vld [vmem:[#allocation3 + $0x78] sm:$0xff]
        %v7059 = vld [vmem:[#allocation3 + $0x80] sm:$0xff]
        %v7060 = vld [vmem:[#allocation3 + $0x88] sm:$0xff]
        %v7061 = vld [vmem:[#allocation3 + $0x90] sm:$0xff]
        %v7062 = vld [vmem:[#allocation3 + $0x98] sm:$0xff]
        %v7063 = vld [vmem:[#allocation3 + $0xa0] sm:$0xff]
        %v7064 = vld [vmem:[#allocation3 + $0xa8] sm:$0xff]
        %v7065 = vld [vmem:[#allocation3 + $0xb0] sm:$0xff]
        %v7066 = vld [vmem:[#allocation3 + $0xb8] sm:$0xff]
        %v7067 = vld [vmem:[#allocation3 + $0xc0] sm:$0xff]
        %v7068 = vld [vmem:[#allocation3 + $0xc8] sm:$0xff]
        %v7069 = vld [vmem:[#allocation3 + $0xd0] sm:$0xff]
        %v7070 = vld [vmem:[#allocation3 + $0xd8] sm:$0xff]
        %v7071 = vld [vmem:[#allocation3 + $0xe0] sm:$0xff]
        %v7072 = vld [vmem:[#allocation3 + $0xe8] sm:$0xff]
        %v7073 = vld [vmem:[#allocation3 + $0xf0] sm:$0xff]
        %v7074 = vld [vmem:[#allocation3 + $0xf8] sm:$0xff]
        %v7075 = vld [vmem:[#allocation3 + $0x100] sm:$0xff]
        %v7076 = vld [vmem:[#allocation3 + $0x108] sm:$0xff]
        %v7077 = vld [vmem:[#allocation3 + $0x110] sm:$0xff]
        %v7078 = vld [vmem:[#allocation3 + $0x118] sm:$0xff]
        %v7079 = vld [vmem:[#allocation3 + $0x120] sm:$0xff]
        %v7080 = vld [vmem:[#allocation3 + $0x128] sm:$0xff]
        %v7081 = vld [vmem:[#allocation3 + $0x130] sm:$0xff]
        %v7082 = vld [vmem:[#allocation3 + $0x138] sm:$0xff]
        %v7083 = vld [vmem:[#allocation3 + $0x140] sm:$0xff]
        %v7084 = vld [vmem:[#allocation3 + $0x148] sm:$0xff]
        %v7085 = vld [vmem:[#allocation3 + $0x150] sm:$0xff]
        %v7086 = vld [vmem:[#allocation3 + $0x158] sm:$0xff]
        %v7087 = vld [vmem:[#allocation3 + $0x160] sm:$0xff]
        %v7088 = vld [vmem:[#allocation3 + $0x168] sm:$0xff]
        %v7089 = vld [vmem:[#allocation3 + $0x170] sm:$0xff]
        %v7090 = vld [vmem:[#allocation3 + $0x178] sm:$0xff]
        %v7091 = vld [vmem:[#allocation3 + $0x180] sm:$0xff]
        %v7092 = vld [vmem:[#allocation3 + $0x188] sm:$0xff]
        %v7093 = vld [vmem:[#allocation3 + $0x190] sm:$0xff]
        %v7094 = vld [vmem:[#allocation3 + $0x198] sm:$0xff]
        %v7095 = vld [vmem:[#allocation3 + $0x1a0] sm:$0xff]
        %v7096 = vld [vmem:[#allocation3 + $0x1a8] sm:$0xff]
        %v7097 = vld [vmem:[#allocation3 + $0x1b0] sm:$0xff]
        %v7098 = vld [vmem:[#allocation3 + $0x1b8] sm:$0xff]
        %v7099 = vld [vmem:[#allocation3 + $0x1c0] sm:$0xff]
        %v7100 = vld [vmem:[#allocation3 + $0x1c8] sm:$0xff]
        %v7101 = vld [vmem:[#allocation3 + $0x1d0] sm:$0xff]
        %v7102 = vld [vmem:[#allocation3 + $0x1d8] sm:$0xff]
        %v7103 = vld [vmem:[#allocation3 + $0x1e0] sm:$0xff]
        %v7104 = vld [vmem:[#allocation3 + $0x1e8] sm:$0xff]
        %v7105 = vld [vmem:[#allocation3 + $0x1f0] sm:$0xff]
        %v7106 = vld [vmem:[#allocation3 + $0x1f8] sm:$0xff]
        %v7107 = vld [vmem:[#allocation3 + $0x200] sm:$0xff]
        %v7108 = vld [vmem:[#allocation3 + $0x208] sm:$0xff]
        %v7109 = vld [vmem:[#allocation3 + $0x210] sm:$0xff]
        %v7110 = vld [vmem:[#allocation3 + $0x218] sm:$0xff]
        %v7111 = vld [vmem:[#allocation3 + $0x220] sm:$0xff]
        %v7112 = vld [vmem:[#allocation3 + $0x228] sm:$0xff]
        %v7113 = vld [vmem:[#allocation3 + $0x230] sm:$0xff]
        %v7114 = vld [vmem:[#allocation3 + $0x238] sm:$0xff]
        %v7115 = vld [vmem:[#allocation3 + $0x240] sm:$0xff]
        %v7116 = vld [vmem:[#allocation3 + $0x248] sm:$0xff]
        %v7117 = vld [vmem:[#allocation3 + $0x250] sm:$0xff]
        %v7118 = vld [vmem:[#allocation3 + $0x258] sm:$0xff]
        %v7119 = vld [vmem:[#allocation3 + $0x260] sm:$0xff]
        %v7120 = vld [vmem:[#allocation3 + $0x268] sm:$0xff]
        %v7121 = vld [vmem:[#allocation3 + $0x270] sm:$0xff]
        %v7122 = vld [vmem:[#allocation3 + $0x278] sm:$0xff]
        %v7123 = vld [vmem:[#allocation3 + $0x280] sm:$0xff]
        %v7124 = vld [vmem:[#allocation3 + $0x288] sm:$0xff]
        %v7125 = vld [vmem:[#allocation3 + $0x290] sm:$0xff]
        %v7126 = vld [vmem:[#allocation3 + $0x298] sm:$0xff]
        %v7127 = vld [vmem:[#allocation3 + $0x2a0] sm:$0xff]
        %v7128 = vld [vmem:[#allocation3 + $0x2a8] sm:$0xff]
        %v7129 = vld [vmem:[#allocation3 + $0x2b0] sm:$0xff]
        %v7130 = vld [vmem:[#allocation3 + $0x2b8] sm:$0xff]
        %v7131 = vld [vmem:[#allocation3 + $0x2c0] sm:$0xff]
        %v7132 = vld [vmem:[#allocation3 + $0x2c8] sm:$0xff]
        %v7133 = vld [vmem:[#allocation3 + $0x2d0] sm:$0xff]
        %v7134 = vld [vmem:[#allocation3 + $0x2d8] sm:$0xff]
        %v7135 = vld [vmem:[#allocation3 + $0x2e0] sm:$0xff]
        %v7136 = vld [vmem:[#allocation3 + $0x2e8] sm:$0xff]
        %v7137 = vld [vmem:[#allocation3 + $0x2f0] sm:$0xff]
        %v7138 = vld [vmem:[#allocation3 + $0x2f8] sm:$0xff]
        %v7139 = vld [vmem:[#allocation3 + $0x300] sm:$0xff]
        %v7140 = vld [vmem:[#allocation3 + $0x308] sm:$0xff]
        %v7141 = vld [vmem:[#allocation3 + $0x310] sm:$0xff]
        %v7142 = vld [vmem:[#allocation3 + $0x318] sm:$0xff]
        %v7143 = vld [vmem:[#allocation3 + $0x320] sm:$0xff]
        %v7144 = vld [vmem:[#allocation3 + $0x328] sm:$0xff]
        %v7145 = vld [vmem:[#allocation3 + $0x330] sm:$0xff]
        %v7146 = vld [vmem:[#allocation3 + $0x338] sm:$0xff]
        %v7147 = vld [vmem:[#allocation3 + $0x340] sm:$0xff]
        %v7148 = vld [vmem:[#allocation3 + $0x348] sm:$0xff]
        %v7149 = vld [vmem:[#allocation3 + $0x350] sm:$0xff]
        %v7150 = vld [vmem:[#allocation3 + $0x358] sm:$0xff]
        %v7151 = vld [vmem:[#allocation3 + $0x360] sm:$0xff]
        %v7152 = vld [vmem:[#allocation3 + $0x368] sm:$0xff]
        %v7153 = vld [vmem:[#allocation3 + $0x370] sm:$0xff]
        %v7154 = vld [vmem:[#allocation3 + $0x378] sm:$0xff]
        %v7155 = vld [vmem:[#allocation3 + $0x380] sm:$0xff]
        %v7156 = vld [vmem:[#allocation3 + $0x388] sm:$0xff]
        %v7157 = vld [vmem:[#allocation3 + $0x390] sm:$0xff]
        %v7158 = vld [vmem:[#allocation3 + $0x398] sm:$0xff]
        %v7159 = vld [vmem:[#allocation3 + $0x3a0] sm:$0xff]
        %v7160 = vld [vmem:[#allocation3 + $0x3a8] sm:$0xff]
        %v7161 = vld [vmem:[#allocation3 + $0x3b0] sm:$0xff]
        %v7162 = vld [vmem:[#allocation3 + $0x3b8] sm:$0xff]
        %v7163 = vld [vmem:[#allocation3 + $0x3c0] sm:$0xff]
        %v7164 = vld [vmem:[#allocation3 + $0x3c8] sm:$0xff]
        %v7165 = vld [vmem:[#allocation3 + $0x3d0] sm:$0xff]
        %v7166 = vld [vmem:[#allocation3 + $0x3d8] sm:$0xff]
        %v7167 = vld [vmem:[#allocation3 + $0x3e0] sm:$0xff]
        %v7168 = vld [vmem:[#allocation3 + $0x3e8] sm:$0xff]
        %v7169 = vld [vmem:[#allocation3 + $0x3f0] sm:$0xff]
        %v7170 = vld [vmem:[#allocation3 + $0x3f8] sm:$0xff]
        %v7171 = vpack.c.bf16 %v6795, %v6787
        %v7172 = vpack.c.bf16 %v6796, %v6788
        %v7173 = vpack.c.bf16 %v6797, %v6789
        %v7174 = vpack.c.bf16 %v6798, %v6790
        %v7175 = vpack.c.bf16 %v6799, %v6791
        %v7176 = vpack.c.bf16 %v6800, %v6792
        %v7177 = vpack.c.bf16 %v6801, %v6793
        %v7178 = vpack.c.bf16 %v6802, %v6794
        %v7179 = vpack.c.bf16 %v6811, %v6803
        %v7180 = vpack.c.bf16 %v6812, %v6804
        %v7181 = vpack.c.bf16 %v6813, %v6805
        %v7182 = vpack.c.bf16 %v6814, %v6806
        %v7183 = vpack.c.bf16 %v6815, %v6807
        %v7184 = vpack.c.bf16 %v6816, %v6808
        %v7185 = vpack.c.bf16 %v6817, %v6809
        %v7186 = vpack.c.bf16 %v6818, %v6810
        %v7187 = vpack.c.bf16 %v6827, %v6819
        %v7188 = vpack.c.bf16 %v6828, %v6820
        %v7189 = vpack.c.bf16 %v6829, %v6821
        %v7190 = vpack.c.bf16 %v6830, %v6822
        %v7191 = vpack.c.bf16 %v6831, %v6823
        %v7192 = vpack.c.bf16 %v6832, %v6824
        %v7193 = vpack.c.bf16 %v6833, %v6825
        %v7194 = vpack.c.bf16 %v6834, %v6826
        %v7195 = vpack.c.bf16 %v6843, %v6835
        %v7196 = vpack.c.bf16 %v6844, %v6836
        %v7197 = vpack.c.bf16 %v6845, %v6837
        %v7198 = vpack.c.bf16 %v6846, %v6838
        %v7199 = vpack.c.bf16 %v6847, %v6839
        %v7200 = vpack.c.bf16 %v6848, %v6840
        %v7201 = vpack.c.bf16 %v6849, %v6841
        %v7202 = vpack.c.bf16 %v6850, %v6842
        %v7203 = vpack.c.bf16 %v6859, %v6851
        %v7204 = vpack.c.bf16 %v6860, %v6852
        %v7205 = vpack.c.bf16 %v6861, %v6853
        %v7206 = vpack.c.bf16 %v6862, %v6854
        %v7207 = vpack.c.bf16 %v6863, %v6855
        %v7208 = vpack.c.bf16 %v6864, %v6856
        %v7209 = vpack.c.bf16 %v6865, %v6857
        %v7210 = vpack.c.bf16 %v6866, %v6858
        %v7211 = vpack.c.bf16 %v6875, %v6867
        %v7212 = vpack.c.bf16 %v6876, %v6868
        %v7213 = vpack.c.bf16 %v6877, %v6869
        %v7214 = vpack.c.bf16 %v6878, %v6870
        %v7215 = vpack.c.bf16 %v6879, %v6871
        %v7216 = vpack.c.bf16 %v6880, %v6872
        %v7217 = vpack.c.bf16 %v6881, %v6873
        %v7218 = vpack.c.bf16 %v6882, %v6874
        %v7219 = vpack.c.bf16 %v6891, %v6883
        %v7220 = vpack.c.bf16 %v6892, %v6884
        %v7221 = vpack.c.bf16 %v6893, %v6885
        %v7222 = vpack.c.bf16 %v6894, %v6886
        %v7223 = vpack.c.bf16 %v6895, %v6887
        %v7224 = vpack.c.bf16 %v6896, %v6888
        %v7225 = vpack.c.bf16 %v6897, %v6889
        %v7226 = vpack.c.bf16 %v6898, %v6890
        %v7227 = vpack.c.bf16 %v6907, %v6899
        %v7228 = vpack.c.bf16 %v6908, %v6900
        %v7229 = vpack.c.bf16 %v6909, %v6901
        %v7230 = vpack.c.bf16 %v6910, %v6902
        %v7231 = vpack.c.bf16 %v6911, %v6903
        %v7232 = vpack.c.bf16 %v6912, %v6904
        %v7233 = vpack.c.bf16 %v6913, %v6905
        %v7234 = vpack.c.bf16 %v6914, %v6906
        %v7235 = vpack.c.bf16 %v6923, %v6915
        %v7236 = vpack.c.bf16 %v6924, %v6916
        %v7237 = vpack.c.bf16 %v6925, %v6917
        %v7238 = vpack.c.bf16 %v6926, %v6918
        %v7239 = vpack.c.bf16 %v6927, %v6919
        %v7240 = vpack.c.bf16 %v6928, %v6920
        %v7241 = vpack.c.bf16 %v6929, %v6921
        %v7242 = vpack.c.bf16 %v6930, %v6922
        %v7243 = vpack.c.bf16 %v6939, %v6931
        %v7244 = vpack.c.bf16 %v6940, %v6932
        %v7245 = vpack.c.bf16 %v6941, %v6933
        %v7246 = vpack.c.bf16 %v6942, %v6934
        %v7247 = vpack.c.bf16 %v6943, %v6935
        %v7248 = vpack.c.bf16 %v6944, %v6936
        %v7249 = vpack.c.bf16 %v6945, %v6937
        %v7250 = vpack.c.bf16 %v6946, %v6938
        %v7251 = vpack.c.bf16 %v6955, %v6947
        %v7252 = vpack.c.bf16 %v6956, %v6948
        %v7253 = vpack.c.bf16 %v6957, %v6949
        %v7254 = vpack.c.bf16 %v6958, %v6950
        %v7255 = vpack.c.bf16 %v6959, %v6951
        %v7256 = vpack.c.bf16 %v6960, %v6952
        %v7257 = vpack.c.bf16 %v6961, %v6953
        %v7258 = vpack.c.bf16 %v6962, %v6954
        %v7259 = vpack.c.bf16 %v6971, %v6963
        %v7260 = vpack.c.bf16 %v6972, %v6964
        %v7261 = vpack.c.bf16 %v6973, %v6965
        %v7262 = vpack.c.bf16 %v6974, %v6966
        %v7263 = vpack.c.bf16 %v6975, %v6967
        %v7264 = vpack.c.bf16 %v6976, %v6968
        %v7265 = vpack.c.bf16 %v6977, %v6969
        %v7266 = vpack.c.bf16 %v6978, %v6970
        %v7267 = vpack.c.bf16 %v6987, %v6979
        %v7268 = vpack.c.bf16 %v6988, %v6980
        %v7269 = vpack.c.bf16 %v6989, %v6981
        %v7270 = vpack.c.bf16 %v6990, %v6982
        %v7271 = vpack.c.bf16 %v6991, %v6983
        %v7272 = vpack.c.bf16 %v6992, %v6984
        %v7273 = vpack.c.bf16 %v6993, %v6985
        %v7274 = vpack.c.bf16 %v6994, %v6986
        %v7275 = vpack.c.bf16 %v7003, %v6995
        %v7276 = vpack.c.bf16 %v7004, %v6996
        %v7277 = vpack.c.bf16 %v7005, %v6997
        %v7278 = vpack.c.bf16 %v7006, %v6998
        %v7279 = vpack.c.bf16 %v7007, %v6999
        %v7280 = vpack.c.bf16 %v7008, %v7000
        %v7281 = vpack.c.bf16 %v7009, %v7001
        %v7282 = vpack.c.bf16 %v7010, %v7002
        %v7283 = vpack.c.bf16 %v7019, %v7011
        %v7284 = vpack.c.bf16 %v7020, %v7012
        %v7285 = vpack.c.bf16 %v7021, %v7013
        %v7286 = vpack.c.bf16 %v7022, %v7014
        %v7287 = vpack.c.bf16 %v7023, %v7015
        %v7288 = vpack.c.bf16 %v7024, %v7016
        %v7289 = vpack.c.bf16 %v7025, %v7017
        %v7290 = vpack.c.bf16 %v7026, %v7018
        %v7291 = vpack.c.bf16 %v7035, %v7027
        %v7292 = vpack.c.bf16 %v7036, %v7028
        %v7293 = vpack.c.bf16 %v7037, %v7029
        %v7294 = vpack.c.bf16 %v7038, %v7030
        %v7295 = vpack.c.bf16 %v7039, %v7031
        %v7296 = vpack.c.bf16 %v7040, %v7032
        %v7297 = vpack.c.bf16 %v7041, %v7033
        %v7298 = vpack.c.bf16 %v7042, %v7034
        %v7299 = vld [vmem:[%s373] sm:$0xff]
        %v7300 = vld [vmem:[%s373 + $0x8] sm:$0xff]
        %v7301 = vld [vmem:[%s373 + $0x10] sm:$0xff]
        %v7302 = vld [vmem:[%s373 + $0x18] sm:$0xff]
        %v7303 = vld [vmem:[%s373 + $0x20] sm:$0xff]
        %v7304 = vld [vmem:[%s373 + $0x28] sm:$0xff]
        %v7305 = vld [vmem:[%s373 + $0x30] sm:$0xff]
        %v7306 = vld [vmem:[%s373 + $0x38] sm:$0xff]
        %v7307 = vld [vmem:[%s373 + $0x40] sm:$0xff]
        %v7308 = vld [vmem:[%s373 + $0x48] sm:$0xff]
        %v7309 = vld [vmem:[%s373 + $0x50] sm:$0xff]
        %v7310 = vld [vmem:[%s373 + $0x58] sm:$0xff]
        %v7311 = vld [vmem:[%s373 + $0x60] sm:$0xff]
        %v7312 = vld [vmem:[%s373 + $0x68] sm:$0xff]
        %v7313 = vld [vmem:[%s373 + $0x70] sm:$0xff]
        %v7314 = vld [vmem:[%s373 + $0x78] sm:$0xff]
        %v7315 = vld [vmem:[%s373 + $0x80] sm:$0xff]
        %v7316 = vld [vmem:[%s373 + $0x88] sm:$0xff]
        %v7317 = vld [vmem:[%s373 + $0x90] sm:$0xff]
        %v7318 = vld [vmem:[%s373 + $0x98] sm:$0xff]
        %v7319 = vld [vmem:[%s373 + $0xa0] sm:$0xff]
        %v7320 = vld [vmem:[%s373 + $0xa8] sm:$0xff]
        %v7321 = vld [vmem:[%s373 + $0xb0] sm:$0xff]
        %v7322 = vld [vmem:[%s373 + $0xb8] sm:$0xff]
        %v7323 = vld [vmem:[%s373 + $0xc0] sm:$0xff]
        %v7324 = vld [vmem:[%s373 + $0xc8] sm:$0xff]
        %v7325 = vld [vmem:[%s373 + $0xd0] sm:$0xff]
        %v7326 = vld [vmem:[%s373 + $0xd8] sm:$0xff]
        %v7327 = vld [vmem:[%s373 + $0xe0] sm:$0xff]
        %v7328 = vld [vmem:[%s373 + $0xe8] sm:$0xff]
        %v7329 = vld [vmem:[%s373 + $0xf0] sm:$0xff]
        %v7330 = vld [vmem:[%s373 + $0xf8] sm:$0xff]
        %v7331 = vld [vmem:[%s373 + $0x100] sm:$0xff]
        %v7332 = vld [vmem:[%s373 + $0x108] sm:$0xff]
        %v7333 = vld [vmem:[%s373 + $0x110] sm:$0xff]
        %v7334 = vld [vmem:[%s373 + $0x118] sm:$0xff]
        %v7335 = vld [vmem:[%s373 + $0x120] sm:$0xff]
        %v7336 = vld [vmem:[%s373 + $0x128] sm:$0xff]
        %v7337 = vld [vmem:[%s373 + $0x130] sm:$0xff]
        %v7338 = vld [vmem:[%s373 + $0x138] sm:$0xff]
        %v7339 = vld [vmem:[%s373 + $0x140] sm:$0xff]
        %v7340 = vld [vmem:[%s373 + $0x148] sm:$0xff]
        %v7341 = vld [vmem:[%s373 + $0x150] sm:$0xff]
        %v7342 = vld [vmem:[%s373 + $0x158] sm:$0xff]
        %v7343 = vld [vmem:[%s373 + $0x160] sm:$0xff]
        %v7344 = vld [vmem:[%s373 + $0x168] sm:$0xff]
        %v7345 = vld [vmem:[%s373 + $0x170] sm:$0xff]
        %v7346 = vld [vmem:[%s373 + $0x178] sm:$0xff]
        %v7347 = vld [vmem:[%s373 + $0x180] sm:$0xff]
        %v7348 = vld [vmem:[%s373 + $0x188] sm:$0xff]
        %v7349 = vld [vmem:[%s373 + $0x190] sm:$0xff]
        %v7350 = vld [vmem:[%s373 + $0x198] sm:$0xff]
        %v7351 = vld [vmem:[%s373 + $0x1a0] sm:$0xff]
        %v7352 = vld [vmem:[%s373 + $0x1a8] sm:$0xff]
        %v7353 = vld [vmem:[%s373 + $0x1b0] sm:$0xff]
        %v7354 = vld [vmem:[%s373 + $0x1b8] sm:$0xff]
        %v7355 = vld [vmem:[%s373 + $0x1c0] sm:$0xff]
        %v7356 = vld [vmem:[%s373 + $0x1c8] sm:$0xff]
        %v7357 = vld [vmem:[%s373 + $0x1d0] sm:$0xff]
        %v7358 = vld [vmem:[%s373 + $0x1d8] sm:$0xff]
        %v7359 = vld [vmem:[%s373 + $0x1e0] sm:$0xff]
        %v7360 = vld [vmem:[%s373 + $0x1e8] sm:$0xff]
        %v7361 = vld [vmem:[%s373 + $0x1f0] sm:$0xff]
        %v7362 = vld [vmem:[%s373 + $0x1f8] sm:$0xff]
        %v7363 = vld [vmem:[%s373 + $0x200] sm:$0xff]
        %v7364 = vld [vmem:[%s373 + $0x208] sm:$0xff]
        %v7365 = vld [vmem:[%s373 + $0x210] sm:$0xff]
        %v7366 = vld [vmem:[%s373 + $0x218] sm:$0xff]
        %v7367 = vld [vmem:[%s373 + $0x220] sm:$0xff]
        %v7368 = vld [vmem:[%s373 + $0x228] sm:$0xff]
        %v7369 = vld [vmem:[%s373 + $0x230] sm:$0xff]
        %v7370 = vld [vmem:[%s373 + $0x238] sm:$0xff]
        %v7371 = vld [vmem:[%s373 + $0x240] sm:$0xff]
        %v7372 = vld [vmem:[%s373 + $0x248] sm:$0xff]
        %v7373 = vld [vmem:[%s373 + $0x250] sm:$0xff]
        %v7374 = vld [vmem:[%s373 + $0x258] sm:$0xff]
        %v7375 = vld [vmem:[%s373 + $0x260] sm:$0xff]
        %v7376 = vld [vmem:[%s373 + $0x268] sm:$0xff]
        %v7377 = vld [vmem:[%s373 + $0x270] sm:$0xff]
        %v7378 = vld [vmem:[%s373 + $0x278] sm:$0xff]
        %v7379 = vld [vmem:[%s373 + $0x280] sm:$0xff]
        %v7380 = vld [vmem:[%s373 + $0x288] sm:$0xff]
        %v7381 = vld [vmem:[%s373 + $0x290] sm:$0xff]
        %v7382 = vld [vmem:[%s373 + $0x298] sm:$0xff]
        %v7383 = vld [vmem:[%s373 + $0x2a0] sm:$0xff]
        %v7384 = vld [vmem:[%s373 + $0x2a8] sm:$0xff]
        %v7385 = vld [vmem:[%s373 + $0x2b0] sm:$0xff]
        %v7386 = vld [vmem:[%s373 + $0x2b8] sm:$0xff]
        %v7387 = vld [vmem:[%s373 + $0x2c0] sm:$0xff]
        %v7388 = vld [vmem:[%s373 + $0x2c8] sm:$0xff]
        %v7389 = vld [vmem:[%s373 + $0x2d0] sm:$0xff]
        %v7390 = vld [vmem:[%s373 + $0x2d8] sm:$0xff]
        %v7391 = vld [vmem:[%s373 + $0x2e0] sm:$0xff]
        %v7392 = vld [vmem:[%s373 + $0x2e8] sm:$0xff]
        %v7393 = vld [vmem:[%s373 + $0x2f0] sm:$0xff]
        %v7394 = vld [vmem:[%s373 + $0x2f8] sm:$0xff]
        %v7395 = vld [vmem:[%s373 + $0x300] sm:$0xff]
        %v7396 = vld [vmem:[%s373 + $0x308] sm:$0xff]
        %v7397 = vld [vmem:[%s373 + $0x310] sm:$0xff]
        %v7398 = vld [vmem:[%s373 + $0x318] sm:$0xff]
        %v7399 = vld [vmem:[%s373 + $0x320] sm:$0xff]
        %v7400 = vld [vmem:[%s373 + $0x328] sm:$0xff]
        %v7401 = vld [vmem:[%s373 + $0x330] sm:$0xff]
        %v7402 = vld [vmem:[%s373 + $0x338] sm:$0xff]
        %v7403 = vld [vmem:[%s373 + $0x340] sm:$0xff]
        %v7404 = vld [vmem:[%s373 + $0x348] sm:$0xff]
        %v7405 = vld [vmem:[%s373 + $0x350] sm:$0xff]
        %v7406 = vld [vmem:[%s373 + $0x358] sm:$0xff]
        %v7407 = vld [vmem:[%s373 + $0x360] sm:$0xff]
        %v7408 = vld [vmem:[%s373 + $0x368] sm:$0xff]
        %v7409 = vld [vmem:[%s373 + $0x370] sm:$0xff]
        %v7410 = vld [vmem:[%s373 + $0x378] sm:$0xff]
        %v7411 = vld [vmem:[%s373 + $0x380] sm:$0xff]
        %v7412 = vld [vmem:[%s373 + $0x388] sm:$0xff]
        %v7413 = vld [vmem:[%s373 + $0x390] sm:$0xff]
        %v7414 = vld [vmem:[%s373 + $0x398] sm:$0xff]
        %v7415 = vld [vmem:[%s373 + $0x3a0] sm:$0xff]
        %v7416 = vld [vmem:[%s373 + $0x3a8] sm:$0xff]
        %v7417 = vld [vmem:[%s373 + $0x3b0] sm:$0xff]
        %v7418 = vld [vmem:[%s373 + $0x3b8] sm:$0xff]
        %v7419 = vld [vmem:[%s373 + $0x3c0] sm:$0xff]
        %v7420 = vld [vmem:[%s373 + $0x3c8] sm:$0xff]
        %v7421 = vld [vmem:[%s373 + $0x3d0] sm:$0xff]
        %v7422 = vld [vmem:[%s373 + $0x3d8] sm:$0xff]
        %v7423 = vld [vmem:[%s373 + $0x3e0] sm:$0xff]
        %v7424 = vld [vmem:[%s373 + $0x3e8] sm:$0xff]
        %v7425 = vld [vmem:[%s373 + $0x3f0] sm:$0xff]
        %v7426 = vld [vmem:[%s373 + $0x3f8] sm:$0xff]
        %v7427 = vld [vmem:[%s373 + $0x400] sm:$0xff]
        %v7428 = vld [vmem:[%s373 + $0x408] sm:$0xff]
        %v7429 = vld [vmem:[%s373 + $0x410] sm:$0xff]
        %v7430 = vld [vmem:[%s373 + $0x418] sm:$0xff]
        %v7431 = vld [vmem:[%s373 + $0x420] sm:$0xff]
        %v7432 = vld [vmem:[%s373 + $0x428] sm:$0xff]
        %v7433 = vld [vmem:[%s373 + $0x430] sm:$0xff]
        %v7434 = vld [vmem:[%s373 + $0x438] sm:$0xff]
        %v7435 = vld [vmem:[%s373 + $0x440] sm:$0xff]
        %v7436 = vld [vmem:[%s373 + $0x448] sm:$0xff]
        %v7437 = vld [vmem:[%s373 + $0x450] sm:$0xff]
        %v7438 = vld [vmem:[%s373 + $0x458] sm:$0xff]
        %v7439 = vld [vmem:[%s373 + $0x460] sm:$0xff]
        %v7440 = vld [vmem:[%s373 + $0x468] sm:$0xff]
        %v7441 = vld [vmem:[%s373 + $0x470] sm:$0xff]
        %v7442 = vld [vmem:[%s373 + $0x478] sm:$0xff]
        %v7443 = vld [vmem:[%s373 + $0x480] sm:$0xff]
        %v7444 = vld [vmem:[%s373 + $0x488] sm:$0xff]
        %v7445 = vld [vmem:[%s373 + $0x490] sm:$0xff]
        %v7446 = vld [vmem:[%s373 + $0x498] sm:$0xff]
        %v7447 = vld [vmem:[%s373 + $0x4a0] sm:$0xff]
        %v7448 = vld [vmem:[%s373 + $0x4a8] sm:$0xff]
        %v7449 = vld [vmem:[%s373 + $0x4b0] sm:$0xff]
        %v7450 = vld [vmem:[%s373 + $0x4b8] sm:$0xff]
        %v7451 = vld [vmem:[%s373 + $0x4c0] sm:$0xff]
        %v7452 = vld [vmem:[%s373 + $0x4c8] sm:$0xff]
        %v7453 = vld [vmem:[%s373 + $0x4d0] sm:$0xff]
        %v7454 = vld [vmem:[%s373 + $0x4d8] sm:$0xff]
        %v7455 = vld [vmem:[%s373 + $0x4e0] sm:$0xff]
        %v7456 = vld [vmem:[%s373 + $0x4e8] sm:$0xff]
        %v7457 = vld [vmem:[%s373 + $0x4f0] sm:$0xff]
        %v7458 = vld [vmem:[%s373 + $0x4f8] sm:$0xff]
        %v7459 = vld [vmem:[%s373 + $0x500] sm:$0xff]
        %v7460 = vld [vmem:[%s373 + $0x508] sm:$0xff]
        %v7461 = vld [vmem:[%s373 + $0x510] sm:$0xff]
        %v7462 = vld [vmem:[%s373 + $0x518] sm:$0xff]
        %v7463 = vld [vmem:[%s373 + $0x520] sm:$0xff]
        %v7464 = vld [vmem:[%s373 + $0x528] sm:$0xff]
        %v7465 = vld [vmem:[%s373 + $0x530] sm:$0xff]
        %v7466 = vld [vmem:[%s373 + $0x538] sm:$0xff]
        %v7467 = vld [vmem:[%s373 + $0x540] sm:$0xff]
        %v7468 = vld [vmem:[%s373 + $0x548] sm:$0xff]
        %v7469 = vld [vmem:[%s373 + $0x550] sm:$0xff]
        %v7470 = vld [vmem:[%s373 + $0x558] sm:$0xff]
        %v7471 = vld [vmem:[%s373 + $0x560] sm:$0xff]
        %v7472 = vld [vmem:[%s373 + $0x568] sm:$0xff]
        %v7473 = vld [vmem:[%s373 + $0x570] sm:$0xff]
        %v7474 = vld [vmem:[%s373 + $0x578] sm:$0xff]
        %v7475 = vld [vmem:[%s373 + $0x580] sm:$0xff]
        %v7476 = vld [vmem:[%s373 + $0x588] sm:$0xff]
        %v7477 = vld [vmem:[%s373 + $0x590] sm:$0xff]
        %v7478 = vld [vmem:[%s373 + $0x598] sm:$0xff]
        %v7479 = vld [vmem:[%s373 + $0x5a0] sm:$0xff]
        %v7480 = vld [vmem:[%s373 + $0x5a8] sm:$0xff]
        %v7481 = vld [vmem:[%s373 + $0x5b0] sm:$0xff]
        %v7482 = vld [vmem:[%s373 + $0x5b8] sm:$0xff]
        %v7483 = vld [vmem:[%s373 + $0x5c0] sm:$0xff]
        %v7484 = vld [vmem:[%s373 + $0x5c8] sm:$0xff]
        %v7485 = vld [vmem:[%s373 + $0x5d0] sm:$0xff]
        %v7486 = vld [vmem:[%s373 + $0x5d8] sm:$0xff]
        %v7487 = vld [vmem:[%s373 + $0x5e0] sm:$0xff]
        %v7488 = vld [vmem:[%s373 + $0x5e8] sm:$0xff]
        %v7489 = vld [vmem:[%s373 + $0x5f0] sm:$0xff]
        %v7490 = vld [vmem:[%s373 + $0x5f8] sm:$0xff]
        %v7491 = vld [vmem:[%s373 + $0x600] sm:$0xff]
        %v7492 = vld [vmem:[%s373 + $0x608] sm:$0xff]
        %v7493 = vld [vmem:[%s373 + $0x610] sm:$0xff]
        %v7494 = vld [vmem:[%s373 + $0x618] sm:$0xff]
        %v7495 = vld [vmem:[%s373 + $0x620] sm:$0xff]
        %v7496 = vld [vmem:[%s373 + $0x628] sm:$0xff]
        %v7497 = vld [vmem:[%s373 + $0x630] sm:$0xff]
        %v7498 = vld [vmem:[%s373 + $0x638] sm:$0xff]
        %v7499 = vld [vmem:[%s373 + $0x640] sm:$0xff]
        %v7500 = vld [vmem:[%s373 + $0x648] sm:$0xff]
        %v7501 = vld [vmem:[%s373 + $0x650] sm:$0xff]
        %v7502 = vld [vmem:[%s373 + $0x658] sm:$0xff]
        %v7503 = vld [vmem:[%s373 + $0x660] sm:$0xff]
        %v7504 = vld [vmem:[%s373 + $0x668] sm:$0xff]
        %v7505 = vld [vmem:[%s373 + $0x670] sm:$0xff]
        %v7506 = vld [vmem:[%s373 + $0x678] sm:$0xff]
        %v7507 = vld [vmem:[%s373 + $0x680] sm:$0xff]
        %v7508 = vld [vmem:[%s373 + $0x688] sm:$0xff]
        %v7509 = vld [vmem:[%s373 + $0x690] sm:$0xff]
        %v7510 = vld [vmem:[%s373 + $0x698] sm:$0xff]
        %v7511 = vld [vmem:[%s373 + $0x6a0] sm:$0xff]
        %v7512 = vld [vmem:[%s373 + $0x6a8] sm:$0xff]
        %v7513 = vld [vmem:[%s373 + $0x6b0] sm:$0xff]
        %v7514 = vld [vmem:[%s373 + $0x6b8] sm:$0xff]
        %v7515 = vld [vmem:[%s373 + $0x6c0] sm:$0xff]
        %v7516 = vld [vmem:[%s373 + $0x6c8] sm:$0xff]
        %v7517 = vld [vmem:[%s373 + $0x6d0] sm:$0xff]
        %v7518 = vld [vmem:[%s373 + $0x6d8] sm:$0xff]
        %v7519 = vld [vmem:[%s373 + $0x6e0] sm:$0xff]
        %v7520 = vld [vmem:[%s373 + $0x6e8] sm:$0xff]
        %v7521 = vld [vmem:[%s373 + $0x6f0] sm:$0xff]
        %v7522 = vld [vmem:[%s373 + $0x6f8] sm:$0xff]
        %v7523 = vld [vmem:[%s373 + $0x700] sm:$0xff]
        %v7524 = vld [vmem:[%s373 + $0x708] sm:$0xff]
        %v7525 = vld [vmem:[%s373 + $0x710] sm:$0xff]
        %v7526 = vld [vmem:[%s373 + $0x718] sm:$0xff]
        %v7527 = vld [vmem:[%s373 + $0x720] sm:$0xff]
        %v7528 = vld [vmem:[%s373 + $0x728] sm:$0xff]
        %v7529 = vld [vmem:[%s373 + $0x730] sm:$0xff]
        %v7530 = vld [vmem:[%s373 + $0x738] sm:$0xff]
        %v7531 = vld [vmem:[%s373 + $0x740] sm:$0xff]
        %v7532 = vld [vmem:[%s373 + $0x748] sm:$0xff]
        %v7533 = vld [vmem:[%s373 + $0x750] sm:$0xff]
        %v7534 = vld [vmem:[%s373 + $0x758] sm:$0xff]
        %v7535 = vld [vmem:[%s373 + $0x760] sm:$0xff]
        %v7536 = vld [vmem:[%s373 + $0x768] sm:$0xff]
        %v7537 = vld [vmem:[%s373 + $0x770] sm:$0xff]
        %v7538 = vld [vmem:[%s373 + $0x778] sm:$0xff]
        %v7539 = vld [vmem:[%s373 + $0x780] sm:$0xff]
        %v7540 = vld [vmem:[%s373 + $0x788] sm:$0xff]
        %v7541 = vld [vmem:[%s373 + $0x790] sm:$0xff]
        %v7542 = vld [vmem:[%s373 + $0x798] sm:$0xff]
        %v7543 = vld [vmem:[%s373 + $0x7a0] sm:$0xff]
        %v7544 = vld [vmem:[%s373 + $0x7a8] sm:$0xff]
        %v7545 = vld [vmem:[%s373 + $0x7b0] sm:$0xff]
        %v7546 = vld [vmem:[%s373 + $0x7b8] sm:$0xff]
        %v7547 = vld [vmem:[%s373 + $0x7c0] sm:$0xff]
        %v7548 = vld [vmem:[%s373 + $0x7c8] sm:$0xff]
        %v7549 = vld [vmem:[%s373 + $0x7d0] sm:$0xff]
        %v7550 = vld [vmem:[%s373 + $0x7d8] sm:$0xff]
        %v7551 = vld [vmem:[%s373 + $0x7e0] sm:$0xff]
        %v7552 = vld [vmem:[%s373 + $0x7e8] sm:$0xff]
        %v7553 = vld [vmem:[%s373 + $0x7f0] sm:$0xff]
        %v7554 = vld [vmem:[%s373 + $0x7f8] sm:$0xff]
        %v7811 = vunpack.c.l.b16 %v7299
        %v7812 = vunpack.c.h.b16 %v7299
        %v7813 = vunpack.c.l.b16 %v7300
        %v7814 = vunpack.c.h.b16 %v7300
        %v7815 = vunpack.c.l.b16 %v7301
        %v7816 = vunpack.c.h.b16 %v7301
        %v7817 = vunpack.c.l.b16 %v7302
        %v7818 = vunpack.c.h.b16 %v7302
        %v7819 = vunpack.c.l.b16 %v7303
        %v7820 = vunpack.c.h.b16 %v7303
        %v7821 = vunpack.c.l.b16 %v7304
        %v7822 = vunpack.c.h.b16 %v7304
        %v7823 = vunpack.c.l.b16 %v7305
        %v7824 = vunpack.c.h.b16 %v7305
        %v7825 = vunpack.c.l.b16 %v7306
        %v7826 = vunpack.c.h.b16 %v7306
        %v7827 = vunpack.c.l.b16 %v7307
        %v7828 = vunpack.c.h.b16 %v7307
        %v7829 = vunpack.c.l.b16 %v7308
        %v7830 = vunpack.c.h.b16 %v7308
        %v7831 = vunpack.c.l.b16 %v7309
        %v7832 = vunpack.c.h.b16 %v7309
        %v7833 = vunpack.c.l.b16 %v7310
        %v7834 = vunpack.c.h.b16 %v7310
        %v7835 = vunpack.c.l.b16 %v7311
        %v7836 = vunpack.c.h.b16 %v7311
        %v7837 = vunpack.c.l.b16 %v7312
        %v7838 = vunpack.c.h.b16 %v7312
        %v7839 = vunpack.c.l.b16 %v7313
        %v7840 = vunpack.c.h.b16 %v7313
        %v7841 = vunpack.c.l.b16 %v7314
        %v7842 = vunpack.c.h.b16 %v7314
        %v7843 = vunpack.c.l.b16 %v7315
        %v7844 = vunpack.c.h.b16 %v7315
        %v7845 = vunpack.c.l.b16 %v7316
        %v7846 = vunpack.c.h.b16 %v7316
        %v7847 = vunpack.c.l.b16 %v7317
        %v7848 = vunpack.c.h.b16 %v7317
        %v7849 = vunpack.c.l.b16 %v7318
        %v7850 = vunpack.c.h.b16 %v7318
        %v7851 = vunpack.c.l.b16 %v7319
        %v7852 = vunpack.c.h.b16 %v7319
        %v7853 = vunpack.c.l.b16 %v7320
        %v7854 = vunpack.c.h.b16 %v7320
        %v7855 = vunpack.c.l.b16 %v7321
        %v7856 = vunpack.c.h.b16 %v7321
        %v7857 = vunpack.c.l.b16 %v7322
        %v7858 = vunpack.c.h.b16 %v7322
        %v7859 = vunpack.c.l.b16 %v7323
        %v7860 = vunpack.c.h.b16 %v7323
        %v7861 = vunpack.c.l.b16 %v7324
        %v7862 = vunpack.c.h.b16 %v7324
        %v7863 = vunpack.c.l.b16 %v7325
        %v7864 = vunpack.c.h.b16 %v7325
        %v7865 = vunpack.c.l.b16 %v7326
        %v7866 = vunpack.c.h.b16 %v7326
        %v7867 = vunpack.c.l.b16 %v7327
        %v7868 = vunpack.c.h.b16 %v7327
        %v7869 = vunpack.c.l.b16 %v7328
        %v7870 = vunpack.c.h.b16 %v7328
        %v7871 = vunpack.c.l.b16 %v7329
        %v7872 = vunpack.c.h.b16 %v7329
        %v7873 = vunpack.c.l.b16 %v7330
        %v7874 = vunpack.c.h.b16 %v7330
        %v7875 = vunpack.c.l.b16 %v7331
        %v7876 = vunpack.c.h.b16 %v7331
        %v7877 = vunpack.c.l.b16 %v7332
        %v7878 = vunpack.c.h.b16 %v7332
        %v7879 = vunpack.c.l.b16 %v7333
        %v7880 = vunpack.c.h.b16 %v7333
        %v7881 = vunpack.c.l.b16 %v7334
        %v7882 = vunpack.c.h.b16 %v7334
        %v7883 = vunpack.c.l.b16 %v7335
        %v7884 = vunpack.c.h.b16 %v7335
        %v7885 = vunpack.c.l.b16 %v7336
        %v7886 = vunpack.c.h.b16 %v7336
        %v7887 = vunpack.c.l.b16 %v7337
        %v7888 = vunpack.c.h.b16 %v7337
        %v7889 = vunpack.c.l.b16 %v7338
        %v7890 = vunpack.c.h.b16 %v7338
        %v7891 = vunpack.c.l.b16 %v7339
        %v7892 = vunpack.c.h.b16 %v7339
        %v7893 = vunpack.c.l.b16 %v7340
        %v7894 = vunpack.c.h.b16 %v7340
        %v7895 = vunpack.c.l.b16 %v7341
        %v7896 = vunpack.c.h.b16 %v7341
        %v7897 = vunpack.c.l.b16 %v7342
        %v7898 = vunpack.c.h.b16 %v7342
        %v7899 = vunpack.c.l.b16 %v7343
        %v7900 = vunpack.c.h.b16 %v7343
        %v7901 = vunpack.c.l.b16 %v7344
        %v7902 = vunpack.c.h.b16 %v7344
        %v7903 = vunpack.c.l.b16 %v7345
        %v7904 = vunpack.c.h.b16 %v7345
        %v7905 = vunpack.c.l.b16 %v7346
        %v7906 = vunpack.c.h.b16 %v7346
        %v7907 = vunpack.c.l.b16 %v7347
        %v7908 = vunpack.c.h.b16 %v7347
        %v7909 = vunpack.c.l.b16 %v7348
        %v7910 = vunpack.c.h.b16 %v7348
        %v7911 = vunpack.c.l.b16 %v7349
        %v7912 = vunpack.c.h.b16 %v7349
        %v7913 = vunpack.c.l.b16 %v7350
        %v7914 = vunpack.c.h.b16 %v7350
        %v7915 = vunpack.c.l.b16 %v7351
        %v7916 = vunpack.c.h.b16 %v7351
        %v7917 = vunpack.c.l.b16 %v7352
        %v7918 = vunpack.c.h.b16 %v7352
        %v7919 = vunpack.c.l.b16 %v7353
        %v7920 = vunpack.c.h.b16 %v7353
        %v7921 = vunpack.c.l.b16 %v7354
        %v7922 = vunpack.c.h.b16 %v7354
        %v7923 = vunpack.c.l.b16 %v7355
        %v7924 = vunpack.c.h.b16 %v7355
        %v7925 = vunpack.c.l.b16 %v7356
        %v7926 = vunpack.c.h.b16 %v7356
        %v7927 = vunpack.c.l.b16 %v7357
        %v7928 = vunpack.c.h.b16 %v7357
        %v7929 = vunpack.c.l.b16 %v7358
        %v7930 = vunpack.c.h.b16 %v7358
        %v7931 = vunpack.c.l.b16 %v7359
        %v7932 = vunpack.c.h.b16 %v7359
        %v7933 = vunpack.c.l.b16 %v7360
        %v7934 = vunpack.c.h.b16 %v7360
        %v7935 = vunpack.c.l.b16 %v7361
        %v7936 = vunpack.c.h.b16 %v7361
        %v7937 = vunpack.c.l.b16 %v7362
        %v7938 = vunpack.c.h.b16 %v7362
        %v7939 = vunpack.c.l.b16 %v7363
        %v7940 = vunpack.c.h.b16 %v7363
        %v7941 = vunpack.c.l.b16 %v7364
        %v7942 = vunpack.c.h.b16 %v7364
        %v7943 = vunpack.c.l.b16 %v7365
        %v7944 = vunpack.c.h.b16 %v7365
        %v7945 = vunpack.c.l.b16 %v7366
        %v7946 = vunpack.c.h.b16 %v7366
        %v7947 = vunpack.c.l.b16 %v7367
        %v7948 = vunpack.c.h.b16 %v7367
        %v7949 = vunpack.c.l.b16 %v7368
        %v7950 = vunpack.c.h.b16 %v7368
        %v7951 = vunpack.c.l.b16 %v7369
        %v7952 = vunpack.c.h.b16 %v7369
        %v7953 = vunpack.c.l.b16 %v7370
        %v7954 = vunpack.c.h.b16 %v7370
        %v7955 = vunpack.c.l.b16 %v7371
        %v7956 = vunpack.c.h.b16 %v7371
        %v7957 = vunpack.c.l.b16 %v7372
        %v7958 = vunpack.c.h.b16 %v7372
        %v7959 = vunpack.c.l.b16 %v7373
        %v7960 = vunpack.c.h.b16 %v7373
        %v7961 = vunpack.c.l.b16 %v7374
        %v7962 = vunpack.c.h.b16 %v7374
        %v7963 = vunpack.c.l.b16 %v7375
        %v7964 = vunpack.c.h.b16 %v7375
        %v7965 = vunpack.c.l.b16 %v7376
        %v7966 = vunpack.c.h.b16 %v7376
        %v7967 = vunpack.c.l.b16 %v7377
        %v7968 = vunpack.c.h.b16 %v7377
        %v7969 = vunpack.c.l.b16 %v7378
        %v7970 = vunpack.c.h.b16 %v7378
        %v7971 = vunpack.c.l.b16 %v7379
        %v7972 = vunpack.c.h.b16 %v7379
        %v7973 = vunpack.c.l.b16 %v7380
        %v7974 = vunpack.c.h.b16 %v7380
        %v7975 = vunpack.c.l.b16 %v7381
        %v7976 = vunpack.c.h.b16 %v7381
        %v7977 = vunpack.c.l.b16 %v7382
        %v7978 = vunpack.c.h.b16 %v7382
        %v7979 = vunpack.c.l.b16 %v7383
        %v7980 = vunpack.c.h.b16 %v7383
        %v7981 = vunpack.c.l.b16 %v7384
        %v7982 = vunpack.c.h.b16 %v7384
        %v7983 = vunpack.c.l.b16 %v7385
        %v7984 = vunpack.c.h.b16 %v7385
        %v7985 = vunpack.c.l.b16 %v7386
        %v7986 = vunpack.c.h.b16 %v7386
        %v7987 = vunpack.c.l.b16 %v7387
        %v7988 = vunpack.c.h.b16 %v7387
        %v7989 = vunpack.c.l.b16 %v7388
        %v7990 = vunpack.c.h.b16 %v7388
        %v7991 = vunpack.c.l.b16 %v7389
        %v7992 = vunpack.c.h.b16 %v7389
        %v7993 = vunpack.c.l.b16 %v7390
        %v7994 = vunpack.c.h.b16 %v7390
        %v7995 = vunpack.c.l.b16 %v7391
        %v7996 = vunpack.c.h.b16 %v7391
        %v7997 = vunpack.c.l.b16 %v7392
        %v7998 = vunpack.c.h.b16 %v7392
        %v7999 = vunpack.c.l.b16 %v7393
        %v8000 = vunpack.c.h.b16 %v7393
        %v8001 = vunpack.c.l.b16 %v7394
        %v8002 = vunpack.c.h.b16 %v7394
        %v8003 = vunpack.c.l.b16 %v7395
        %v8004 = vunpack.c.h.b16 %v7395
        %v8005 = vunpack.c.l.b16 %v7396
        %v8006 = vunpack.c.h.b16 %v7396
        %v8007 = vunpack.c.l.b16 %v7397
        %v8008 = vunpack.c.h.b16 %v7397
        %v8009 = vunpack.c.l.b16 %v7398
        %v8010 = vunpack.c.h.b16 %v7398
        %v8011 = vunpack.c.l.b16 %v7399
        %v8012 = vunpack.c.h.b16 %v7399
        %v8013 = vunpack.c.l.b16 %v7400
        %v8014 = vunpack.c.h.b16 %v7400
        %v8015 = vunpack.c.l.b16 %v7401
        %v8016 = vunpack.c.h.b16 %v7401
        %v8017 = vunpack.c.l.b16 %v7402
        %v8018 = vunpack.c.h.b16 %v7402
        %v8019 = vunpack.c.l.b16 %v7403
        %v8020 = vunpack.c.h.b16 %v7403
        %v8021 = vunpack.c.l.b16 %v7404
        %v8022 = vunpack.c.h.b16 %v7404
        %v8023 = vunpack.c.l.b16 %v7405
        %v8024 = vunpack.c.h.b16 %v7405
        %v8025 = vunpack.c.l.b16 %v7406
        %v8026 = vunpack.c.h.b16 %v7406
        %v8027 = vunpack.c.l.b16 %v7407
        %v8028 = vunpack.c.h.b16 %v7407
        %v8029 = vunpack.c.l.b16 %v7408
        %v8030 = vunpack.c.h.b16 %v7408
        %v8031 = vunpack.c.l.b16 %v7409
        %v8032 = vunpack.c.h.b16 %v7409
        %v8033 = vunpack.c.l.b16 %v7410
        %v8034 = vunpack.c.h.b16 %v7410
        %v8035 = vunpack.c.l.b16 %v7411
        %v8036 = vunpack.c.h.b16 %v7411
        %v8037 = vunpack.c.l.b16 %v7412
        %v8038 = vunpack.c.h.b16 %v7412
        %v8039 = vunpack.c.l.b16 %v7413
        %v8040 = vunpack.c.h.b16 %v7413
        %v8041 = vunpack.c.l.b16 %v7414
        %v8042 = vunpack.c.h.b16 %v7414
        %v8043 = vunpack.c.l.b16 %v7415
        %v8044 = vunpack.c.h.b16 %v7415
        %v8045 = vunpack.c.l.b16 %v7416
        %v8046 = vunpack.c.h.b16 %v7416
        %v8047 = vunpack.c.l.b16 %v7417
        %v8048 = vunpack.c.h.b16 %v7417
        %v8049 = vunpack.c.l.b16 %v7418
        %v8050 = vunpack.c.h.b16 %v7418
        %v8051 = vunpack.c.l.b16 %v7419
        %v8052 = vunpack.c.h.b16 %v7419
        %v8053 = vunpack.c.l.b16 %v7420
        %v8054 = vunpack.c.h.b16 %v7420
        %v8055 = vunpack.c.l.b16 %v7421
        %v8056 = vunpack.c.h.b16 %v7421
        %v8057 = vunpack.c.l.b16 %v7422
        %v8058 = vunpack.c.h.b16 %v7422
        %v8059 = vunpack.c.l.b16 %v7423
        %v8060 = vunpack.c.h.b16 %v7423
        %v8061 = vunpack.c.l.b16 %v7424
        %v8062 = vunpack.c.h.b16 %v7424
        %v8063 = vunpack.c.l.b16 %v7425
        %v8064 = vunpack.c.h.b16 %v7425
        %v8065 = vunpack.c.l.b16 %v7426
        %v8066 = vunpack.c.h.b16 %v7426
        %v8067 = vunpack.c.l.b16 %v7427
        %v8068 = vunpack.c.h.b16 %v7427
        %v8069 = vunpack.c.l.b16 %v7428
        %v8070 = vunpack.c.h.b16 %v7428
        %v8071 = vunpack.c.l.b16 %v7429
        %v8072 = vunpack.c.h.b16 %v7429
        %v8073 = vunpack.c.l.b16 %v7430
        %v8074 = vunpack.c.h.b16 %v7430
        %v8075 = vunpack.c.l.b16 %v7431
        %v8076 = vunpack.c.h.b16 %v7431
        %v8077 = vunpack.c.l.b16 %v7432
        %v8078 = vunpack.c.h.b16 %v7432
        %v8079 = vunpack.c.l.b16 %v7433
        %v8080 = vunpack.c.h.b16 %v7433
        %v8081 = vunpack.c.l.b16 %v7434
        %v8082 = vunpack.c.h.b16 %v7434
        %v8083 = vunpack.c.l.b16 %v7435
        %v8084 = vunpack.c.h.b16 %v7435
        %v8085 = vunpack.c.l.b16 %v7436
        %v8086 = vunpack.c.h.b16 %v7436
        %v8087 = vunpack.c.l.b16 %v7437
        %v8088 = vunpack.c.h.b16 %v7437
        %v8089 = vunpack.c.l.b16 %v7438
        %v8090 = vunpack.c.h.b16 %v7438
        %v8091 = vunpack.c.l.b16 %v7439
        %v8092 = vunpack.c.h.b16 %v7439
        %v8093 = vunpack.c.l.b16 %v7440
        %v8094 = vunpack.c.h.b16 %v7440
        %v8095 = vunpack.c.l.b16 %v7441
        %v8096 = vunpack.c.h.b16 %v7441
        %v8097 = vunpack.c.l.b16 %v7442
        %v8098 = vunpack.c.h.b16 %v7442
        %v8099 = vunpack.c.l.b16 %v7443
        %v8100 = vunpack.c.h.b16 %v7443
        %v8101 = vunpack.c.l.b16 %v7444
        %v8102 = vunpack.c.h.b16 %v7444
        %v8103 = vunpack.c.l.b16 %v7445
        %v8104 = vunpack.c.h.b16 %v7445
        %v8105 = vunpack.c.l.b16 %v7446
        %v8106 = vunpack.c.h.b16 %v7446
        %v8107 = vunpack.c.l.b16 %v7447
        %v8108 = vunpack.c.h.b16 %v7447
        %v8109 = vunpack.c.l.b16 %v7448
        %v8110 = vunpack.c.h.b16 %v7448
        %v8111 = vunpack.c.l.b16 %v7449
        %v8112 = vunpack.c.h.b16 %v7449
        %v8113 = vunpack.c.l.b16 %v7450
        %v8114 = vunpack.c.h.b16 %v7450
        %v8115 = vunpack.c.l.b16 %v7451
        %v8116 = vunpack.c.h.b16 %v7451
        %v8117 = vunpack.c.l.b16 %v7452
        %v8118 = vunpack.c.h.b16 %v7452
        %v8119 = vunpack.c.l.b16 %v7453
        %v8120 = vunpack.c.h.b16 %v7453
        %v8121 = vunpack.c.l.b16 %v7454
        %v8122 = vunpack.c.h.b16 %v7454
        %v8123 = vunpack.c.l.b16 %v7455
        %v8124 = vunpack.c.h.b16 %v7455
        %v8125 = vunpack.c.l.b16 %v7456
        %v8126 = vunpack.c.h.b16 %v7456
        %v8127 = vunpack.c.l.b16 %v7457
        %v8128 = vunpack.c.h.b16 %v7457
        %v8129 = vunpack.c.l.b16 %v7458
        %v8130 = vunpack.c.h.b16 %v7458
        %v8131 = vunpack.c.l.b16 %v7459
        %v8132 = vunpack.c.h.b16 %v7459
        %v8133 = vunpack.c.l.b16 %v7460
        %v8134 = vunpack.c.h.b16 %v7460
        %v8135 = vunpack.c.l.b16 %v7461
        %v8136 = vunpack.c.h.b16 %v7461
        %v8137 = vunpack.c.l.b16 %v7462
        %v8138 = vunpack.c.h.b16 %v7462
        %v8139 = vunpack.c.l.b16 %v7463
        %v8140 = vunpack.c.h.b16 %v7463
        %v8141 = vunpack.c.l.b16 %v7464
        %v8142 = vunpack.c.h.b16 %v7464
        %v8143 = vunpack.c.l.b16 %v7465
        %v8144 = vunpack.c.h.b16 %v7465
        %v8145 = vunpack.c.l.b16 %v7466
        %v8146 = vunpack.c.h.b16 %v7466
        %v8147 = vunpack.c.l.b16 %v7467
        %v8148 = vunpack.c.h.b16 %v7467
        %v8149 = vunpack.c.l.b16 %v7468
        %v8150 = vunpack.c.h.b16 %v7468
        %v8151 = vunpack.c.l.b16 %v7469
        %v8152 = vunpack.c.h.b16 %v7469
        %v8153 = vunpack.c.l.b16 %v7470
        %v8154 = vunpack.c.h.b16 %v7470
        %v8155 = vunpack.c.l.b16 %v7471
        %v8156 = vunpack.c.h.b16 %v7471
        %v8157 = vunpack.c.l.b16 %v7472
        %v8158 = vunpack.c.h.b16 %v7472
        %v8159 = vunpack.c.l.b16 %v7473
        %v8160 = vunpack.c.h.b16 %v7473
        %v8161 = vunpack.c.l.b16 %v7474
        %v8162 = vunpack.c.h.b16 %v7474
        %v8163 = vunpack.c.l.b16 %v7475
        %v8164 = vunpack.c.h.b16 %v7475
        %v8165 = vunpack.c.l.b16 %v7476
        %v8166 = vunpack.c.h.b16 %v7476
        %v8167 = vunpack.c.l.b16 %v7477
        %v8168 = vunpack.c.h.b16 %v7477
        %v8169 = vunpack.c.l.b16 %v7478
        %v8170 = vunpack.c.h.b16 %v7478
        %v8171 = vunpack.c.l.b16 %v7479
        %v8172 = vunpack.c.h.b16 %v7479
        %v8173 = vunpack.c.l.b16 %v7480
        %v8174 = vunpack.c.h.b16 %v7480
        %v8175 = vunpack.c.l.b16 %v7481
        %v8176 = vunpack.c.h.b16 %v7481
        %v8177 = vunpack.c.l.b16 %v7482
        %v8178 = vunpack.c.h.b16 %v7482
        %v8179 = vunpack.c.l.b16 %v7483
        %v8180 = vunpack.c.h.b16 %v7483
        %v8181 = vunpack.c.l.b16 %v7484
        %v8182 = vunpack.c.h.b16 %v7484
        %v8183 = vunpack.c.l.b16 %v7485
        %v8184 = vunpack.c.h.b16 %v7485
        %v8185 = vunpack.c.l.b16 %v7486
        %v8186 = vunpack.c.h.b16 %v7486
        %v8187 = vunpack.c.l.b16 %v7487
        %v8188 = vunpack.c.h.b16 %v7487
        %v8189 = vunpack.c.l.b16 %v7488
        %v8190 = vunpack.c.h.b16 %v7488
        %v8191 = vunpack.c.l.b16 %v7489
        %v8192 = vunpack.c.h.b16 %v7489
        %v8193 = vunpack.c.l.b16 %v7490
        %v8194 = vunpack.c.h.b16 %v7490
        %v8195 = vunpack.c.l.b16 %v7491
        %v8196 = vunpack.c.h.b16 %v7491
        %v8197 = vunpack.c.l.b16 %v7492
        %v8198 = vunpack.c.h.b16 %v7492
        %v8199 = vunpack.c.l.b16 %v7493
        %v8200 = vunpack.c.h.b16 %v7493
        %v8201 = vunpack.c.l.b16 %v7494
        %v8202 = vunpack.c.h.b16 %v7494
        %v8203 = vunpack.c.l.b16 %v7495
        %v8204 = vunpack.c.h.b16 %v7495
        %v8205 = vunpack.c.l.b16 %v7496
        %v8206 = vunpack.c.h.b16 %v7496
        %v8207 = vunpack.c.l.b16 %v7497
        %v8208 = vunpack.c.h.b16 %v7497
        %v8209 = vunpack.c.l.b16 %v7498
        %v8210 = vunpack.c.h.b16 %v7498
        %v8211 = vunpack.c.l.b16 %v7499
        %v8212 = vunpack.c.h.b16 %v7499
        %v8213 = vunpack.c.l.b16 %v7500
        %v8214 = vunpack.c.h.b16 %v7500
        %v8215 = vunpack.c.l.b16 %v7501
        %v8216 = vunpack.c.h.b16 %v7501
        %v8217 = vunpack.c.l.b16 %v7502
        %v8218 = vunpack.c.h.b16 %v7502
        %v8219 = vunpack.c.l.b16 %v7503
        %v8220 = vunpack.c.h.b16 %v7503
        %v8221 = vunpack.c.l.b16 %v7504
        %v8222 = vunpack.c.h.b16 %v7504
        %v8223 = vunpack.c.l.b16 %v7505
        %v8224 = vunpack.c.h.b16 %v7505
        %v8225 = vunpack.c.l.b16 %v7506
        %v8226 = vunpack.c.h.b16 %v7506
        %v8227 = vunpack.c.l.b16 %v7507
        %v8228 = vunpack.c.h.b16 %v7507
        %v8229 = vunpack.c.l.b16 %v7508
        %v8230 = vunpack.c.h.b16 %v7508
        %v8231 = vunpack.c.l.b16 %v7509
        %v8232 = vunpack.c.h.b16 %v7509
        %v8233 = vunpack.c.l.b16 %v7510
        %v8234 = vunpack.c.h.b16 %v7510
        %v8235 = vunpack.c.l.b16 %v7511
        %v8236 = vunpack.c.h.b16 %v7511
        %v8237 = vunpack.c.l.b16 %v7512
        %v8238 = vunpack.c.h.b16 %v7512
        %v8239 = vunpack.c.l.b16 %v7513
        %v8240 = vunpack.c.h.b16 %v7513
        %v8241 = vunpack.c.l.b16 %v7514
        %v8242 = vunpack.c.h.b16 %v7514
        %v8243 = vunpack.c.l.b16 %v7515
        %v8244 = vunpack.c.h.b16 %v7515
        %v8245 = vunpack.c.l.b16 %v7516
        %v8246 = vunpack.c.h.b16 %v7516
        %v8247 = vunpack.c.l.b16 %v7517
        %v8248 = vunpack.c.h.b16 %v7517
        %v8249 = vunpack.c.l.b16 %v7518
        %v8250 = vunpack.c.h.b16 %v7518
        %v8251 = vunpack.c.l.b16 %v7519
        %v8252 = vunpack.c.h.b16 %v7519
        %v8253 = vunpack.c.l.b16 %v7520
        %v8254 = vunpack.c.h.b16 %v7520
        %v8255 = vunpack.c.l.b16 %v7521
        %v8256 = vunpack.c.h.b16 %v7521
        %v8257 = vunpack.c.l.b16 %v7522
        %v8258 = vunpack.c.h.b16 %v7522
        %v8259 = vunpack.c.l.b16 %v7523
        %v8260 = vunpack.c.h.b16 %v7523
        %v8261 = vunpack.c.l.b16 %v7524
        %v8262 = vunpack.c.h.b16 %v7524
        %v8263 = vunpack.c.l.b16 %v7525
        %v8264 = vunpack.c.h.b16 %v7525
        %v8265 = vunpack.c.l.b16 %v7526
        %v8266 = vunpack.c.h.b16 %v7526
        %v8267 = vunpack.c.l.b16 %v7527
        %v8268 = vunpack.c.h.b16 %v7527
        %v8269 = vunpack.c.l.b16 %v7528
        %v8270 = vunpack.c.h.b16 %v7528
        %v8271 = vunpack.c.l.b16 %v7529
        %v8272 = vunpack.c.h.b16 %v7529
        %v8273 = vunpack.c.l.b16 %v7530
        %v8274 = vunpack.c.h.b16 %v7530
        %v8275 = vunpack.c.l.b16 %v7531
        %v8276 = vunpack.c.h.b16 %v7531
        %v8277 = vunpack.c.l.b16 %v7532
        %v8278 = vunpack.c.h.b16 %v7532
        %v8279 = vunpack.c.l.b16 %v7533
        %v8280 = vunpack.c.h.b16 %v7533
        %v8281 = vunpack.c.l.b16 %v7534
        %v8282 = vunpack.c.h.b16 %v7534
        %v8283 = vunpack.c.l.b16 %v7535
        %v8284 = vunpack.c.h.b16 %v7535
        %v8285 = vunpack.c.l.b16 %v7536
        %v8286 = vunpack.c.h.b16 %v7536
        %v8287 = vunpack.c.l.b16 %v7537
        %v8288 = vunpack.c.h.b16 %v7537
        %v8289 = vunpack.c.l.b16 %v7538
        %v8290 = vunpack.c.h.b16 %v7538
        %v8291 = vunpack.c.l.b16 %v7539
        %v8292 = vunpack.c.h.b16 %v7539
        %v8293 = vunpack.c.l.b16 %v7540
        %v8294 = vunpack.c.h.b16 %v7540
        %v8295 = vunpack.c.l.b16 %v7541
        %v8296 = vunpack.c.h.b16 %v7541
        %v8297 = vunpack.c.l.b16 %v7542
        %v8298 = vunpack.c.h.b16 %v7542
        %v8299 = vunpack.c.l.b16 %v7543
        %v8300 = vunpack.c.h.b16 %v7543
        %v8301 = vunpack.c.l.b16 %v7544
        %v8302 = vunpack.c.h.b16 %v7544
        %v8303 = vunpack.c.l.b16 %v7545
        %v8304 = vunpack.c.h.b16 %v7545
        %v8305 = vunpack.c.l.b16 %v7546
        %v8306 = vunpack.c.h.b16 %v7546
        %v8307 = vunpack.c.l.b16 %v7547
        %v8308 = vunpack.c.h.b16 %v7547
        %v8309 = vunpack.c.l.b16 %v7548
        %v8310 = vunpack.c.h.b16 %v7548
        %v8311 = vunpack.c.l.b16 %v7549
        %v8312 = vunpack.c.h.b16 %v7549
        %v8313 = vunpack.c.l.b16 %v7550
        %v8314 = vunpack.c.h.b16 %v7550
        %v8315 = vunpack.c.l.b16 %v7551
        %v8316 = vunpack.c.h.b16 %v7551
        %v8317 = vunpack.c.l.b16 %v7552
        %v8318 = vunpack.c.h.b16 %v7552
        %v8319 = vunpack.c.l.b16 %v7553
        %v8320 = vunpack.c.h.b16 %v7553
        %v8321 = vunpack.c.l.b16 %v7554
        %v8322 = vunpack.c.h.b16 %v7554
        %v8323 = vpack.c.b16 %v7815, %v7811
        %v8324 = vpack.c.b16 %v7816, %v7812
        %v8325 = vpack.c.b16 %v7817, %v7813
        %v8326 = vpack.c.b16 %v7818, %v7814
        %v8327 = vpack.c.b16 %v7823, %v7819
        %v8328 = vpack.c.b16 %v7824, %v7820
        %v8329 = vpack.c.b16 %v7825, %v7821
        %v8330 = vpack.c.b16 %v7826, %v7822
        %v8331 = vpack.c.b16 %v7831, %v7827
        %v8332 = vpack.c.b16 %v7832, %v7828
        %v8333 = vpack.c.b16 %v7833, %v7829
        %v8334 = vpack.c.b16 %v7834, %v7830
        %v8335 = vpack.c.b16 %v7839, %v7835
        %v8336 = vpack.c.b16 %v7840, %v7836
        %v8337 = vpack.c.b16 %v7841, %v7837
        %v8338 = vpack.c.b16 %v7842, %v7838
        %v8339 = vpack.c.b16 %v7847, %v7843
        %v8340 = vpack.c.b16 %v7848, %v7844
        %v8341 = vpack.c.b16 %v7849, %v7845
        %v8342 = vpack.c.b16 %v7850, %v7846
        %v8343 = vpack.c.b16 %v7855, %v7851
        %v8344 = vpack.c.b16 %v7856, %v7852
        %v8345 = vpack.c.b16 %v7857, %v7853
        %v8346 = vpack.c.b16 %v7858, %v7854
        %v8347 = vpack.c.b16 %v7863, %v7859
        %v8348 = vpack.c.b16 %v7864, %v7860
        %v8349 = vpack.c.b16 %v7865, %v7861
        %v8350 = vpack.c.b16 %v7866, %v7862
        %v8351 = vpack.c.b16 %v7871, %v7867
        %v8352 = vpack.c.b16 %v7872, %v7868
        %v8353 = vpack.c.b16 %v7873, %v7869
        %v8354 = vpack.c.b16 %v7874, %v7870
        %v8355 = vpack.c.b16 %v7879, %v7875
        %v8356 = vpack.c.b16 %v7880, %v7876
        %v8357 = vpack.c.b16 %v7881, %v7877
        %v8358 = vpack.c.b16 %v7882, %v7878
        %v8359 = vpack.c.b16 %v7887, %v7883
        %v8360 = vpack.c.b16 %v7888, %v7884
        %v8361 = vpack.c.b16 %v7889, %v7885
        %v8362 = vpack.c.b16 %v7890, %v7886
        %v8363 = vpack.c.b16 %v7895, %v7891
        %v8364 = vpack.c.b16 %v7896, %v7892
        %v8365 = vpack.c.b16 %v7897, %v7893
        %v8366 = vpack.c.b16 %v7898, %v7894
        %v8367 = vpack.c.b16 %v7903, %v7899
        %v8368 = vpack.c.b16 %v7904, %v7900
        %v8369 = vpack.c.b16 %v7905, %v7901
        %v8370 = vpack.c.b16 %v7906, %v7902
        %v8371 = vpack.c.b16 %v7911, %v7907
        %v8372 = vpack.c.b16 %v7912, %v7908
        %v8373 = vpack.c.b16 %v7913, %v7909
        %v8374 = vpack.c.b16 %v7914, %v7910
        %v8375 = vpack.c.b16 %v7919, %v7915
        %v8376 = vpack.c.b16 %v7920, %v7916
        %v8377 = vpack.c.b16 %v7921, %v7917
        %v8378 = vpack.c.b16 %v7922, %v7918
        %v8379 = vpack.c.b16 %v7927, %v7923
        %v8380 = vpack.c.b16 %v7928, %v7924
        %v8381 = vpack.c.b16 %v7929, %v7925
        %v8382 = vpack.c.b16 %v7930, %v7926
        %v8383 = vpack.c.b16 %v7935, %v7931
        %v8384 = vpack.c.b16 %v7936, %v7932
        %v8385 = vpack.c.b16 %v7937, %v7933
        %v8386 = vpack.c.b16 %v7938, %v7934
        %v8387 = vpack.c.b16 %v7943, %v7939
        %v8388 = vpack.c.b16 %v7944, %v7940
        %v8389 = vpack.c.b16 %v7945, %v7941
        %v8390 = vpack.c.b16 %v7946, %v7942
        %v8391 = vpack.c.b16 %v7951, %v7947
        %v8392 = vpack.c.b16 %v7952, %v7948
        %v8393 = vpack.c.b16 %v7953, %v7949
        %v8394 = vpack.c.b16 %v7954, %v7950
        %v8395 = vpack.c.b16 %v7959, %v7955
        %v8396 = vpack.c.b16 %v7960, %v7956
        %v8397 = vpack.c.b16 %v7961, %v7957
        %v8398 = vpack.c.b16 %v7962, %v7958
        %v8399 = vpack.c.b16 %v7967, %v7963
        %v8400 = vpack.c.b16 %v7968, %v7964
        %v8401 = vpack.c.b16 %v7969, %v7965
        %v8402 = vpack.c.b16 %v7970, %v7966
        %v8403 = vpack.c.b16 %v7975, %v7971
        %v8404 = vpack.c.b16 %v7976, %v7972
        %v8405 = vpack.c.b16 %v7977, %v7973
        %v8406 = vpack.c.b16 %v7978, %v7974
        %v8407 = vpack.c.b16 %v7983, %v7979
        %v8408 = vpack.c.b16 %v7984, %v7980
        %v8409 = vpack.c.b16 %v7985, %v7981
        %v8410 = vpack.c.b16 %v7986, %v7982
        %v8411 = vpack.c.b16 %v7991, %v7987
        %v8412 = vpack.c.b16 %v7992, %v7988
        %v8413 = vpack.c.b16 %v7993, %v7989
        %v8414 = vpack.c.b16 %v7994, %v7990
        %v8415 = vpack.c.b16 %v7999, %v7995
        %v8416 = vpack.c.b16 %v8000, %v7996
        %v8417 = vpack.c.b16 %v8001, %v7997
        %v8418 = vpack.c.b16 %v8002, %v7998
        %v8419 = vpack.c.b16 %v8007, %v8003
        %v8420 = vpack.c.b16 %v8008, %v8004
        %v8421 = vpack.c.b16 %v8009, %v8005
        %v8422 = vpack.c.b16 %v8010, %v8006
        %v8423 = vpack.c.b16 %v8015, %v8011
        %v8424 = vpack.c.b16 %v8016, %v8012
        %v8425 = vpack.c.b16 %v8017, %v8013
        %v8426 = vpack.c.b16 %v8018, %v8014
        %v8427 = vpack.c.b16 %v8023, %v8019
        %v8428 = vpack.c.b16 %v8024, %v8020
        %v8429 = vpack.c.b16 %v8025, %v8021
        %v8430 = vpack.c.b16 %v8026, %v8022
        %v8431 = vpack.c.b16 %v8031, %v8027
        %v8432 = vpack.c.b16 %v8032, %v8028
        %v8433 = vpack.c.b16 %v8033, %v8029
        %v8434 = vpack.c.b16 %v8034, %v8030
        %v8435 = vpack.c.b16 %v8039, %v8035
        %v8436 = vpack.c.b16 %v8040, %v8036
        %v8437 = vpack.c.b16 %v8041, %v8037
        %v8438 = vpack.c.b16 %v8042, %v8038
        %v8439 = vpack.c.b16 %v8047, %v8043
        %v8440 = vpack.c.b16 %v8048, %v8044
        %v8441 = vpack.c.b16 %v8049, %v8045
        %v8442 = vpack.c.b16 %v8050, %v8046
        %v8443 = vpack.c.b16 %v8055, %v8051
        %v8444 = vpack.c.b16 %v8056, %v8052
        %v8445 = vpack.c.b16 %v8057, %v8053
        %v8446 = vpack.c.b16 %v8058, %v8054
        %v8447 = vpack.c.b16 %v8063, %v8059
        %v8448 = vpack.c.b16 %v8064, %v8060
        %v8449 = vpack.c.b16 %v8065, %v8061
        %v8450 = vpack.c.b16 %v8066, %v8062
        %v8451 = vpack.c.b16 %v8071, %v8067
        %v8452 = vpack.c.b16 %v8072, %v8068
        %v8453 = vpack.c.b16 %v8073, %v8069
        %v8454 = vpack.c.b16 %v8074, %v8070
        %v8455 = vpack.c.b16 %v8079, %v8075
        %v8456 = vpack.c.b16 %v8080, %v8076
        %v8457 = vpack.c.b16 %v8081, %v8077
        %v8458 = vpack.c.b16 %v8082, %v8078
        %v8459 = vpack.c.b16 %v8087, %v8083
        %v8460 = vpack.c.b16 %v8088, %v8084
        %v8461 = vpack.c.b16 %v8089, %v8085
        %v8462 = vpack.c.b16 %v8090, %v8086
        %v8463 = vpack.c.b16 %v8095, %v8091
        %v8464 = vpack.c.b16 %v8096, %v8092
        %v8465 = vpack.c.b16 %v8097, %v8093
        %v8466 = vpack.c.b16 %v8098, %v8094
        %v8467 = vpack.c.b16 %v8103, %v8099
        %v8468 = vpack.c.b16 %v8104, %v8100
        %v8469 = vpack.c.b16 %v8105, %v8101
        %v8470 = vpack.c.b16 %v8106, %v8102
        %v8471 = vpack.c.b16 %v8111, %v8107
        %v8472 = vpack.c.b16 %v8112, %v8108
        %v8473 = vpack.c.b16 %v8113, %v8109
        %v8474 = vpack.c.b16 %v8114, %v8110
        %v8475 = vpack.c.b16 %v8119, %v8115
        %v8476 = vpack.c.b16 %v8120, %v8116
        %v8477 = vpack.c.b16 %v8121, %v8117
        %v8478 = vpack.c.b16 %v8122, %v8118
        %v8479 = vpack.c.b16 %v8127, %v8123
        %v8480 = vpack.c.b16 %v8128, %v8124
        %v8481 = vpack.c.b16 %v8129, %v8125
        %v8482 = vpack.c.b16 %v8130, %v8126
        %v8483 = vpack.c.b16 %v8135, %v8131
        %v8484 = vpack.c.b16 %v8136, %v8132
        %v8485 = vpack.c.b16 %v8137, %v8133
        %v8486 = vpack.c.b16 %v8138, %v8134
        %v8487 = vpack.c.b16 %v8143, %v8139
        %v8488 = vpack.c.b16 %v8144, %v8140
        %v8489 = vpack.c.b16 %v8145, %v8141
        %v8490 = vpack.c.b16 %v8146, %v8142
        %v8491 = vpack.c.b16 %v8151, %v8147
        %v8492 = vpack.c.b16 %v8152, %v8148
        %v8493 = vpack.c.b16 %v8153, %v8149
        %v8494 = vpack.c.b16 %v8154, %v8150
        %v8495 = vpack.c.b16 %v8159, %v8155
        %v8496 = vpack.c.b16 %v8160, %v8156
        %v8497 = vpack.c.b16 %v8161, %v8157
        %v8498 = vpack.c.b16 %v8162, %v8158
        %v8499 = vpack.c.b16 %v8167, %v8163
        %v8500 = vpack.c.b16 %v8168, %v8164
        %v8501 = vpack.c.b16 %v8169, %v8165
        %v8502 = vpack.c.b16 %v8170, %v8166
        %v8503 = vpack.c.b16 %v8175, %v8171
        %v8504 = vpack.c.b16 %v8176, %v8172
        %v8505 = vpack.c.b16 %v8177, %v8173
        %v8506 = vpack.c.b16 %v8178, %v8174
        %v8507 = vpack.c.b16 %v8183, %v8179
        %v8508 = vpack.c.b16 %v8184, %v8180
        %v8509 = vpack.c.b16 %v8185, %v8181
        %v8510 = vpack.c.b16 %v8186, %v8182
        %v8511 = vpack.c.b16 %v8191, %v8187
        %v8512 = vpack.c.b16 %v8192, %v8188
        %v8513 = vpack.c.b16 %v8193, %v8189
        %v8514 = vpack.c.b16 %v8194, %v8190
        %v8515 = vpack.c.b16 %v8199, %v8195
        %v8516 = vpack.c.b16 %v8200, %v8196
        %v8517 = vpack.c.b16 %v8201, %v8197
        %v8518 = vpack.c.b16 %v8202, %v8198
        %v8519 = vpack.c.b16 %v8207, %v8203
        %v8520 = vpack.c.b16 %v8208, %v8204
        %v8521 = vpack.c.b16 %v8209, %v8205
        %v8522 = vpack.c.b16 %v8210, %v8206
        %v8523 = vpack.c.b16 %v8215, %v8211
        %v8524 = vpack.c.b16 %v8216, %v8212
        %v8525 = vpack.c.b16 %v8217, %v8213
        %v8526 = vpack.c.b16 %v8218, %v8214
        %v8527 = vpack.c.b16 %v8223, %v8219
        %v8528 = vpack.c.b16 %v8224, %v8220
        %v8529 = vpack.c.b16 %v8225, %v8221
        %v8530 = vpack.c.b16 %v8226, %v8222
        %v8531 = vpack.c.b16 %v8231, %v8227
        %v8532 = vpack.c.b16 %v8232, %v8228
        %v8533 = vpack.c.b16 %v8233, %v8229
        %v8534 = vpack.c.b16 %v8234, %v8230
        %v8535 = vpack.c.b16 %v8239, %v8235
        %v8536 = vpack.c.b16 %v8240, %v8236
        %v8537 = vpack.c.b16 %v8241, %v8237
        %v8538 = vpack.c.b16 %v8242, %v8238
        %v8539 = vpack.c.b16 %v8247, %v8243
        %v8540 = vpack.c.b16 %v8248, %v8244
        %v8541 = vpack.c.b16 %v8249, %v8245
        %v8542 = vpack.c.b16 %v8250, %v8246
        %v8543 = vpack.c.b16 %v8255, %v8251
        %v8544 = vpack.c.b16 %v8256, %v8252
        %v8545 = vpack.c.b16 %v8257, %v8253
        %v8546 = vpack.c.b16 %v8258, %v8254
        %v8547 = vpack.c.b16 %v8263, %v8259
        %v8548 = vpack.c.b16 %v8264, %v8260
        %v8549 = vpack.c.b16 %v8265, %v8261
        %v8550 = vpack.c.b16 %v8266, %v8262
        %v8551 = vpack.c.b16 %v8271, %v8267
        %v8552 = vpack.c.b16 %v8272, %v8268
        %v8553 = vpack.c.b16 %v8273, %v8269
        %v8554 = vpack.c.b16 %v8274, %v8270
        %v8555 = vpack.c.b16 %v8279, %v8275
        %v8556 = vpack.c.b16 %v8280, %v8276
        %v8557 = vpack.c.b16 %v8281, %v8277
        %v8558 = vpack.c.b16 %v8282, %v8278
        %v8559 = vpack.c.b16 %v8287, %v8283
        %v8560 = vpack.c.b16 %v8288, %v8284
        %v8561 = vpack.c.b16 %v8289, %v8285
        %v8562 = vpack.c.b16 %v8290, %v8286
        %v8563 = vpack.c.b16 %v8295, %v8291
        %v8564 = vpack.c.b16 %v8296, %v8292
        %v8565 = vpack.c.b16 %v8297, %v8293
        %v8566 = vpack.c.b16 %v8298, %v8294
        %v8567 = vpack.c.b16 %v8303, %v8299
        %v8568 = vpack.c.b16 %v8304, %v8300
        %v8569 = vpack.c.b16 %v8305, %v8301
        %v8570 = vpack.c.b16 %v8306, %v8302
        %v8571 = vpack.c.b16 %v8311, %v8307
        %v8572 = vpack.c.b16 %v8312, %v8308
        %v8573 = vpack.c.b16 %v8313, %v8309
        %v8574 = vpack.c.b16 %v8314, %v8310
        %v8575 = vpack.c.b16 %v8319, %v8315
        %v8576 = vpack.c.b16 %v8320, %v8316
        %v8577 = vpack.c.b16 %v8321, %v8317
        %v8578 = vpack.c.b16 %v8322, %v8318
        %8835 = vmatprep.subr.bf16.mxu0 %v8352
        %8836 = vmatpush1.bf16.msra.mxu0 %v8351
        %8837 = vmatprep.subr.bf16.mxu0 %v8348
        %8838 = vmatpush1.bf16.msra.mxu0 %v8347
        %8839 = vmatprep.subr.bf16.mxu0 %v8344
        %8840 = vmatpush1.bf16.msra.mxu0 %v8343
        %8841 = vmatprep.subr.bf16.mxu0 %v8340
        %8842 = vmatpush1.bf16.msra.mxu0 %v8339
        %8843 = vmatprep.subr.bf16.mxu0 %v8336
        %8844 = vmatpush1.bf16.msra.mxu0 %v8335
        %8845 = vmatprep.subr.bf16.mxu0 %v8332
        %8846 = vmatpush1.bf16.msra.mxu0 %v8331
        %8847 = vmatprep.subr.bf16.mxu0 %v8328
        %8848 = vmatpush1.bf16.msra.mxu0 %v8327
        %8849 = vmatprep.subr.bf16.mxu0 %v8324
        %8850 = vmatpush1.bf16.msra.mxu0 %v8323
        %8851 = vmatprep.subr.bf16.mxu0 %v8384
        %8852 = vmatpush2.bf16.msra.mxu0 %v8383
        %8853 = vmatprep.subr.bf16.mxu0 %v8380
        %8854 = vmatpush2.bf16.msra.mxu0 %v8379
        %8855 = vmatprep.subr.bf16.mxu0 %v8376
        %8856 = vmatpush2.bf16.msra.mxu0 %v8375
        %8857 = vmatprep.subr.bf16.mxu0 %v8372
        %8858 = vmatpush2.bf16.msra.mxu0 %v8371
        %8859 = vmatprep.subr.bf16.mxu0 %v8368
        %8860 = vmatpush2.bf16.msra.mxu0 %v8367
        %8861 = vmatprep.subr.bf16.mxu0 %v8364
        %8862 = vmatpush2.bf16.msra.mxu0 %v8363
        %8863 = vmatprep.subr.bf16.mxu0 %v8360
        %8864 = vmatpush2.bf16.msra.mxu0 %v8359
        %8865 = vmatprep.subr.bf16.mxu0 %v8356
        %8866 = vmatpush2.bf16.msra.mxu0 %v8355
        %8867 = vmatprep.mubr.bf16.mxu0 %v7172
        %8868 = vmatmul.mubr.bf16.gmra.mxu0 %v7171
        %v8869 = vpop.f32.mrf.mxu0
        %v8870 = vadd.f32 0.0, %v8869
        %v8871 = vpop.f32.mrf.mxu0
        %v8872 = vadd.f32 0.0, %v8871
        %v8873 = vpop.f32.mrf.mxu0
        %v8874 = vadd.f32 0.0, %v8873
        %v8875 = vpop.f32.mrf.mxu0
        %v8876 = vadd.f32 0.0, %v8875
        %8877 = vmatprep.mubr.bf16.mxu0 %v7180
        %8878 = vmatmul.mubr.bf16.gmra.mxu0 %v7179
        %v8879 = vpop.f32.mrf.mxu0
        %v8880 = vadd.f32 0.0, %v8879
        %v8881 = vpop.f32.mrf.mxu0
        %v8882 = vadd.f32 0.0, %v8881
        %v8883 = vpop.f32.mrf.mxu0
        %v8884 = vadd.f32 0.0, %v8883
        %v8885 = vpop.f32.mrf.mxu0
        %v8886 = vadd.f32 0.0, %v8885
        %8887 = vmatprep.mubr.bf16.mxu0 %v7188
        %8888 = vmatmul.mubr.bf16.gmra.mxu0 %v7187
        %v8889 = vpop.f32.mrf.mxu0
        %v8890 = vadd.f32 0.0, %v8889
        %v8891 = vpop.f32.mrf.mxu0
        %v8892 = vadd.f32 0.0, %v8891
        %v8893 = vpop.f32.mrf.mxu0
        %v8894 = vadd.f32 0.0, %v8893
        %v8895 = vpop.f32.mrf.mxu0
        %v8896 = vadd.f32 0.0, %v8895
        %8897 = vmatprep.mubr.bf16.mxu0 %v7196
        %8898 = vmatmul.mubr.bf16.gmra.mxu0 %v7195
        %v8899 = vpop.f32.mrf.mxu0
        %v8900 = vadd.f32 0.0, %v8899
        %v8901 = vpop.f32.mrf.mxu0
        %v8902 = vadd.f32 0.0, %v8901
        %v8903 = vpop.f32.mrf.mxu0
        %v8904 = vadd.f32 0.0, %v8903
        %v8905 = vpop.f32.mrf.mxu0
        %v8906 = vadd.f32 0.0, %v8905
        %8907 = vmatprep.mubr.bf16.mxu0 %v7204
        %8908 = vmatmul.mubr.bf16.gmra.mxu0 %v7203
        %v8909 = vpop.f32.mrf.mxu0
        %v8910 = vadd.f32 0.0, %v8909
        %v8911 = vpop.f32.mrf.mxu0
        %v8912 = vadd.f32 0.0, %v8911
        %v8913 = vpop.f32.mrf.mxu0
        %v8914 = vadd.f32 0.0, %v8913
        %v8915 = vpop.f32.mrf.mxu0
        %v8916 = vadd.f32 0.0, %v8915
        %8917 = vmatprep.mubr.bf16.mxu0 %v7212
        %8918 = vmatmul.mubr.bf16.gmra.mxu0 %v7211
        %v8919 = vpop.f32.mrf.mxu0
        %v8920 = vadd.f32 0.0, %v8919
        %v8921 = vpop.f32.mrf.mxu0
        %v8922 = vadd.f32 0.0, %v8921
        %v8923 = vpop.f32.mrf.mxu0
        %v8924 = vadd.f32 0.0, %v8923
        %v8925 = vpop.f32.mrf.mxu0
        %v8926 = vadd.f32 0.0, %v8925
        %8927 = vmatprep.mubr.bf16.mxu0 %v7220
        %8928 = vmatmul.mubr.bf16.gmra.mxu0 %v7219
        %v8929 = vpop.f32.mrf.mxu0
        %v8930 = vadd.f32 0.0, %v8929
        %v8931 = vpop.f32.mrf.mxu0
        %v8932 = vadd.f32 0.0, %v8931
        %v8933 = vpop.f32.mrf.mxu0
        %v8934 = vadd.f32 0.0, %v8933
        %v8935 = vpop.f32.mrf.mxu0
        %v8936 = vadd.f32 0.0, %v8935
        %8937 = vmatprep.mubr.bf16.mxu0 %v7228
        %8938 = vmatmul.mubr.bf16.gmra.mxu0 %v7227
        %v8939 = vpop.f32.mrf.mxu0
        %v8940 = vadd.f32 0.0, %v8939
        %v8941 = vpop.f32.mrf.mxu0
        %v8942 = vadd.f32 0.0, %v8941
        %v8943 = vpop.f32.mrf.mxu0
        %v8944 = vadd.f32 0.0, %v8943
        %v8945 = vpop.f32.mrf.mxu0
        %v8946 = vadd.f32 0.0, %v8945
        %8947 = vmatprep.mubr.bf16.mxu0 %v7236
        %8948 = vmatmul.mubr.bf16.gmra.mxu0 %v7235
        %v8949 = vpop.f32.mrf.mxu0
        %v8950 = vadd.f32 0.0, %v8949
        %v8951 = vpop.f32.mrf.mxu0
        %v8952 = vadd.f32 0.0, %v8951
        %v8953 = vpop.f32.mrf.mxu0
        %v8954 = vadd.f32 0.0, %v8953
        %v8955 = vpop.f32.mrf.mxu0
        %v8956 = vadd.f32 0.0, %v8955
        %8957 = vmatprep.mubr.bf16.mxu0 %v7244
        %8958 = vmatmul.mubr.bf16.gmra.mxu0 %v7243
        %v8959 = vpop.f32.mrf.mxu0
        %v8960 = vadd.f32 0.0, %v8959
        %v8961 = vpop.f32.mrf.mxu0
        %v8962 = vadd.f32 0.0, %v8961
        %v8963 = vpop.f32.mrf.mxu0
        %v8964 = vadd.f32 0.0, %v8963
        %v8965 = vpop.f32.mrf.mxu0
        %v8966 = vadd.f32 0.0, %v8965
        %8967 = vmatprep.mubr.bf16.mxu0 %v7252
        %8968 = vmatmul.mubr.bf16.gmra.mxu0 %v7251
        %v8969 = vpop.f32.mrf.mxu0
        %v8970 = vadd.f32 0.0, %v8969
        %v8971 = vpop.f32.mrf.mxu0
        %v8972 = vadd.f32 0.0, %v8971
        %v8973 = vpop.f32.mrf.mxu0
        %v8974 = vadd.f32 0.0, %v8973
        %v8975 = vpop.f32.mrf.mxu0
        %v8976 = vadd.f32 0.0, %v8975
        %8977 = vmatprep.mubr.bf16.mxu0 %v7260
        %8978 = vmatmul.mubr.bf16.gmra.mxu0 %v7259
        %v8979 = vpop.f32.mrf.mxu0
        %v8980 = vadd.f32 0.0, %v8979
        %v8981 = vpop.f32.mrf.mxu0
        %v8982 = vadd.f32 0.0, %v8981
        %v8983 = vpop.f32.mrf.mxu0
        %v8984 = vadd.f32 0.0, %v8983
        %v8985 = vpop.f32.mrf.mxu0
        %v8986 = vadd.f32 0.0, %v8985
        %8987 = vmatprep.mubr.bf16.mxu0 %v7268
        %8988 = vmatmul.mubr.bf16.gmra.mxu0 %v7267
        %v8989 = vpop.f32.mrf.mxu0
        %v8990 = vadd.f32 0.0, %v8989
        %v8991 = vpop.f32.mrf.mxu0
        %v8992 = vadd.f32 0.0, %v8991
        %v8993 = vpop.f32.mrf.mxu0
        %v8994 = vadd.f32 0.0, %v8993
        %v8995 = vpop.f32.mrf.mxu0
        %v8996 = vadd.f32 0.0, %v8995
        %8997 = vmatprep.mubr.bf16.mxu0 %v7276
        %8998 = vmatmul.mubr.bf16.gmra.mxu0 %v7275
        %v8999 = vpop.f32.mrf.mxu0
        %v9000 = vadd.f32 0.0, %v8999
        %v9001 = vpop.f32.mrf.mxu0
        %v9002 = vadd.f32 0.0, %v9001
        %v9003 = vpop.f32.mrf.mxu0
        %v9004 = vadd.f32 0.0, %v9003
        %v9005 = vpop.f32.mrf.mxu0
        %v9006 = vadd.f32 0.0, %v9005
        %9007 = vmatprep.mubr.bf16.mxu0 %v7284
        %9008 = vmatmul.mubr.bf16.gmra.mxu0 %v7283
        %v9009 = vpop.f32.mrf.mxu0
        %v9010 = vadd.f32 0.0, %v9009
        %v9011 = vpop.f32.mrf.mxu0
        %v9012 = vadd.f32 0.0, %v9011
        %v9013 = vpop.f32.mrf.mxu0
        %v9014 = vadd.f32 0.0, %v9013
        %v9015 = vpop.f32.mrf.mxu0
        %v9016 = vadd.f32 0.0, %v9015
        %9017 = vmatprep.mubr.bf16.mxu0 %v7292
        %9018 = vmatmul.mubr.bf16.gmra.mxu0 %v7291
        %v9019 = vpop.f32.mrf.mxu0
        %v9020 = vadd.f32 0.0, %v9019
        %v9021 = vpop.f32.mrf.mxu0
        %v9022 = vadd.f32 0.0, %v9021
        %v9023 = vpop.f32.mrf.mxu0
        %v9024 = vadd.f32 0.0, %v9023
        %v9025 = vpop.f32.mrf.mxu0
        %v9026 = vadd.f32 0.0, %v9025
        %9027 = vdwg.mxu0
        %9028 = vmatprep.subr.bf16.mxu0 %v8416
        %9029 = vmatpush1.bf16.msra.mxu0 %v8415
        %9030 = vmatprep.subr.bf16.mxu0 %v8412
        %9031 = vmatpush1.bf16.msra.mxu0 %v8411
        %9032 = vmatprep.subr.bf16.mxu0 %v8408
        %9033 = vmatpush1.bf16.msra.mxu0 %v8407
        %9034 = vmatprep.subr.bf16.mxu0 %v8404
        %9035 = vmatpush1.bf16.msra.mxu0 %v8403
        %9036 = vmatprep.subr.bf16.mxu0 %v8400
        %9037 = vmatpush1.bf16.msra.mxu0 %v8399
        %9038 = vmatprep.subr.bf16.mxu0 %v8396
        %9039 = vmatpush1.bf16.msra.mxu0 %v8395
        %9040 = vmatprep.subr.bf16.mxu0 %v8392
        %9041 = vmatpush1.bf16.msra.mxu0 %v8391
        %9042 = vmatprep.subr.bf16.mxu0 %v8388
        %9043 = vmatpush1.bf16.msra.mxu0 %v8387
        %9044 = vmatprep.subr.bf16.mxu0 %v8448
        %9045 = vmatpush2.bf16.msra.mxu0 %v8447
        %9046 = vmatprep.subr.bf16.mxu0 %v8444
        %9047 = vmatpush2.bf16.msra.mxu0 %v8443
        %9048 = vmatprep.subr.bf16.mxu0 %v8440
        %9049 = vmatpush2.bf16.msra.mxu0 %v8439
        %9050 = vmatprep.subr.bf16.mxu0 %v8436
        %9051 = vmatpush2.bf16.msra.mxu0 %v8435
        %9052 = vmatprep.subr.bf16.mxu0 %v8432
        %9053 = vmatpush2.bf16.msra.mxu0 %v8431
        %9054 = vmatprep.subr.bf16.mxu0 %v8428
        %9055 = vmatpush2.bf16.msra.mxu0 %v8427
        %9056 = vmatprep.subr.bf16.mxu0 %v8424
        %9057 = vmatpush2.bf16.msra.mxu0 %v8423
        %9058 = vmatprep.subr.bf16.mxu0 %v8420
        %9059 = vmatpush2.bf16.msra.mxu0 %v8419
        %9060 = vmatprep.mubr.bf16.mxu0 %v7174
        %9061 = vmatmul.mubr.bf16.gmra.mxu0 %v7173
        %v9062 = vpop.f32.mrf.mxu0
        %v9063 = vadd.f32 %v8870, %v9062
        %v9064 = vpop.f32.mrf.mxu0
        %v9065 = vadd.f32 %v8872, %v9064
        %v9066 = vpop.f32.mrf.mxu0
        %v9067 = vadd.f32 %v8874, %v9066
        %v9068 = vpop.f32.mrf.mxu0
        %v9069 = vadd.f32 %v8876, %v9068
        %9070 = vmatprep.mubr.bf16.mxu0 %v7182
        %9071 = vmatmul.mubr.bf16.gmra.mxu0 %v7181
        %v9072 = vpop.f32.mrf.mxu0
        %v9073 = vadd.f32 %v8880, %v9072
        %v9074 = vpop.f32.mrf.mxu0
        %v9075 = vadd.f32 %v8882, %v9074
        %v9076 = vpop.f32.mrf.mxu0
        %v9077 = vadd.f32 %v8884, %v9076
        %v9078 = vpop.f32.mrf.mxu0
        %v9079 = vadd.f32 %v8886, %v9078
        %9080 = vmatprep.mubr.bf16.mxu0 %v7190
        %9081 = vmatmul.mubr.bf16.gmra.mxu0 %v7189
        %v9082 = vpop.f32.mrf.mxu0
        %v9083 = vadd.f32 %v8890, %v9082
        %v9084 = vpop.f32.mrf.mxu0
        %v9085 = vadd.f32 %v8892, %v9084
        %v9086 = vpop.f32.mrf.mxu0
        %v9087 = vadd.f32 %v8894, %v9086
        %v9088 = vpop.f32.mrf.mxu0
        %v9089 = vadd.f32 %v8896, %v9088
        %9090 = vmatprep.mubr.bf16.mxu0 %v7198
        %9091 = vmatmul.mubr.bf16.gmra.mxu0 %v7197
        %v9092 = vpop.f32.mrf.mxu0
        %v9093 = vadd.f32 %v8900, %v9092
        %v9094 = vpop.f32.mrf.mxu0
        %v9095 = vadd.f32 %v8902, %v9094
        %v9096 = vpop.f32.mrf.mxu0
        %v9097 = vadd.f32 %v8904, %v9096
        %v9098 = vpop.f32.mrf.mxu0
        %v9099 = vadd.f32 %v8906, %v9098
        %9100 = vmatprep.mubr.bf16.mxu0 %v7206
        %9101 = vmatmul.mubr.bf16.gmra.mxu0 %v7205
        %v9102 = vpop.f32.mrf.mxu0
        %v9103 = vadd.f32 %v8910, %v9102
        %v9104 = vpop.f32.mrf.mxu0
        %v9105 = vadd.f32 %v8912, %v9104
        %v9106 = vpop.f32.mrf.mxu0
        %v9107 = vadd.f32 %v8914, %v9106
        %v9108 = vpop.f32.mrf.mxu0
        %v9109 = vadd.f32 %v8916, %v9108
        %9110 = vmatprep.mubr.bf16.mxu0 %v7214
        %9111 = vmatmul.mubr.bf16.gmra.mxu0 %v7213
        %v9112 = vpop.f32.mrf.mxu0
        %v9113 = vadd.f32 %v8920, %v9112
        %v9114 = vpop.f32.mrf.mxu0
        %v9115 = vadd.f32 %v8922, %v9114
        %v9116 = vpop.f32.mrf.mxu0
        %v9117 = vadd.f32 %v8924, %v9116
        %v9118 = vpop.f32.mrf.mxu0
        %v9119 = vadd.f32 %v8926, %v9118
        %9120 = vmatprep.mubr.bf16.mxu0 %v7222
        %9121 = vmatmul.mubr.bf16.gmra.mxu0 %v7221
        %v9122 = vpop.f32.mrf.mxu0
        %v9123 = vadd.f32 %v8930, %v9122
        %v9124 = vpop.f32.mrf.mxu0
        %v9125 = vadd.f32 %v8932, %v9124
        %v9126 = vpop.f32.mrf.mxu0
        %v9127 = vadd.f32 %v8934, %v9126
        %v9128 = vpop.f32.mrf.mxu0
        %v9129 = vadd.f32 %v8936, %v9128
        %9130 = vmatprep.mubr.bf16.mxu0 %v7230
        %9131 = vmatmul.mubr.bf16.gmra.mxu0 %v7229
        %v9132 = vpop.f32.mrf.mxu0
        %v9133 = vadd.f32 %v8940, %v9132
        %v9134 = vpop.f32.mrf.mxu0
        %v9135 = vadd.f32 %v8942, %v9134
        %v9136 = vpop.f32.mrf.mxu0
        %v9137 = vadd.f32 %v8944, %v9136
        %v9138 = vpop.f32.mrf.mxu0
        %v9139 = vadd.f32 %v8946, %v9138
        %9140 = vmatprep.mubr.bf16.mxu0 %v7238
        %9141 = vmatmul.mubr.bf16.gmra.mxu0 %v7237
        %v9142 = vpop.f32.mrf.mxu0
        %v9143 = vadd.f32 %v8950, %v9142
        %v9144 = vpop.f32.mrf.mxu0
        %v9145 = vadd.f32 %v8952, %v9144
        %v9146 = vpop.f32.mrf.mxu0
        %v9147 = vadd.f32 %v8954, %v9146
        %v9148 = vpop.f32.mrf.mxu0
        %v9149 = vadd.f32 %v8956, %v9148
        %9150 = vmatprep.mubr.bf16.mxu0 %v7246
        %9151 = vmatmul.mubr.bf16.gmra.mxu0 %v7245
        %v9152 = vpop.f32.mrf.mxu0
        %v9153 = vadd.f32 %v8960, %v9152
        %v9154 = vpop.f32.mrf.mxu0
        %v9155 = vadd.f32 %v8962, %v9154
        %v9156 = vpop.f32.mrf.mxu0
        %v9157 = vadd.f32 %v8964, %v9156
        %v9158 = vpop.f32.mrf.mxu0
        %v9159 = vadd.f32 %v8966, %v9158
        %9160 = vmatprep.mubr.bf16.mxu0 %v7254
        %9161 = vmatmul.mubr.bf16.gmra.mxu0 %v7253
        %v9162 = vpop.f32.mrf.mxu0
        %v9163 = vadd.f32 %v8970, %v9162
        %v9164 = vpop.f32.mrf.mxu0
        %v9165 = vadd.f32 %v8972, %v9164
        %v9166 = vpop.f32.mrf.mxu0
        %v9167 = vadd.f32 %v8974, %v9166
        %v9168 = vpop.f32.mrf.mxu0
        %v9169 = vadd.f32 %v8976, %v9168
        %9170 = vmatprep.mubr.bf16.mxu0 %v7262
        %9171 = vmatmul.mubr.bf16.gmra.mxu0 %v7261
        %v9172 = vpop.f32.mrf.mxu0
        %v9173 = vadd.f32 %v8980, %v9172
        %v9174 = vpop.f32.mrf.mxu0
        %v9175 = vadd.f32 %v8982, %v9174
        %v9176 = vpop.f32.mrf.mxu0
        %v9177 = vadd.f32 %v8984, %v9176
        %v9178 = vpop.f32.mrf.mxu0
        %v9179 = vadd.f32 %v8986, %v9178
        %9180 = vmatprep.mubr.bf16.mxu0 %v7270
        %9181 = vmatmul.mubr.bf16.gmra.mxu0 %v7269
        %v9182 = vpop.f32.mrf.mxu0
        %v9183 = vadd.f32 %v8990, %v9182
        %v9184 = vpop.f32.mrf.mxu0
        %v9185 = vadd.f32 %v8992, %v9184
        %v9186 = vpop.f32.mrf.mxu0
        %v9187 = vadd.f32 %v8994, %v9186
        %v9188 = vpop.f32.mrf.mxu0
        %v9189 = vadd.f32 %v8996, %v9188
        %9190 = vmatprep.mubr.bf16.mxu0 %v7278
        %9191 = vmatmul.mubr.bf16.gmra.mxu0 %v7277
        %v9192 = vpop.f32.mrf.mxu0
        %v9193 = vadd.f32 %v9000, %v9192
        %v9194 = vpop.f32.mrf.mxu0
        %v9195 = vadd.f32 %v9002, %v9194
        %v9196 = vpop.f32.mrf.mxu0
        %v9197 = vadd.f32 %v9004, %v9196
        %v9198 = vpop.f32.mrf.mxu0
        %v9199 = vadd.f32 %v9006, %v9198
        %9200 = vmatprep.mubr.bf16.mxu0 %v7286
        %9201 = vmatmul.mubr.bf16.gmra.mxu0 %v7285
        %v9202 = vpop.f32.mrf.mxu0
        %v9203 = vadd.f32 %v9010, %v9202
        %v9204 = vpop.f32.mrf.mxu0
        %v9205 = vadd.f32 %v9012, %v9204
        %v9206 = vpop.f32.mrf.mxu0
        %v9207 = vadd.f32 %v9014, %v9206
        %v9208 = vpop.f32.mrf.mxu0
        %v9209 = vadd.f32 %v9016, %v9208
        %9210 = vmatprep.mubr.bf16.mxu0 %v7294
        %9211 = vmatmul.mubr.bf16.gmra.mxu0 %v7293
        %v9212 = vpop.f32.mrf.mxu0
        %v9213 = vadd.f32 %v9020, %v9212
        %v9214 = vpop.f32.mrf.mxu0
        %v9215 = vadd.f32 %v9022, %v9214
        %v9216 = vpop.f32.mrf.mxu0
        %v9217 = vadd.f32 %v9024, %v9216
        %v9218 = vpop.f32.mrf.mxu0
        %v9219 = vadd.f32 %v9026, %v9218
        %9220 = vdwg.mxu0
        %9221 = vmatprep.subr.bf16.mxu0 %v8480
        %9222 = vmatpush1.bf16.msra.mxu0 %v8479
        %9223 = vmatprep.subr.bf16.mxu0 %v8476
        %9224 = vmatpush1.bf16.msra.mxu0 %v8475
        %9225 = vmatprep.subr.bf16.mxu0 %v8472
        %9226 = vmatpush1.bf16.msra.mxu0 %v8471
        %9227 = vmatprep.subr.bf16.mxu0 %v8468
        %9228 = vmatpush1.bf16.msra.mxu0 %v8467
        %9229 = vmatprep.subr.bf16.mxu0 %v8464
        %9230 = vmatpush1.bf16.msra.mxu0 %v8463
        %9231 = vmatprep.subr.bf16.mxu0 %v8460
        %9232 = vmatpush1.bf16.msra.mxu0 %v8459
        %9233 = vmatprep.subr.bf16.mxu0 %v8456
        %9234 = vmatpush1.bf16.msra.mxu0 %v8455
        %9235 = vmatprep.subr.bf16.mxu0 %v8452
        %9236 = vmatpush1.bf16.msra.mxu0 %v8451
        %9237 = vmatprep.subr.bf16.mxu0 %v8512
        %9238 = vmatpush2.bf16.msra.mxu0 %v8511
        %9239 = vmatprep.subr.bf16.mxu0 %v8508
        %9240 = vmatpush2.bf16.msra.mxu0 %v8507
        %9241 = vmatprep.subr.bf16.mxu0 %v8504
        %9242 = vmatpush2.bf16.msra.mxu0 %v8503
        %9243 = vmatprep.subr.bf16.mxu0 %v8500
        %9244 = vmatpush2.bf16.msra.mxu0 %v8499
        %9245 = vmatprep.subr.bf16.mxu0 %v8496
        %9246 = vmatpush2.bf16.msra.mxu0 %v8495
        %9247 = vmatprep.subr.bf16.mxu0 %v8492
        %9248 = vmatpush2.bf16.msra.mxu0 %v8491
        %9249 = vmatprep.subr.bf16.mxu0 %v8488
        %9250 = vmatpush2.bf16.msra.mxu0 %v8487
        %9251 = vmatprep.subr.bf16.mxu0 %v8484
        %9252 = vmatpush2.bf16.msra.mxu0 %v8483
        %9253 = vmatprep.mubr.bf16.mxu0 %v7176
        %9254 = vmatmul.mubr.bf16.gmra.mxu0 %v7175
        %v9255 = vpop.f32.mrf.mxu0
        %v9256 = vadd.f32 %v9063, %v9255
        %v9257 = vpop.f32.mrf.mxu0
        %v9258 = vadd.f32 %v9065, %v9257
        %v9259 = vpop.f32.mrf.mxu0
        %v9260 = vadd.f32 %v9067, %v9259
        %v9261 = vpop.f32.mrf.mxu0
        %v9262 = vadd.f32 %v9069, %v9261
        %9263 = vmatprep.mubr.bf16.mxu0 %v7184
        %9264 = vmatmul.mubr.bf16.gmra.mxu0 %v7183
        %v9265 = vpop.f32.mrf.mxu0
        %v9266 = vadd.f32 %v9073, %v9265
        %v9267 = vpop.f32.mrf.mxu0
        %v9268 = vadd.f32 %v9075, %v9267
        %v9269 = vpop.f32.mrf.mxu0
        %v9270 = vadd.f32 %v9077, %v9269
        %v9271 = vpop.f32.mrf.mxu0
        %v9272 = vadd.f32 %v9079, %v9271
        %9273 = vmatprep.mubr.bf16.mxu0 %v7192
        %9274 = vmatmul.mubr.bf16.gmra.mxu0 %v7191
        %v9275 = vpop.f32.mrf.mxu0
        %v9276 = vadd.f32 %v9083, %v9275
        %v9277 = vpop.f32.mrf.mxu0
        %v9278 = vadd.f32 %v9085, %v9277
        %v9279 = vpop.f32.mrf.mxu0
        %v9280 = vadd.f32 %v9087, %v9279
        %v9281 = vpop.f32.mrf.mxu0
        %v9282 = vadd.f32 %v9089, %v9281
        %9283 = vmatprep.mubr.bf16.mxu0 %v7200
        %9284 = vmatmul.mubr.bf16.gmra.mxu0 %v7199
        %v9285 = vpop.f32.mrf.mxu0
        %v9286 = vadd.f32 %v9093, %v9285
        %v9287 = vpop.f32.mrf.mxu0
        %v9288 = vadd.f32 %v9095, %v9287
        %v9289 = vpop.f32.mrf.mxu0
        %v9290 = vadd.f32 %v9097, %v9289
        %v9291 = vpop.f32.mrf.mxu0
        %v9292 = vadd.f32 %v9099, %v9291
        %9293 = vmatprep.mubr.bf16.mxu0 %v7208
        %9294 = vmatmul.mubr.bf16.gmra.mxu0 %v7207
        %v9295 = vpop.f32.mrf.mxu0
        %v9296 = vadd.f32 %v9103, %v9295
        %v9297 = vpop.f32.mrf.mxu0
        %v9298 = vadd.f32 %v9105, %v9297
        %v9299 = vpop.f32.mrf.mxu0
        %v9300 = vadd.f32 %v9107, %v9299
        %v9301 = vpop.f32.mrf.mxu0
        %v9302 = vadd.f32 %v9109, %v9301
        %9303 = vmatprep.mubr.bf16.mxu0 %v7216
        %9304 = vmatmul.mubr.bf16.gmra.mxu0 %v7215
        %v9305 = vpop.f32.mrf.mxu0
        %v9306 = vadd.f32 %v9113, %v9305
        %v9307 = vpop.f32.mrf.mxu0
        %v9308 = vadd.f32 %v9115, %v9307
        %v9309 = vpop.f32.mrf.mxu0
        %v9310 = vadd.f32 %v9117, %v9309
        %v9311 = vpop.f32.mrf.mxu0
        %v9312 = vadd.f32 %v9119, %v9311
        %9313 = vmatprep.mubr.bf16.mxu0 %v7224
        %9314 = vmatmul.mubr.bf16.gmra.mxu0 %v7223
        %v9315 = vpop.f32.mrf.mxu0
        %v9316 = vadd.f32 %v9123, %v9315
        %v9317 = vpop.f32.mrf.mxu0
        %v9318 = vadd.f32 %v9125, %v9317
        %v9319 = vpop.f32.mrf.mxu0
        %v9320 = vadd.f32 %v9127, %v9319
        %v9321 = vpop.f32.mrf.mxu0
        %v9322 = vadd.f32 %v9129, %v9321
        %9323 = vmatprep.mubr.bf16.mxu0 %v7232
        %9324 = vmatmul.mubr.bf16.gmra.mxu0 %v7231
        %v9325 = vpop.f32.mrf.mxu0
        %v9326 = vadd.f32 %v9133, %v9325
        %v9327 = vpop.f32.mrf.mxu0
        %v9328 = vadd.f32 %v9135, %v9327
        %v9329 = vpop.f32.mrf.mxu0
        %v9330 = vadd.f32 %v9137, %v9329
        %v9331 = vpop.f32.mrf.mxu0
        %v9332 = vadd.f32 %v9139, %v9331
        %9333 = vmatprep.mubr.bf16.mxu0 %v7240
        %9334 = vmatmul.mubr.bf16.gmra.mxu0 %v7239
        %v9335 = vpop.f32.mrf.mxu0
        %v9336 = vadd.f32 %v9143, %v9335
        %v9337 = vpop.f32.mrf.mxu0
        %v9338 = vadd.f32 %v9145, %v9337
        %v9339 = vpop.f32.mrf.mxu0
        %v9340 = vadd.f32 %v9147, %v9339
        %v9341 = vpop.f32.mrf.mxu0
        %v9342 = vadd.f32 %v9149, %v9341
        %9343 = vmatprep.mubr.bf16.mxu0 %v7248
        %9344 = vmatmul.mubr.bf16.gmra.mxu0 %v7247
        %v9345 = vpop.f32.mrf.mxu0
        %v9346 = vadd.f32 %v9153, %v9345
        %v9347 = vpop.f32.mrf.mxu0
        %v9348 = vadd.f32 %v9155, %v9347
        %v9349 = vpop.f32.mrf.mxu0
        %v9350 = vadd.f32 %v9157, %v9349
        %v9351 = vpop.f32.mrf.mxu0
        %v9352 = vadd.f32 %v9159, %v9351
        %9353 = vmatprep.mubr.bf16.mxu0 %v7256
        %9354 = vmatmul.mubr.bf16.gmra.mxu0 %v7255
        %v9355 = vpop.f32.mrf.mxu0
        %v9356 = vadd.f32 %v9163, %v9355
        %v9357 = vpop.f32.mrf.mxu0
        %v9358 = vadd.f32 %v9165, %v9357
        %v9359 = vpop.f32.mrf.mxu0
        %v9360 = vadd.f32 %v9167, %v9359
        %v9361 = vpop.f32.mrf.mxu0
        %v9362 = vadd.f32 %v9169, %v9361
        %9363 = vmatprep.mubr.bf16.mxu0 %v7264
        %9364 = vmatmul.mubr.bf16.gmra.mxu0 %v7263
        %v9365 = vpop.f32.mrf.mxu0
        %v9366 = vadd.f32 %v9173, %v9365
        %v9367 = vpop.f32.mrf.mxu0
        %v9368 = vadd.f32 %v9175, %v9367
        %v9369 = vpop.f32.mrf.mxu0
        %v9370 = vadd.f32 %v9177, %v9369
        %v9371 = vpop.f32.mrf.mxu0
        %v9372 = vadd.f32 %v9179, %v9371
        %9373 = vmatprep.mubr.bf16.mxu0 %v7272
        %9374 = vmatmul.mubr.bf16.gmra.mxu0 %v7271
        %v9375 = vpop.f32.mrf.mxu0
        %v9376 = vadd.f32 %v9183, %v9375
        %v9377 = vpop.f32.mrf.mxu0
        %v9378 = vadd.f32 %v9185, %v9377
        %v9379 = vpop.f32.mrf.mxu0
        %v9380 = vadd.f32 %v9187, %v9379
        %v9381 = vpop.f32.mrf.mxu0
        %v9382 = vadd.f32 %v9189, %v9381
        %9383 = vmatprep.mubr.bf16.mxu0 %v7280
        %9384 = vmatmul.mubr.bf16.gmra.mxu0 %v7279
        %v9385 = vpop.f32.mrf.mxu0
        %v9386 = vadd.f32 %v9193, %v9385
        %v9387 = vpop.f32.mrf.mxu0
        %v9388 = vadd.f32 %v9195, %v9387
        %v9389 = vpop.f32.mrf.mxu0
        %v9390 = vadd.f32 %v9197, %v9389
        %v9391 = vpop.f32.mrf.mxu0
        %v9392 = vadd.f32 %v9199, %v9391
        %9393 = vmatprep.mubr.bf16.mxu0 %v7288
        %9394 = vmatmul.mubr.bf16.gmra.mxu0 %v7287
        %v9395 = vpop.f32.mrf.mxu0
        %v9396 = vadd.f32 %v9203, %v9395
        %v9397 = vpop.f32.mrf.mxu0
        %v9398 = vadd.f32 %v9205, %v9397
        %v9399 = vpop.f32.mrf.mxu0
        %v9400 = vadd.f32 %v9207, %v9399
        %v9401 = vpop.f32.mrf.mxu0
        %v9402 = vadd.f32 %v9209, %v9401
        %9403 = vmatprep.mubr.bf16.mxu0 %v7296
        %9404 = vmatmul.mubr.bf16.gmra.mxu0 %v7295
        %v9405 = vpop.f32.mrf.mxu0
        %v9406 = vadd.f32 %v9213, %v9405
        %v9407 = vpop.f32.mrf.mxu0
        %v9408 = vadd.f32 %v9215, %v9407
        %v9409 = vpop.f32.mrf.mxu0
        %v9410 = vadd.f32 %v9217, %v9409
        %v9411 = vpop.f32.mrf.mxu0
        %v9412 = vadd.f32 %v9219, %v9411
        %9413 = vdwg.mxu0
        %9414 = vmatprep.subr.bf16.mxu0 %v8544
        %9415 = vmatpush1.bf16.msra.mxu0 %v8543
        %9416 = vmatprep.subr.bf16.mxu0 %v8540
        %9417 = vmatpush1.bf16.msra.mxu0 %v8539
        %9418 = vmatprep.subr.bf16.mxu0 %v8536
        %9419 = vmatpush1.bf16.msra.mxu0 %v8535
        %9420 = vmatprep.subr.bf16.mxu0 %v8532
        %9421 = vmatpush1.bf16.msra.mxu0 %v8531
        %9422 = vmatprep.subr.bf16.mxu0 %v8528
        %9423 = vmatpush1.bf16.msra.mxu0 %v8527
        %9424 = vmatprep.subr.bf16.mxu0 %v8524
        %9425 = vmatpush1.bf16.msra.mxu0 %v8523
        %9426 = vmatprep.subr.bf16.mxu0 %v8520
        %9427 = vmatpush1.bf16.msra.mxu0 %v8519
        %9428 = vmatprep.subr.bf16.mxu0 %v8516
        %9429 = vmatpush1.bf16.msra.mxu0 %v8515
        %9430 = vmatprep.subr.bf16.mxu0 %v8576
        %9431 = vmatpush2.bf16.msra.mxu0 %v8575
        %9432 = vmatprep.subr.bf16.mxu0 %v8572
        %9433 = vmatpush2.bf16.msra.mxu0 %v8571
        %9434 = vmatprep.subr.bf16.mxu0 %v8568
        %9435 = vmatpush2.bf16.msra.mxu0 %v8567
        %9436 = vmatprep.subr.bf16.mxu0 %v8564
        %9437 = vmatpush2.bf16.msra.mxu0 %v8563
        %9438 = vmatprep.subr.bf16.mxu0 %v8560
        %9439 = vmatpush2.bf16.msra.mxu0 %v8559
        %9440 = vmatprep.subr.bf16.mxu0 %v8556
        %9441 = vmatpush2.bf16.msra.mxu0 %v8555
        %9442 = vmatprep.subr.bf16.mxu0 %v8552
        %9443 = vmatpush2.bf16.msra.mxu0 %v8551
        %9444 = vmatprep.subr.bf16.mxu0 %v8548
        %9445 = vmatpush2.bf16.msra.mxu0 %v8547
        %9446 = vmatprep.mubr.bf16.mxu0 %v7178
        %9447 = vmatmul.mubr.bf16.gmra.mxu0 %v7177
        %v9448 = vpop.f32.mrf.mxu0
        %v9449 = vadd.f32 %v9256, %v9448
        %v9450 = vpop.f32.mrf.mxu0
        %v9451 = vadd.f32 %v9258, %v9450
        %v9452 = vpop.f32.mrf.mxu0
        %v9453 = vadd.f32 %v9260, %v9452
        %v9454 = vpop.f32.mrf.mxu0
        %v9455 = vadd.f32 %v9262, %v9454
        %9456 = vmatprep.mubr.bf16.mxu0 %v7186
        %9457 = vmatmul.mubr.bf16.gmra.mxu0 %v7185
        %v9458 = vpop.f32.mrf.mxu0
        %v9459 = vadd.f32 %v9266, %v9458
        %v9460 = vpop.f32.mrf.mxu0
        %v9461 = vadd.f32 %v9268, %v9460
        %v9462 = vpop.f32.mrf.mxu0
        %v9463 = vadd.f32 %v9270, %v9462
        %v9464 = vpop.f32.mrf.mxu0
        %v9465 = vadd.f32 %v9272, %v9464
        %9466 = vmatprep.mubr.bf16.mxu0 %v7194
        %9467 = vmatmul.mubr.bf16.gmra.mxu0 %v7193
        %v9468 = vpop.f32.mrf.mxu0
        %v9469 = vadd.f32 %v9276, %v9468
        %v9470 = vpop.f32.mrf.mxu0
        %v9471 = vadd.f32 %v9278, %v9470
        %v9472 = vpop.f32.mrf.mxu0
        %v9473 = vadd.f32 %v9280, %v9472
        %v9474 = vpop.f32.mrf.mxu0
        %v9475 = vadd.f32 %v9282, %v9474
        %9476 = vmatprep.mubr.bf16.mxu0 %v7202
        %9477 = vmatmul.mubr.bf16.gmra.mxu0 %v7201
        %v9478 = vpop.f32.mrf.mxu0
        %v9479 = vadd.f32 %v9286, %v9478
        %v9480 = vpop.f32.mrf.mxu0
        %v9481 = vadd.f32 %v9288, %v9480
        %v9482 = vpop.f32.mrf.mxu0
        %v9483 = vadd.f32 %v9290, %v9482
        %v9484 = vpop.f32.mrf.mxu0
        %v9485 = vadd.f32 %v9292, %v9484
        %9486 = vmatprep.mubr.bf16.mxu0 %v7210
        %9487 = vmatmul.mubr.bf16.gmra.mxu0 %v7209
        %v9488 = vpop.f32.mrf.mxu0
        %v9489 = vadd.f32 %v9296, %v9488
        %v9490 = vpop.f32.mrf.mxu0
        %v9491 = vadd.f32 %v9298, %v9490
        %v9492 = vpop.f32.mrf.mxu0
        %v9493 = vadd.f32 %v9300, %v9492
        %v9494 = vpop.f32.mrf.mxu0
        %v9495 = vadd.f32 %v9302, %v9494
        %9496 = vmatprep.mubr.bf16.mxu0 %v7218
        %9497 = vmatmul.mubr.bf16.gmra.mxu0 %v7217
        %v9498 = vpop.f32.mrf.mxu0
        %v9499 = vadd.f32 %v9306, %v9498
        %v9500 = vpop.f32.mrf.mxu0
        %v9501 = vadd.f32 %v9308, %v9500
        %v9502 = vpop.f32.mrf.mxu0
        %v9503 = vadd.f32 %v9310, %v9502
        %v9504 = vpop.f32.mrf.mxu0
        %v9505 = vadd.f32 %v9312, %v9504
        %9506 = vmatprep.mubr.bf16.mxu0 %v7226
        %9507 = vmatmul.mubr.bf16.gmra.mxu0 %v7225
        %v9508 = vpop.f32.mrf.mxu0
        %v9509 = vadd.f32 %v9316, %v9508
        %v9510 = vpop.f32.mrf.mxu0
        %v9511 = vadd.f32 %v9318, %v9510
        %v9512 = vpop.f32.mrf.mxu0
        %v9513 = vadd.f32 %v9320, %v9512
        %v9514 = vpop.f32.mrf.mxu0
        %v9515 = vadd.f32 %v9322, %v9514
        %9516 = vmatprep.mubr.bf16.mxu0 %v7234
        %9517 = vmatmul.mubr.bf16.gmra.mxu0 %v7233
        %v9518 = vpop.f32.mrf.mxu0
        %v9519 = vadd.f32 %v9326, %v9518
        %v9520 = vpop.f32.mrf.mxu0
        %v9521 = vadd.f32 %v9328, %v9520
        %v9522 = vpop.f32.mrf.mxu0
        %v9523 = vadd.f32 %v9330, %v9522
        %v9524 = vpop.f32.mrf.mxu0
        %v9525 = vadd.f32 %v9332, %v9524
        %9526 = vmatprep.mubr.bf16.mxu0 %v7242
        %9527 = vmatmul.mubr.bf16.gmra.mxu0 %v7241
        %v9528 = vpop.f32.mrf.mxu0
        %v9529 = vadd.f32 %v9336, %v9528
        %v9530 = vpop.f32.mrf.mxu0
        %v9531 = vadd.f32 %v9338, %v9530
        %v9532 = vpop.f32.mrf.mxu0
        %v9533 = vadd.f32 %v9340, %v9532
        %v9534 = vpop.f32.mrf.mxu0
        %v9535 = vadd.f32 %v9342, %v9534
        %9536 = vmatprep.mubr.bf16.mxu0 %v7250
        %9537 = vmatmul.mubr.bf16.gmra.mxu0 %v7249
        %v9538 = vpop.f32.mrf.mxu0
        %v9539 = vadd.f32 %v9346, %v9538
        %v9540 = vpop.f32.mrf.mxu0
        %v9541 = vadd.f32 %v9348, %v9540
        %v9542 = vpop.f32.mrf.mxu0
        %v9543 = vadd.f32 %v9350, %v9542
        %v9544 = vpop.f32.mrf.mxu0
        %v9545 = vadd.f32 %v9352, %v9544
        %9546 = vmatprep.mubr.bf16.mxu0 %v7258
        %9547 = vmatmul.mubr.bf16.gmra.mxu0 %v7257
        %v9548 = vpop.f32.mrf.mxu0
        %v9549 = vadd.f32 %v9356, %v9548
        %v9550 = vpop.f32.mrf.mxu0
        %v9551 = vadd.f32 %v9358, %v9550
        %v9552 = vpop.f32.mrf.mxu0
        %v9553 = vadd.f32 %v9360, %v9552
        %v9554 = vpop.f32.mrf.mxu0
        %v9555 = vadd.f32 %v9362, %v9554
        %9556 = vmatprep.mubr.bf16.mxu0 %v7266
        %9557 = vmatmul.mubr.bf16.gmra.mxu0 %v7265
        %v9558 = vpop.f32.mrf.mxu0
        %v9559 = vadd.f32 %v9366, %v9558
        %v9560 = vpop.f32.mrf.mxu0
        %v9561 = vadd.f32 %v9368, %v9560
        %v9562 = vpop.f32.mrf.mxu0
        %v9563 = vadd.f32 %v9370, %v9562
        %v9564 = vpop.f32.mrf.mxu0
        %v9565 = vadd.f32 %v9372, %v9564
        %9566 = vmatprep.mubr.bf16.mxu0 %v7274
        %9567 = vmatmul.mubr.bf16.gmra.mxu0 %v7273
        %v9568 = vpop.f32.mrf.mxu0
        %v9569 = vadd.f32 %v9376, %v9568
        %v9570 = vpop.f32.mrf.mxu0
        %v9571 = vadd.f32 %v9378, %v9570
        %v9572 = vpop.f32.mrf.mxu0
        %v9573 = vadd.f32 %v9380, %v9572
        %v9574 = vpop.f32.mrf.mxu0
        %v9575 = vadd.f32 %v9382, %v9574
        %9576 = vmatprep.mubr.bf16.mxu0 %v7282
        %9577 = vmatmul.mubr.bf16.gmra.mxu0 %v7281
        %v9578 = vpop.f32.mrf.mxu0
        %v9579 = vadd.f32 %v9386, %v9578
        %v9580 = vpop.f32.mrf.mxu0
        %v9581 = vadd.f32 %v9388, %v9580
        %v9582 = vpop.f32.mrf.mxu0
        %v9583 = vadd.f32 %v9390, %v9582
        %v9584 = vpop.f32.mrf.mxu0
        %v9585 = vadd.f32 %v9392, %v9584
        %9586 = vmatprep.mubr.bf16.mxu0 %v7290
        %9587 = vmatmul.mubr.bf16.gmra.mxu0 %v7289
        %v9588 = vpop.f32.mrf.mxu0
        %v9589 = vadd.f32 %v9396, %v9588
        %v9590 = vpop.f32.mrf.mxu0
        %v9591 = vadd.f32 %v9398, %v9590
        %v9592 = vpop.f32.mrf.mxu0
        %v9593 = vadd.f32 %v9400, %v9592
        %v9594 = vpop.f32.mrf.mxu0
        %v9595 = vadd.f32 %v9402, %v9594
        %9596 = vmatprep.mubr.bf16.mxu0 %v7298
        %9597 = vmatmul.mubr.bf16.gmra.mxu0 %v7297
        %v9598 = vpop.f32.mrf.mxu0
        %v9599 = vadd.f32 %v9406, %v9598
        %v9600 = vpop.f32.mrf.mxu0
        %v9601 = vadd.f32 %v9408, %v9600
        %v9602 = vpop.f32.mrf.mxu0
        %v9603 = vadd.f32 %v9410, %v9602
        %v9604 = vpop.f32.mrf.mxu0
        %v9605 = vadd.f32 %v9412, %v9604
        %9606 = vdwg.mxu0
        %9607 = vmatprep.subr.bf16.mxu0 %v8354
        %9608 = vmatpush1.bf16.msra.mxu0 %v8353
        %9609 = vmatprep.subr.bf16.mxu0 %v8350
        %9610 = vmatpush1.bf16.msra.mxu0 %v8349
        %9611 = vmatprep.subr.bf16.mxu0 %v8346
        %9612 = vmatpush1.bf16.msra.mxu0 %v8345
        %9613 = vmatprep.subr.bf16.mxu0 %v8342
        %9614 = vmatpush1.bf16.msra.mxu0 %v8341
        %9615 = vmatprep.subr.bf16.mxu0 %v8338
        %9616 = vmatpush1.bf16.msra.mxu0 %v8337
        %9617 = vmatprep.subr.bf16.mxu0 %v8334
        %9618 = vmatpush1.bf16.msra.mxu0 %v8333
        %9619 = vmatprep.subr.bf16.mxu0 %v8330
        %9620 = vmatpush1.bf16.msra.mxu0 %v8329
        %9621 = vmatprep.subr.bf16.mxu0 %v8326
        %9622 = vmatpush1.bf16.msra.mxu0 %v8325
        %9623 = vmatprep.subr.bf16.mxu0 %v8386
        %9624 = vmatpush2.bf16.msra.mxu0 %v8385
        %9625 = vmatprep.subr.bf16.mxu0 %v8382
        %9626 = vmatpush2.bf16.msra.mxu0 %v8381
        %9627 = vmatprep.subr.bf16.mxu0 %v8378
        %9628 = vmatpush2.bf16.msra.mxu0 %v8377
        %9629 = vmatprep.subr.bf16.mxu0 %v8374
        %9630 = vmatpush2.bf16.msra.mxu0 %v8373
        %9631 = vmatprep.subr.bf16.mxu0 %v8370
        %9632 = vmatpush2.bf16.msra.mxu0 %v8369
        %9633 = vmatprep.subr.bf16.mxu0 %v8366
        %9634 = vmatpush2.bf16.msra.mxu0 %v8365
        %9635 = vmatprep.subr.bf16.mxu0 %v8362
        %9636 = vmatpush2.bf16.msra.mxu0 %v8361
        %9637 = vmatprep.subr.bf16.mxu0 %v8358
        %9638 = vmatpush2.bf16.msra.mxu0 %v8357
        %9639 = vmatprep.mubr.bf16.mxu0 %v7172
        %9640 = vmatmul.mubr.bf16.gmra.mxu0 %v7171
        %v9641 = vpop.f32.mrf.mxu0
        %v9642 = vadd.f32 0.0, %v9641
        %v9643 = vpop.f32.mrf.mxu0
        %v9644 = vadd.f32 0.0, %v9643
        %v9645 = vpop.f32.mrf.mxu0
        %v9646 = vadd.f32 0.0, %v9645
        %v9647 = vpop.f32.mrf.mxu0
        %v9648 = vadd.f32 0.0, %v9647
        %9649 = vmatprep.mubr.bf16.mxu0 %v7180
        %9650 = vmatmul.mubr.bf16.gmra.mxu0 %v7179
        %v9651 = vpop.f32.mrf.mxu0
        %v9652 = vadd.f32 0.0, %v9651
        %v9653 = vpop.f32.mrf.mxu0
        %v9654 = vadd.f32 0.0, %v9653
        %v9655 = vpop.f32.mrf.mxu0
        %v9656 = vadd.f32 0.0, %v9655
        %v9657 = vpop.f32.mrf.mxu0
        %v9658 = vadd.f32 0.0, %v9657
        %9659 = vmatprep.mubr.bf16.mxu0 %v7188
        %9660 = vmatmul.mubr.bf16.gmra.mxu0 %v7187
        %v9661 = vpop.f32.mrf.mxu0
        %v9662 = vadd.f32 0.0, %v9661
        %v9663 = vpop.f32.mrf.mxu0
        %v9664 = vadd.f32 0.0, %v9663
        %v9665 = vpop.f32.mrf.mxu0
        %v9666 = vadd.f32 0.0, %v9665
        %v9667 = vpop.f32.mrf.mxu0
        %v9668 = vadd.f32 0.0, %v9667
        %9669 = vmatprep.mubr.bf16.mxu0 %v7196
        %9670 = vmatmul.mubr.bf16.gmra.mxu0 %v7195
        %v9671 = vpop.f32.mrf.mxu0
        %v9672 = vadd.f32 0.0, %v9671
        %v9673 = vpop.f32.mrf.mxu0
        %v9674 = vadd.f32 0.0, %v9673
        %v9675 = vpop.f32.mrf.mxu0
        %v9676 = vadd.f32 0.0, %v9675
        %v9677 = vpop.f32.mrf.mxu0
        %v9678 = vadd.f32 0.0, %v9677
        %9679 = vmatprep.mubr.bf16.mxu0 %v7204
        %9680 = vmatmul.mubr.bf16.gmra.mxu0 %v7203
        %v9681 = vpop.f32.mrf.mxu0
        %v9682 = vadd.f32 0.0, %v9681
        %v9683 = vpop.f32.mrf.mxu0
        %v9684 = vadd.f32 0.0, %v9683
        %v9685 = vpop.f32.mrf.mxu0
        %v9686 = vadd.f32 0.0, %v9685
        %v9687 = vpop.f32.mrf.mxu0
        %v9688 = vadd.f32 0.0, %v9687
        %9689 = vmatprep.mubr.bf16.mxu0 %v7212
        %9690 = vmatmul.mubr.bf16.gmra.mxu0 %v7211
        %v9691 = vpop.f32.mrf.mxu0
        %v9692 = vadd.f32 0.0, %v9691
        %v9693 = vpop.f32.mrf.mxu0
        %v9694 = vadd.f32 0.0, %v9693
        %v9695 = vpop.f32.mrf.mxu0
        %v9696 = vadd.f32 0.0, %v9695
        %v9697 = vpop.f32.mrf.mxu0
        %v9698 = vadd.f32 0.0, %v9697
        %9699 = vmatprep.mubr.bf16.mxu0 %v7220
        %9700 = vmatmul.mubr.bf16.gmra.mxu0 %v7219
        %v9701 = vpop.f32.mrf.mxu0
        %v9702 = vadd.f32 0.0, %v9701
        %v9703 = vpop.f32.mrf.mxu0
        %v9704 = vadd.f32 0.0, %v9703
        %v9705 = vpop.f32.mrf.mxu0
        %v9706 = vadd.f32 0.0, %v9705
        %v9707 = vpop.f32.mrf.mxu0
        %v9708 = vadd.f32 0.0, %v9707
        %9709 = vmatprep.mubr.bf16.mxu0 %v7228
        %9710 = vmatmul.mubr.bf16.gmra.mxu0 %v7227
        %v9711 = vpop.f32.mrf.mxu0
        %v9712 = vadd.f32 0.0, %v9711
        %v9713 = vpop.f32.mrf.mxu0
        %v9714 = vadd.f32 0.0, %v9713
        %v9715 = vpop.f32.mrf.mxu0
        %v9716 = vadd.f32 0.0, %v9715
        %v9717 = vpop.f32.mrf.mxu0
        %v9718 = vadd.f32 0.0, %v9717
        %9719 = vmatprep.mubr.bf16.mxu0 %v7236
        %9720 = vmatmul.mubr.bf16.gmra.mxu0 %v7235
        %v9721 = vpop.f32.mrf.mxu0
        %v9722 = vadd.f32 0.0, %v9721
        %v9723 = vpop.f32.mrf.mxu0
        %v9724 = vadd.f32 0.0, %v9723
        %v9725 = vpop.f32.mrf.mxu0
        %v9726 = vadd.f32 0.0, %v9725
        %v9727 = vpop.f32.mrf.mxu0
        %v9728 = vadd.f32 0.0, %v9727
        %9729 = vmatprep.mubr.bf16.mxu0 %v7244
        %9730 = vmatmul.mubr.bf16.gmra.mxu0 %v7243
        %v9731 = vpop.f32.mrf.mxu0
        %v9732 = vadd.f32 0.0, %v9731
        %v9733 = vpop.f32.mrf.mxu0
        %v9734 = vadd.f32 0.0, %v9733
        %v9735 = vpop.f32.mrf.mxu0
        %v9736 = vadd.f32 0.0, %v9735
        %v9737 = vpop.f32.mrf.mxu0
        %v9738 = vadd.f32 0.0, %v9737
        %9739 = vmatprep.mubr.bf16.mxu0 %v7252
        %9740 = vmatmul.mubr.bf16.gmra.mxu0 %v7251
        %v9741 = vpop.f32.mrf.mxu0
        %v9742 = vadd.f32 0.0, %v9741
        %v9743 = vpop.f32.mrf.mxu0
        %v9744 = vadd.f32 0.0, %v9743
        %v9745 = vpop.f32.mrf.mxu0
        %v9746 = vadd.f32 0.0, %v9745
        %v9747 = vpop.f32.mrf.mxu0
        %v9748 = vadd.f32 0.0, %v9747
        %9749 = vmatprep.mubr.bf16.mxu0 %v7260
        %9750 = vmatmul.mubr.bf16.gmra.mxu0 %v7259
        %v9751 = vpop.f32.mrf.mxu0
        %v9752 = vadd.f32 0.0, %v9751
        %v9753 = vpop.f32.mrf.mxu0
        %v9754 = vadd.f32 0.0, %v9753
        %v9755 = vpop.f32.mrf.mxu0
        %v9756 = vadd.f32 0.0, %v9755
        %v9757 = vpop.f32.mrf.mxu0
        %v9758 = vadd.f32 0.0, %v9757
        %9759 = vmatprep.mubr.bf16.mxu0 %v7268
        %9760 = vmatmul.mubr.bf16.gmra.mxu0 %v7267
        %v9761 = vpop.f32.mrf.mxu0
        %v9762 = vadd.f32 0.0, %v9761
        %v9763 = vpop.f32.mrf.mxu0
        %v9764 = vadd.f32 0.0, %v9763
        %v9765 = vpop.f32.mrf.mxu0
        %v9766 = vadd.f32 0.0, %v9765
        %v9767 = vpop.f32.mrf.mxu0
        %v9768 = vadd.f32 0.0, %v9767
        %9769 = vmatprep.mubr.bf16.mxu0 %v7276
        %9770 = vmatmul.mubr.bf16.gmra.mxu0 %v7275
        %v9771 = vpop.f32.mrf.mxu0
        %v9772 = vadd.f32 0.0, %v9771
        %v9773 = vpop.f32.mrf.mxu0
        %v9774 = vadd.f32 0.0, %v9773
        %v9775 = vpop.f32.mrf.mxu0
        %v9776 = vadd.f32 0.0, %v9775
        %v9777 = vpop.f32.mrf.mxu0
        %v9778 = vadd.f32 0.0, %v9777
        %9779 = vmatprep.mubr.bf16.mxu0 %v7284
        %9780 = vmatmul.mubr.bf16.gmra.mxu0 %v7283
        %v9781 = vpop.f32.mrf.mxu0
        %v9782 = vadd.f32 0.0, %v9781
        %v9783 = vpop.f32.mrf.mxu0
        %v9784 = vadd.f32 0.0, %v9783
        %v9785 = vpop.f32.mrf.mxu0
        %v9786 = vadd.f32 0.0, %v9785
        %v9787 = vpop.f32.mrf.mxu0
        %v9788 = vadd.f32 0.0, %v9787
        %9789 = vmatprep.mubr.bf16.mxu0 %v7292
        %9790 = vmatmul.mubr.bf16.gmra.mxu0 %v7291
        %v9791 = vpop.f32.mrf.mxu0
        %v9792 = vadd.f32 0.0, %v9791
        %v9793 = vpop.f32.mrf.mxu0
        %v9794 = vadd.f32 0.0, %v9793
        %v9795 = vpop.f32.mrf.mxu0
        %v9796 = vadd.f32 0.0, %v9795
        %v9797 = vpop.f32.mrf.mxu0
        %v9798 = vadd.f32 0.0, %v9797
        %9799 = vdwg.mxu0
        %9800 = vmatprep.subr.bf16.mxu0 %v8418
        %9801 = vmatpush1.bf16.msra.mxu0 %v8417
        %9802 = vmatprep.subr.bf16.mxu0 %v8414
        %9803 = vmatpush1.bf16.msra.mxu0 %v8413
        %9804 = vmatprep.subr.bf16.mxu0 %v8410
        %9805 = vmatpush1.bf16.msra.mxu0 %v8409
        %9806 = vmatprep.subr.bf16.mxu0 %v8406
        %9807 = vmatpush1.bf16.msra.mxu0 %v8405
        %9808 = vmatprep.subr.bf16.mxu0 %v8402
        %9809 = vmatpush1.bf16.msra.mxu0 %v8401
        %9810 = vmatprep.subr.bf16.mxu0 %v8398
        %9811 = vmatpush1.bf16.msra.mxu0 %v8397
        %9812 = vmatprep.subr.bf16.mxu0 %v8394
        %9813 = vmatpush1.bf16.msra.mxu0 %v8393
        %9814 = vmatprep.subr.bf16.mxu0 %v8390
        %9815 = vmatpush1.bf16.msra.mxu0 %v8389
        %9816 = vmatprep.subr.bf16.mxu0 %v8450
        %9817 = vmatpush2.bf16.msra.mxu0 %v8449
        %9818 = vmatprep.subr.bf16.mxu0 %v8446
        %9819 = vmatpush2.bf16.msra.mxu0 %v8445
        %9820 = vmatprep.subr.bf16.mxu0 %v8442
        %9821 = vmatpush2.bf16.msra.mxu0 %v8441
        %9822 = vmatprep.subr.bf16.mxu0 %v8438
        %9823 = vmatpush2.bf16.msra.mxu0 %v8437
        %9824 = vmatprep.subr.bf16.mxu0 %v8434
        %9825 = vmatpush2.bf16.msra.mxu0 %v8433
        %9826 = vmatprep.subr.bf16.mxu0 %v8430
        %9827 = vmatpush2.bf16.msra.mxu0 %v8429
        %9828 = vmatprep.subr.bf16.mxu0 %v8426
        %9829 = vmatpush2.bf16.msra.mxu0 %v8425
        %9830 = vmatprep.subr.bf16.mxu0 %v8422
        %9831 = vmatpush2.bf16.msra.mxu0 %v8421
        %9832 = vmatprep.mubr.bf16.mxu0 %v7174
        %9833 = vmatmul.mubr.bf16.gmra.mxu0 %v7173
        %v9834 = vpop.f32.mrf.mxu0
        %v9835 = vadd.f32 %v9642, %v9834
        %v9836 = vpop.f32.mrf.mxu0
        %v9837 = vadd.f32 %v9644, %v9836
        %v9838 = vpop.f32.mrf.mxu0
        %v9839 = vadd.f32 %v9646, %v9838
        %v9840 = vpop.f32.mrf.mxu0
        %v9841 = vadd.f32 %v9648, %v9840
        %9842 = vmatprep.mubr.bf16.mxu0 %v7182
        %9843 = vmatmul.mubr.bf16.gmra.mxu0 %v7181
        %v9844 = vpop.f32.mrf.mxu0
        %v9845 = vadd.f32 %v9652, %v9844
        %v9846 = vpop.f32.mrf.mxu0
        %v9847 = vadd.f32 %v9654, %v9846
        %v9848 = vpop.f32.mrf.mxu0
        %v9849 = vadd.f32 %v9656, %v9848
        %v9850 = vpop.f32.mrf.mxu0
        %v9851 = vadd.f32 %v9658, %v9850
        %9852 = vmatprep.mubr.bf16.mxu0 %v7190
        %9853 = vmatmul.mubr.bf16.gmra.mxu0 %v7189
        %v9854 = vpop.f32.mrf.mxu0
        %v9855 = vadd.f32 %v9662, %v9854
        %v9856 = vpop.f32.mrf.mxu0
        %v9857 = vadd.f32 %v9664, %v9856
        %v9858 = vpop.f32.mrf.mxu0
        %v9859 = vadd.f32 %v9666, %v9858
        %v9860 = vpop.f32.mrf.mxu0
        %v9861 = vadd.f32 %v9668, %v9860
        %9862 = vmatprep.mubr.bf16.mxu0 %v7198
        %9863 = vmatmul.mubr.bf16.gmra.mxu0 %v7197
        %v9864 = vpop.f32.mrf.mxu0
        %v9865 = vadd.f32 %v9672, %v9864
        %v9866 = vpop.f32.mrf.mxu0
        %v9867 = vadd.f32 %v9674, %v9866
        %v9868 = vpop.f32.mrf.mxu0
        %v9869 = vadd.f32 %v9676, %v9868
        %v9870 = vpop.f32.mrf.mxu0
        %v9871 = vadd.f32 %v9678, %v9870
        %9872 = vmatprep.mubr.bf16.mxu0 %v7206
        %9873 = vmatmul.mubr.bf16.gmra.mxu0 %v7205
        %v9874 = vpop.f32.mrf.mxu0
        %v9875 = vadd.f32 %v9682, %v9874
        %v9876 = vpop.f32.mrf.mxu0
        %v9877 = vadd.f32 %v9684, %v9876
        %v9878 = vpop.f32.mrf.mxu0
        %v9879 = vadd.f32 %v9686, %v9878
        %v9880 = vpop.f32.mrf.mxu0
        %v9881 = vadd.f32 %v9688, %v9880
        %9882 = vmatprep.mubr.bf16.mxu0 %v7214
        %9883 = vmatmul.mubr.bf16.gmra.mxu0 %v7213
        %v9884 = vpop.f32.mrf.mxu0
        %v9885 = vadd.f32 %v9692, %v9884
        %v9886 = vpop.f32.mrf.mxu0
        %v9887 = vadd.f32 %v9694, %v9886
        %v9888 = vpop.f32.mrf.mxu0
        %v9889 = vadd.f32 %v9696, %v9888
        %v9890 = vpop.f32.mrf.mxu0
        %v9891 = vadd.f32 %v9698, %v9890
        %9892 = vmatprep.mubr.bf16.mxu0 %v7222
        %9893 = vmatmul.mubr.bf16.gmra.mxu0 %v7221
        %v9894 = vpop.f32.mrf.mxu0
        %v9895 = vadd.f32 %v9702, %v9894
        %v9896 = vpop.f32.mrf.mxu0
        %v9897 = vadd.f32 %v9704, %v9896
        %v9898 = vpop.f32.mrf.mxu0
        %v9899 = vadd.f32 %v9706, %v9898
        %v9900 = vpop.f32.mrf.mxu0
        %v9901 = vadd.f32 %v9708, %v9900
        %9902 = vmatprep.mubr.bf16.mxu0 %v7230
        %9903 = vmatmul.mubr.bf16.gmra.mxu0 %v7229
        %v9904 = vpop.f32.mrf.mxu0
        %v9905 = vadd.f32 %v9712, %v9904
        %v9906 = vpop.f32.mrf.mxu0
        %v9907 = vadd.f32 %v9714, %v9906
        %v9908 = vpop.f32.mrf.mxu0
        %v9909 = vadd.f32 %v9716, %v9908
        %v9910 = vpop.f32.mrf.mxu0
        %v9911 = vadd.f32 %v9718, %v9910
        %9912 = vmatprep.mubr.bf16.mxu0 %v7238
        %9913 = vmatmul.mubr.bf16.gmra.mxu0 %v7237
        %v9914 = vpop.f32.mrf.mxu0
        %v9915 = vadd.f32 %v9722, %v9914
        %v9916 = vpop.f32.mrf.mxu0
        %v9917 = vadd.f32 %v9724, %v9916
        %v9918 = vpop.f32.mrf.mxu0
        %v9919 = vadd.f32 %v9726, %v9918
        %v9920 = vpop.f32.mrf.mxu0
        %v9921 = vadd.f32 %v9728, %v9920
        %9922 = vmatprep.mubr.bf16.mxu0 %v7246
        %9923 = vmatmul.mubr.bf16.gmra.mxu0 %v7245
        %v9924 = vpop.f32.mrf.mxu0
        %v9925 = vadd.f32 %v9732, %v9924
        %v9926 = vpop.f32.mrf.mxu0
        %v9927 = vadd.f32 %v9734, %v9926
        %v9928 = vpop.f32.mrf.mxu0
        %v9929 = vadd.f32 %v9736, %v9928
        %v9930 = vpop.f32.mrf.mxu0
        %v9931 = vadd.f32 %v9738, %v9930
        %9932 = vmatprep.mubr.bf16.mxu0 %v7254
        %9933 = vmatmul.mubr.bf16.gmra.mxu0 %v7253
        %v9934 = vpop.f32.mrf.mxu0
        %v9935 = vadd.f32 %v9742, %v9934
        %v9936 = vpop.f32.mrf.mxu0
        %v9937 = vadd.f32 %v9744, %v9936
        %v9938 = vpop.f32.mrf.mxu0
        %v9939 = vadd.f32 %v9746, %v9938
        %v9940 = vpop.f32.mrf.mxu0
        %v9941 = vadd.f32 %v9748, %v9940
        %9942 = vmatprep.mubr.bf16.mxu0 %v7262
        %9943 = vmatmul.mubr.bf16.gmra.mxu0 %v7261
        %v9944 = vpop.f32.mrf.mxu0
        %v9945 = vadd.f32 %v9752, %v9944
        %v9946 = vpop.f32.mrf.mxu0
        %v9947 = vadd.f32 %v9754, %v9946
        %v9948 = vpop.f32.mrf.mxu0
        %v9949 = vadd.f32 %v9756, %v9948
        %v9950 = vpop.f32.mrf.mxu0
        %v9951 = vadd.f32 %v9758, %v9950
        %9952 = vmatprep.mubr.bf16.mxu0 %v7270
        %9953 = vmatmul.mubr.bf16.gmra.mxu0 %v7269
        %v9954 = vpop.f32.mrf.mxu0
        %v9955 = vadd.f32 %v9762, %v9954
        %v9956 = vpop.f32.mrf.mxu0
        %v9957 = vadd.f32 %v9764, %v9956
        %v9958 = vpop.f32.mrf.mxu0
        %v9959 = vadd.f32 %v9766, %v9958
        %v9960 = vpop.f32.mrf.mxu0
        %v9961 = vadd.f32 %v9768, %v9960
        %9962 = vmatprep.mubr.bf16.mxu0 %v7278
        %9963 = vmatmul.mubr.bf16.gmra.mxu0 %v7277
        %v9964 = vpop.f32.mrf.mxu0
        %v9965 = vadd.f32 %v9772, %v9964
        %v9966 = vpop.f32.mrf.mxu0
        %v9967 = vadd.f32 %v9774, %v9966
        %v9968 = vpop.f32.mrf.mxu0
        %v9969 = vadd.f32 %v9776, %v9968
        %v9970 = vpop.f32.mrf.mxu0
        %v9971 = vadd.f32 %v9778, %v9970
        %9972 = vmatprep.mubr.bf16.mxu0 %v7286
        %9973 = vmatmul.mubr.bf16.gmra.mxu0 %v7285
        %v9974 = vpop.f32.mrf.mxu0
        %v9975 = vadd.f32 %v9782, %v9974
        %v9976 = vpop.f32.mrf.mxu0
        %v9977 = vadd.f32 %v9784, %v9976
        %v9978 = vpop.f32.mrf.mxu0
        %v9979 = vadd.f32 %v9786, %v9978
        %v9980 = vpop.f32.mrf.mxu0
        %v9981 = vadd.f32 %v9788, %v9980
        %9982 = vmatprep.mubr.bf16.mxu0 %v7294
        %9983 = vmatmul.mubr.bf16.gmra.mxu0 %v7293
        %v9984 = vpop.f32.mrf.mxu0
        %v9985 = vadd.f32 %v9792, %v9984
        %v9986 = vpop.f32.mrf.mxu0
        %v9987 = vadd.f32 %v9794, %v9986
        %v9988 = vpop.f32.mrf.mxu0
        %v9989 = vadd.f32 %v9796, %v9988
        %v9990 = vpop.f32.mrf.mxu0
        %v9991 = vadd.f32 %v9798, %v9990
        %9992 = vdwg.mxu0
        %9993 = vmatprep.subr.bf16.mxu0 %v8482
        %9994 = vmatpush1.bf16.msra.mxu0 %v8481
        %9995 = vmatprep.subr.bf16.mxu0 %v8478
        %9996 = vmatpush1.bf16.msra.mxu0 %v8477
        %9997 = vmatprep.subr.bf16.mxu0 %v8474
        %9998 = vmatpush1.bf16.msra.mxu0 %v8473
        %9999 = vmatprep.subr.bf16.mxu0 %v8470
        %10000 = vmatpush1.bf16.msra.mxu0 %v8469
        %10001 = vmatprep.subr.bf16.mxu0 %v8466
        %10002 = vmatpush1.bf16.msra.mxu0 %v8465
        %10003 = vmatprep.subr.bf16.mxu0 %v8462
        %10004 = vmatpush1.bf16.msra.mxu0 %v8461
        %10005 = vmatprep.subr.bf16.mxu0 %v8458
        %10006 = vmatpush1.bf16.msra.mxu0 %v8457
        %10007 = vmatprep.subr.bf16.mxu0 %v8454
        %10008 = vmatpush1.bf16.msra.mxu0 %v8453
        %10009 = vmatprep.subr.bf16.mxu0 %v8514
        %10010 = vmatpush2.bf16.msra.mxu0 %v8513
        %10011 = vmatprep.subr.bf16.mxu0 %v8510
        %10012 = vmatpush2.bf16.msra.mxu0 %v8509
        %10013 = vmatprep.subr.bf16.mxu0 %v8506
        %10014 = vmatpush2.bf16.msra.mxu0 %v8505
        %10015 = vmatprep.subr.bf16.mxu0 %v8502
        %10016 = vmatpush2.bf16.msra.mxu0 %v8501
        %10017 = vmatprep.subr.bf16.mxu0 %v8498
        %10018 = vmatpush2.bf16.msra.mxu0 %v8497
        %10019 = vmatprep.subr.bf16.mxu0 %v8494
        %10020 = vmatpush2.bf16.msra.mxu0 %v8493
        %10021 = vmatprep.subr.bf16.mxu0 %v8490
        %10022 = vmatpush2.bf16.msra.mxu0 %v8489
        %10023 = vmatprep.subr.bf16.mxu0 %v8486
        %10024 = vmatpush2.bf16.msra.mxu0 %v8485
        %10025 = vmatprep.mubr.bf16.mxu0 %v7176
        %10026 = vmatmul.mubr.bf16.gmra.mxu0 %v7175
        %v10027 = vpop.f32.mrf.mxu0
        %v10028 = vadd.f32 %v9835, %v10027
        %v10029 = vpop.f32.mrf.mxu0
        %v10030 = vadd.f32 %v9837, %v10029
        %v10031 = vpop.f32.mrf.mxu0
        %v10032 = vadd.f32 %v9839, %v10031
        %v10033 = vpop.f32.mrf.mxu0
        %v10034 = vadd.f32 %v9841, %v10033
        %10035 = vmatprep.mubr.bf16.mxu0 %v7184
        %10036 = vmatmul.mubr.bf16.gmra.mxu0 %v7183
        %v10037 = vpop.f32.mrf.mxu0
        %v10038 = vadd.f32 %v9845, %v10037
        %v10039 = vpop.f32.mrf.mxu0
        %v10040 = vadd.f32 %v9847, %v10039
        %v10041 = vpop.f32.mrf.mxu0
        %v10042 = vadd.f32 %v9849, %v10041
        %v10043 = vpop.f32.mrf.mxu0
        %v10044 = vadd.f32 %v9851, %v10043
        %10045 = vmatprep.mubr.bf16.mxu0 %v7192
        %10046 = vmatmul.mubr.bf16.gmra.mxu0 %v7191
        %v10047 = vpop.f32.mrf.mxu0
        %v10048 = vadd.f32 %v9855, %v10047
        %v10049 = vpop.f32.mrf.mxu0
        %v10050 = vadd.f32 %v9857, %v10049
        %v10051 = vpop.f32.mrf.mxu0
        %v10052 = vadd.f32 %v9859, %v10051
        %v10053 = vpop.f32.mrf.mxu0
        %v10054 = vadd.f32 %v9861, %v10053
        %10055 = vmatprep.mubr.bf16.mxu0 %v7200
        %10056 = vmatmul.mubr.bf16.gmra.mxu0 %v7199
        %v10057 = vpop.f32.mrf.mxu0
        %v10058 = vadd.f32 %v9865, %v10057
        %v10059 = vpop.f32.mrf.mxu0
        %v10060 = vadd.f32 %v9867, %v10059
        %v10061 = vpop.f32.mrf.mxu0
        %v10062 = vadd.f32 %v9869, %v10061
        %v10063 = vpop.f32.mrf.mxu0
        %v10064 = vadd.f32 %v9871, %v10063
        %10065 = vmatprep.mubr.bf16.mxu0 %v7208
        %10066 = vmatmul.mubr.bf16.gmra.mxu0 %v7207
        %v10067 = vpop.f32.mrf.mxu0
        %v10068 = vadd.f32 %v9875, %v10067
        %v10069 = vpop.f32.mrf.mxu0
        %v10070 = vadd.f32 %v9877, %v10069
        %v10071 = vpop.f32.mrf.mxu0
        %v10072 = vadd.f32 %v9879, %v10071
        %v10073 = vpop.f32.mrf.mxu0
        %v10074 = vadd.f32 %v9881, %v10073
        %10075 = vmatprep.mubr.bf16.mxu0 %v7216
        %10076 = vmatmul.mubr.bf16.gmra.mxu0 %v7215
        %v10077 = vpop.f32.mrf.mxu0
        %v10078 = vadd.f32 %v9885, %v10077
        %v10079 = vpop.f32.mrf.mxu0
        %v10080 = vadd.f32 %v9887, %v10079
        %v10081 = vpop.f32.mrf.mxu0
        %v10082 = vadd.f32 %v9889, %v10081
        %v10083 = vpop.f32.mrf.mxu0
        %v10084 = vadd.f32 %v9891, %v10083
        %10085 = vmatprep.mubr.bf16.mxu0 %v7224
        %10086 = vmatmul.mubr.bf16.gmra.mxu0 %v7223
        %v10087 = vpop.f32.mrf.mxu0
        %v10088 = vadd.f32 %v9895, %v10087
        %v10089 = vpop.f32.mrf.mxu0
        %v10090 = vadd.f32 %v9897, %v10089
        %v10091 = vpop.f32.mrf.mxu0
        %v10092 = vadd.f32 %v9899, %v10091
        %v10093 = vpop.f32.mrf.mxu0
        %v10094 = vadd.f32 %v9901, %v10093
        %10095 = vmatprep.mubr.bf16.mxu0 %v7232
        %10096 = vmatmul.mubr.bf16.gmra.mxu0 %v7231
        %v10097 = vpop.f32.mrf.mxu0
        %v10098 = vadd.f32 %v9905, %v10097
        %v10099 = vpop.f32.mrf.mxu0
        %v10100 = vadd.f32 %v9907, %v10099
        %v10101 = vpop.f32.mrf.mxu0
        %v10102 = vadd.f32 %v9909, %v10101
        %v10103 = vpop.f32.mrf.mxu0
        %v10104 = vadd.f32 %v9911, %v10103
        %10105 = vmatprep.mubr.bf16.mxu0 %v7240
        %10106 = vmatmul.mubr.bf16.gmra.mxu0 %v7239
        %v10107 = vpop.f32.mrf.mxu0
        %v10108 = vadd.f32 %v9915, %v10107
        %v10109 = vpop.f32.mrf.mxu0
        %v10110 = vadd.f32 %v9917, %v10109
        %v10111 = vpop.f32.mrf.mxu0
        %v10112 = vadd.f32 %v9919, %v10111
        %v10113 = vpop.f32.mrf.mxu0
        %v10114 = vadd.f32 %v9921, %v10113
        %10115 = vmatprep.mubr.bf16.mxu0 %v7248
        %10116 = vmatmul.mubr.bf16.gmra.mxu0 %v7247
        %v10117 = vpop.f32.mrf.mxu0
        %v10118 = vadd.f32 %v9925, %v10117
        %v10119 = vpop.f32.mrf.mxu0
        %v10120 = vadd.f32 %v9927, %v10119
        %v10121 = vpop.f32.mrf.mxu0
        %v10122 = vadd.f32 %v9929, %v10121
        %v10123 = vpop.f32.mrf.mxu0
        %v10124 = vadd.f32 %v9931, %v10123
        %10125 = vmatprep.mubr.bf16.mxu0 %v7256
        %10126 = vmatmul.mubr.bf16.gmra.mxu0 %v7255
        %v10127 = vpop.f32.mrf.mxu0
        %v10128 = vadd.f32 %v9935, %v10127
        %v10129 = vpop.f32.mrf.mxu0
        %v10130 = vadd.f32 %v9937, %v10129
        %v10131 = vpop.f32.mrf.mxu0
        %v10132 = vadd.f32 %v9939, %v10131
        %v10133 = vpop.f32.mrf.mxu0
        %v10134 = vadd.f32 %v9941, %v10133
        %10135 = vmatprep.mubr.bf16.mxu0 %v7264
        %10136 = vmatmul.mubr.bf16.gmra.mxu0 %v7263
        %v10137 = vpop.f32.mrf.mxu0
        %v10138 = vadd.f32 %v9945, %v10137
        %v10139 = vpop.f32.mrf.mxu0
        %v10140 = vadd.f32 %v9947, %v10139
        %v10141 = vpop.f32.mrf.mxu0
        %v10142 = vadd.f32 %v9949, %v10141
        %v10143 = vpop.f32.mrf.mxu0
        %v10144 = vadd.f32 %v9951, %v10143
        %10145 = vmatprep.mubr.bf16.mxu0 %v7272
        %10146 = vmatmul.mubr.bf16.gmra.mxu0 %v7271
        %v10147 = vpop.f32.mrf.mxu0
        %v10148 = vadd.f32 %v9955, %v10147
        %v10149 = vpop.f32.mrf.mxu0
        %v10150 = vadd.f32 %v9957, %v10149
        %v10151 = vpop.f32.mrf.mxu0
        %v10152 = vadd.f32 %v9959, %v10151
        %v10153 = vpop.f32.mrf.mxu0
        %v10154 = vadd.f32 %v9961, %v10153
        %10155 = vmatprep.mubr.bf16.mxu0 %v7280
        %10156 = vmatmul.mubr.bf16.gmra.mxu0 %v7279
        %v10157 = vpop.f32.mrf.mxu0
        %v10158 = vadd.f32 %v9965, %v10157
        %v10159 = vpop.f32.mrf.mxu0
        %v10160 = vadd.f32 %v9967, %v10159
        %v10161 = vpop.f32.mrf.mxu0
        %v10162 = vadd.f32 %v9969, %v10161
        %v10163 = vpop.f32.mrf.mxu0
        %v10164 = vadd.f32 %v9971, %v10163
        %10165 = vmatprep.mubr.bf16.mxu0 %v7288
        %10166 = vmatmul.mubr.bf16.gmra.mxu0 %v7287
        %v10167 = vpop.f32.mrf.mxu0
        %v10168 = vadd.f32 %v9975, %v10167
        %v10169 = vpop.f32.mrf.mxu0
        %v10170 = vadd.f32 %v9977, %v10169
        %v10171 = vpop.f32.mrf.mxu0
        %v10172 = vadd.f32 %v9979, %v10171
        %v10173 = vpop.f32.mrf.mxu0
        %v10174 = vadd.f32 %v9981, %v10173
        %10175 = vmatprep.mubr.bf16.mxu0 %v7296
        %10176 = vmatmul.mubr.bf16.gmra.mxu0 %v7295
        %v10177 = vpop.f32.mrf.mxu0
        %v10178 = vadd.f32 %v9985, %v10177
        %v10179 = vpop.f32.mrf.mxu0
        %v10180 = vadd.f32 %v9987, %v10179
        %v10181 = vpop.f32.mrf.mxu0
        %v10182 = vadd.f32 %v9989, %v10181
        %v10183 = vpop.f32.mrf.mxu0
        %v10184 = vadd.f32 %v9991, %v10183
        %10185 = vdwg.mxu0
        %10186 = vmatprep.subr.bf16.mxu0 %v8546
        %10187 = vmatpush1.bf16.msra.mxu0 %v8545
        %10188 = vmatprep.subr.bf16.mxu0 %v8542
        %10189 = vmatpush1.bf16.msra.mxu0 %v8541
        %10190 = vmatprep.subr.bf16.mxu0 %v8538
        %10191 = vmatpush1.bf16.msra.mxu0 %v8537
        %10192 = vmatprep.subr.bf16.mxu0 %v8534
        %10193 = vmatpush1.bf16.msra.mxu0 %v8533
        %10194 = vmatprep.subr.bf16.mxu0 %v8530
        %10195 = vmatpush1.bf16.msra.mxu0 %v8529
        %10196 = vmatprep.subr.bf16.mxu0 %v8526
        %10197 = vmatpush1.bf16.msra.mxu0 %v8525
        %10198 = vmatprep.subr.bf16.mxu0 %v8522
        %10199 = vmatpush1.bf16.msra.mxu0 %v8521
        %10200 = vmatprep.subr.bf16.mxu0 %v8518
        %10201 = vmatpush1.bf16.msra.mxu0 %v8517
        %10202 = vmatprep.subr.bf16.mxu0 %v8578
        %10203 = vmatpush2.bf16.msra.mxu0 %v8577
        %10204 = vmatprep.subr.bf16.mxu0 %v8574
        %10205 = vmatpush2.bf16.msra.mxu0 %v8573
        %10206 = vmatprep.subr.bf16.mxu0 %v8570
        %10207 = vmatpush2.bf16.msra.mxu0 %v8569
        %10208 = vmatprep.subr.bf16.mxu0 %v8566
        %10209 = vmatpush2.bf16.msra.mxu0 %v8565
        %10210 = vmatprep.subr.bf16.mxu0 %v8562
        %10211 = vmatpush2.bf16.msra.mxu0 %v8561
        %10212 = vmatprep.subr.bf16.mxu0 %v8558
        %10213 = vmatpush2.bf16.msra.mxu0 %v8557
        %10214 = vmatprep.subr.bf16.mxu0 %v8554
        %10215 = vmatpush2.bf16.msra.mxu0 %v8553
        %10216 = vmatprep.subr.bf16.mxu0 %v8550
        %10217 = vmatpush2.bf16.msra.mxu0 %v8549
        %10218 = vmatprep.mubr.bf16.mxu0 %v7178
        %10219 = vmatmul.mubr.bf16.gmra.mxu0 %v7177
        %v10220 = vpop.f32.mrf.mxu0
        %v10221 = vadd.f32 %v10028, %v10220
        %v10222 = vpop.f32.mrf.mxu0
        %v10223 = vadd.f32 %v10030, %v10222
        %v10224 = vpop.f32.mrf.mxu0
        %v10225 = vadd.f32 %v10032, %v10224
        %v10226 = vpop.f32.mrf.mxu0
        %v10227 = vadd.f32 %v10034, %v10226
        %10228 = vmatprep.mubr.bf16.mxu0 %v7186
        %10229 = vmatmul.mubr.bf16.gmra.mxu0 %v7185
        %v10230 = vpop.f32.mrf.mxu0
        %v10231 = vadd.f32 %v10038, %v10230
        %v10232 = vpop.f32.mrf.mxu0
        %v10233 = vadd.f32 %v10040, %v10232
        %v10234 = vpop.f32.mrf.mxu0
        %v10235 = vadd.f32 %v10042, %v10234
        %v10236 = vpop.f32.mrf.mxu0
        %v10237 = vadd.f32 %v10044, %v10236
        %10238 = vmatprep.mubr.bf16.mxu0 %v7194
        %10239 = vmatmul.mubr.bf16.gmra.mxu0 %v7193
        %v10240 = vpop.f32.mrf.mxu0
        %v10241 = vadd.f32 %v10048, %v10240
        %v10242 = vpop.f32.mrf.mxu0
        %v10243 = vadd.f32 %v10050, %v10242
        %v10244 = vpop.f32.mrf.mxu0
        %v10245 = vadd.f32 %v10052, %v10244
        %v10246 = vpop.f32.mrf.mxu0
        %v10247 = vadd.f32 %v10054, %v10246
        %10248 = vmatprep.mubr.bf16.mxu0 %v7202
        %10249 = vmatmul.mubr.bf16.gmra.mxu0 %v7201
        %v10250 = vpop.f32.mrf.mxu0
        %v10251 = vadd.f32 %v10058, %v10250
        %v10252 = vpop.f32.mrf.mxu0
        %v10253 = vadd.f32 %v10060, %v10252
        %v10254 = vpop.f32.mrf.mxu0
        %v10255 = vadd.f32 %v10062, %v10254
        %v10256 = vpop.f32.mrf.mxu0
        %v10257 = vadd.f32 %v10064, %v10256
        %10258 = vmatprep.mubr.bf16.mxu0 %v7210
        %10259 = vmatmul.mubr.bf16.gmra.mxu0 %v7209
        %v10260 = vpop.f32.mrf.mxu0
        %v10261 = vadd.f32 %v10068, %v10260
        %v10262 = vpop.f32.mrf.mxu0
        %v10263 = vadd.f32 %v10070, %v10262
        %v10264 = vpop.f32.mrf.mxu0
        %v10265 = vadd.f32 %v10072, %v10264
        %v10266 = vpop.f32.mrf.mxu0
        %v10267 = vadd.f32 %v10074, %v10266
        %10268 = vmatprep.mubr.bf16.mxu0 %v7218
        %10269 = vmatmul.mubr.bf16.gmra.mxu0 %v7217
        %v10270 = vpop.f32.mrf.mxu0
        %v10271 = vadd.f32 %v10078, %v10270
        %v10272 = vpop.f32.mrf.mxu0
        %v10273 = vadd.f32 %v10080, %v10272
        %v10274 = vpop.f32.mrf.mxu0
        %v10275 = vadd.f32 %v10082, %v10274
        %v10276 = vpop.f32.mrf.mxu0
        %v10277 = vadd.f32 %v10084, %v10276
        %10278 = vmatprep.mubr.bf16.mxu0 %v7226
        %10279 = vmatmul.mubr.bf16.gmra.mxu0 %v7225
        %v10280 = vpop.f32.mrf.mxu0
        %v10281 = vadd.f32 %v10088, %v10280
        %v10282 = vpop.f32.mrf.mxu0
        %v10283 = vadd.f32 %v10090, %v10282
        %v10284 = vpop.f32.mrf.mxu0
        %v10285 = vadd.f32 %v10092, %v10284
        %v10286 = vpop.f32.mrf.mxu0
        %v10287 = vadd.f32 %v10094, %v10286
        %10288 = vmatprep.mubr.bf16.mxu0 %v7234
        %10289 = vmatmul.mubr.bf16.gmra.mxu0 %v7233
        %v10290 = vpop.f32.mrf.mxu0
        %v10291 = vadd.f32 %v10098, %v10290
        %v10292 = vpop.f32.mrf.mxu0
        %v10293 = vadd.f32 %v10100, %v10292
        %v10294 = vpop.f32.mrf.mxu0
        %v10295 = vadd.f32 %v10102, %v10294
        %v10296 = vpop.f32.mrf.mxu0
        %v10297 = vadd.f32 %v10104, %v10296
        %10298 = vmatprep.mubr.bf16.mxu0 %v7242
        %10299 = vmatmul.mubr.bf16.gmra.mxu0 %v7241
        %v10300 = vpop.f32.mrf.mxu0
        %v10301 = vadd.f32 %v10108, %v10300
        %v10302 = vpop.f32.mrf.mxu0
        %v10303 = vadd.f32 %v10110, %v10302
        %v10304 = vpop.f32.mrf.mxu0
        %v10305 = vadd.f32 %v10112, %v10304
        %v10306 = vpop.f32.mrf.mxu0
        %v10307 = vadd.f32 %v10114, %v10306
        %10308 = vmatprep.mubr.bf16.mxu0 %v7250
        %10309 = vmatmul.mubr.bf16.gmra.mxu0 %v7249
        %v10310 = vpop.f32.mrf.mxu0
        %v10311 = vadd.f32 %v10118, %v10310
        %v10312 = vpop.f32.mrf.mxu0
        %v10313 = vadd.f32 %v10120, %v10312
        %v10314 = vpop.f32.mrf.mxu0
        %v10315 = vadd.f32 %v10122, %v10314
        %v10316 = vpop.f32.mrf.mxu0
        %v10317 = vadd.f32 %v10124, %v10316
        %10318 = vmatprep.mubr.bf16.mxu0 %v7258
        %10319 = vmatmul.mubr.bf16.gmra.mxu0 %v7257
        %v10320 = vpop.f32.mrf.mxu0
        %v10321 = vadd.f32 %v10128, %v10320
        %v10322 = vpop.f32.mrf.mxu0
        %v10323 = vadd.f32 %v10130, %v10322
        %v10324 = vpop.f32.mrf.mxu0
        %v10325 = vadd.f32 %v10132, %v10324
        %v10326 = vpop.f32.mrf.mxu0
        %v10327 = vadd.f32 %v10134, %v10326
        %10328 = vmatprep.mubr.bf16.mxu0 %v7266
        %10329 = vmatmul.mubr.bf16.gmra.mxu0 %v7265
        %v10330 = vpop.f32.mrf.mxu0
        %v10331 = vadd.f32 %v10138, %v10330
        %v10332 = vpop.f32.mrf.mxu0
        %v10333 = vadd.f32 %v10140, %v10332
        %v10334 = vpop.f32.mrf.mxu0
        %v10335 = vadd.f32 %v10142, %v10334
        %v10336 = vpop.f32.mrf.mxu0
        %v10337 = vadd.f32 %v10144, %v10336
        %10338 = vmatprep.mubr.bf16.mxu0 %v7274
        %10339 = vmatmul.mubr.bf16.gmra.mxu0 %v7273
        %v10340 = vpop.f32.mrf.mxu0
        %v10341 = vadd.f32 %v10148, %v10340
        %v10342 = vpop.f32.mrf.mxu0
        %v10343 = vadd.f32 %v10150, %v10342
        %v10344 = vpop.f32.mrf.mxu0
        %v10345 = vadd.f32 %v10152, %v10344
        %v10346 = vpop.f32.mrf.mxu0
        %v10347 = vadd.f32 %v10154, %v10346
        %10348 = vmatprep.mubr.bf16.mxu0 %v7282
        %10349 = vmatmul.mubr.bf16.gmra.mxu0 %v7281
        %v10350 = vpop.f32.mrf.mxu0
        %v10351 = vadd.f32 %v10158, %v10350
        %v10352 = vpop.f32.mrf.mxu0
        %v10353 = vadd.f32 %v10160, %v10352
        %v10354 = vpop.f32.mrf.mxu0
        %v10355 = vadd.f32 %v10162, %v10354
        %v10356 = vpop.f32.mrf.mxu0
        %v10357 = vadd.f32 %v10164, %v10356
        %10358 = vmatprep.mubr.bf16.mxu0 %v7290
        %10359 = vmatmul.mubr.bf16.gmra.mxu0 %v7289
        %v10360 = vpop.f32.mrf.mxu0
        %v10361 = vadd.f32 %v10168, %v10360
        %v10362 = vpop.f32.mrf.mxu0
        %v10363 = vadd.f32 %v10170, %v10362
        %v10364 = vpop.f32.mrf.mxu0
        %v10365 = vadd.f32 %v10172, %v10364
        %v10366 = vpop.f32.mrf.mxu0
        %v10367 = vadd.f32 %v10174, %v10366
        %10368 = vmatprep.mubr.bf16.mxu0 %v7298
        %10369 = vmatmul.mubr.bf16.gmra.mxu0 %v7297
        %v10370 = vpop.f32.mrf.mxu0
        %v10371 = vadd.f32 %v10178, %v10370
        %v10372 = vpop.f32.mrf.mxu0
        %v10373 = vadd.f32 %v10180, %v10372
        %v10374 = vpop.f32.mrf.mxu0
        %v10375 = vadd.f32 %v10182, %v10374
        %v10376 = vpop.f32.mrf.mxu0
        %v10377 = vadd.f32 %v10184, %v10376
        %10378 = vdwg.mxu0
        %v10379 = vadd.f32 %v7043, %v9449
        %v10380 = vadd.f32 %v7044, %v9451
        %v10381 = vadd.f32 %v7045, %v10221
        %v10382 = vadd.f32 %v7046, %v10223
        %v10383 = vadd.f32 %v7047, %v9453
        %v10384 = vadd.f32 %v7048, %v9455
        %v10385 = vadd.f32 %v7049, %v10225
        %v10386 = vadd.f32 %v7050, %v10227
        %v10387 = vadd.f32 %v7051, %v9459
        %v10388 = vadd.f32 %v7052, %v9461
        %v10389 = vadd.f32 %v7053, %v10231
        %v10390 = vadd.f32 %v7054, %v10233
        %v10391 = vadd.f32 %v7055, %v9463
        %v10392 = vadd.f32 %v7056, %v9465
        %v10393 = vadd.f32 %v7057, %v10235
        %v10394 = vadd.f32 %v7058, %v10237
        %v10395 = vadd.f32 %v7059, %v9469
        %v10396 = vadd.f32 %v7060, %v9471
        %v10397 = vadd.f32 %v7061, %v10241
        %v10398 = vadd.f32 %v7062, %v10243
        %v10399 = vadd.f32 %v7063, %v9473
        %v10400 = vadd.f32 %v7064, %v9475
        %v10401 = vadd.f32 %v7065, %v10245
        %v10402 = vadd.f32 %v7066, %v10247
        %v10403 = vadd.f32 %v7067, %v9479
        %v10404 = vadd.f32 %v7068, %v9481
        %v10405 = vadd.f32 %v7069, %v10251
        %v10406 = vadd.f32 %v7070, %v10253
        %v10407 = vadd.f32 %v7071, %v9483
        %v10408 = vadd.f32 %v7072, %v9485
        %v10409 = vadd.f32 %v7073, %v10255
        %v10410 = vadd.f32 %v7074, %v10257
        %v10411 = vadd.f32 %v7075, %v9489
        %v10412 = vadd.f32 %v7076, %v9491
        %v10413 = vadd.f32 %v7077, %v10261
        %v10414 = vadd.f32 %v7078, %v10263
        %v10415 = vadd.f32 %v7079, %v9493
        %v10416 = vadd.f32 %v7080, %v9495
        %v10417 = vadd.f32 %v7081, %v10265
        %v10418 = vadd.f32 %v7082, %v10267
        %v10419 = vadd.f32 %v7083, %v9499
        %v10420 = vadd.f32 %v7084, %v9501
        %v10421 = vadd.f32 %v7085, %v10271
        %v10422 = vadd.f32 %v7086, %v10273
        %v10423 = vadd.f32 %v7087, %v9503
        %v10424 = vadd.f32 %v7088, %v9505
        %v10425 = vadd.f32 %v7089, %v10275
        %v10426 = vadd.f32 %v7090, %v10277
        %v10427 = vadd.f32 %v7091, %v9509
        %v10428 = vadd.f32 %v7092, %v9511
        %v10429 = vadd.f32 %v7093, %v10281
        %v10430 = vadd.f32 %v7094, %v10283
        %v10431 = vadd.f32 %v7095, %v9513
        %v10432 = vadd.f32 %v7096, %v9515
        %v10433 = vadd.f32 %v7097, %v10285
        %v10434 = vadd.f32 %v7098, %v10287
        %v10435 = vadd.f32 %v7099, %v9519
        %v10436 = vadd.f32 %v7100, %v9521
        %v10437 = vadd.f32 %v7101, %v10291
        %v10438 = vadd.f32 %v7102, %v10293
        %v10439 = vadd.f32 %v7103, %v9523
        %v10440 = vadd.f32 %v7104, %v9525
        %v10441 = vadd.f32 %v7105, %v10295
        %v10442 = vadd.f32 %v7106, %v10297
        %v10443 = vadd.f32 %v7107, %v9529
        %v10444 = vadd.f32 %v7108, %v9531
        %v10445 = vadd.f32 %v7109, %v10301
        %v10446 = vadd.f32 %v7110, %v10303
        %v10447 = vadd.f32 %v7111, %v9533
        %v10448 = vadd.f32 %v7112, %v9535
        %v10449 = vadd.f32 %v7113, %v10305
        %v10450 = vadd.f32 %v7114, %v10307
        %v10451 = vadd.f32 %v7115, %v9539
        %v10452 = vadd.f32 %v7116, %v9541
        %v10453 = vadd.f32 %v7117, %v10311
        %v10454 = vadd.f32 %v7118, %v10313
        %v10455 = vadd.f32 %v7119, %v9543
        %v10456 = vadd.f32 %v7120, %v9545
        %v10457 = vadd.f32 %v7121, %v10315
        %v10458 = vadd.f32 %v7122, %v10317
        %v10459 = vadd.f32 %v7123, %v9549
        %v10460 = vadd.f32 %v7124, %v9551
        %v10461 = vadd.f32 %v7125, %v10321
        %v10462 = vadd.f32 %v7126, %v10323
        %v10463 = vadd.f32 %v7127, %v9553
        %v10464 = vadd.f32 %v7128, %v9555
        %v10465 = vadd.f32 %v7129, %v10325
        %v10466 = vadd.f32 %v7130, %v10327
        %v10467 = vadd.f32 %v7131, %v9559
        %v10468 = vadd.f32 %v7132, %v9561
        %v10469 = vadd.f32 %v7133, %v10331
        %v10470 = vadd.f32 %v7134, %v10333
        %v10471 = vadd.f32 %v7135, %v9563
        %v10472 = vadd.f32 %v7136, %v9565
        %v10473 = vadd.f32 %v7137, %v10335
        %v10474 = vadd.f32 %v7138, %v10337
        %v10475 = vadd.f32 %v7139, %v9569
        %v10476 = vadd.f32 %v7140, %v9571
        %v10477 = vadd.f32 %v7141, %v10341
        %v10478 = vadd.f32 %v7142, %v10343
        %v10479 = vadd.f32 %v7143, %v9573
        %v10480 = vadd.f32 %v7144, %v9575
        %v10481 = vadd.f32 %v7145, %v10345
        %v10482 = vadd.f32 %v7146, %v10347
        %v10483 = vadd.f32 %v7147, %v9579
        %v10484 = vadd.f32 %v7148, %v9581
        %v10485 = vadd.f32 %v7149, %v10351
        %v10486 = vadd.f32 %v7150, %v10353
        %v10487 = vadd.f32 %v7151, %v9583
        %v10488 = vadd.f32 %v7152, %v9585
        %v10489 = vadd.f32 %v7153, %v10355
        %v10490 = vadd.f32 %v7154, %v10357
        %v10491 = vadd.f32 %v7155, %v9589
        %v10492 = vadd.f32 %v7156, %v9591
        %v10493 = vadd.f32 %v7157, %v10361
        %v10494 = vadd.f32 %v7158, %v10363
        %v10495 = vadd.f32 %v7159, %v9593
        %v10496 = vadd.f32 %v7160, %v9595
        %v10497 = vadd.f32 %v7161, %v10365
        %v10498 = vadd.f32 %v7162, %v10367
        %v10499 = vadd.f32 %v7163, %v9599
        %v10500 = vadd.f32 %v7164, %v9601
        %v10501 = vadd.f32 %v7165, %v10371
        %v10502 = vadd.f32 %v7166, %v10373
        %v10503 = vadd.f32 %v7167, %v9603
        %v10504 = vadd.f32 %v7168, %v9605
        %v10505 = vadd.f32 %v7169, %v10375
        %v10506 = vadd.f32 %v7170, %v10377
        %10507 = vst [vmem:[#allocation3] sm:$0xff] %v10379
        %10508 = vst [vmem:[#allocation3 + $0x8] sm:$0xff] %v10380
        %10509 = vst [vmem:[#allocation3 + $0x10] sm:$0xff] %v10381
        %10510 = vst [vmem:[#allocation3 + $0x18] sm:$0xff] %v10382
        %10511 = vst [vmem:[#allocation3 + $0x20] sm:$0xff] %v10383
        %10512 = vst [vmem:[#allocation3 + $0x28] sm:$0xff] %v10384
        %10513 = vst [vmem:[#allocation3 + $0x30] sm:$0xff] %v10385
        %10514 = vst [vmem:[#allocation3 + $0x38] sm:$0xff] %v10386
        %10515 = vst [vmem:[#allocation3 + $0x40] sm:$0xff] %v10387
        %10516 = vst [vmem:[#allocation3 + $0x48] sm:$0xff] %v10388
        %10517 = vst [vmem:[#allocation3 + $0x50] sm:$0xff] %v10389
        %10518 = vst [vmem:[#allocation3 + $0x58] sm:$0xff] %v10390
        %10519 = vst [vmem:[#allocation3 + $0x60] sm:$0xff] %v10391
        %10520 = vst [vmem:[#allocation3 + $0x68] sm:$0xff] %v10392
        %10521 = vst [vmem:[#allocation3 + $0x70] sm:$0xff] %v10393
        %10522 = vst [vmem:[#allocation3 + $0x78] sm:$0xff] %v10394
        %10523 = vst [vmem:[#allocation3 + $0x80] sm:$0xff] %v10395
        %10524 = vst [vmem:[#allocation3 + $0x88] sm:$0xff] %v10396
        %10525 = vst [vmem:[#allocation3 + $0x90] sm:$0xff] %v10397
        %10526 = vst [vmem:[#allocation3 + $0x98] sm:$0xff] %v10398
        %10527 = vst [vmem:[#allocation3 + $0xa0] sm:$0xff] %v10399
        %10528 = vst [vmem:[#allocation3 + $0xa8] sm:$0xff] %v10400
        %10529 = vst [vmem:[#allocation3 + $0xb0] sm:$0xff] %v10401
        %10530 = vst [vmem:[#allocation3 + $0xb8] sm:$0xff] %v10402
        %10531 = vst [vmem:[#allocation3 + $0xc0] sm:$0xff] %v10403
        %10532 = vst [vmem:[#allocation3 + $0xc8] sm:$0xff] %v10404
        %10533 = vst [vmem:[#allocation3 + $0xd0] sm:$0xff] %v10405
        %10534 = vst [vmem:[#allocation3 + $0xd8] sm:$0xff] %v10406
        %10535 = vst [vmem:[#allocation3 + $0xe0] sm:$0xff] %v10407
        %10536 = vst [vmem:[#allocation3 + $0xe8] sm:$0xff] %v10408
        %10537 = vst [vmem:[#allocation3 + $0xf0] sm:$0xff] %v10409
        %10538 = vst [vmem:[#allocation3 + $0xf8] sm:$0xff] %v10410
        %10539 = vst [vmem:[#allocation3 + $0x100] sm:$0xff] %v10411
        %10540 = vst [vmem:[#allocation3 + $0x108] sm:$0xff] %v10412
        %10541 = vst [vmem:[#allocation3 + $0x110] sm:$0xff] %v10413
        %10542 = vst [vmem:[#allocation3 + $0x118] sm:$0xff] %v10414
        %10543 = vst [vmem:[#allocation3 + $0x120] sm:$0xff] %v10415
        %10544 = vst [vmem:[#allocation3 + $0x128] sm:$0xff] %v10416
        %10545 = vst [vmem:[#allocation3 + $0x130] sm:$0xff] %v10417
        %10546 = vst [vmem:[#allocation3 + $0x138] sm:$0xff] %v10418
        %10547 = vst [vmem:[#allocation3 + $0x140] sm:$0xff] %v10419
        %10548 = vst [vmem:[#allocation3 + $0x148] sm:$0xff] %v10420
        %10549 = vst [vmem:[#allocation3 + $0x150] sm:$0xff] %v10421
        %10550 = vst [vmem:[#allocation3 + $0x158] sm:$0xff] %v10422
        %10551 = vst [vmem:[#allocation3 + $0x160] sm:$0xff] %v10423
        %10552 = vst [vmem:[#allocation3 + $0x168] sm:$0xff] %v10424
        %10553 = vst [vmem:[#allocation3 + $0x170] sm:$0xff] %v10425
        %10554 = vst [vmem:[#allocation3 + $0x178] sm:$0xff] %v10426
        %10555 = vst [vmem:[#allocation3 + $0x180] sm:$0xff] %v10427
        %10556 = vst [vmem:[#allocation3 + $0x188] sm:$0xff] %v10428
        %10557 = vst [vmem:[#allocation3 + $0x190] sm:$0xff] %v10429
        %10558 = vst [vmem:[#allocation3 + $0x198] sm:$0xff] %v10430
        %10559 = vst [vmem:[#allocation3 + $0x1a0] sm:$0xff] %v10431
        %10560 = vst [vmem:[#allocation3 + $0x1a8] sm:$0xff] %v10432
        %10561 = vst [vmem:[#allocation3 + $0x1b0] sm:$0xff] %v10433
        %10562 = vst [vmem:[#allocation3 + $0x1b8] sm:$0xff] %v10434
        %10563 = vst [vmem:[#allocation3 + $0x1c0] sm:$0xff] %v10435
        %10564 = vst [vmem:[#allocation3 + $0x1c8] sm:$0xff] %v10436
        %10565 = vst [vmem:[#allocation3 + $0x1d0] sm:$0xff] %v10437
        %10566 = vst [vmem:[#allocation3 + $0x1d8] sm:$0xff] %v10438
        %10567 = vst [vmem:[#allocation3 + $0x1e0] sm:$0xff] %v10439
        %10568 = vst [vmem:[#allocation3 + $0x1e8] sm:$0xff] %v10440
        %10569 = vst [vmem:[#allocation3 + $0x1f0] sm:$0xff] %v10441
        %10570 = vst [vmem:[#allocation3 + $0x1f8] sm:$0xff] %v10442
        %10571 = vst [vmem:[#allocation3 + $0x200] sm:$0xff] %v10443
        %10572 = vst [vmem:[#allocation3 + $0x208] sm:$0xff] %v10444
        %10573 = vst [vmem:[#allocation3 + $0x210] sm:$0xff] %v10445
        %10574 = vst [vmem:[#allocation3 + $0x218] sm:$0xff] %v10446
        %10575 = vst [vmem:[#allocation3 + $0x220] sm:$0xff] %v10447
        %10576 = vst [vmem:[#allocation3 + $0x228] sm:$0xff] %v10448
        %10577 = vst [vmem:[#allocation3 + $0x230] sm:$0xff] %v10449
        %10578 = vst [vmem:[#allocation3 + $0x238] sm:$0xff] %v10450
        %10579 = vst [vmem:[#allocation3 + $0x240] sm:$0xff] %v10451
        %10580 = vst [vmem:[#allocation3 + $0x248] sm:$0xff] %v10452
        %10581 = vst [vmem:[#allocation3 + $0x250] sm:$0xff] %v10453
        %10582 = vst [vmem:[#allocation3 + $0x258] sm:$0xff] %v10454
        %10583 = vst [vmem:[#allocation3 + $0x260] sm:$0xff] %v10455
        %10584 = vst [vmem:[#allocation3 + $0x268] sm:$0xff] %v10456
        %10585 = vst [vmem:[#allocation3 + $0x270] sm:$0xff] %v10457
        %10586 = vst [vmem:[#allocation3 + $0x278] sm:$0xff] %v10458
        %10587 = vst [vmem:[#allocation3 + $0x280] sm:$0xff] %v10459
        %10588 = vst [vmem:[#allocation3 + $0x288] sm:$0xff] %v10460
        %10589 = vst [vmem:[#allocation3 + $0x290] sm:$0xff] %v10461
        %10590 = vst [vmem:[#allocation3 + $0x298] sm:$0xff] %v10462
        %10591 = vst [vmem:[#allocation3 + $0x2a0] sm:$0xff] %v10463
        %10592 = vst [vmem:[#allocation3 + $0x2a8] sm:$0xff] %v10464
        %10593 = vst [vmem:[#allocation3 + $0x2b0] sm:$0xff] %v10465
        %10594 = vst [vmem:[#allocation3 + $0x2b8] sm:$0xff] %v10466
        %10595 = vst [vmem:[#allocation3 + $0x2c0] sm:$0xff] %v10467
        %10596 = vst [vmem:[#allocation3 + $0x2c8] sm:$0xff] %v10468
        %10597 = vst [vmem:[#allocation3 + $0x2d0] sm:$0xff] %v10469
        %10598 = vst [vmem:[#allocation3 + $0x2d8] sm:$0xff] %v10470
        %10599 = vst [vmem:[#allocation3 + $0x2e0] sm:$0xff] %v10471
        %10600 = vst [vmem:[#allocation3 + $0x2e8] sm:$0xff] %v10472
        %10601 = vst [vmem:[#allocation3 + $0x2f0] sm:$0xff] %v10473
        %10602 = vst [vmem:[#allocation3 + $0x2f8] sm:$0xff] %v10474
        %10603 = vst [vmem:[#allocation3 + $0x300] sm:$0xff] %v10475
        %10604 = vst [vmem:[#allocation3 + $0x308] sm:$0xff] %v10476
        %10605 = vst [vmem:[#allocation3 + $0x310] sm:$0xff] %v10477
        %10606 = vst [vmem:[#allocation3 + $0x318] sm:$0xff] %v10478
        %10607 = vst [vmem:[#allocation3 + $0x320] sm:$0xff] %v10479
        %10608 = vst [vmem:[#allocation3 + $0x328] sm:$0xff] %v10480
        %10609 = vst [vmem:[#allocation3 + $0x330] sm:$0xff] %v10481
        %10610 = vst [vmem:[#allocation3 + $0x338] sm:$0xff] %v10482
        %10611 = vst [vmem:[#allocation3 + $0x340] sm:$0xff] %v10483
        %10612 = vst [vmem:[#allocation3 + $0x348] sm:$0xff] %v10484
        %10613 = vst [vmem:[#allocation3 + $0x350] sm:$0xff] %v10485
        %10614 = vst [vmem:[#allocation3 + $0x358] sm:$0xff] %v10486
        %10615 = vst [vmem:[#allocation3 + $0x360] sm:$0xff] %v10487
        %10616 = vst [vmem:[#allocation3 + $0x368] sm:$0xff] %v10488
        %10617 = vst [vmem:[#allocation3 + $0x370] sm:$0xff] %v10489
        %10618 = vst [vmem:[#allocation3 + $0x378] sm:$0xff] %v10490
        %10619 = vst [vmem:[#allocation3 + $0x380] sm:$0xff] %v10491
        %10620 = vst [vmem:[#allocation3 + $0x388] sm:$0xff] %v10492
        %10621 = vst [vmem:[#allocation3 + $0x390] sm:$0xff] %v10493
        %10622 = vst [vmem:[#allocation3 + $0x398] sm:$0xff] %v10494
        %10623 = vst [vmem:[#allocation3 + $0x3a0] sm:$0xff] %v10495
        %10624 = vst [vmem:[#allocation3 + $0x3a8] sm:$0xff] %v10496
        %10625 = vst [vmem:[#allocation3 + $0x3b0] sm:$0xff] %v10497
        %10626 = vst [vmem:[#allocation3 + $0x3b8] sm:$0xff] %v10498
        %10627 = vst [vmem:[#allocation3 + $0x3c0] sm:$0xff] %v10499
        %10628 = vst [vmem:[#allocation3 + $0x3c8] sm:$0xff] %v10500
        %10629 = vst [vmem:[#allocation3 + $0x3d0] sm:$0xff] %v10501
        %10630 = vst [vmem:[#allocation3 + $0x3d8] sm:$0xff] %v10502
        %10631 = vst [vmem:[#allocation3 + $0x3e0] sm:$0xff] %v10503
        %10632 = vst [vmem:[#allocation3 + $0x3e8] sm:$0xff] %v10504
        %10633 = vst [vmem:[#allocation3 + $0x3f0] sm:$0xff] %v10505
        %10634 = vst [vmem:[#allocation3 + $0x3f8] sm:$0xff] %v10506
        %p10635 = scmp.eq.s32.totalorder %s27, 1
        // Predicated region
        $region81: #{tpu_custom_call.1} parent=47 // pred_check
          %p10636 = pneg %p10635
        $region82: #{tpu_custom_call.1} parent=47 // pred_check_branch
          %10638 = sbr.rel (%p10636) target = $region84
        $region83: #{tpu_custom_call.1} parent=47 // pred_region
          %v10639 = vld [vmem:[#allocation3] sm:$0xff]
          %v10640 = vld [vmem:[#allocation3 + $0x8] sm:$0xff]
          %v10641 = vld [vmem:[#allocation3 + $0x10] sm:$0xff]
          %v10642 = vld [vmem:[#allocation3 + $0x18] sm:$0xff]
          %v10643 = vld [vmem:[#allocation3 + $0x20] sm:$0xff]
          %v10644 = vld [vmem:[#allocation3 + $0x28] sm:$0xff]
          %v10645 = vld [vmem:[#allocation3 + $0x30] sm:$0xff]
          %v10646 = vld [vmem:[#allocation3 + $0x38] sm:$0xff]
          %v10647 = vld [vmem:[#allocation3 + $0x40] sm:$0xff]
          %v10648 = vld [vmem:[#allocation3 + $0x48] sm:$0xff]
          %v10649 = vld [vmem:[#allocation3 + $0x50] sm:$0xff]
          %v10650 = vld [vmem:[#allocation3 + $0x58] sm:$0xff]
          %v10651 = vld [vmem:[#allocation3 + $0x60] sm:$0xff]
          %v10652 = vld [vmem:[#allocation3 + $0x68] sm:$0xff]
          %v10653 = vld [vmem:[#allocation3 + $0x70] sm:$0xff]
          %v10654 = vld [vmem:[#allocation3 + $0x78] sm:$0xff]
          %v10655 = vld [vmem:[#allocation3 + $0x80] sm:$0xff]
          %v10656 = vld [vmem:[#allocation3 + $0x88] sm:$0xff]
          %v10657 = vld [vmem:[#allocation3 + $0x90] sm:$0xff]
          %v10658 = vld [vmem:[#allocation3 + $0x98] sm:$0xff]
          %v10659 = vld [vmem:[#allocation3 + $0xa0] sm:$0xff]
          %v10660 = vld [vmem:[#allocation3 + $0xa8] sm:$0xff]
          %v10661 = vld [vmem:[#allocation3 + $0xb0] sm:$0xff]
          %v10662 = vld [vmem:[#allocation3 + $0xb8] sm:$0xff]
          %v10663 = vld [vmem:[#allocation3 + $0xc0] sm:$0xff]
          %v10664 = vld [vmem:[#allocation3 + $0xc8] sm:$0xff]
          %v10665 = vld [vmem:[#allocation3 + $0xd0] sm:$0xff]
          %v10666 = vld [vmem:[#allocation3 + $0xd8] sm:$0xff]
          %v10667 = vld [vmem:[#allocation3 + $0xe0] sm:$0xff]
          %v10668 = vld [vmem:[#allocation3 + $0xe8] sm:$0xff]
          %v10669 = vld [vmem:[#allocation3 + $0xf0] sm:$0xff]
          %v10670 = vld [vmem:[#allocation3 + $0xf8] sm:$0xff]
          %v10671 = vld [vmem:[#allocation3 + $0x100] sm:$0xff]
          %v10672 = vld [vmem:[#allocation3 + $0x108] sm:$0xff]
          %v10673 = vld [vmem:[#allocation3 + $0x110] sm:$0xff]
          %v10674 = vld [vmem:[#allocation3 + $0x118] sm:$0xff]
          %v10675 = vld [vmem:[#allocation3 + $0x120] sm:$0xff]
          %v10676 = vld [vmem:[#allocation3 + $0x128] sm:$0xff]
          %v10677 = vld [vmem:[#allocation3 + $0x130] sm:$0xff]
          %v10678 = vld [vmem:[#allocation3 + $0x138] sm:$0xff]
          %v10679 = vld [vmem:[#allocation3 + $0x140] sm:$0xff]
          %v10680 = vld [vmem:[#allocation3 + $0x148] sm:$0xff]
          %v10681 = vld [vmem:[#allocation3 + $0x150] sm:$0xff]
          %v10682 = vld [vmem:[#allocation3 + $0x158] sm:$0xff]
          %v10683 = vld [vmem:[#allocation3 + $0x160] sm:$0xff]
          %v10684 = vld [vmem:[#allocation3 + $0x168] sm:$0xff]
          %v10685 = vld [vmem:[#allocation3 + $0x170] sm:$0xff]
          %v10686 = vld [vmem:[#allocation3 + $0x178] sm:$0xff]
          %v10687 = vld [vmem:[#allocation3 + $0x180] sm:$0xff]
          %v10688 = vld [vmem:[#allocation3 + $0x188] sm:$0xff]
          %v10689 = vld [vmem:[#allocation3 + $0x190] sm:$0xff]
          %v10690 = vld [vmem:[#allocation3 + $0x198] sm:$0xff]
          %v10691 = vld [vmem:[#allocation3 + $0x1a0] sm:$0xff]
          %v10692 = vld [vmem:[#allocation3 + $0x1a8] sm:$0xff]
          %v10693 = vld [vmem:[#allocation3 + $0x1b0] sm:$0xff]
          %v10694 = vld [vmem:[#allocation3 + $0x1b8] sm:$0xff]
          %v10695 = vld [vmem:[#allocation3 + $0x1c0] sm:$0xff]
          %v10696 = vld [vmem:[#allocation3 + $0x1c8] sm:$0xff]
          %v10697 = vld [vmem:[#allocation3 + $0x1d0] sm:$0xff]
          %v10698 = vld [vmem:[#allocation3 + $0x1d8] sm:$0xff]
          %v10699 = vld [vmem:[#allocation3 + $0x1e0] sm:$0xff]
          %v10700 = vld [vmem:[#allocation3 + $0x1e8] sm:$0xff]
          %v10701 = vld [vmem:[#allocation3 + $0x1f0] sm:$0xff]
          %v10702 = vld [vmem:[#allocation3 + $0x1f8] sm:$0xff]
          %v10703 = vld [vmem:[#allocation3 + $0x200] sm:$0xff]
          %v10704 = vld [vmem:[#allocation3 + $0x208] sm:$0xff]
          %v10705 = vld [vmem:[#allocation3 + $0x210] sm:$0xff]
          %v10706 = vld [vmem:[#allocation3 + $0x218] sm:$0xff]
          %v10707 = vld [vmem:[#allocation3 + $0x220] sm:$0xff]
          %v10708 = vld [vmem:[#allocation3 + $0x228] sm:$0xff]
          %v10709 = vld [vmem:[#allocation3 + $0x230] sm:$0xff]
          %v10710 = vld [vmem:[#allocation3 + $0x238] sm:$0xff]
          %v10711 = vld [vmem:[#allocation3 + $0x240] sm:$0xff]
          %v10712 = vld [vmem:[#allocation3 + $0x248] sm:$0xff]
          %v10713 = vld [vmem:[#allocation3 + $0x250] sm:$0xff]
          %v10714 = vld [vmem:[#allocation3 + $0x258] sm:$0xff]
          %v10715 = vld [vmem:[#allocation3 + $0x260] sm:$0xff]
          %v10716 = vld [vmem:[#allocation3 + $0x268] sm:$0xff]
          %v10717 = vld [vmem:[#allocation3 + $0x270] sm:$0xff]
          %v10718 = vld [vmem:[#allocation3 + $0x278] sm:$0xff]
          %v10719 = vld [vmem:[#allocation3 + $0x280] sm:$0xff]
          %v10720 = vld [vmem:[#allocation3 + $0x288] sm:$0xff]
          %v10721 = vld [vmem:[#allocation3 + $0x290] sm:$0xff]
          %v10722 = vld [vmem:[#allocation3 + $0x298] sm:$0xff]
          %v10723 = vld [vmem:[#allocation3 + $0x2a0] sm:$0xff]
          %v10724 = vld [vmem:[#allocation3 + $0x2a8] sm:$0xff]
          %v10725 = vld [vmem:[#allocation3 + $0x2b0] sm:$0xff]
          %v10726 = vld [vmem:[#allocation3 + $0x2b8] sm:$0xff]
          %v10727 = vld [vmem:[#allocation3 + $0x2c0] sm:$0xff]
          %v10728 = vld [vmem:[#allocation3 + $0x2c8] sm:$0xff]
          %v10729 = vld [vmem:[#allocation3 + $0x2d0] sm:$0xff]
          %v10730 = vld [vmem:[#allocation3 + $0x2d8] sm:$0xff]
          %v10731 = vld [vmem:[#allocation3 + $0x2e0] sm:$0xff]
          %v10732 = vld [vmem:[#allocation3 + $0x2e8] sm:$0xff]
          %v10733 = vld [vmem:[#allocation3 + $0x2f0] sm:$0xff]
          %v10734 = vld [vmem:[#allocation3 + $0x2f8] sm:$0xff]
          %v10735 = vld [vmem:[#allocation3 + $0x300] sm:$0xff]
          %v10736 = vld [vmem:[#allocation3 + $0x308] sm:$0xff]
          %v10737 = vld [vmem:[#allocation3 + $0x310] sm:$0xff]
          %v10738 = vld [vmem:[#allocation3 + $0x318] sm:$0xff]
          %v10739 = vld [vmem:[#allocation3 + $0x320] sm:$0xff]
          %v10740 = vld [vmem:[#allocation3 + $0x328] sm:$0xff]
          %v10741 = vld [vmem:[#allocation3 + $0x330] sm:$0xff]
          %v10742 = vld [vmem:[#allocation3 + $0x338] sm:$0xff]
          %v10743 = vld [vmem:[#allocation3 + $0x340] sm:$0xff]
          %v10744 = vld [vmem:[#allocation3 + $0x348] sm:$0xff]
          %v10745 = vld [vmem:[#allocation3 + $0x350] sm:$0xff]
          %v10746 = vld [vmem:[#allocation3 + $0x358] sm:$0xff]
          %v10747 = vld [vmem:[#allocation3 + $0x360] sm:$0xff]
          %v10748 = vld [vmem:[#allocation3 + $0x368] sm:$0xff]
          %v10749 = vld [vmem:[#allocation3 + $0x370] sm:$0xff]
          %v10750 = vld [vmem:[#allocation3 + $0x378] sm:$0xff]
          %v10751 = vld [vmem:[#allocation3 + $0x380] sm:$0xff]
          %v10752 = vld [vmem:[#allocation3 + $0x388] sm:$0xff]
          %v10753 = vld [vmem:[#allocation3 + $0x390] sm:$0xff]
          %v10754 = vld [vmem:[#allocation3 + $0x398] sm:$0xff]
          %v10755 = vld [vmem:[#allocation3 + $0x3a0] sm:$0xff]
          %v10756 = vld [vmem:[#allocation3 + $0x3a8] sm:$0xff]
          %v10757 = vld [vmem:[#allocation3 + $0x3b0] sm:$0xff]
          %v10758 = vld [vmem:[#allocation3 + $0x3b8] sm:$0xff]
          %v10759 = vld [vmem:[#allocation3 + $0x3c0] sm:$0xff]
          %v10760 = vld [vmem:[#allocation3 + $0x3c8] sm:$0xff]
          %v10761 = vld [vmem:[#allocation3 + $0x3d0] sm:$0xff]
          %v10762 = vld [vmem:[#allocation3 + $0x3d8] sm:$0xff]
          %v10763 = vld [vmem:[#allocation3 + $0x3e0] sm:$0xff]
          %v10764 = vld [vmem:[#allocation3 + $0x3e8] sm:$0xff]
          %v10765 = vld [vmem:[#allocation3 + $0x3f0] sm:$0xff]
          %v10766 = vld [vmem:[#allocation3 + $0x3f8] sm:$0xff]
          %v10767 = vld [vmem:[#allocation15] sm:$0xf]
          %v10769 = vlaneseq
          %v10770 = vshrl.u32 %v10769, 7
          %v10771 = vsub.s32 0, %v10770
          %v10772 = vrot.slane %v10767, %v10771
          %v10773 = vlaneseq
          %v10774 = vshrl.u32 %v10773, 7
          %v10775 = vsub.s32 1, %v10774
          %v10776 = vrot.slane %v10767, %v10775
          %v10777 = vlaneseq
          %v10778 = vshrl.u32 %v10777, 7
          %v10779 = vsub.s32 2, %v10778
          %v10780 = vrot.slane %v10767, %v10779
          %v10781 = vlaneseq
          %v10782 = vshrl.u32 %v10781, 7
          %v10783 = vsub.s32 3, %v10782
          %v10784 = vrot.slane %v10767, %v10783
          %v10789 = vadd.f32 %v10639, %v10772
          %v10790 = vadd.f32 %v10640, %v10776
          %v10791 = vadd.f32 %v10641, %v10780
          %v10792 = vadd.f32 %v10642, %v10784
          %v10793 = vadd.f32 %v10643, %v10772
          %v10794 = vadd.f32 %v10644, %v10776
          %v10795 = vadd.f32 %v10645, %v10780
          %v10796 = vadd.f32 %v10646, %v10784
          %v10797 = vadd.f32 %v10647, %v10772
          %v10798 = vadd.f32 %v10648, %v10776
          %v10799 = vadd.f32 %v10649, %v10780
          %v10800 = vadd.f32 %v10650, %v10784
          %v10801 = vadd.f32 %v10651, %v10772
          %v10802 = vadd.f32 %v10652, %v10776
          %v10803 = vadd.f32 %v10653, %v10780
          %v10804 = vadd.f32 %v10654, %v10784
          %v10805 = vadd.f32 %v10655, %v10772
          %v10806 = vadd.f32 %v10656, %v10776
          %v10807 = vadd.f32 %v10657, %v10780
          %v10808 = vadd.f32 %v10658, %v10784
          %v10809 = vadd.f32 %v10659, %v10772
          %v10810 = vadd.f32 %v10660, %v10776
          %v10811 = vadd.f32 %v10661, %v10780
          %v10812 = vadd.f32 %v10662, %v10784
          %v10813 = vadd.f32 %v10663, %v10772
          %v10814 = vadd.f32 %v10664, %v10776
          %v10815 = vadd.f32 %v10665, %v10780
          %v10816 = vadd.f32 %v10666, %v10784
          %v10817 = vadd.f32 %v10667, %v10772
          %v10818 = vadd.f32 %v10668, %v10776
          %v10819 = vadd.f32 %v10669, %v10780
          %v10820 = vadd.f32 %v10670, %v10784
          %v10821 = vadd.f32 %v10671, %v10772
          %v10822 = vadd.f32 %v10672, %v10776
          %v10823 = vadd.f32 %v10673, %v10780
          %v10824 = vadd.f32 %v10674, %v10784
          %v10825 = vadd.f32 %v10675, %v10772
          %v10826 = vadd.f32 %v10676, %v10776
          %v10827 = vadd.f32 %v10677, %v10780
          %v10828 = vadd.f32 %v10678, %v10784
          %v10829 = vadd.f32 %v10679, %v10772
          %v10830 = vadd.f32 %v10680, %v10776
          %v10831 = vadd.f32 %v10681, %v10780
          %v10832 = vadd.f32 %v10682, %v10784
          %v10833 = vadd.f32 %v10683, %v10772
          %v10834 = vadd.f32 %v10684, %v10776
          %v10835 = vadd.f32 %v10685, %v10780
          %v10836 = vadd.f32 %v10686, %v10784
          %v10837 = vadd.f32 %v10687, %v10772
          %v10838 = vadd.f32 %v10688, %v10776
          %v10839 = vadd.f32 %v10689, %v10780
          %v10840 = vadd.f32 %v10690, %v10784
          %v10841 = vadd.f32 %v10691, %v10772
          %v10842 = vadd.f32 %v10692, %v10776
          %v10843 = vadd.f32 %v10693, %v10780
          %v10844 = vadd.f32 %v10694, %v10784
          %v10845 = vadd.f32 %v10695, %v10772
          %v10846 = vadd.f32 %v10696, %v10776
          %v10847 = vadd.f32 %v10697, %v10780
          %v10848 = vadd.f32 %v10698, %v10784
          %v10849 = vadd.f32 %v10699, %v10772
          %v10850 = vadd.f32 %v10700, %v10776
          %v10851 = vadd.f32 %v10701, %v10780
          %v10852 = vadd.f32 %v10702, %v10784
          %v10853 = vadd.f32 %v10703, %v10772
          %v10854 = vadd.f32 %v10704, %v10776
          %v10855 = vadd.f32 %v10705, %v10780
          %v10856 = vadd.f32 %v10706, %v10784
          %v10857 = vadd.f32 %v10707, %v10772
          %v10858 = vadd.f32 %v10708, %v10776
          %v10859 = vadd.f32 %v10709, %v10780
          %v10860 = vadd.f32 %v10710, %v10784
          %v10861 = vadd.f32 %v10711, %v10772
          %v10862 = vadd.f32 %v10712, %v10776
          %v10863 = vadd.f32 %v10713, %v10780
          %v10864 = vadd.f32 %v10714, %v10784
          %v10865 = vadd.f32 %v10715, %v10772
          %v10866 = vadd.f32 %v10716, %v10776
          %v10867 = vadd.f32 %v10717, %v10780
          %v10868 = vadd.f32 %v10718, %v10784
          %v10869 = vadd.f32 %v10719, %v10772
          %v10870 = vadd.f32 %v10720, %v10776
          %v10871 = vadd.f32 %v10721, %v10780
          %v10872 = vadd.f32 %v10722, %v10784
          %v10873 = vadd.f32 %v10723, %v10772
          %v10874 = vadd.f32 %v10724, %v10776
          %v10875 = vadd.f32 %v10725, %v10780
          %v10876 = vadd.f32 %v10726, %v10784
          %v10877 = vadd.f32 %v10727, %v10772
          %v10878 = vadd.f32 %v10728, %v10776
          %v10879 = vadd.f32 %v10729, %v10780
          %v10880 = vadd.f32 %v10730, %v10784
          %v10881 = vadd.f32 %v10731, %v10772
          %v10882 = vadd.f32 %v10732, %v10776
          %v10883 = vadd.f32 %v10733, %v10780
          %v10884 = vadd.f32 %v10734, %v10784
          %v10885 = vadd.f32 %v10735, %v10772
          %v10886 = vadd.f32 %v10736, %v10776
          %v10887 = vadd.f32 %v10737, %v10780
          %v10888 = vadd.f32 %v10738, %v10784
          %v10889 = vadd.f32 %v10739, %v10772
          %v10890 = vadd.f32 %v10740, %v10776
          %v10891 = vadd.f32 %v10741, %v10780
          %v10892 = vadd.f32 %v10742, %v10784
          %v10893 = vadd.f32 %v10743, %v10772
          %v10894 = vadd.f32 %v10744, %v10776
          %v10895 = vadd.f32 %v10745, %v10780
          %v10896 = vadd.f32 %v10746, %v10784
          %v10897 = vadd.f32 %v10747, %v10772
          %v10898 = vadd.f32 %v10748, %v10776
          %v10899 = vadd.f32 %v10749, %v10780
          %v10900 = vadd.f32 %v10750, %v10784
          %v10901 = vadd.f32 %v10751, %v10772
          %v10902 = vadd.f32 %v10752, %v10776
          %v10903 = vadd.f32 %v10753, %v10780
          %v10904 = vadd.f32 %v10754, %v10784
          %v10905 = vadd.f32 %v10755, %v10772
          %v10906 = vadd.f32 %v10756, %v10776
          %v10907 = vadd.f32 %v10757, %v10780
          %v10908 = vadd.f32 %v10758, %v10784
          %v10909 = vadd.f32 %v10759, %v10772
          %v10910 = vadd.f32 %v10760, %v10776
          %v10911 = vadd.f32 %v10761, %v10780
          %v10912 = vadd.f32 %v10762, %v10784
          %v10913 = vadd.f32 %v10763, %v10772
          %v10914 = vadd.f32 %v10764, %v10776
          %v10915 = vadd.f32 %v10765, %v10780
          %v10916 = vadd.f32 %v10766, %v10784
          %10917 = vst [vmem:[#allocation16] sm:$0xff] %v10789
          %10918 = vst [vmem:[#allocation16 + $0x8] sm:$0xff] %v10790
          %10919 = vst [vmem:[#allocation16 + $0x10] sm:$0xff] %v10791
          %10920 = vst [vmem:[#allocation16 + $0x18] sm:$0xff] %v10792
          %10921 = vst [vmem:[#allocation16 + $0x20] sm:$0xff] %v10793
          %10922 = vst [vmem:[#allocation16 + $0x28] sm:$0xff] %v10794
          %10923 = vst [vmem:[#allocation16 + $0x30] sm:$0xff] %v10795
          %10924 = vst [vmem:[#allocation16 + $0x38] sm:$0xff] %v10796
          %10925 = vst [vmem:[#allocation16 + $0x40] sm:$0xff] %v10797
          %10926 = vst [vmem:[#allocation16 + $0x48] sm:$0xff] %v10798
          %10927 = vst [vmem:[#allocation16 + $0x50] sm:$0xff] %v10799
          %10928 = vst [vmem:[#allocation16 + $0x58] sm:$0xff] %v10800
          %10929 = vst [vmem:[#allocation16 + $0x60] sm:$0xff] %v10801
          %10930 = vst [vmem:[#allocation16 + $0x68] sm:$0xff] %v10802
          %10931 = vst [vmem:[#allocation16 + $0x70] sm:$0xff] %v10803
          %10932 = vst [vmem:[#allocation16 + $0x78] sm:$0xff] %v10804
          %10933 = vst [vmem:[#allocation16 + $0x80] sm:$0xff] %v10805
          %10934 = vst [vmem:[#allocation16 + $0x88] sm:$0xff] %v10806
          %10935 = vst [vmem:[#allocation16 + $0x90] sm:$0xff] %v10807
          %10936 = vst [vmem:[#allocation16 + $0x98] sm:$0xff] %v10808
          %10937 = vst [vmem:[#allocation16 + $0xa0] sm:$0xff] %v10809
          %10938 = vst [vmem:[#allocation16 + $0xa8] sm:$0xff] %v10810
          %10939 = vst [vmem:[#allocation16 + $0xb0] sm:$0xff] %v10811
          %10940 = vst [vmem:[#allocation16 + $0xb8] sm:$0xff] %v10812
          %10941 = vst [vmem:[#allocation16 + $0xc0] sm:$0xff] %v10813
          %10942 = vst [vmem:[#allocation16 + $0xc8] sm:$0xff] %v10814
          %10943 = vst [vmem:[#allocation16 + $0xd0] sm:$0xff] %v10815
          %10944 = vst [vmem:[#allocation16 + $0xd8] sm:$0xff] %v10816
          %10945 = vst [vmem:[#allocation16 + $0xe0] sm:$0xff] %v10817
          %10946 = vst [vmem:[#allocation16 + $0xe8] sm:$0xff] %v10818
          %10947 = vst [vmem:[#allocation16 + $0xf0] sm:$0xff] %v10819
          %10948 = vst [vmem:[#allocation16 + $0xf8] sm:$0xff] %v10820
          %10949 = vst [vmem:[#allocation16 + $0x100] sm:$0xff] %v10821
          %10950 = vst [vmem:[#allocation16 + $0x108] sm:$0xff] %v10822
          %10951 = vst [vmem:[#allocation16 + $0x110] sm:$0xff] %v10823
          %10952 = vst [vmem:[#allocation16 + $0x118] sm:$0xff] %v10824
          %10953 = vst [vmem:[#allocation16 + $0x120] sm:$0xff] %v10825
          %10954 = vst [vmem:[#allocation16 + $0x128] sm:$0xff] %v10826
          %10955 = vst [vmem:[#allocation16 + $0x130] sm:$0xff] %v10827
          %10956 = vst [vmem:[#allocation16 + $0x138] sm:$0xff] %v10828
          %10957 = vst [vmem:[#allocation16 + $0x140] sm:$0xff] %v10829
          %10958 = vst [vmem:[#allocation16 + $0x148] sm:$0xff] %v10830
          %10959 = vst [vmem:[#allocation16 + $0x150] sm:$0xff] %v10831
          %10960 = vst [vmem:[#allocation16 + $0x158] sm:$0xff] %v10832
          %10961 = vst [vmem:[#allocation16 + $0x160] sm:$0xff] %v10833
          %10962 = vst [vmem:[#allocation16 + $0x168] sm:$0xff] %v10834
          %10963 = vst [vmem:[#allocation16 + $0x170] sm:$0xff] %v10835
          %10964 = vst [vmem:[#allocation16 + $0x178] sm:$0xff] %v10836
          %10965 = vst [vmem:[#allocation16 + $0x180] sm:$0xff] %v10837
          %10966 = vst [vmem:[#allocation16 + $0x188] sm:$0xff] %v10838
          %10967 = vst [vmem:[#allocation16 + $0x190] sm:$0xff] %v10839
          %10968 = vst [vmem:[#allocation16 + $0x198] sm:$0xff] %v10840
          %10969 = vst [vmem:[#allocation16 + $0x1a0] sm:$0xff] %v10841
          %10970 = vst [vmem:[#allocation16 + $0x1a8] sm:$0xff] %v10842
          %10971 = vst [vmem:[#allocation16 + $0x1b0] sm:$0xff] %v10843
          %10972 = vst [vmem:[#allocation16 + $0x1b8] sm:$0xff] %v10844
          %10973 = vst [vmem:[#allocation16 + $0x1c0] sm:$0xff] %v10845
          %10974 = vst [vmem:[#allocation16 + $0x1c8] sm:$0xff] %v10846
          %10975 = vst [vmem:[#allocation16 + $0x1d0] sm:$0xff] %v10847
          %10976 = vst [vmem:[#allocation16 + $0x1d8] sm:$0xff] %v10848
          %10977 = vst [vmem:[#allocation16 + $0x1e0] sm:$0xff] %v10849
          %10978 = vst [vmem:[#allocation16 + $0x1e8] sm:$0xff] %v10850
          %10979 = vst [vmem:[#allocation16 + $0x1f0] sm:$0xff] %v10851
          %10980 = vst [vmem:[#allocation16 + $0x1f8] sm:$0xff] %v10852
          %10981 = vst [vmem:[#allocation16 + $0x200] sm:$0xff] %v10853
          %10982 = vst [vmem:[#allocation16 + $0x208] sm:$0xff] %v10854
          %10983 = vst [vmem:[#allocation16 + $0x210] sm:$0xff] %v10855
          %10984 = vst [vmem:[#allocation16 + $0x218] sm:$0xff] %v10856
          %10985 = vst [vmem:[#allocation16 + $0x220] sm:$0xff] %v10857
          %10986 = vst [vmem:[#allocation16 + $0x228] sm:$0xff] %v10858
          %10987 = vst [vmem:[#allocation16 + $0x230] sm:$0xff] %v10859
          %10988 = vst [vmem:[#allocation16 + $0x238] sm:$0xff] %v10860
          %10989 = vst [vmem:[#allocation16 + $0x240] sm:$0xff] %v10861
          %10990 = vst [vmem:[#allocation16 + $0x248] sm:$0xff] %v10862
          %10991 = vst [vmem:[#allocation16 + $0x250] sm:$0xff] %v10863
          %10992 = vst [vmem:[#allocation16 + $0x258] sm:$0xff] %v10864
          %10993 = vst [vmem:[#allocation16 + $0x260] sm:$0xff] %v10865
          %10994 = vst [vmem:[#allocation16 + $0x268] sm:$0xff] %v10866
          %10995 = vst [vmem:[#allocation16 + $0x270] sm:$0xff] %v10867
          %10996 = vst [vmem:[#allocation16 + $0x278] sm:$0xff] %v10868
          %10997 = vst [vmem:[#allocation16 + $0x280] sm:$0xff] %v10869
          %10998 = vst [vmem:[#allocation16 + $0x288] sm:$0xff] %v10870
          %10999 = vst [vmem:[#allocation16 + $0x290] sm:$0xff] %v10871
          %11000 = vst [vmem:[#allocation16 + $0x298] sm:$0xff] %v10872
          %11001 = vst [vmem:[#allocation16 + $0x2a0] sm:$0xff] %v10873
          %11002 = vst [vmem:[#allocation16 + $0x2a8] sm:$0xff] %v10874
          %11003 = vst [vmem:[#allocation16 + $0x2b0] sm:$0xff] %v10875
          %11004 = vst [vmem:[#allocation16 + $0x2b8] sm:$0xff] %v10876
          %11005 = vst [vmem:[#allocation16 + $0x2c0] sm:$0xff] %v10877
          %11006 = vst [vmem:[#allocation16 + $0x2c8] sm:$0xff] %v10878
          %11007 = vst [vmem:[#allocation16 + $0x2d0] sm:$0xff] %v10879
          %11008 = vst [vmem:[#allocation16 + $0x2d8] sm:$0xff] %v10880
          %11009 = vst [vmem:[#allocation16 + $0x2e0] sm:$0xff] %v10881
          %11010 = vst [vmem:[#allocation16 + $0x2e8] sm:$0xff] %v10882
          %11011 = vst [vmem:[#allocation16 + $0x2f0] sm:$0xff] %v10883
          %11012 = vst [vmem:[#allocation16 + $0x2f8] sm:$0xff] %v10884
          %11013 = vst [vmem:[#allocation16 + $0x300] sm:$0xff] %v10885
          %11014 = vst [vmem:[#allocation16 + $0x308] sm:$0xff] %v10886
          %11015 = vst [vmem:[#allocation16 + $0x310] sm:$0xff] %v10887
          %11016 = vst [vmem:[#allocation16 + $0x318] sm:$0xff] %v10888
          %11017 = vst [vmem:[#allocation16 + $0x320] sm:$0xff] %v10889
          %11018 = vst [vmem:[#allocation16 + $0x328] sm:$0xff] %v10890
          %11019 = vst [vmem:[#allocation16 + $0x330] sm:$0xff] %v10891
          %11020 = vst [vmem:[#allocation16 + $0x338] sm:$0xff] %v10892
          %11021 = vst [vmem:[#allocation16 + $0x340] sm:$0xff] %v10893
          %11022 = vst [vmem:[#allocation16 + $0x348] sm:$0xff] %v10894
          %11023 = vst [vmem:[#allocation16 + $0x350] sm:$0xff] %v10895
          %11024 = vst [vmem:[#allocation16 + $0x358] sm:$0xff] %v10896
          %11025 = vst [vmem:[#allocation16 + $0x360] sm:$0xff] %v10897
          %11026 = vst [vmem:[#allocation16 + $0x368] sm:$0xff] %v10898
          %11027 = vst [vmem:[#allocation16 + $0x370] sm:$0xff] %v10899
          %11028 = vst [vmem:[#allocation16 + $0x378] sm:$0xff] %v10900
          %11029 = vst [vmem:[#allocation16 + $0x380] sm:$0xff] %v10901
          %11030 = vst [vmem:[#allocation16 + $0x388] sm:$0xff] %v10902
          %11031 = vst [vmem:[#allocation16 + $0x390] sm:$0xff] %v10903
          %11032 = vst [vmem:[#allocation16 + $0x398] sm:$0xff] %v10904
          %11033 = vst [vmem:[#allocation16 + $0x3a0] sm:$0xff] %v10905
          %11034 = vst [vmem:[#allocation16 + $0x3a8] sm:$0xff] %v10906
          %11035 = vst [vmem:[#allocation16 + $0x3b0] sm:$0xff] %v10907
          %11036 = vst [vmem:[#allocation16 + $0x3b8] sm:$0xff] %v10908
          %11037 = vst [vmem:[#allocation16 + $0x3c0] sm:$0xff] %v10909
          %11038 = vst [vmem:[#allocation16 + $0x3c8] sm:$0xff] %v10910
          %11039 = vst [vmem:[#allocation16 + $0x3d0] sm:$0xff] %v10911
          %11040 = vst [vmem:[#allocation16 + $0x3d8] sm:$0xff] %v10912
          %11041 = vst [vmem:[#allocation16 + $0x3e0] sm:$0xff] %v10913
          %11042 = vst [vmem:[#allocation16 + $0x3e8] sm:$0xff] %v10914
          %11043 = vst [vmem:[#allocation16 + $0x3f0] sm:$0xff] %v10915
          %11044 = vst [vmem:[#allocation16 + $0x3f8] sm:$0xff] %v10916
        $region84: #{tpu_custom_call.1} parent=47 // pred_fallthru
          _
        // Predicated region
        $region85: #{tpu_custom_call.1} parent=47 // pred_check
          %p11045 = pneg %p202
        $region86: #{tpu_custom_call.1} parent=47 // pred_check_branch
          %11047 = sbr.rel (%p11045) target = $region88
        $region87: #{tpu_custom_call.1} parent=47 // pred_region
          %s11049 = ssub.s32 16384, 16384
          %11050 = vsyncadd [#allocation6], %s11049
          %s11051 = sshll.u32 [#allocation16], 4
          %s11052 = int_to_ptr.vmem [resolvable:$true] %s11051
          %11057 = dma.vmem_to_hbm [thread:$0]  %s11052, 16384, %s7, [#allocation6], 512, 512, 32
        $region88: #{tpu_custom_call.1} parent=47 // pred_fallthru
          _
        // Predicated region
        $region89: #{tpu_custom_call.1} parent=47 // pred_check
          %p11058 = pneg %p202
        $region90: #{tpu_custom_call.1} parent=47 // pred_check_branch
          %11060 = sbr.rel (%p11058) target = $region92
        $region91: #{tpu_custom_call.1} parent=47 // pred_region
          %11061 = dma.done [#allocation6], 16384
        $region92: #{tpu_custom_call.1} parent=47 // pred_fallthru
          _
      $region48: #{tpu_custom_call.1} parent=5 // pred_fallthru
        _
      %p11062 = scmp.le.s32.totalorder 2, %s22
      // Predicated region
      $region93: #{tpu_custom_call.1} parent=5 // pred_check
        %p11063 = pneg %p11062
      $region94: #{tpu_custom_call.1} parent=5 // pred_check_branch
        %11065 = sbr.rel (%p11063) target = $region96
      $region95: #{tpu_custom_call.1} parent=5 // pred_region
        %s11066 = ssub.s32 %s22, 2
      $region96: #{tpu_custom_call.1} parent=5 // pred_fallthru
        _
    $region6: #{tpu_custom_call.1} parent=1 // loop_footer
      %s26 = sadd.s32 1, %s22
    $region7: #{tpu_custom_call.1} parent=1 // loop_footer_branch
      %21 = sbr.rel target = $region3
    $region8: #{tpu_custom_call.1} parent=1 // loop_exit
      _
    %11067 = vsyncpa [#allocation5], 1
    %s11068 = scalar_lea.sflag [#allocation5], 1
    %11069 = vsyncpa %s11068, 1
    %11070 = vsyncpa [#allocation8], 1
    %11071 = vsyncpa [#allocation11], 1
    %s11072 = scalar_lea.sflag [#allocation11], 1
    %11073 = vsyncpa %s11072, 1
    %11074 = vsyncpa [#allocation14], 1
    %s11075 = scalar_lea.sflag [#allocation14], 1
    %11076 = vsyncpa %s11075, 1
    %11077 = vsyncpa [#allocation6], 1
    %s11078 = scalar_lea.sflag [#allocation6], 1
    %11079 = vsyncpa %s11078, 1

</llo_original>
